<compile_context>
chip_gen: v6e
topology: v6e:2x2x1
jax: 0.10.0
libtpu: 0.0.40
codegen_flags: <defaults>
</compile_context>

<pallas_src>
import functools

import jax
import jax.numpy as jnp
from jax.experimental import pallas as pl
from jax.experimental.pallas import tpu as pltpu


# ---------------------------------------------------------------------------
# Fused conv stack kernel (conv1 -> relu -> conv2 -> relu -> conv3 channel 0)
# ---------------------------------------------------------------------------
def _srcnn_conv_stack_kernel(p_ref, w1_ref, b1_ref, w2_ref, b2_ref, w3_ref,
                             b3_ref, o_ref, xp3_ref, *, ho1, wo1, pad_total):
    # p_ref : (1, Ho1*Wo1, K1*K1*Cin)  im2col patches for conv1 (one batch elem)
    # w1_ref: (K1*K1*Cin, 64)   b1_ref: (1, 64)
    # w2_ref: (64, 32)          b2_ref: (1, 32)
    # w3_ref: (K3, K3, 32)      b3_ref: (1, 1)      (output channel 0 only)
    # o_ref : (1, Hf, Wf)       xp3_ref: VMEM scratch (Hf+K3-1, Wf+K3-1, 32)

    # conv1: single well-shaped MXU matmul, f32 accumulation.
    out1 = jnp.dot(p_ref[0], w1_ref[...], preferred_element_type=jnp.float32)
    out1 = jnp.maximum(out1 + b1_ref[...], 0.0)                 # (Ho1*Wo1, 64)

    # conv2 (1x1) fused: pointwise matmul commutes with replicate padding, so
    # apply it on the unpadded conv1 output and pad afterwards.
    out2 = jnp.dot(out1, w2_ref[...], preferred_element_type=jnp.float32)
    out2 = jnp.maximum(out2 + b2_ref[...], 0.0)                 # (Ho1*Wo1, 32)

    # Replicate-pad by (conv2.pad + conv3.pad) into VMEM scratch.
    pt = pad_total
    hp3, wp3, c2 = xp3_ref.shape
    for h in range(ho1):                                        # interior rows
        xp3_ref[pt + h, pt:pt + wo1, :] = out2[h * wo1:(h + 1) * wo1, :]
    left = xp3_ref[pt:pt + ho1, pt:pt + 1, :]
    xp3_ref[pt:pt + ho1, 0:pt, :] = jnp.broadcast_to(left, (ho1, pt, c2))
    right = xp3_ref[pt:pt + ho1, pt + wo1 - 1:pt + wo1, :]
    xp3_ref[pt:pt + ho1, pt + wo1:wp3, :] = jnp.broadcast_to(right,
                                                             (ho1, pt, c2))
    top = xp3_ref[pt:pt + 1, :, :]
    xp3_ref[0:pt, :, :] = jnp.broadcast_to(top, (pt, wp3, c2))
    bot = xp3_ref[pt + ho1 - 1:pt + ho1, :, :]
    xp3_ref[pt + ho1:hp3, :, :] = jnp.broadcast_to(bot, (pt, wp3, c2))

    # conv3, output channel 0 only: 25 taps of multiply + lane-reduce over the
    # 32 input channels (VPU/XLU; ~0.2 MFLOP, not worth an MXU reshape dance).
    k3 = w3_ref.shape[0]
    hf, wf = o_ref.shape[1], o_ref.shape[2]
    acc = jnp.zeros((hf, wf), jnp.float32)
    for i in range(k3):
        for j in range(k3):
            slab = xp3_ref[i:i + hf, j:j + wf, :]               # (hf, wf, 32)
            acc = acc + jnp.sum(slab * w3_ref[i, j], axis=-1)
    acc = acc + b3_ref[...]                                     # (1,1) bcast
    o_ref[0] = acc.astype(o_ref.dtype)


def _fused_conv_stack(patches, w1r, b1, w2r, b2, w3c0, b3c0, *, ho1, wo1,
                      pad_total, k3, out_dtype):
    B, P, K1 = patches.shape
    C1 = w1r.shape[1]
    C2 = w2r.shape[1]
    hf = ho1 + 2 * pad_total - k3 + 1
    wf = wo1 + 2 * pad_total - k3 + 1
    hp3 = ho1 + 2 * pad_total
    wp3 = wo1 + 2 * pad_total

    kernel = functools.partial(_srcnn_conv_stack_kernel, ho1=ho1, wo1=wo1,
                               pad_total=pad_total)
    return pl.pallas_call(
        kernel,
        out_shape=jax.ShapeDtypeStruct((B, hf, wf), out_dtype),
        grid_spec=pltpu.PrefetchScalarGridSpec(
            num_scalar_prefetch=0,
            grid=(B,),
            in_specs=[
                pl.BlockSpec((1, P, K1), lambda b: (b, 0, 0)),   # patches
                pl.BlockSpec((K1, C1), lambda b: (0, 0)),        # w1 (im2col)
                pl.BlockSpec((1, C1), lambda b: (0, 0)),         # b1
                pl.BlockSpec((C1, C2), lambda b: (0, 0)),        # w2 (1x1)
                pl.BlockSpec((1, C2), lambda b: (0, 0)),         # b2
                pl.BlockSpec((k3, k3, C2), lambda b: (0, 0, 0)),  # w3 ch0
                pl.BlockSpec((1, 1), lambda b: (0, 0)),          # b3 ch0
            ],
            out_specs=pl.BlockSpec((1, hf, wf), lambda b: (b, 0, 0)),
            scratch_shapes=[pltpu.VMEM((hp3, wp3, C2), jnp.float32)],
        ),
        compiler_params=pltpu.CompilerParams(
            dimension_semantics=("parallel",)),   # B>=2 keeps both v7x TCs busy
    )(patches, w1r, b1.reshape(1, C1), w2r, b2.reshape(1, C2), w3c0, b3c0)


def _im2col(x_nhwc, *, k, pad):
    """Edge-pad + extract conv patches -> (B, Ho*Wo, k*k*C). Tiny XLA prep."""
    B, H, W, C = x_nhwc.shape
    xp = jnp.pad(x_nhwc, ((0, 0), (pad, pad), (pad, pad), (0, 0)), mode="edge")
    ho = H + 2 * pad - k + 1
    wo = W + 2 * pad - k + 1
    cols = []
    for i in range(k):
        for j in range(k):
            cols.append(xp[:, i:i + ho, j:j + wo, :])
    patches = jnp.concatenate(cols, axis=-1)          # (B, ho, wo, k*k*C)
    return patches.reshape(B, ho * wo, k * k * C), ho, wo


# ---------------------------------------------------------------------------
# Tiled linear kernel (works at real Linear(2210, 92631) sizes too)
# ---------------------------------------------------------------------------
def _linear_kernel(x_ref, w_ref, b_ref, o_ref, acc_ref):
    @pl.when(pl.program_id(1) == 0)
    def _init():
        acc_ref[...] = jnp.zeros_like(acc_ref)

    acc_ref[...] += jnp.dot(x_ref[...], w_ref[...],
                            preferred_element_type=jnp.float32)

    @pl.when(pl.program_id(1) == pl.num_programs(1) - 1)
    def _finalize():
        o_ref[...] = (acc_ref[...] + b_ref[...]).astype(o_ref.dtype)


def _largest_divisor_tile(dim, cap):
    cap = min(cap, dim)
    for t in range(cap, 0, -1):
        if dim % t == 0:
            return t
    return dim


def linear_tiled(x2d, w, b, *, max_tn=512, max_tk=512):
    # Tiles capped at 512x512 f32 (~1 MiB, ~2 MiB double-buffered) -> fits the
    # scoped VMEM defaults on v5e (16 MiB), v6e (32 MiB) and v7x (32/64 MiB).
    # TODO(synk): ragged Dout/Din (e.g. 92631) would need padded tiles/masking.
    B, Din = x2d.shape
    Dout = w.shape[1]
    tn = _largest_divisor_tile(Dout, max_tn)
    tk = _largest_divisor_tile(Din, max_tk)
    grid = (Dout // tn, Din // tk)            # reduction (k) axis last
    return pl.pallas_call(
        _linear_kernel,
        out_shape=jax.ShapeDtypeStruct((B, Dout), x2d.dtype),
        grid_spec=pltpu.PrefetchScalarGridSpec(
            num_scalar_prefetch=0,
            grid=grid,
            in_specs=[
                pl.BlockSpec((B, tk), lambda j, k: (0, k)),
                pl.BlockSpec((tk, tn), lambda j, k: (k, j)),
                pl.BlockSpec((1, tn), lambda j, k: (0, j)),
            ],
            out_specs=pl.BlockSpec((B, tn), lambda j, k: (0, j)),
            scratch_shapes=[pltpu.VMEM((B, tn), jnp.float32)],
        ),
        compiler_params=pltpu.CompilerParams(
            dimension_semantics=("parallel", "arbitrary")),
    )(x2d, w, b.reshape(1, Dout))


# ---------------------------------------------------------------------------
# Parameters & forward
# ---------------------------------------------------------------------------
def init_srcnn_params(key, noi, linear_in, linear_out):
    """PyTorch-style uniform(-1/sqrt(fan_in), 1/sqrt(fan_in)) init.

    Conv weights stored as (KH, KW, Cin, Cout); linear as (Din, Dout).
    """
    ks = jax.random.split(key, 8)

    def u(k, shape, fan_in):
        bound = 1.0 / (fan_in ** 0.5)
        return jax.random.uniform(k, shape, jnp.float32, -bound, bound)

    return {
        "w1": u(ks[0], (9, 9, noi, 64), noi * 9 * 9),
        "b1": u(ks[1], (64,), noi * 9 * 9),
        "w2": u(ks[2], (1, 1, 64, 32), 64 * 1 * 1),
        "b2": u(ks[3], (32,), 64 * 1 * 1),
        "w3": u(ks[4], (5, 5, 32, noi), 32 * 5 * 5),
        "b3": u(ks[5], (noi,), 32 * 5 * 5),
        "wl": u(ks[6], (linear_in, linear_out), linear_in),
        "bl": u(ks[7], (linear_out,), linear_in),
    }


def srcnn_forward(params, x_nchw):
    # x_nchw: (B, noi, H, W) — PyTorch layout in.
    x = jnp.transpose(x_nchw, (0, 2, 3, 1))                 # -> NHWC
    k1 = params["w1"].shape[0]
    cin = params["w1"].shape[2]
    k3 = params["w3"].shape[0]

    patches, ho1, wo1 = _im2col(x, k=k1, pad=2)             # conv1 patches
    w1r = params["w1"].reshape(k1 * k1 * cin, params["w1"].shape[3])
    w2r = params["w2"].reshape(params["w2"].shape[2], params["w2"].shape[3])
    w3c0 = params["w3"][:, :, :, 0]                         # only channel 0
    b3c0 = params["b3"][0].reshape(1, 1)

    y = _fused_conv_stack(patches, w1r, params["b1"], w2r, params["b2"],
                          w3c0, b3c0, ho1=ho1, wo1=wo1,
                          pad_total=2 + 2, k3=k3, out_dtype=x.dtype)
    B, hf, wf = y.shape
    x2d = y.reshape(B, hf * wf)          # free row-major reshape (no HBM pass)
    return linear_tiled(x2d, params["wl"], params["bl"])


# ---------------------------------------------------------------------------
# Pure-JAX reference (for a loose numerical sanity check)
# ---------------------------------------------------------------------------
def _reference_forward(params, x_nchw):
    x = jnp.transpose(x_nchw, (0, 2, 3, 1))

    def conv(x, w, b, pad):
        xp = jnp.pad(x, ((0, 0), (pad, pad), (pad, pad), (0, 0)), mode="edge")
        y = jax.lax.conv_general_dilated(
            xp, w, window_strides=(1, 1), padding="VALID",
            dimension_numbers=("NHWC", "HWIO", "NHWC"))
        return y + b

    y = jnp.maximum(conv(x, params["w1"], params["b1"], 2), 0.0)
    y = jnp.maximum(conv(y, params["w2"], params["b2"], 2), 0.0)
    y = conv(y, params["w3"], params["b3"], 2)
    B, Hc, Wc, _ = y.shape
    x2d = y[:, :, :, 0].reshape(B, Hc * Wc)
    return x2d @ params["wl"] + params["bl"]


if __name__ == "__main__":
    # Small shapes consistent with the forward pass: conv1 (k9,p2) shrinks H,W
    # by 4, conv2 (k1,p2) grows them by 4, conv3 (k5,p2) keeps them, so the
    # final spatial equals the input spatial and Linear.in_features == H*W.
    noi, B, H, W = 4, 2, 16, 16
    linear_in, linear_out = H * W, 128   # scaled-down stand-in for 2210->92631

    key = jax.random.PRNGKey(0)
    kx, kp = jax.random.split(key)
    x = jax.random.normal(kx, (B, noi, H, W), jnp.float32)
    params = init_srcnn_params(kp, noi, linear_in, linear_out)

    out = jax.jit(srcnn_forward)(params, x)
    out = jax.block_until_ready(out)
    assert out.shape == (B, linear_out), out.shape
    assert bool(jnp.all(jnp.isfinite(out)))

    # Loose sanity check vs a pure-JAX reference (default-precision MXU math
    # differs slightly between paths, so the tolerance is intentionally wide).
    ref = _reference_forward(params, x)
    max_err = float(jnp.max(jnp.abs(out - ref)))
    scale = max(1.0, float(jnp.max(jnp.abs(ref))))
    assert max_err <= 5e-2 * scale, (max_err, scale)

    print("KERNEL_OK")
</pallas_src>

<mosaic_0001>
module attributes {stable_mosaic.version = 11 : i64} {
  func.func @_srcnn_conv_stack_kernel(%arg0: i32, %arg1: memref<1x144x324xf32, #tpu.memory_space<vmem>>, %arg2: memref<324x64xf32, #tpu.memory_space<vmem>>, %arg3: memref<1x64xf32, #tpu.memory_space<vmem>>, %arg4: memref<64x32xf32, #tpu.memory_space<vmem>>, %arg5: memref<1x32xf32, #tpu.memory_space<vmem>>, %arg6: memref<5x5x32xf32, #tpu.memory_space<vmem>>, %arg7: memref<1x1xf32, #tpu.memory_space<vmem>>, %arg8: memref<1x16x16xf32, #tpu.memory_space<vmem>>, %arg9: memref<20x20x32xf32, #tpu.memory_space<vmem>>) attributes {dimension_semantics = [#tpu.dimension_semantics<parallel>], iteration_bounds = array<i64: 2>, scalar_prefetch = 0 : i64, scratch_operands = 1 : i64, tpu.core_type = #tpu.core_type<tc>, window_params = [{transform_indices = @transform_0, window_bounds = array<i64: 1, 144, 324>}, {pipeline_mode = #tpu.pipeline_mode<synchronous>, transform_indices = @transform_1, window_bounds = array<i64: 324, 64>}, {pipeline_mode = #tpu.pipeline_mode<synchronous>, transform_indices = @transform_2, window_bounds = array<i64: 1, 64>}, {pipeline_mode = #tpu.pipeline_mode<synchronous>, transform_indices = @transform_3, window_bounds = array<i64: 64, 32>}, {pipeline_mode = #tpu.pipeline_mode<synchronous>, transform_indices = @transform_4, window_bounds = array<i64: 1, 32>}, {pipeline_mode = #tpu.pipeline_mode<synchronous>, transform_indices = @transform_5, window_bounds = array<i64: 5, 5, 32>}, {pipeline_mode = #tpu.pipeline_mode<synchronous>, transform_indices = @transform_6, window_bounds = array<i64: 1, 1>}, {transform_indices = @transform_7, window_bounds = array<i64: 1, 16, 16>}]} {
    %c0 = arith.constant 0 : index
    %c0_0 = arith.constant 0 : index
    %c0_1 = arith.constant 0 : index
    %0 = vector.load %arg1[%c0, %c0_0, %c0_1] : memref<1x144x324xf32, #tpu.memory_space<vmem>>, vector<1x144x324xf32>
    %1 = vector.shape_cast %0 : vector<1x144x324xf32> to vector<144x324xf32>
    %c0_2 = arith.constant 0 : index
    %c0_3 = arith.constant 0 : index
    %2 = vector.load %arg2[%c0_2, %c0_3] : memref<324x64xf32, #tpu.memory_space<vmem>>, vector<324x64xf32>
    %cst = arith.constant dense<0.000000e+00> : vector<144x64xf32>
    %3 = tpu.matmul %1, %2, %cst {dimension_numbers = #tpu.dot_dimension_numbers<[1], [0], [0], [1], [0, 0, 1, 1], [], []>} : vector<144x324xf32>, vector<324x64xf32>, vector<144x64xf32> -> vector<144x64xf32>
    %c0_4 = arith.constant 0 : index
    %c0_5 = arith.constant 0 : index
    %4 = vector.load %arg3[%c0_4, %c0_5] : memref<1x64xf32, #tpu.memory_space<vmem>>, vector<1x64xf32>
    %5 = vector.broadcast %4 : vector<1x64xf32> to vector<144x64xf32>
    %6 = arith.addf %3, %5 : vector<144x64xf32>
    %cst_6 = arith.constant 0.000000e+00 : f32
    %7 = vector.broadcast %cst_6 : f32 to vector<144x64xf32>
    %8 = arith.maximumf %6, %7 : vector<144x64xf32>
    %c0_7 = arith.constant 0 : index
    %c0_8 = arith.constant 0 : index
    %9 = vector.load %arg4[%c0_7, %c0_8] : memref<64x32xf32, #tpu.memory_space<vmem>>, vector<64x32xf32>
    %cst_9 = arith.constant dense<0.000000e+00> : vector<144x32xf32>
    %10 = tpu.matmul %8, %9, %cst_9 {dimension_numbers = #tpu.dot_dimension_numbers<[1], [0], [0], [1], [0, 0, 1, 1], [], []>} : vector<144x64xf32>, vector<64x32xf32>, vector<144x32xf32> -> vector<144x32xf32>
    %c0_10 = arith.constant 0 : index
    %c0_11 = arith.constant 0 : index
    %11 = vector.load %arg5[%c0_10, %c0_11] : memref<1x32xf32, #tpu.memory_space<vmem>>, vector<1x32xf32>
    %12 = vector.broadcast %11 : vector<1x32xf32> to vector<144x32xf32>
    %13 = arith.addf %10, %12 : vector<144x32xf32>
    %cst_12 = arith.constant 0.000000e+00 : f32
    %14 = vector.broadcast %cst_12 : f32 to vector<144x32xf32>
    %15 = arith.maximumf %13, %14 : vector<144x32xf32>
    %16 = vector.extract_strided_slice %15 {offsets = [0, 0], sizes = [12, 32], strides = [1, 1]} : vector<144x32xf32> to vector<12x32xf32>
    %c4 = arith.constant 4 : index
    %c4_13 = arith.constant 4 : index
    %c0_14 = arith.constant 0 : index
    %17 = vector.load %arg9[%c4, %c4_13, %c0_14] : memref<20x20x32xf32, #tpu.memory_space<vmem>>, vector<1x12x32xf32>
    %18 = vector.shape_cast %17 : vector<1x12x32xf32> to vector<12x32xf32>
    %19 = vector.shape_cast %16 : vector<12x32xf32> to vector<1x12x32xf32>
    tpu.vector_store %arg9[%c4, %c4_13, %c0_14], %19 {strides = array<i32>} : memref<20x20x32xf32, #tpu.memory_space<vmem>>, vector<1x12x32xf32>,
    %20 = vector.extract_strided_slice %15 {offsets = [12, 0], sizes = [12, 32], strides = [1, 1]} : vector<144x32xf32> to vector<12x32xf32>
    %c5 = arith.constant 5 : index
    %c4_15 = arith.constant 4 : index
    %c0_16 = arith.constant 0 : index
    %21 = vector.load %arg9[%c5, %c4_15, %c0_16] : memref<20x20x32xf32, #tpu.memory_space<vmem>>, vector<1x12x32xf32>
    %22 = vector.shape_cast %21 : vector<1x12x32xf32> to vector<12x32xf32>
    %23 = vector.shape_cast %20 : vector<12x32xf32> to vector<1x12x32xf32>
    tpu.vector_store %arg9[%c5, %c4_15, %c0_16], %23 {strides = array<i32>} : memref<20x20x32xf32, #tpu.memory_space<vmem>>, vector<1x12x32xf32>,
    %24 = vector.extract_strided_slice %15 {offsets = [24, 0], sizes = [12, 32], strides = [1, 1]} : vector<144x32xf32> to vector<12x32xf32>
    %c6 = arith.constant 6 : index
    %c4_17 = arith.constant 4 : index
    %c0_18 = arith.constant 0 : index
    %25 = vector.load %arg9[%c6, %c4_17, %c0_18] : memref<20x20x32xf32, #tpu.memory_space<vmem>>, vector<1x12x32xf32>
    %26 = vector.shape_cast %25 : vector<1x12x32xf32> to vector<12x32xf32>
    %27 = vector.shape_cast %24 : vector<12x32xf32> to vector<1x12x32xf32>
    tpu.vector_store %arg9[%c6, %c4_17, %c0_18], %27 {strides = array<i32>} : memref<20x20x32xf32, #tpu.memory_space<vmem>>, vector<1x12x32xf32>,
    %28 = vector.extract_strided_slice %15 {offsets = [36, 0], sizes = [12, 32], strides = [1, 1]} : vector<144x32xf32> to vector<12x32xf32>
    %c7 = arith.constant 7 : index
    %c4_19 = arith.constant 4 : index
    %c0_20 = arith.constant 0 : index
    %29 = vector.load %arg9[%c7, %c4_19, %c0_20] : memref<20x20x32xf32, #tpu.memory_space<vmem>>, vector<1x12x32xf32>
    %30 = vector.shape_cast %29 : vector<1x12x32xf32> to vector<12x32xf32>
    %31 = vector.shape_cast %28 : vector<12x32xf32> to vector<1x12x32xf32>
    tpu.vector_store %arg9[%c7, %c4_19, %c0_20], %31 {strides = array<i32>} : memref<20x20x32xf32, #tpu.memory_space<vmem>>, vector<1x12x32xf32>,
    %32 = vector.extract_strided_slice %15 {offsets = [48, 0], sizes = [12, 32], strides = [1, 1]} : vector<144x32xf32> to vector<12x32xf32>
    %c8 = arith.constant 8 : index
    %c4_21 = arith.constant 4 : index
    %c0_22 = arith.constant 0 : index
    %33 = vector.load %arg9[%c8, %c4_21, %c0_22] : memref<20x20x32xf32, #tpu.memory_space<vmem>>, vector<1x12x32xf32>
    %34 = vector.shape_cast %33 : vector<1x12x32xf32> to vector<12x32xf32>
    %35 = vector.shape_cast %32 : vector<12x32xf32> to vector<1x12x32xf32>
    tpu.vector_store %arg9[%c8, %c4_21, %c0_22], %35 {strides = array<i32>} : memref<20x20x32xf32, #tpu.memory_space<vmem>>, vector<1x12x32xf32>,
    %36 = vector.extract_strided_slice %15 {offsets = [60, 0], sizes = [12, 32], strides = [1, 1]} : vector<144x32xf32> to vector<12x32xf32>
    %c9 = arith.constant 9 : index
    %c4_23 = arith.constant 4 : index
    %c0_24 = arith.constant 0 : index
    %37 = vector.load %arg9[%c9, %c4_23, %c0_24] : memref<20x20x32xf32, #tpu.memory_space<vmem>>, vector<1x12x32xf32>
    %38 = vector.shape_cast %37 : vector<1x12x32xf32> to vector<12x32xf32>
    %39 = vector.shape_cast %36 : vector<12x32xf32> to vector<1x12x32xf32>
    tpu.vector_store %arg9[%c9, %c4_23, %c0_24], %39 {strides = array<i32>} : memref<20x20x32xf32, #tpu.memory_space<vmem>>, vector<1x12x32xf32>,
    %40 = vector.extract_strided_slice %15 {offsets = [72, 0], sizes = [12, 32], strides = [1, 1]} : vector<144x32xf32> to vector<12x32xf32>
    %c10 = arith.constant 10 : index
    %c4_25 = arith.constant 4 : index
    %c0_26 = arith.constant 0 : index
    %41 = vector.load %arg9[%c10, %c4_25, %c0_26] : memref<20x20x32xf32, #tpu.memory_space<vmem>>, vector<1x12x32xf32>
    %42 = vector.shape_cast %41 : vector<1x12x32xf32> to vector<12x32xf32>
    %43 = vector.shape_cast %40 : vector<12x32xf32> to vector<1x12x32xf32>
    tpu.vector_store %arg9[%c10, %c4_25, %c0_26], %43 {strides = array<i32>} : memref<20x20x32xf32, #tpu.memory_space<vmem>>, vector<1x12x32xf32>,
    %44 = vector.extract_strided_slice %15 {offsets = [84, 0], sizes = [12, 32], strides = [1, 1]} : vector<144x32xf32> to vector<12x32xf32>
    %c11 = arith.constant 11 : index
    %c4_27 = arith.constant 4 : index
    %c0_28 = arith.constant 0 : index
    %45 = vector.load %arg9[%c11, %c4_27, %c0_28] : memref<20x20x32xf32, #tpu.memory_space<vmem>>, vector<1x12x32xf32>
    %46 = vector.shape_cast %45 : vector<1x12x32xf32> to vector<12x32xf32>
    %47 = vector.shape_cast %44 : vector<12x32xf32> to vector<1x12x32xf32>
    tpu.vector_store %arg9[%c11, %c4_27, %c0_28], %47 {strides = array<i32>} : memref<20x20x32xf32, #tpu.memory_space<vmem>>, vector<1x12x32xf32>,
    %48 = vector.extract_strided_slice %15 {offsets = [96, 0], sizes = [12, 32], strides = [1, 1]} : vector<144x32xf32> to vector<12x32xf32>
    %c12 = arith.constant 12 : index
    %c4_29 = arith.constant 4 : index
    %c0_30 = arith.constant 0 : index
    %49 = vector.load %arg9[%c12, %c4_29, %c0_30] : memref<20x20x32xf32, #tpu.memory_space<vmem>>, vector<1x12x32xf32>
    %50 = vector.shape_cast %49 : vector<1x12x32xf32> to vector<12x32xf32>
    %51 = vector.shape_cast %48 : vector<12x32xf32> to vector<1x12x32xf32>
    tpu.vector_store %arg9[%c12, %c4_29, %c0_30], %51 {strides = array<i32>} : memref<20x20x32xf32, #tpu.memory_space<vmem>>, vector<1x12x32xf32>,
    %52 = vector.extract_strided_slice %15 {offsets = [108, 0], sizes = [12, 32], strides = [1, 1]} : vector<144x32xf32> to vector<12x32xf32>
    %c13 = arith.constant 13 : index
    %c4_31 = arith.constant 4 : index
    %c0_32 = arith.constant 0 : index
    %53 = vector.load %arg9[%c13, %c4_31, %c0_32] : memref<20x20x32xf32, #tpu.memory_space<vmem>>, vector<1x12x32xf32>
    %54 = vector.shape_cast %53 : vector<1x12x32xf32> to vector<12x32xf32>
    %55 = vector.shape_cast %52 : vector<12x32xf32> to vector<1x12x32xf32>
    tpu.vector_store %arg9[%c13, %c4_31, %c0_32], %55 {strides = array<i32>} : memref<20x20x32xf32, #tpu.memory_space<vmem>>, vector<1x12x32xf32>,
    %56 = vector.extract_strided_slice %15 {offsets = [120, 0], sizes = [12, 32], strides = [1, 1]} : vector<144x32xf32> to vector<12x32xf32>
    %c14 = arith.constant 14 : index
    %c4_33 = arith.constant 4 : index
    %c0_34 = arith.constant 0 : index
    %57 = vector.load %arg9[%c14, %c4_33, %c0_34] : memref<20x20x32xf32, #tpu.memory_space<vmem>>, vector<1x12x32xf32>
    %58 = vector.shape_cast %57 : vector<1x12x32xf32> to vector<12x32xf32>
    %59 = vector.shape_cast %56 : vector<12x32xf32> to vector<1x12x32xf32>
    tpu.vector_store %arg9[%c14, %c4_33, %c0_34], %59 {strides = array<i32>} : memref<20x20x32xf32, #tpu.memory_space<vmem>>, vector<1x12x32xf32>,
    %60 = vector.extract_strided_slice %15 {offsets = [132, 0], sizes = [12, 32], strides = [1, 1]} : vector<144x32xf32> to vector<12x32xf32>
    %c15 = arith.constant 15 : index
    %c4_35 = arith.constant 4 : index
    %c0_36 = arith.constant 0 : index
    %61 = vector.load %arg9[%c15, %c4_35, %c0_36] : memref<20x20x32xf32, #tpu.memory_space<vmem>>, vector<1x12x32xf32>
    %62 = vector.shape_cast %61 : vector<1x12x32xf32> to vector<12x32xf32>
    %63 = vector.shape_cast %60 : vector<12x32xf32> to vector<1x12x32xf32>
    tpu.vector_store %arg9[%c15, %c4_35, %c0_36], %63 {strides = array<i32>} : memref<20x20x32xf32, #tpu.memory_space<vmem>>, vector<1x12x32xf32>,
    %c4_37 = arith.constant 4 : index
    %c4_38 = arith.constant 4 : index
    %c0_39 = arith.constant 0 : index
    %64 = vector.load %arg9[%c4_37, %c4_38, %c0_39] : memref<20x20x32xf32, #tpu.memory_space<vmem>>, vector<12x1x32xf32>
    %65 = vector.shape_cast %64 : vector<12x1x32xf32> to vector<12x1x32xf32>
    %66 = vector.broadcast %65 : vector<12x1x32xf32> to vector<12x4x32xf32>
    %c4_40 = arith.constant 4 : index
    %c0_41 = arith.constant 0 : index
    %c0_42 = arith.constant 0 : index
    %67 = vector.load %arg9[%c4_40, %c0_41, %c0_42] : memref<20x20x32xf32, #tpu.memory_space<vmem>>, vector<12x4x32xf32>
    tpu.vector_store %arg9[%c4_40, %c0_41, %c0_42], %66 {strides = array<i32>} : memref<20x20x32xf32, #tpu.memory_space<vmem>>, vector<12x4x32xf32>,
    %c4_43 = arith.constant 4 : index
    %c15_44 = arith.constant 15 : index
    %c0_45 = arith.constant 0 : index
    %68 = vector.load %arg9[%c4_43, %c15_44, %c0_45] : memref<20x20x32xf32, #tpu.memory_space<vmem>>, vector<12x1x32xf32>
    %69 = vector.shape_cast %68 : vector<12x1x32xf32> to vector<12x1x32xf32>
    %70 = vector.broadcast %69 : vector<12x1x32xf32> to vector<12x4x32xf32>
    %c4_46 = arith.constant 4 : index
    %c16 = arith.constant 16 : index
    %c0_47 = arith.constant 0 : index
    %71 = vector.load %arg9[%c4_46, %c16, %c0_47] : memref<20x20x32xf32, #tpu.memory_space<vmem>>, vector<12x4x32xf32>
    tpu.vector_store %arg9[%c4_46, %c16, %c0_47], %70 {strides = array<i32>} : memref<20x20x32xf32, #tpu.memory_space<vmem>>, vector<12x4x32xf32>,
    %c4_48 = arith.constant 4 : index
    %c0_49 = arith.constant 0 : index
    %c0_50 = arith.constant 0 : index
    %72 = vector.load %arg9[%c4_48, %c0_49, %c0_50] : memref<20x20x32xf32, #tpu.memory_space<vmem>>, vector<1x20x32xf32>
    %73 = vector.shape_cast %72 : vector<1x20x32xf32> to vector<1x20x32xf32>
    %74 = vector.broadcast %73 : vector<1x20x32xf32> to vector<4x20x32xf32>
    %c0_51 = arith.constant 0 : index
    %c0_52 = arith.constant 0 : index
    %c0_53 = arith.constant 0 : index
    %75 = vector.load %arg9[%c0_51, %c0_52, %c0_53] : memref<20x20x32xf32, #tpu.memory_space<vmem>>, vector<4x20x32xf32>
    tpu.vector_store %arg9[%c0_51, %c0_52, %c0_53], %74 {strides = array<i32>} : memref<20x20x32xf32, #tpu.memory_space<vmem>>, vector<4x20x32xf32>,
    %c15_54 = arith.constant 15 : index
    %c0_55 = arith.constant 0 : index
    %c0_56 = arith.constant 0 : index
    %76 = vector.load %arg9[%c15_54, %c0_55, %c0_56] : memref<20x20x32xf32, #tpu.memory_space<vmem>>, vector<1x20x32xf32>
    %77 = vector.shape_cast %76 : vector<1x20x32xf32> to vector<1x20x32xf32>
    %78 = vector.broadcast %77 : vector<1x20x32xf32> to vector<4x20x32xf32>
    %c16_57 = arith.constant 16 : index
    %c0_58 = arith.constant 0 : index
    %c0_59 = arith.constant 0 : index
    %79 = vector.load %arg9[%c16_57, %c0_58, %c0_59] : memref<20x20x32xf32, #tpu.memory_space<vmem>>, vector<4x20x32xf32>
    tpu.vector_store %arg9[%c16_57, %c0_58, %c0_59], %78 {strides = array<i32>} : memref<20x20x32xf32, #tpu.memory_space<vmem>>, vector<4x20x32xf32>,
    %cst_60 = arith.constant 0.000000e+00 : f32
    %80 = vector.broadcast %cst_60 : f32 to vector<16x16xf32>
    %c0_61 = arith.constant 0 : index
    %c0_62 = arith.constant 0 : index
    %c0_63 = arith.constant 0 : index
    %81 = vector.load %arg9[%c0_61, %c0_62, %c0_63] : memref<20x20x32xf32, #tpu.memory_space<vmem>>, vector<16x16x32xf32>
    %c0_64 = arith.constant 0 : index
    %c0_65 = arith.constant 0 : index
    %c0_66 = arith.constant 0 : index
    %82 = vector.load %arg6[%c0_64, %c0_65, %c0_66] : memref<5x5x32xf32, #tpu.memory_space<vmem>>, vector<1x1x32xf32>
    %83 = vector.shape_cast %82 : vector<1x1x32xf32> to vector<32xf32>
    %84 = vector.shape_cast %83 : vector<32xf32> to vector<1x1x32xf32>
    %85 = vector.broadcast %84 : vector<1x1x32xf32> to vector<16x16x32xf32>
    %86 = arith.mulf %81, %85 : vector<16x16x32xf32>
    %cst_67 = arith.constant dense<0.000000e+00> : vector<16x16xf32>
    %87 = vector.multi_reduction <add>, %86, %cst_67 [2] : vector<16x16x32xf32> to vector<16x16xf32>
    %88 = arith.addf %80, %87 : vector<16x16xf32>
    %c0_68 = arith.constant 0 : index
    %c1 = arith.constant 1 : index
    %c0_69 = arith.constant 0 : index
    %89 = vector.load %arg9[%c0_68, %c1, %c0_69] : memref<20x20x32xf32, #tpu.memory_space<vmem>>, vector<16x16x32xf32>
    %c0_70 = arith.constant 0 : index
    %c1_71 = arith.constant 1 : index
    %c0_72 = arith.constant 0 : index
    %90 = vector.load %arg6[%c0_70, %c1_71, %c0_72] : memref<5x5x32xf32, #tpu.memory_space<vmem>>, vector<1x1x32xf32>
    %91 = vector.shape_cast %90 : vector<1x1x32xf32> to vector<32xf32>
    %92 = vector.shape_cast %91 : vector<32xf32> to vector<1x1x32xf32>
    %93 = vector.broadcast %92 : vector<1x1x32xf32> to vector<16x16x32xf32>
    %94 = arith.mulf %89, %93 : vector<16x16x32xf32>
    %cst_73 = arith.constant dense<0.000000e+00> : vector<16x16xf32>
    %95 = vector.multi_reduction <add>, %94, %cst_73 [2] : vector<16x16x32xf32> to vector<16x16xf32>
    %96 = arith.addf %88, %95 : vector<16x16xf32>
    %c0_74 = arith.constant 0 : index
    %c2 = arith.constant 2 : index
    %c0_75 = arith.constant 0 : index
    %97 = vector.load %arg9[%c0_74, %c2, %c0_75] : memref<20x20x32xf32, #tpu.memory_space<vmem>>, vector<16x16x32xf32>
    %c0_76 = arith.constant 0 : index
    %c2_77 = arith.constant 2 : index
    %c0_78 = arith.constant 0 : index
    %98 = vector.load %arg6[%c0_76, %c2_77, %c0_78] : memref<5x5x32xf32, #tpu.memory_space<vmem>>, vector<1x1x32xf32>
    %99 = vector.shape_cast %98 : vector<1x1x32xf32> to vector<32xf32>
    %100 = vector.shape_cast %99 : vector<32xf32> to vector<1x1x32xf32>
    %101 = vector.broadcast %100 : vector<1x1x32xf32> to vector<16x16x32xf32>
    %102 = arith.mulf %97, %101 : vector<16x16x32xf32>
    %cst_79 = arith.constant dense<0.000000e+00> : vector<16x16xf32>
    %103 = vector.multi_reduction <add>, %102, %cst_79 [2] : vector<16x16x32xf32> to vector<16x16xf32>
    %104 = arith.addf %96, %103 : vector<16x16xf32>
    %c0_80 = arith.constant 0 : index
    %c3 = arith.constant 3 : index
    %c0_81 = arith.constant 0 : index
    %105 = vector.load %arg9[%c0_80, %c3, %c0_81] : memref<20x20x32xf32, #tpu.memory_space<vmem>>, vector<16x16x32xf32>
    %c0_82 = arith.constant 0 : index
    %c3_83 = arith.constant 3 : index
    %c0_84 = arith.constant 0 : index
    %106 = vector.load %arg6[%c0_82, %c3_83, %c0_84] : memref<5x5x32xf32, #tpu.memory_space<vmem>>, vector<1x1x32xf32>
    %107 = vector.shape_cast %106 : vector<1x1x32xf32> to vector<32xf32>
    %108 = vector.shape_cast %107 : vector<32xf32> to vector<1x1x32xf32>
    %109 = vector.broadcast %108 : vector<1x1x32xf32> to vector<16x16x32xf32>
    %110 = arith.mulf %105, %109 : vector<16x16x32xf32>
    %cst_85 = arith.constant dense<0.000000e+00> : vector<16x16xf32>
    %111 = vector.multi_reduction <add>, %110, %cst_85 [2] : vector<16x16x32xf32> to vector<16x16xf32>
    %112 = arith.addf %104, %111 : vector<16x16xf32>
    %c0_86 = arith.constant 0 : index
    %c4_87 = arith.constant 4 : index
    %c0_88 = arith.constant 0 : index
    %113 = vector.load %arg9[%c0_86, %c4_87, %c0_88] : memref<20x20x32xf32, #tpu.memory_space<vmem>>, vector<16x16x32xf32>
    %c0_89 = arith.constant 0 : index
    %c4_90 = arith.constant 4 : index
    %c0_91 = arith.constant 0 : index
    %114 = vector.load %arg6[%c0_89, %c4_90, %c0_91] : memref<5x5x32xf32, #tpu.memory_space<vmem>>, vector<1x1x32xf32>
    %115 = vector.shape_cast %114 : vector<1x1x32xf32> to vector<32xf32>
    %116 = vector.shape_cast %115 : vector<32xf32> to vector<1x1x32xf32>
    %117 = vector.broadcast %116 : vector<1x1x32xf32> to vector<16x16x32xf32>
    %118 = arith.mulf %113, %117 : vector<16x16x32xf32>
    %cst_92 = arith.constant dense<0.000000e+00> : vector<16x16xf32>
    %119 = vector.multi_reduction <add>, %118, %cst_92 [2] : vector<16x16x32xf32> to vector<16x16xf32>
    %120 = arith.addf %112, %119 : vector<16x16xf32>
    %c1_93 = arith.constant 1 : index
    %c0_94 = arith.constant 0 : index
    %c0_95 = arith.constant 0 : index
    %121 = vector.load %arg9[%c1_93, %c0_94, %c0_95] : memref<20x20x32xf32, #tpu.memory_space<vmem>>, vector<16x16x32xf32>
    %c1_96 = arith.constant 1 : index
    %c0_97 = arith.constant 0 : index
    %c0_98 = arith.constant 0 : index
    %122 = vector.load %arg6[%c1_96, %c0_97, %c0_98] : memref<5x5x32xf32, #tpu.memory_space<vmem>>, vector<1x1x32xf32>
    %123 = vector.shape_cast %122 : vector<1x1x32xf32> to vector<32xf32>
    %124 = vector.shape_cast %123 : vector<32xf32> to vector<1x1x32xf32>
    %125 = vector.broadcast %124 : vector<1x1x32xf32> to vector<16x16x32xf32>
    %126 = arith.mulf %121, %125 : vector<16x16x32xf32>
    %cst_99 = arith.constant dense<0.000000e+00> : vector<16x16xf32>
    %127 = vector.multi_reduction <add>, %126, %cst_99 [2] : vector<16x16x32xf32> to vector<16x16xf32>
    %128 = arith.addf %120, %127 : vector<16x16xf32>
    %c1_100 = arith.constant 1 : index
    %c1_101 = arith.constant 1 : index
    %c0_102 = arith.constant 0 : index
    %129 = vector.load %arg9[%c1_100, %c1_101, %c0_102] : memref<20x20x32xf32, #tpu.memory_space<vmem>>, vector<16x16x32xf32>
    %c1_103 = arith.constant 1 : index
    %c1_104 = arith.constant 1 : index
    %c0_105 = arith.constant 0 : index
    %130 = vector.load %arg6[%c1_103, %c1_104, %c0_105] : memref<5x5x32xf32, #tpu.memory_space<vmem>>, vector<1x1x32xf32>
    %131 = vector.shape_cast %130 : vector<1x1x32xf32> to vector<32xf32>
    %132 = vector.shape_cast %131 : vector<32xf32> to vector<1x1x32xf32>
    %133 = vector.broadcast %132 : vector<1x1x32xf32> to vector<16x16x32xf32>
    %134 = arith.mulf %129, %133 : vector<16x16x32xf32>
    %cst_106 = arith.constant dense<0.000000e+00> : vector<16x16xf32>
    %135 = vector.multi_reduction <add>, %134, %cst_106 [2] : vector<16x16x32xf32> to vector<16x16xf32>
    %136 = arith.addf %128, %135 : vector<16x16xf32>
    %c1_107 = arith.constant 1 : index
    %c2_108 = arith.constant 2 : index
    %c0_109 = arith.constant 0 : index
    %137 = vector.load %arg9[%c1_107, %c2_108, %c0_109] : memref<20x20x32xf32, #tpu.memory_space<vmem>>, vector<16x16x32xf32>
    %c1_110 = arith.constant 1 : index
    %c2_111 = arith.constant 2 : index
    %c0_112 = arith.constant 0 : index
    %138 = vector.load %arg6[%c1_110, %c2_111, %c0_112] : memref<5x5x32xf32, #tpu.memory_space<vmem>>, vector<1x1x32xf32>
    %139 = vector.shape_cast %138 : vector<1x1x32xf32> to vector<32xf32>
    %140 = vector.shape_cast %139 : vector<32xf32> to vector<1x1x32xf32>
    %141 = vector.broadcast %140 : vector<1x1x32xf32> to vector<16x16x32xf32>
    %142 = arith.mulf %137, %141 : vector<16x16x32xf32>
    %cst_113 = arith.constant dense<0.000000e+00> : vector<16x16xf32>
    %143 = vector.multi_reduction <add>, %142, %cst_113 [2] : vector<16x16x32xf32> to vector<16x16xf32>
    %144 = arith.addf %136, %143 : vector<16x16xf32>
    %c1_114 = arith.constant 1 : index
    %c3_115 = arith.constant 3 : index
    %c0_116 = arith.constant 0 : index
    %145 = vector.load %arg9[%c1_114, %c3_115, %c0_116] : memref<20x20x32xf32, #tpu.memory_space<vmem>>, vector<16x16x32xf32>
    %c1_117 = arith.constant 1 : index
    %c3_118 = arith.constant 3 : index
    %c0_119 = arith.constant 0 : index
    %146 = vector.load %arg6[%c1_117, %c3_118, %c0_119] : memref<5x5x32xf32, #tpu.memory_space<vmem>>, vector<1x1x32xf32>
    %147 = vector.shape_cast %146 : vector<1x1x32xf32> to vector<32xf32>
    %148 = vector.shape_cast %147 : vector<32xf32> to vector<1x1x32xf32>
    %149 = vector.broadcast %148 : vector<1x1x32xf32> to vector<16x16x32xf32>
    %150 = arith.mulf %145, %149 : vector<16x16x32xf32>
    %cst_120 = arith.constant dense<0.000000e+00> : vector<16x16xf32>
    %151 = vector.multi_reduction <add>, %150, %cst_120 [2] : vector<16x16x32xf32> to vector<16x16xf32>
    %152 = arith.addf %144, %151 : vector<16x16xf32>
    %c1_121 = arith.constant 1 : index
    %c4_122 = arith.constant 4 : index
    %c0_123 = arith.constant 0 : index
    %153 = vector.load %arg9[%c1_121, %c4_122, %c0_123] : memref<20x20x32xf32, #tpu.memory_space<vmem>>, vector<16x16x32xf32>
    %c1_124 = arith.constant 1 : index
    %c4_125 = arith.constant 4 : index
    %c0_126 = arith.constant 0 : index
    %154 = vector.load %arg6[%c1_124, %c4_125, %c0_126] : memref<5x5x32xf32, #tpu.memory_space<vmem>>, vector<1x1x32xf32>
    %155 = vector.shape_cast %154 : vector<1x1x32xf32> to vector<32xf32>
    %156 = vector.shape_cast %155 : vector<32xf32> to vector<1x1x32xf32>
    %157 = vector.broadcast %156 : vector<1x1x32xf32> to vector<16x16x32xf32>
    %158 = arith.mulf %153, %157 : vector<16x16x32xf32>
    %cst_127 = arith.constant dense<0.000000e+00> : vector<16x16xf32>
    %159 = vector.multi_reduction <add>, %158, %cst_127 [2] : vector<16x16x32xf32> to vector<16x16xf32>
    %160 = arith.addf %152, %159 : vector<16x16xf32>
    %c2_128 = arith.constant 2 : index
    %c0_129 = arith.constant 0 : index
    %c0_130 = arith.constant 0 : index
    %161 = vector.load %arg9[%c2_128, %c0_129, %c0_130] : memref<20x20x32xf32, #tpu.memory_space<vmem>>, vector<16x16x32xf32>
    %c2_131 = arith.constant 2 : index
    %c0_132 = arith.constant 0 : index
    %c0_133 = arith.constant 0 : index
    %162 = vector.load %arg6[%c2_131, %c0_132, %c0_133] : memref<5x5x32xf32, #tpu.memory_space<vmem>>, vector<1x1x32xf32>
    %163 = vector.shape_cast %162 : vector<1x1x32xf32> to vector<32xf32>
    %164 = vector.shape_cast %163 : vector<32xf32> to vector<1x1x32xf32>
    %165 = vector.broadcast %164 : vector<1x1x32xf32> to vector<16x16x32xf32>
    %166 = arith.mulf %161, %165 : vector<16x16x32xf32>
    %cst_134 = arith.constant dense<0.000000e+00> : vector<16x16xf32>
    %167 = vector.multi_reduction <add>, %166, %cst_134 [2] : vector<16x16x32xf32> to vector<16x16xf32>
    %168 = arith.addf %160, %167 : vector<16x16xf32>
    %c2_135 = arith.constant 2 : index
    %c1_136 = arith.constant 1 : index
    %c0_137 = arith.constant 0 : index
    %169 = vector.load %arg9[%c2_135, %c1_136, %c0_137] : memref<20x20x32xf32, #tpu.memory_space<vmem>>, vector<16x16x32xf32>
    %c2_138 = arith.constant 2 : index
    %c1_139 = arith.constant 1 : index
    %c0_140 = arith.constant 0 : index
    %170 = vector.load %arg6[%c2_138, %c1_139, %c0_140] : memref<5x5x32xf32, #tpu.memory_space<vmem>>, vector<1x1x32xf32>
    %171 = vector.shape_cast %170 : vector<1x1x32xf32> to vector<32xf32>
    %172 = vector.shape_cast %171 : vector<32xf32> to vector<1x1x32xf32>
    %173 = vector.broadcast %172 : vector<1x1x32xf32> to vector<16x16x32xf32>
    %174 = arith.mulf %169, %173 : vector<16x16x32xf32>
    %cst_141 = arith.constant dense<0.000000e+00> : vector<16x16xf32>
    %175 = vector.multi_reduction <add>, %174, %cst_141 [2] : vector<16x16x32xf32> to vector<16x16xf32>
    %176 = arith.addf %168, %175 : vector<16x16xf32>
    %c2_142 = arith.constant 2 : index
    %c2_143 = arith.constant 2 : index
    %c0_144 = arith.constant 0 : index
    %177 = vector.load %arg9[%c2_142, %c2_143, %c0_144] : memref<20x20x32xf32, #tpu.memory_space<vmem>>, vector<16x16x32xf32>
    %c2_145 = arith.constant 2 : index
    %c2_146 = arith.constant 2 : index
    %c0_147 = arith.constant 0 : index
    %178 = vector.load %arg6[%c2_145, %c2_146, %c0_147] : memref<5x5x32xf32, #tpu.memory_space<vmem>>, vector<1x1x32xf32>
    %179 = vector.shape_cast %178 : vector<1x1x32xf32> to vector<32xf32>
    %180 = vector.shape_cast %179 : vector<32xf32> to vector<1x1x32xf32>
    %181 = vector.broadcast %180 : vector<1x1x32xf32> to vector<16x16x32xf32>
    %182 = arith.mulf %177, %181 : vector<16x16x32xf32>
    %cst_148 = arith.constant dense<0.000000e+00> : vector<16x16xf32>
    %183 = vector.multi_reduction <add>, %182, %cst_148 [2] : vector<16x16x32xf32> to vector<16x16xf32>
    %184 = arith.addf %176, %183 : vector<16x16xf32>
    %c2_149 = arith.constant 2 : index
    %c3_150 = arith.constant 3 : index
    %c0_151 = arith.constant 0 : index
    %185 = vector.load %arg9[%c2_149, %c3_150, %c0_151] : memref<20x20x32xf32, #tpu.memory_space<vmem>>, vector<16x16x32xf32>
    %c2_152 = arith.constant 2 : index
    %c3_153 = arith.constant 3 : index
    %c0_154 = arith.constant 0 : index
    %186 = vector.load %arg6[%c2_152, %c3_153, %c0_154] : memref<5x5x32xf32, #tpu.memory_space<vmem>>, vector<1x1x32xf32>
    %187 = vector.shape_cast %186 : vector<1x1x32xf32> to vector<32xf32>
    %188 = vector.shape_cast %187 : vector<32xf32> to vector<1x1x32xf32>
    %189 = vector.broadcast %188 : vector<1x1x32xf32> to vector<16x16x32xf32>
    %190 = arith.mulf %185, %189 : vector<16x16x32xf32>
    %cst_155 = arith.constant dense<0.000000e+00> : vector<16x16xf32>
    %191 = vector.multi_reduction <add>, %190, %cst_155 [2] : vector<16x16x32xf32> to vector<16x16xf32>
    %192 = arith.addf %184, %191 : vector<16x16xf32>
    %c2_156 = arith.constant 2 : index
    %c4_157 = arith.constant 4 : index
    %c0_158 = arith.constant 0 : index
    %193 = vector.load %arg9[%c2_156, %c4_157, %c0_158] : memref<20x20x32xf32, #tpu.memory_space<vmem>>, vector<16x16x32xf32>
    %c2_159 = arith.constant 2 : index
    %c4_160 = arith.constant 4 : index
    %c0_161 = arith.constant 0 : index
    %194 = vector.load %arg6[%c2_159, %c4_160, %c0_161] : memref<5x5x32xf32, #tpu.memory_space<vmem>>, vector<1x1x32xf32>
    %195 = vector.shape_cast %194 : vector<1x1x32xf32> to vector<32xf32>
    %196 = vector.shape_cast %195 : vector<32xf32> to vector<1x1x32xf32>
    %197 = vector.broadcast %196 : vector<1x1x32xf32> to vector<16x16x32xf32>
    %198 = arith.mulf %193, %197 : vector<16x16x32xf32>
    %cst_162 = arith.constant dense<0.000000e+00> : vector<16x16xf32>
    %199 = vector.multi_reduction <add>, %198, %cst_162 [2] : vector<16x16x32xf32> to vector<16x16xf32>
    %200 = arith.addf %192, %199 : vector<16x16xf32>
    %c3_163 = arith.constant 3 : index
    %c0_164 = arith.constant 0 : index
    %c0_165 = arith.constant 0 : index
    %201 = vector.load %arg9[%c3_163, %c0_164, %c0_165] : memref<20x20x32xf32, #tpu.memory_space<vmem>>, vector<16x16x32xf32>
    %c3_166 = arith.constant 3 : index
    %c0_167 = arith.constant 0 : index
    %c0_168 = arith.constant 0 : index
    %202 = vector.load %arg6[%c3_166, %c0_167, %c0_168] : memref<5x5x32xf32, #tpu.memory_space<vmem>>, vector<1x1x32xf32>
    %203 = vector.shape_cast %202 : vector<1x1x32xf32> to vector<32xf32>
    %204 = vector.shape_cast %203 : vector<32xf32> to vector<1x1x32xf32>
    %205 = vector.broadcast %204 : vector<1x1x32xf32> to vector<16x16x32xf32>
    %206 = arith.mulf %201, %205 : vector<16x16x32xf32>
    %cst_169 = arith.constant dense<0.000000e+00> : vector<16x16xf32>
    %207 = vector.multi_reduction <add>, %206, %cst_169 [2] : vector<16x16x32xf32> to vector<16x16xf32>
    %208 = arith.addf %200, %207 : vector<16x16xf32>
    %c3_170 = arith.constant 3 : index
    %c1_171 = arith.constant 1 : index
    %c0_172 = arith.constant 0 : index
    %209 = vector.load %arg9[%c3_170, %c1_171, %c0_172] : memref<20x20x32xf32, #tpu.memory_space<vmem>>, vector<16x16x32xf32>
    %c3_173 = arith.constant 3 : index
    %c1_174 = arith.constant 1 : index
    %c0_175 = arith.constant 0 : index
    %210 = vector.load %arg6[%c3_173, %c1_174, %c0_175] : memref<5x5x32xf32, #tpu.memory_space<vmem>>, vector<1x1x32xf32>
    %211 = vector.shape_cast %210 : vector<1x1x32xf32> to vector<32xf32>
    %212 = vector.shape_cast %211 : vector<32xf32> to vector<1x1x32xf32>
    %213 = vector.broadcast %212 : vector<1x1x32xf32> to vector<16x16x32xf32>
    %214 = arith.mulf %209, %213 : vector<16x16x32xf32>
    %cst_176 = arith.constant dense<0.000000e+00> : vector<16x16xf32>
    %215 = vector.multi_reduction <add>, %214, %cst_176 [2] : vector<16x16x32xf32> to vector<16x16xf32>
    %216 = arith.addf %208, %215 : vector<16x16xf32>
    %c3_177 = arith.constant 3 : index
    %c2_178 = arith.constant 2 : index
    %c0_179 = arith.constant 0 : index
    %217 = vector.load %arg9[%c3_177, %c2_178, %c0_179] : memref<20x20x32xf32, #tpu.memory_space<vmem>>, vector<16x16x32xf32>
    %c3_180 = arith.constant 3 : index
    %c2_181 = arith.constant 2 : index
    %c0_182 = arith.constant 0 : index
    %218 = vector.load %arg6[%c3_180, %c2_181, %c0_182] : memref<5x5x32xf32, #tpu.memory_space<vmem>>, vector<1x1x32xf32>
    %219 = vector.shape_cast %218 : vector<1x1x32xf32> to vector<32xf32>
    %220 = vector.shape_cast %219 : vector<32xf32> to vector<1x1x32xf32>
    %221 = vector.broadcast %220 : vector<1x1x32xf32> to vector<16x16x32xf32>
    %222 = arith.mulf %217, %221 : vector<16x16x32xf32>
    %cst_183 = arith.constant dense<0.000000e+00> : vector<16x16xf32>
    %223 = vector.multi_reduction <add>, %222, %cst_183 [2] : vector<16x16x32xf32> to vector<16x16xf32>
    %224 = arith.addf %216, %223 : vector<16x16xf32>
    %c3_184 = arith.constant 3 : index
    %c3_185 = arith.constant 3 : index
    %c0_186 = arith.constant 0 : index
    %225 = vector.load %arg9[%c3_184, %c3_185, %c0_186] : memref<20x20x32xf32, #tpu.memory_space<vmem>>, vector<16x16x32xf32>
    %c3_187 = arith.constant 3 : index
    %c3_188 = arith.constant 3 : index
    %c0_189 = arith.constant 0 : index
    %226 = vector.load %arg6[%c3_187, %c3_188, %c0_189] : memref<5x5x32xf32, #tpu.memory_space<vmem>>, vector<1x1x32xf32>
    %227 = vector.shape_cast %226 : vector<1x1x32xf32> to vector<32xf32>
    %228 = vector.shape_cast %227 : vector<32xf32> to vector<1x1x32xf32>
    %229 = vector.broadcast %228 : vector<1x1x32xf32> to vector<16x16x32xf32>
    %230 = arith.mulf %225, %229 : vector<16x16x32xf32>
    %cst_190 = arith.constant dense<0.000000e+00> : vector<16x16xf32>
    %231 = vector.multi_reduction <add>, %230, %cst_190 [2] : vector<16x16x32xf32> to vector<16x16xf32>
    %232 = arith.addf %224, %231 : vector<16x16xf32>
    %c3_191 = arith.constant 3 : index
    %c4_192 = arith.constant 4 : index
    %c0_193 = arith.constant 0 : index
    %233 = vector.load %arg9[%c3_191, %c4_192, %c0_193] : memref<20x20x32xf32, #tpu.memory_space<vmem>>, vector<16x16x32xf32>
    %c3_194 = arith.constant 3 : index
    %c4_195 = arith.constant 4 : index
    %c0_196 = arith.constant 0 : index
    %234 = vector.load %arg6[%c3_194, %c4_195, %c0_196] : memref<5x5x32xf32, #tpu.memory_space<vmem>>, vector<1x1x32xf32>
    %235 = vector.shape_cast %234 : vector<1x1x32xf32> to vector<32xf32>
    %236 = vector.shape_cast %235 : vector<32xf32> to vector<1x1x32xf32>
    %237 = vector.broadcast %236 : vector<1x1x32xf32> to vector<16x16x32xf32>
    %238 = arith.mulf %233, %237 : vector<16x16x32xf32>
    %cst_197 = arith.constant dense<0.000000e+00> : vector<16x16xf32>
    %239 = vector.multi_reduction <add>, %238, %cst_197 [2] : vector<16x16x32xf32> to vector<16x16xf32>
    %240 = arith.addf %232, %239 : vector<16x16xf32>
    %c4_198 = arith.constant 4 : index
    %c0_199 = arith.constant 0 : index
    %c0_200 = arith.constant 0 : index
    %241 = vector.load %arg9[%c4_198, %c0_199, %c0_200] : memref<20x20x32xf32, #tpu.memory_space<vmem>>, vector<16x16x32xf32>
    %c4_201 = arith.constant 4 : index
    %c0_202 = arith.constant 0 : index
    %c0_203 = arith.constant 0 : index
    %242 = vector.load %arg6[%c4_201, %c0_202, %c0_203] : memref<5x5x32xf32, #tpu.memory_space<vmem>>, vector<1x1x32xf32>
    %243 = vector.shape_cast %242 : vector<1x1x32xf32> to vector<32xf32>
    %244 = vector.shape_cast %243 : vector<32xf32> to vector<1x1x32xf32>
    %245 = vector.broadcast %244 : vector<1x1x32xf32> to vector<16x16x32xf32>
    %246 = arith.mulf %241, %245 : vector<16x16x32xf32>
    %cst_204 = arith.constant dense<0.000000e+00> : vector<16x16xf32>
    %247 = vector.multi_reduction <add>, %246, %cst_204 [2] : vector<16x16x32xf32> to vector<16x16xf32>
    %248 = arith.addf %240, %247 : vector<16x16xf32>
    %c4_205 = arith.constant 4 : index
    %c1_206 = arith.constant 1 : index
    %c0_207 = arith.constant 0 : index
    %249 = vector.load %arg9[%c4_205, %c1_206, %c0_207] : memref<20x20x32xf32, #tpu.memory_space<vmem>>, vector<16x16x32xf32>
    %c4_208 = arith.constant 4 : index
    %c1_209 = arith.constant 1 : index
    %c0_210 = arith.constant 0 : index
    %250 = vector.load %arg6[%c4_208, %c1_209, %c0_210] : memref<5x5x32xf32, #tpu.memory_space<vmem>>, vector<1x1x32xf32>
    %251 = vector.shape_cast %250 : vector<1x1x32xf32> to vector<32xf32>
    %252 = vector.shape_cast %251 : vector<32xf32> to vector<1x1x32xf32>
    %253 = vector.broadcast %252 : vector<1x1x32xf32> to vector<16x16x32xf32>
    %254 = arith.mulf %249, %253 : vector<16x16x32xf32>
    %cst_211 = arith.constant dense<0.000000e+00> : vector<16x16xf32>
    %255 = vector.multi_reduction <add>, %254, %cst_211 [2] : vector<16x16x32xf32> to vector<16x16xf32>
    %256 = arith.addf %248, %255 : vector<16x16xf32>
    %c4_212 = arith.constant 4 : index
    %c2_213 = arith.constant 2 : index
    %c0_214 = arith.constant 0 : index
    %257 = vector.load %arg9[%c4_212, %c2_213, %c0_214] : memref<20x20x32xf32, #tpu.memory_space<vmem>>, vector<16x16x32xf32>
    %c4_215 = arith.constant 4 : index
    %c2_216 = arith.constant 2 : index
    %c0_217 = arith.constant 0 : index
    %258 = vector.load %arg6[%c4_215, %c2_216, %c0_217] : memref<5x5x32xf32, #tpu.memory_space<vmem>>, vector<1x1x32xf32>
    %259 = vector.shape_cast %258 : vector<1x1x32xf32> to vector<32xf32>
    %260 = vector.shape_cast %259 : vector<32xf32> to vector<1x1x32xf32>
    %261 = vector.broadcast %260 : vector<1x1x32xf32> to vector<16x16x32xf32>
    %262 = arith.mulf %257, %261 : vector<16x16x32xf32>
    %cst_218 = arith.constant dense<0.000000e+00> : vector<16x16xf32>
    %263 = vector.multi_reduction <add>, %262, %cst_218 [2] : vector<16x16x32xf32> to vector<16x16xf32>
    %264 = arith.addf %256, %263 : vector<16x16xf32>
    %c4_219 = arith.constant 4 : index
    %c3_220 = arith.constant 3 : index
    %c0_221 = arith.constant 0 : index
    %265 = vector.load %arg9[%c4_219, %c3_220, %c0_221] : memref<20x20x32xf32, #tpu.memory_space<vmem>>, vector<16x16x32xf32>
    %c4_222 = arith.constant 4 : index
    %c3_223 = arith.constant 3 : index
    %c0_224 = arith.constant 0 : index
    %266 = vector.load %arg6[%c4_222, %c3_223, %c0_224] : memref<5x5x32xf32, #tpu.memory_space<vmem>>, vector<1x1x32xf32>
    %267 = vector.shape_cast %266 : vector<1x1x32xf32> to vector<32xf32>
    %268 = vector.shape_cast %267 : vector<32xf32> to vector<1x1x32xf32>
    %269 = vector.broadcast %268 : vector<1x1x32xf32> to vector<16x16x32xf32>
    %270 = arith.mulf %265, %269 : vector<16x16x32xf32>
    %cst_225 = arith.constant dense<0.000000e+00> : vector<16x16xf32>
    %271 = vector.multi_reduction <add>, %270, %cst_225 [2] : vector<16x16x32xf32> to vector<16x16xf32>
    %272 = arith.addf %264, %271 : vector<16x16xf32>
    %c4_226 = arith.constant 4 : index
    %c4_227 = arith.constant 4 : index
    %c0_228 = arith.constant 0 : index
    %273 = vector.load %arg9[%c4_226, %c4_227, %c0_228] : memref<20x20x32xf32, #tpu.memory_space<vmem>>, vector<16x16x32xf32>
    %c4_229 = arith.constant 4 : index
    %c4_230 = arith.constant 4 : index
    %c0_231 = arith.constant 0 : index
    %274 = vector.load %arg6[%c4_229, %c4_230, %c0_231] : memref<5x5x32xf32, #tpu.memory_space<vmem>>, vector<1x1x32xf32>
    %275 = vector.shape_cast %274 : vector<1x1x32xf32> to vector<32xf32>
    %276 = vector.shape_cast %275 : vector<32xf32> to vector<1x1x32xf32>
    %277 = vector.broadcast %276 : vector<1x1x32xf32> to vector<16x16x32xf32>
    %278 = arith.mulf %273, %277 : vector<16x16x32xf32>
    %cst_232 = arith.constant dense<0.000000e+00> : vector<16x16xf32>
    %279 = vector.multi_reduction <add>, %278, %cst_232 [2] : vector<16x16x32xf32> to vector<16x16xf32>
    %280 = arith.addf %272, %279 : vector<16x16xf32>
    %c0_233 = arith.constant 0 : index
    %c0_234 = arith.constant 0 : index
    %281 = vector.load %arg7[%c0_233, %c0_234] : memref<1x1xf32, #tpu.memory_space<vmem>>, vector<1x1xf32>
    %282 = vector.broadcast %281 : vector<1x1xf32> to vector<16x16xf32>
    %283 = arith.addf %280, %282 : vector<16x16xf32>
    %c0_235 = arith.constant 0 : index
    %c0_236 = arith.constant 0 : index
    %c0_237 = arith.constant 0 : index
    %284 = vector.load %arg8[%c0_235, %c0_236, %c0_237] : memref<1x16x16xf32, #tpu.memory_space<vmem>>, vector<1x16x16xf32>
    %285 = vector.shape_cast %284 : vector<1x16x16xf32> to vector<16x16xf32>
    %286 = vector.shape_cast %283 : vector<16x16xf32> to vector<1x16x16xf32>
    tpu.vector_store %arg8[%c0_235, %c0_236, %c0_237], %286 {strides = array<i32>} : memref<1x16x16xf32, #tpu.memory_space<vmem>>, vector<1x16x16xf32>,
    return
  }
  func.func @transform_0(%arg0: i32) -> (i32, i32, i32) {
    %c0_i32 = arith.constant 0 : i32
    %c0_i32_0 = arith.constant 0 : i32
    %c0_i32_1 = arith.constant 0 : i32
    return %arg0, %c0_i32, %c0_i32_0 : i32, i32, i32
  }
  func.func @transform_1(%arg0: i32) -> (i32, i32) {
    %c0_i32 = arith.constant 0 : i32
    %c0_i32_0 = arith.constant 0 : i32
    %c0_i32_1 = arith.constant 0 : i32
    return %c0_i32, %c0_i32_0 : i32, i32
  }
  func.func @transform_2(%arg0: i32) -> (i32, i32) {
    %c0_i32 = arith.constant 0 : i32
    %c0_i32_0 = arith.constant 0 : i32
    %c0_i32_1 = arith.constant 0 : i32
    return %c0_i32, %c0_i32_0 : i32, i32
  }
  func.func @transform_3(%arg0: i32) -> (i32, i32) {
    %c0_i32 = arith.constant 0 : i32
    %c0_i32_0 = arith.constant 0 : i32
    %c0_i32_1 = arith.constant 0 : i32
    return %c0_i32, %c0_i32_0 : i32, i32
  }
  func.func @transform_4(%arg0: i32) -> (i32, i32) {
    %c0_i32 = arith.constant 0 : i32
    %c0_i32_0 = arith.constant 0 : i32
    %c0_i32_1 = arith.constant 0 : i32
    return %c0_i32, %c0_i32_0 : i32, i32
  }
  func.func @transform_5(%arg0: i32) -> (i32, i32, i32) {
    %c0_i32 = arith.constant 0 : i32
    %c0_i32_0 = arith.constant 0 : i32
    %c0_i32_1 = arith.constant 0 : i32
    %c0_i32_2 = arith.constant 0 : i32
    return %c0_i32, %c0_i32_0, %c0_i32_1 : i32, i32, i32
  }
  func.func @transform_6(%arg0: i32) -> (i32, i32) {
    %c0_i32 = arith.constant 0 : i32
    %c0_i32_0 = arith.constant 0 : i32
    %c0_i32_1 = arith.constant 0 : i32
    return %c0_i32, %c0_i32_0 : i32, i32
  }
  func.func @transform_7(%arg0: i32) -> (i32, i32, i32) {
    %c0_i32 = arith.constant 0 : i32
    %c0_i32_0 = arith.constant 0 : i32
    %c0_i32_1 = arith.constant 0 : i32
    return %arg0, %c0_i32, %c0_i32_0 : i32, i32, i32
  }
}

module attributes {stable_mosaic.version = 11 : i64} {
  func.func @_linear_kernel(%arg0: i32, %arg1: i32, %arg2: memref<2x256xf32, #tpu.memory_space<vmem>>, %arg3: memref<256x128xf32, #tpu.memory_space<vmem>>, %arg4: memref<1x128xf32, #tpu.memory_space<vmem>>, %arg5: memref<2x128xf32, #tpu.memory_space<vmem>>, %arg6: memref<2x128xf32, #tpu.memory_space<vmem>>) attributes {dimension_semantics = [#tpu.dimension_semantics<parallel>, #tpu.dimension_semantics<arbitrary>], iteration_bounds = array<i64: 1, 1>, scalar_prefetch = 0 : i64, scratch_operands = 1 : i64, tpu.core_type = #tpu.core_type<tc>, window_params = [{transform_indices = @transform_0, window_bounds = array<i64: 2, 256>}, {transform_indices = @transform_1, window_bounds = array<i64: 256, 128>}, {transform_indices = @transform_2, window_bounds = array<i64: 1, 128>}, {transform_indices = @transform_3, window_bounds = array<i64: 2, 128>}]} {
    %c0_i32 = arith.constant 0 : i32
    %0 = arith.cmpi eq, %arg1, %c0_i32 : i32
    %1 = arith.extui %0 : i1 to i32
    %c0_i32_0 = arith.constant 0 : i32
    %2 = arith.cmpi ne, %1, %c0_i32_0 : i32
    scf.if %2 {
      %cst_10 = arith.constant 0.000000e+00 : f32
      %12 = vector.broadcast %cst_10 : f32 to vector<2x128xf32>
      %c0_11 = arith.constant 0 : index
      %c0_12 = arith.constant 0 : index
      %13 = vector.load %arg6[%c0_11, %c0_12] : memref<2x128xf32, #tpu.memory_space<vmem>>, vector<2x128xf32>
      tpu.vector_store %arg6[%c0_11, %c0_12], %12 {strides = array<i32>} : memref<2x128xf32, #tpu.memory_space<vmem>>, vector<2x128xf32>,
    } else {
    }
    %c0 = arith.constant 0 : index
    %c0_1 = arith.constant 0 : index
    %3 = vector.load %arg6[%c0, %c0_1] : memref<2x128xf32, #tpu.memory_space<vmem>>, vector<2x128xf32>
    %c0_2 = arith.constant 0 : index
    %c0_3 = arith.constant 0 : index
    %4 = vector.load %arg2[%c0_2, %c0_3] : memref<2x256xf32, #tpu.memory_space<vmem>>, vector<2x256xf32>
    %c0_4 = arith.constant 0 : index
    %c0_5 = arith.constant 0 : index
    %5 = vector.load %arg3[%c0_4, %c0_5] : memref<256x128xf32, #tpu.memory_space<vmem>>, vector<256x128xf32>
    %cst = arith.constant dense<0.000000e+00> : vector<2x128xf32>
    %6 = tpu.matmul %4, %5, %cst {dimension_numbers = #tpu.dot_dimension_numbers<[1], [0], [0], [1], [0, 0, 1, 1], [], []>} : vector<2x256xf32>, vector<256x128xf32>, vector<2x128xf32> -> vector<2x128xf32>
    %7 = arith.addf %3, %6 : vector<2x128xf32>
    %c0_6 = arith.constant 0 : index
    %c0_7 = arith.constant 0 : index
    %8 = vector.load %arg6[%c0_6, %c0_7] : memref<2x128xf32, #tpu.memory_space<vmem>>, vector<2x128xf32>
    tpu.vector_store %arg6[%c0_6, %c0_7], %7 {strides = array<i32>} : memref<2x128xf32, #tpu.memory_space<vmem>>, vector<2x128xf32>,
    %c0_i32_8 = arith.constant 0 : i32
    %9 = arith.cmpi eq, %arg1, %c0_i32_8 : i32
    %10 = arith.extui %9 : i1 to i32
    %c0_i32_9 = arith.constant 0 : i32
    %11 = arith.cmpi ne, %10, %c0_i32_9 : i32
    scf.if %11 {
      %c0_10 = arith.constant 0 : index
      %c0_11 = arith.constant 0 : index
      %12 = vector.load %arg6[%c0_10, %c0_11] : memref<2x128xf32, #tpu.memory_space<vmem>>, vector<2x128xf32>
      %c0_12 = arith.constant 0 : index
      %c0_13 = arith.constant 0 : index
      %13 = vector.load %arg4[%c0_12, %c0_13] : memref<1x128xf32, #tpu.memory_space<vmem>>, vector<1x128xf32>
      %14 = vector.broadcast %13 : vector<1x128xf32> to vector<2x128xf32>
      %15 = arith.addf %12, %14 : vector<2x128xf32>
      %c0_14 = arith.constant 0 : index
      %c0_15 = arith.constant 0 : index
      %16 = vector.load %arg5[%c0_14, %c0_15] : memref<2x128xf32, #tpu.memory_space<vmem>>, vector<2x128xf32>
      tpu.vector_store %arg5[%c0_14, %c0_15], %15 {strides = array<i32>} : memref<2x128xf32, #tpu.memory_space<vmem>>, vector<2x128xf32>,
    } else {
    }
    return
  }
  func.func @transform_0(%arg0: i32, %arg1: i32) -> (i32, i32) {
    %c0_i32 = arith.constant 0 : i32
    %c0_i32_0 = arith.constant 0 : i32
    return %c0_i32, %arg1 : i32, i32
  }
  func.func @transform_1(%arg0: i32, %arg1: i32) -> (i32, i32) {
    %c0_i32 = arith.constant 0 : i32
    return %arg1, %arg0 : i32, i32
  }
  func.func @transform_2(%arg0: i32, %arg1: i32) -> (i32, i32) {
    %c0_i32 = arith.constant 0 : i32
    %c0_i32_0 = arith.constant 0 : i32
    return %c0_i32, %arg0 : i32, i32
  }
  func.func @transform_3(%arg0: i32, %arg1: i32) -> (i32, i32) {
    %c0_i32 = arith.constant 0 : i32
    %c0_i32_0 = arith.constant 0 : i32
    return %c0_i32, %arg0 : i32, i32
  }
}

</mosaic_0001>

<llo_original>
// kernel: srcnn_forward.3
$region0: #{srcnn_forward.3}
  #allocation0 [shape = 'u32[]', space=smem, size = 0x4, offset = 0x4, fixed_abs, tag = 'smem constant byte address 0x4 - core index']
  #allocation1 [shape = 'u32[144,128]{1,0:T(1,128)}', space=vmem, size = 0x12000, scoped, tag = 'internal scratch']
  #allocation2 [shape = 'f32[2,128]{1,0:T(2,128)}', space=vmem, size = 0x400, scoped, tag = 'scratch operand']
  %s0 = inlined_call_operand.vmem [shape: f32[2,256], index: 0, kind: input, shape index: {}]
  %s1 = inlined_call_operand.vmem [shape: f32[256,128], index: 1, kind: input, shape index: {}]
  %s2 = inlined_call_operand.vmem [shape: f32[1,128], index: 2, kind: input, shape index: {}]
  %s3 = inlined_call_operand.hbm [shape: f32[2,128], index: 3, kind: output, shape index: {}]
  %s4 = sld [smem:[#allocation0]]
  $region30: #{srcnn_forward.3} parent=0
    _
  %s6 = ssub.s32 1, %s4
  %s7 = scalar_select 0, %s6, %s4
  $region1: #{srcnn_forward.3} parent=0
    #allocation3 [shape = 'u8[1024]{0}', space=vmem, size = 0x400, scoped, tag = 'output window, operand 0, single buffered']
    #allocation4 [shape = 's32[1]{0}', space=sflag, size = 0x4, scoped, tag = 'scoped memory for srcnn_forward.3']
    %8 = vsyncpa [#allocation4], 0
    // Predicated region
    $region2: #{srcnn_forward.3} parent=1 // pred_check
      _
    $region3: #{srcnn_forward.3} parent=1 // pred_check_branch
      %10 = sbr.rel (0) target = $region5
    $region4: #{srcnn_forward.3} parent=1 // pred_region
      _
    $region5: #{srcnn_forward.3} parent=1 // pred_fallthru
      _
    // Predicated region
    $region6: #{srcnn_forward.3} parent=1 // pred_check
      _
    $region7: #{srcnn_forward.3} parent=1 // pred_check_branch
      %12 = sbr.rel (0) target = $region9
    $region8: #{srcnn_forward.3} parent=1 // pred_region
      _
    $region9: #{srcnn_forward.3} parent=1 // pred_fallthru
      _
    // Predicated region
    $region10: #{srcnn_forward.3} parent=1 // pred_check
      _
    $region11: #{srcnn_forward.3} parent=1 // pred_check_branch
      %14 = sbr.rel (0) target = $region13
    $region12: #{srcnn_forward.3} parent=1 // pred_region
      _
    $region13: #{srcnn_forward.3} parent=1 // pred_fallthru
      _
    %p15 = scmp.eq.s32.totalorder 0, 0
    // Predicated region
    $region14: #{srcnn_forward.3} parent=1 // pred_check
      %p16 = pneg %p15
    $region15: #{srcnn_forward.3} parent=1 // pred_check_branch
      %18 = sbr.rel (%p16) target = $region17
    $region16: #{srcnn_forward.3} parent=1 // pred_region
      %19 = vst [vmem:[#allocation2] sm:$0x3] 0.0
    $region17: #{srcnn_forward.3} parent=1 // pred_fallthru
      _
    %v20 = vld [vmem:[#allocation2] sm:$0x3]
    %v21 = vld [vmem:[%s0] sm:$0xf]
    %v22 = vld [vmem:[%s1] sm:$0xff]
    %v23 = vld [vmem:[%s1 + $0x8] sm:$0xff]
    %v24 = vld [vmem:[%s1 + $0x10] sm:$0xff]
    %v25 = vld [vmem:[%s1 + $0x18] sm:$0xff]
    %v26 = vld [vmem:[%s1 + $0x20] sm:$0xff]
    %v27 = vld [vmem:[%s1 + $0x28] sm:$0xff]
    %v28 = vld [vmem:[%s1 + $0x30] sm:$0xff]
    %v29 = vld [vmem:[%s1 + $0x38] sm:$0xff]
    %v30 = vld [vmem:[%s1 + $0x40] sm:$0xff]
    %v31 = vld [vmem:[%s1 + $0x48] sm:$0xff]
    %v32 = vld [vmem:[%s1 + $0x50] sm:$0xff]
    %v33 = vld [vmem:[%s1 + $0x58] sm:$0xff]
    %v34 = vld [vmem:[%s1 + $0x60] sm:$0xff]
    %v35 = vld [vmem:[%s1 + $0x68] sm:$0xff]
    %v36 = vld [vmem:[%s1 + $0x70] sm:$0xff]
    %v37 = vld [vmem:[%s1 + $0x78] sm:$0xff]
    %v38 = vld [vmem:[%s1 + $0x80] sm:$0xff]
    %v39 = vld [vmem:[%s1 + $0x88] sm:$0xff]
    %v40 = vld [vmem:[%s1 + $0x90] sm:$0xff]
    %v41 = vld [vmem:[%s1 + $0x98] sm:$0xff]
    %v42 = vld [vmem:[%s1 + $0xa0] sm:$0xff]
    %v43 = vld [vmem:[%s1 + $0xa8] sm:$0xff]
    %v44 = vld [vmem:[%s1 + $0xb0] sm:$0xff]
    %v45 = vld [vmem:[%s1 + $0xb8] sm:$0xff]
    %v46 = vld [vmem:[%s1 + $0xc0] sm:$0xff]
    %v47 = vld [vmem:[%s1 + $0xc8] sm:$0xff]
    %v48 = vld [vmem:[%s1 + $0xd0] sm:$0xff]
    %v49 = vld [vmem:[%s1 + $0xd8] sm:$0xff]
    %v50 = vld [vmem:[%s1 + $0xe0] sm:$0xff]
    %v51 = vld [vmem:[%s1 + $0xe8] sm:$0xff]
    %v52 = vld [vmem:[%s1 + $0xf0] sm:$0xff]
    %v53 = vld [vmem:[%s1 + $0xf8] sm:$0xff]
    %v56 = vunpack.c.l.s4 1983009808
    %v57 = vunpack.c.0.s8 %v56
    %v58 = vlaneseq
    %v59 = vshrl.u32 %v58, 7
    %v60 = vsub.s32 %v57, %v59
    %v61 = vrot.slane %v21, %v60
    %v62 = vcombine.high %v61, %v61
    %65 = vmatprep.subr.mxu0 0.0
    %66 = vmatpush1.msra.mxu0 %v37
    %67 = vmatprep.subr.mxu0 0.0
    %68 = vmatpush1.msra.mxu0 %v36
    %69 = vmatprep.subr.mxu0 0.0
    %70 = vmatpush1.msra.mxu0 %v35
    %71 = vmatprep.subr.mxu0 0.0
    %72 = vmatpush1.msra.mxu0 %v34
    %73 = vmatprep.subr.mxu0 0.0
    %74 = vmatpush1.msra.mxu0 %v33
    %75 = vmatprep.subr.mxu0 0.0
    %76 = vmatpush1.msra.mxu0 %v32
    %77 = vmatprep.subr.mxu0 0.0
    %78 = vmatpush1.msra.mxu0 %v31
    %79 = vmatprep.subr.mxu0 0.0
    %80 = vmatpush1.msra.mxu0 %v30
    %81 = vmatprep.subr.mxu0 0.0
    %82 = vmatpush1.msra.mxu0 %v29
    %83 = vmatprep.subr.mxu0 0.0
    %84 = vmatpush1.msra.mxu0 %v28
    %85 = vmatprep.subr.mxu0 0.0
    %86 = vmatpush1.msra.mxu0 %v27
    %87 = vmatprep.subr.mxu0 0.0
    %88 = vmatpush1.msra.mxu0 %v26
    %89 = vmatprep.subr.mxu0 0.0
    %90 = vmatpush1.msra.mxu0 %v25
    %91 = vmatprep.subr.mxu0 0.0
    %92 = vmatpush1.msra.mxu0 %v24
    %93 = vmatprep.subr.mxu0 0.0
    %94 = vmatpush1.msra.mxu0 %v23
    %95 = vmatprep.subr.mxu0 0.0
    %96 = vmatpush1.msra.mxu0 %v22
    %97 = vmatprep.subr.mxu0 0.0
    %98 = vmatpush2.msra.mxu0 %v53
    %99 = vmatprep.subr.mxu0 0.0
    %100 = vmatpush2.msra.mxu0 %v52
    %101 = vmatprep.subr.mxu0 0.0
    %102 = vmatpush2.msra.mxu0 %v51
    %103 = vmatprep.subr.mxu0 0.0
    %104 = vmatpush2.msra.mxu0 %v50
    %105 = vmatprep.subr.mxu0 0.0
    %106 = vmatpush2.msra.mxu0 %v49
    %107 = vmatprep.subr.mxu0 0.0
    %108 = vmatpush2.msra.mxu0 %v48
    %109 = vmatprep.subr.mxu0 0.0
    %110 = vmatpush2.msra.mxu0 %v47
    %111 = vmatprep.subr.mxu0 0.0
    %112 = vmatpush2.msra.mxu0 %v46
    %113 = vmatprep.subr.mxu0 0.0
    %114 = vmatpush2.msra.mxu0 %v45
    %115 = vmatprep.subr.mxu0 0.0
    %116 = vmatpush2.msra.mxu0 %v44
    %117 = vmatprep.subr.mxu0 0.0
    %118 = vmatpush2.msra.mxu0 %v43
    %119 = vmatprep.subr.mxu0 0.0
    %120 = vmatpush2.msra.mxu0 %v42
    %121 = vmatprep.subr.mxu0 0.0
    %122 = vmatpush2.msra.mxu0 %v41
    %123 = vmatprep.subr.mxu0 0.0
    %124 = vmatpush2.msra.mxu0 %v40
    %125 = vmatprep.subr.mxu0 0.0
    %126 = vmatpush2.msra.mxu0 %v39
    %127 = vmatprep.subr.mxu0 0.0
    %128 = vmatpush2.msra.mxu0 %v38
    %129 = vmatprep.mubr.f32.mxu0 %v62
    %130 = vmatmul.mubr.f32.gmra.mxu0 %v61
    %v131 = vpop.f32.mrf.mxu0
    %v132 = vadd.f32 0.0, %v131
    %v133 = vpop.f32.mrf.mxu0
    %134 = vdwg.mxu0
    %v135 = vadd.f32 %v20, %v132
    %136 = vst [vmem:[#allocation2] sm:$0x3] %v135
    // Predicated region
    $region18: #{srcnn_forward.3} parent=1 // pred_check
      %p137 = pneg %p15
    $region19: #{srcnn_forward.3} parent=1 // pred_check_branch
      %139 = sbr.rel (%p137) target = $region21
    $region20: #{srcnn_forward.3} parent=1 // pred_region
      %v140 = vld [vmem:[#allocation2] sm:$0x3]
      %v141 = vld [vmem:[%s2] sm:$0x1]
      %v143 = vlaneseq
      %v144 = vshrl.u32 %v143, 7
      %v145 = vsub.s32 0, %v144
      %v146 = vrot.slane %v141, %v145
      %v148 = vadd.f32 %v140, %v146
      %149 = vst [vmem:[#allocation3] sm:$0x3] %v148
    $region21: #{srcnn_forward.3} parent=1 // pred_fallthru
      _
    // Predicated region
    $region22: #{srcnn_forward.3} parent=1 // pred_check
      _
    $region23: #{srcnn_forward.3} parent=1 // pred_check_branch
      %151 = sbr.rel (0) target = $region25
    $region24: #{srcnn_forward.3} parent=1 // pred_region
      %s153 = ssub.s32 32, 32
      %154 = vsyncadd [#allocation4], %s153
      %s156 = sshll.u32 [#allocation3], 4
      %s157 = int_to_ptr.vmem [resolvable:$true] %s156
      %159 = dma.vmem_to_hbm [thread:$0]  %s157, 32, %s3, [#allocation4]
    $region25: #{srcnn_forward.3} parent=1 // pred_fallthru
      _
    // Predicated region
    $region26: #{srcnn_forward.3} parent=1 // pred_check
      _
    $region27: #{srcnn_forward.3} parent=1 // pred_check_branch
      %161 = sbr.rel (0) target = $region29
    $region28: #{srcnn_forward.3} parent=1 // pred_region
      %162 = dma.done [#allocation4], 32
    $region29: #{srcnn_forward.3} parent=1 // pred_fallthru
      _
    %163 = vsyncpa [#allocation4], 1

// kernel: srcnn_forward.2
$region0: #{srcnn_forward.2}
  #allocation0 [shape = 'u32[]', space=smem, size = 0x4, offset = 0x4, fixed_abs, tag = 'smem constant byte address 0x4 - core index']
  #allocation1 [shape = 'u32[144,128]{1,0:T(1,128)}', space=vmem, size = 0x12000, scoped, tag = 'internal scratch']
  #allocation2 [shape = 'f32[20,20,32]{2,1,0:T(8,128)}', space=vmem, size = 0x3c000, scoped, tag = 'scratch operand']
  #allocation3 [shape = 'f32[1,1]{1,0:T(1,128)S(1)}', space=vmem, size = 0x200, scoped, tag = 'scoped memory for srcnn_forward.2']
  %s0 = inlined_call_operand.vmem [shape: f32[2,144,324], index: 0, kind: input, shape index: {}]
  %s1 = inlined_call_operand.vmem [shape: f32[324,64], index: 1, kind: input, shape index: {}]
  %s2 = inlined_call_operand.vmem [shape: f32[1,64], index: 2, kind: input, shape index: {}]
  %s3 = inlined_call_operand.vmem [shape: f32[64,32], index: 3, kind: input, shape index: {}]
  %s4 = inlined_call_operand.vmem [shape: f32[1,32], index: 4, kind: input, shape index: {}]
  %s5 = inlined_call_operand.vmem [shape: f32[5,5,32], index: 5, kind: input, shape index: {}]
  %s6 = inlined_call_operand.<no memory space> [shape: f32[1,1], index: 6, kind: input, shape index: {}]
  %s7 = inlined_call_operand.vmem [shape: f32[2,16,16], index: 7, kind: output, shape index: {}]
  %s8 = sld [smem:[#allocation0]]
  $region61: #{srcnn_forward.2} parent=0
    _
  %s10 = ssub.s32 1, %s8
  %s11 = scalar_select 0, %s10, %s8
  %v12 = vstv %s6
  %13 = vst [vmem:[#allocation3] sm:$0x1] %v12
  loop: start=0, step=1, limit=4
  $region2: #{srcnn_forward.2} parent=0 // loop_pre_header
    _
  $region3: #{srcnn_forward.2} parent=0 // loop_header
    %s15 = sphi 0, %s19
    %p16 = scmp.ge.s32.totalorder %s15, 4
    %s25 = sphi 0, %s27
    %s28 = sphi 0, %s25
    %s29 = sphi 0, %s28
    %s45 = sphi 0, %s29
    %s49 = sphi 0, %s49
    %s51 = sphi 0, %s49
    %s52 = sphi 0, %s51
    %s66 = sphi 0, %s52
    %s70 = sphi 0, %s70
    %s72 = sphi 0, %s70
    %s73 = sphi 0, %s72
    %s87 = sphi 0, %s73
    %s91 = sphi 0, %s91
    %s93 = sphi 0, %s91
    %s94 = sphi 0, %s93
    %s108 = sphi 0, %s94
    %s112 = sphi 0, %s112
    %s114 = sphi 0, %s112
    %s115 = sphi 0, %s114
    %s129 = sphi 0, %s115
    %s133 = sphi 0, %s133
    %s135 = sphi 0, %s133
    %s136 = sphi 0, %s135
    %s150 = sphi 0, %s136
    %s154 = sphi 0, %s154
    %s156 = sphi 0, %s154
    %s157 = sphi 0, %s156
    %s171 = sphi 0, %s157
    %s177 = sphi 0, %s179
    %s180 = sphi 0, %s177
    %s181 = sphi 0, %s180
    %s197 = sphi 0, %s181
  $region4: #{srcnn_forward.2} parent=0 // loop_header_branch
    %18 = sbr.rel (%p16) target = $region8
  $region5: #{srcnn_forward.2} parent=0 // loop_body
    %s20 = ssub.s32 %s15, 1
    %s21 = ssub.s32 %s15, 2
    %s22 = sadd.s32 %s15, 1
    %s23 = ssub.s32 %s15, %s22
    %p24 = scmp.eq.s32.totalorder %s23, 0
    %s26 = sadd.s32 %s25, 1
    %s27 = scalar_select %p24, %s25, %s26
    %p30 = pneg %p24
    %p31 = scmp.eq.s32.totalorder %s15, 1
    %p32 = por %p30, %p31
    %p33 = scmp.ne.s32.totalorder %s25, %s28
    %p34 = scmp.eq.s32.totalorder %s15, 0
    %p35 = por %p33, %p34
    %p36 = scmp.ne.s32.totalorder %s25, %s28
    %p37 = scmp.eq.s32.totalorder %s20, 1
    %p38 = por %p36, %p37
    %p39 = scmp.ne.s32.totalorder %s28, %s29
    %p40 = scmp.eq.s32.totalorder %s20, 0
    %p41 = por %p39, %p40
    %p42 = scmp.ne.s32.totalorder %s28, %s29
    %p43 = scmp.eq.s32.totalorder %s21, 1
    %p44 = por %p42, %p43
    %p46 = scmp.ne.s32.totalorder %s29, %s45
    %p47 = scmp.eq.s32.totalorder %s21, 0
    %p48 = por %p46, %p47
    %s50 = sadd.s32 %s49, 1
    %p53 = scmp.eq.s32.totalorder %s15, 1
    %p54 = scmp.ne.s32.totalorder %s49, %s51
    %p55 = scmp.eq.s32.totalorder %s15, 0
    %p56 = por %p54, %p55
    %p57 = scmp.ne.s32.totalorder %s49, %s51
    %p58 = scmp.eq.s32.totalorder %s20, 1
    %p59 = por %p57, %p58
    %p60 = scmp.ne.s32.totalorder %s51, %s52
    %p61 = scmp.eq.s32.totalorder %s20, 0
    %p62 = por %p60, %p61
    %p63 = scmp.ne.s32.totalorder %s51, %s52
    %p64 = scmp.eq.s32.totalorder %s21, 1
    %p65 = por %p63, %p64
    %p67 = scmp.ne.s32.totalorder %s52, %s66
    %p68 = scmp.eq.s32.totalorder %s21, 0
    %p69 = por %p67, %p68
    %s71 = sadd.s32 %s70, 1
    %p74 = scmp.eq.s32.totalorder %s15, 1
    %p75 = scmp.ne.s32.totalorder %s70, %s72
    %p76 = scmp.eq.s32.totalorder %s15, 0
    %p77 = por %p75, %p76
    %p78 = scmp.ne.s32.totalorder %s70, %s72
    %p79 = scmp.eq.s32.totalorder %s20, 1
    %p80 = por %p78, %p79
    %p81 = scmp.ne.s32.totalorder %s72, %s73
    %p82 = scmp.eq.s32.totalorder %s20, 0
    %p83 = por %p81, %p82
    %p84 = scmp.ne.s32.totalorder %s72, %s73
    %p85 = scmp.eq.s32.totalorder %s21, 1
    %p86 = por %p84, %p85
    %p88 = scmp.ne.s32.totalorder %s73, %s87
    %p89 = scmp.eq.s32.totalorder %s21, 0
    %p90 = por %p88, %p89
    %s92 = sadd.s32 %s91, 1
    %p95 = scmp.eq.s32.totalorder %s15, 1
    %p96 = scmp.ne.s32.totalorder %s91, %s93
    %p97 = scmp.eq.s32.totalorder %s15, 0
    %p98 = por %p96, %p97
    %p99 = scmp.ne.s32.totalorder %s91, %s93
    %p100 = scmp.eq.s32.totalorder %s20, 1
    %p101 = por %p99, %p100
    %p102 = scmp.ne.s32.totalorder %s93, %s94
    %p103 = scmp.eq.s32.totalorder %s20, 0
    %p104 = por %p102, %p103
    %p105 = scmp.ne.s32.totalorder %s93, %s94
    %p106 = scmp.eq.s32.totalorder %s21, 1
    %p107 = por %p105, %p106
    %p109 = scmp.ne.s32.totalorder %s94, %s108
    %p110 = scmp.eq.s32.totalorder %s21, 0
    %p111 = por %p109, %p110
    %s113 = sadd.s32 %s112, 1
    %p116 = scmp.eq.s32.totalorder %s15, 1
    %p117 = scmp.ne.s32.totalorder %s112, %s114
    %p118 = scmp.eq.s32.totalorder %s15, 0
    %p119 = por %p117, %p118
    %p120 = scmp.ne.s32.totalorder %s112, %s114
    %p121 = scmp.eq.s32.totalorder %s20, 1
    %p122 = por %p120, %p121
    %p123 = scmp.ne.s32.totalorder %s114, %s115
    %p124 = scmp.eq.s32.totalorder %s20, 0
    %p125 = por %p123, %p124
    %p126 = scmp.ne.s32.totalorder %s114, %s115
    %p127 = scmp.eq.s32.totalorder %s21, 1
    %p128 = por %p126, %p127
    %p130 = scmp.ne.s32.totalorder %s115, %s129
    %p131 = scmp.eq.s32.totalorder %s21, 0
    %p132 = por %p130, %p131
    %s134 = sadd.s32 %s133, 1
    %p137 = scmp.eq.s32.totalorder %s15, 1
    %p138 = scmp.ne.s32.totalorder %s133, %s135
    %p139 = scmp.eq.s32.totalorder %s15, 0
    %p140 = por %p138, %p139
    %p141 = scmp.ne.s32.totalorder %s133, %s135
    %p142 = scmp.eq.s32.totalorder %s20, 1
    %p143 = por %p141, %p142
    %p144 = scmp.ne.s32.totalorder %s135, %s136
    %p145 = scmp.eq.s32.totalorder %s20, 0
    %p146 = por %p144, %p145
    %p147 = scmp.ne.s32.totalorder %s135, %s136
    %p148 = scmp.eq.s32.totalorder %s21, 1
    %p149 = por %p147, %p148
    %p151 = scmp.ne.s32.totalorder %s136, %s150
    %p152 = scmp.eq.s32.totalorder %s21, 0
    %p153 = por %p151, %p152
    %s155 = sadd.s32 %s154, 1
    %p158 = scmp.eq.s32.totalorder %s15, 1
    %p159 = scmp.ne.s32.totalorder %s154, %s156
    %p160 = scmp.eq.s32.totalorder %s15, 0
    %p161 = por %p159, %p160
    %p162 = scmp.ne.s32.totalorder %s154, %s156
    %p163 = scmp.eq.s32.totalorder %s20, 1
    %p164 = por %p162, %p163
    %p165 = scmp.ne.s32.totalorder %s156, %s157
    %p166 = scmp.eq.s32.totalorder %s20, 0
    %p167 = por %p165, %p166
    %p168 = scmp.ne.s32.totalorder %s156, %s157
    %p169 = scmp.eq.s32.totalorder %s21, 1
    %p170 = por %p168, %p169
    %p172 = scmp.ne.s32.totalorder %s157, %s171
    %p173 = scmp.eq.s32.totalorder %s21, 0
    %p174 = por %p172, %p173
    %s175 = ssub.s32 %s15, %s22
    %p176 = scmp.eq.s32.totalorder %s175, 0
    %s178 = sadd.s32 %s177, 1
    %s179 = scalar_select %p176, %s177, %s178
    %p182 = pneg %p176
    %p183 = scmp.eq.s32.totalorder %s15, 1
    %p184 = por %p182, %p183
    %p185 = scmp.ne.s32.totalorder %s177, %s180
    %p186 = scmp.eq.s32.totalorder %s15, 0
    %p187 = por %p185, %p186
    %p188 = scmp.ne.s32.totalorder %s177, %s180
    %p189 = scmp.eq.s32.totalorder %s20, 1
    %p190 = por %p188, %p189
    %p191 = scmp.ne.s32.totalorder %s180, %s181
    %p192 = scmp.eq.s32.totalorder %s20, 0
    %p193 = por %p191, %p192
    %p194 = scmp.ne.s32.totalorder %s180, %s181
    %p195 = scmp.eq.s32.totalorder %s21, 1
    %p196 = por %p194, %p195
    %p198 = scmp.ne.s32.totalorder %s181, %s197
    %p199 = scmp.eq.s32.totalorder %s21, 0
    %p200 = por %p198, %p199
    %p201 = scmp.le.s32.totalorder 1, %s15
    %p202 = scmp.lt.s32.totalorder %s15, 3
    %p203 = pnand %p201, %p202
    %p204 = pneg %p203
    // Predicated region
    $region9: #{srcnn_forward.2} parent=5 // pred_check
      _
    $region10: #{srcnn_forward.2} parent=5 // pred_check_branch
      %206 = sbr.rel (%p203) target = $region12
    $region11: #{srcnn_forward.2} parent=5 // pred_region
      %s207 = ssub.s32 %s15, 1
      // Predicated region
      $region13: #{srcnn_forward.2} parent=11 // pred_check
        %p208 = pneg %p62
      $region14: #{srcnn_forward.2} parent=11 // pred_check_branch
        %210 = sbr.rel (%p208) target = $region16
      $region15: #{srcnn_forward.2} parent=11 // pred_region
        _
      $region16: #{srcnn_forward.2} parent=11 // pred_fallthru
        _
      // Predicated region
      $region17: #{srcnn_forward.2} parent=11 // pred_check
        %p211 = pneg %p83
      $region18: #{srcnn_forward.2} parent=11 // pred_check_branch
        %213 = sbr.rel (%p211) target = $region20
      $region19: #{srcnn_forward.2} parent=11 // pred_region
        _
      $region20: #{srcnn_forward.2} parent=11 // pred_fallthru
        _
      // Predicated region
      $region21: #{srcnn_forward.2} parent=11 // pred_check
        %p214 = pneg %p104
      $region22: #{srcnn_forward.2} parent=11 // pred_check_branch
        %216 = sbr.rel (%p214) target = $region24
      $region23: #{srcnn_forward.2} parent=11 // pred_region
        _
      $region24: #{srcnn_forward.2} parent=11 // pred_fallthru
        _
      // Predicated region
      $region25: #{srcnn_forward.2} parent=11 // pred_check
        %p217 = pneg %p125
      $region26: #{srcnn_forward.2} parent=11 // pred_check_branch
        %219 = sbr.rel (%p217) target = $region28
      $region27: #{srcnn_forward.2} parent=11 // pred_region
        _
      $region28: #{srcnn_forward.2} parent=11 // pred_fallthru
        _
      // Predicated region
      $region29: #{srcnn_forward.2} parent=11 // pred_check
        %p220 = pneg %p146
      $region30: #{srcnn_forward.2} parent=11 // pred_check_branch
        %222 = sbr.rel (%p220) target = $region32
      $region31: #{srcnn_forward.2} parent=11 // pred_region
        _
      $region32: #{srcnn_forward.2} parent=11 // pred_fallthru
        _
      // Predicated region
      $region33: #{srcnn_forward.2} parent=11 // pred_check
        %p223 = pneg %p167
      $region34: #{srcnn_forward.2} parent=11 // pred_check_branch
        %225 = sbr.rel (%p223) target = $region36
      $region35: #{srcnn_forward.2} parent=11 // pred_region
        _
      $region36: #{srcnn_forward.2} parent=11 // pred_fallthru
        _
    $region12: #{srcnn_forward.2} parent=5 // pred_fallthru
      _
    %p226 = scmp.lt.s32.totalorder %s15, 2
    // Predicated region
    $region37: #{srcnn_forward.2} parent=5 // pred_check
      %p227 = pneg %p226
    $region38: #{srcnn_forward.2} parent=5 // pred_check_branch
      %229 = sbr.rel (%p227) target = $region40
    $region39: #{srcnn_forward.2} parent=5 // pred_region
      // Predicated region
      $region41: #{srcnn_forward.2} parent=39 // pred_check
        %p230 = pneg %p35
      $region42: #{srcnn_forward.2} parent=39 // pred_check_branch
        %232 = sbr.rel (%p230) target = $region44
      $region43: #{srcnn_forward.2} parent=39 // pred_region
        %p233 = scmp.lt.s32.totalorder %s15, 1
        %s234 = scalar_select %p233, %s15, 1
        %s235 = smul.addr %s234, 54
        %s236 = smul.addr %s235, 8
        %s237 = scalar_lea.vmem %s0, %s236
      $region44: #{srcnn_forward.2} parent=39 // pred_fallthru
        _
    $region40: #{srcnn_forward.2} parent=5 // pred_fallthru
      _
    %p238 = scmp.le.s32.totalorder 1, %s15
    %p239 = scmp.lt.s32.totalorder %s15, 3
    %p240 = pnand %p238, %p239
    %p241 = pneg %p240
    // Predicated region
    $region45: #{srcnn_forward.2} parent=5 // pred_check
      _
    $region46: #{srcnn_forward.2} parent=5 // pred_check_branch
      %243 = sbr.rel (%p240) target = $region48
    $region47: #{srcnn_forward.2} parent=5 // pred_region
      %s244 = ssub.s32 %s15, 1
      %p245 = scmp.lt.s32.totalorder %s20, 1
      %s246 = scalar_select %p245, %s20, 1
      %s247 = smul.addr %s246, 54
      %s248 = smul.addr %s247, 8
      %s249 = scalar_lea.vmem %s0, %s248
      %p250 = pneg %p41
      %p251 = pneg %p38
      %p252 = pneg %p62
      %p253 = pneg %p59
      %p254 = pneg %p83
      %p255 = pneg %p80
      %p256 = pneg %p104
      %p257 = pneg %p101
      %p258 = pneg %p125
      %p259 = pneg %p122
      %p260 = pneg %p146
      %p261 = pneg %p143
      %p262 = pneg %p167
      %p263 = pneg %p164
      %p264 = pneg %p193
      %p265 = pneg %p190
      %p266 = scmp.lt.s32.totalorder %s20, 1
      %s267 = scalar_select %p266, %s20, 1
      %s268 = smul.addr %s267, 2
      %s269 = smul.addr %s268, 8
      %s270 = scalar_lea.vmem %s7, %s269
      %p271 = scmp.lt.s32.totalorder %s20, 1
      %s272 = scalar_select %p271, %s20, 1
      %s273 = smul.addr %s272, 54
      %s274 = smul.addr %s273, 8
      %s275 = scalar_lea.vmem %s0, %s274
      %p276 = scmp.lt.s32.totalorder %s20, 1
      %s277 = scalar_select %p276, %s20, 1
      %s278 = smul.addr %s277, 2
      %s279 = smul.addr %s278, 8
      %s280 = scalar_lea.vmem %s7, %s279
      %v281 = vld [vmem:[%s275] sm:$0xff]
      %v282 = vld [vmem:[%s275 + $0x8] sm:$0xff]
      %v283 = vld [vmem:[%s275 + $0x10] sm:$0xff]
      %v284 = vld [vmem:[%s275 + $0x18] sm:$0xff]
      %v285 = vld [vmem:[%s275 + $0x20] sm:$0xff]
      %v286 = vld [vmem:[%s275 + $0x28] sm:$0xff]
      %v287 = vld [vmem:[%s275 + $0x30] sm:$0xff]
      %v288 = vld [vmem:[%s275 + $0x38] sm:$0xff]
      %v289 = vld [vmem:[%s275 + $0x40] sm:$0xff]
      %v290 = vld [vmem:[%s275 + $0x48] sm:$0xff]
      %v291 = vld [vmem:[%s275 + $0x50] sm:$0xff]
      %v292 = vld [vmem:[%s275 + $0x58] sm:$0xff]
      %v293 = vld [vmem:[%s275 + $0x60] sm:$0xff]
      %v294 = vld [vmem:[%s275 + $0x68] sm:$0xff]
      %v295 = vld [vmem:[%s275 + $0x70] sm:$0xff]
      %v296 = vld [vmem:[%s275 + $0x78] sm:$0xff]
      %v297 = vld [vmem:[%s275 + $0x80] sm:$0xff]
      %v298 = vld [vmem:[%s275 + $0x88] sm:$0xff]
      %v299 = vld [vmem:[%s275 + $0x90] sm:$0xff]
      %v300 = vld [vmem:[%s275 + $0x98] sm:$0xff]
      %v301 = vld [vmem:[%s275 + $0xa0] sm:$0xff]
      %v302 = vld [vmem:[%s275 + $0xa8] sm:$0xff]
      %v303 = vld [vmem:[%s275 + $0xb0] sm:$0xff]
      %v304 = vld [vmem:[%s275 + $0xb8] sm:$0xff]
      %v305 = vld [vmem:[%s275 + $0xc0] sm:$0xff]
      %v306 = vld [vmem:[%s275 + $0xc8] sm:$0xff]
      %v307 = vld [vmem:[%s275 + $0xd0] sm:$0xff]
      %v308 = vld [vmem:[%s275 + $0xd8] sm:$0xff]
      %v309 = vld [vmem:[%s275 + $0xe0] sm:$0xff]
      %v310 = vld [vmem:[%s275 + $0xe8] sm:$0xff]
      %v311 = vld [vmem:[%s275 + $0xf0] sm:$0xff]
      %v312 = vld [vmem:[%s275 + $0xf8] sm:$0xff]
      %v313 = vld [vmem:[%s275 + $0x100] sm:$0xff]
      %v314 = vld [vmem:[%s275 + $0x108] sm:$0xff]
      %v315 = vld [vmem:[%s275 + $0x110] sm:$0xff]
      %v316 = vld [vmem:[%s275 + $0x118] sm:$0xff]
      %v317 = vld [vmem:[%s275 + $0x120] sm:$0xff]
      %v318 = vld [vmem:[%s275 + $0x128] sm:$0xff]
      %v319 = vld [vmem:[%s275 + $0x130] sm:$0xff]
      %v320 = vld [vmem:[%s275 + $0x138] sm:$0xff]
      %v321 = vld [vmem:[%s275 + $0x140] sm:$0xff]
      %v322 = vld [vmem:[%s275 + $0x148] sm:$0xff]
      %v323 = vld [vmem:[%s275 + $0x150] sm:$0xff]
      %v324 = vld [vmem:[%s275 + $0x158] sm:$0xff]
      %v325 = vld [vmem:[%s275 + $0x160] sm:$0xff]
      %v326 = vld [vmem:[%s275 + $0x168] sm:$0xff]
      %v327 = vld [vmem:[%s275 + $0x170] sm:$0xff]
      %v328 = vld [vmem:[%s275 + $0x178] sm:$0xff]
      %v329 = vld [vmem:[%s275 + $0x180] sm:$0xff]
      %v330 = vld [vmem:[%s275 + $0x188] sm:$0xff]
      %v331 = vld [vmem:[%s275 + $0x190] sm:$0xff]
      %v332 = vld [vmem:[%s275 + $0x198] sm:$0xff]
      %v333 = vld [vmem:[%s275 + $0x1a0] sm:$0xff]
      %v334 = vld [vmem:[%s275 + $0x1a8] sm:$0xff]
      %v335 = vld [vmem:[%s1] sm:$0xff]
      %v336 = vld [vmem:[%s1 + $0x8] sm:$0xff]
      %v337 = vld [vmem:[%s1 + $0x10] sm:$0xff]
      %v338 = vld [vmem:[%s1 + $0x18] sm:$0xff]
      %v339 = vld [vmem:[%s1 + $0x20] sm:$0xff]
      %v340 = vld [vmem:[%s1 + $0x28] sm:$0xff]
      %v341 = vld [vmem:[%s1 + $0x30] sm:$0xff]
      %v342 = vld [vmem:[%s1 + $0x38] sm:$0xff]
      %v343 = vld [vmem:[%s1 + $0x40] sm:$0xff]
      %v344 = vld [vmem:[%s1 + $0x48] sm:$0xff]
      %v345 = vld [vmem:[%s1 + $0x50] sm:$0xff]
      %v346 = vld [vmem:[%s1 + $0x58] sm:$0xff]
      %v347 = vld [vmem:[%s1 + $0x60] sm:$0xff]
      %v348 = vld [vmem:[%s1 + $0x68] sm:$0xff]
      %v349 = vld [vmem:[%s1 + $0x70] sm:$0xff]
      %v350 = vld [vmem:[%s1 + $0x78] sm:$0xff]
      %v351 = vld [vmem:[%s1 + $0x80] sm:$0xff]
      %v352 = vld [vmem:[%s1 + $0x88] sm:$0xff]
      %v353 = vld [vmem:[%s1 + $0x90] sm:$0xff]
      %v354 = vld [vmem:[%s1 + $0x98] sm:$0xff]
      %v355 = vld [vmem:[%s1 + $0xa0] sm:$0xff]
      %v356 = vld [vmem:[%s1 + $0xa8] sm:$0xff]
      %v357 = vld [vmem:[%s1 + $0xb0] sm:$0xff]
      %v358 = vld [vmem:[%s1 + $0xb8] sm:$0xff]
      %v359 = vld [vmem:[%s1 + $0xc0] sm:$0xff]
      %v360 = vld [vmem:[%s1 + $0xc8] sm:$0xff]
      %v361 = vld [vmem:[%s1 + $0xd0] sm:$0xff]
      %v362 = vld [vmem:[%s1 + $0xd8] sm:$0xff]
      %v363 = vld [vmem:[%s1 + $0xe0] sm:$0xff]
      %v364 = vld [vmem:[%s1 + $0xe8] sm:$0xff]
      %v365 = vld [vmem:[%s1 + $0xf0] sm:$0xff]
      %v366 = vld [vmem:[%s1 + $0xf8] sm:$0xff]
      %v367 = vld [vmem:[%s1 + $0x100] sm:$0xff]
      %v368 = vld [vmem:[%s1 + $0x108] sm:$0xff]
      %v369 = vld [vmem:[%s1 + $0x110] sm:$0xff]
      %v370 = vld [vmem:[%s1 + $0x118] sm:$0xff]
      %v371 = vld [vmem:[%s1 + $0x120] sm:$0xff]
      %v372 = vld [vmem:[%s1 + $0x128] sm:$0xff]
      %v373 = vld [vmem:[%s1 + $0x130] sm:$0xff]
      %v374 = vld [vmem:[%s1 + $0x138] sm:$0xff]
      %v375 = vld [vmem:[%s1 + $0x140] sm:$0xf]
      %v376 = vld [vmem:[%s2] sm:$0x1]
      %v378 = vlaneseq
      %v379 = vshrl.u32 %v378, 7
      %v380 = vsub.s32 0, %v379
      %v381 = vrot.slane %v376, %v380
      %vm383 = vcmask 556032
      %v385 = vsel %vm383, %v283, 0
      %v388 = vsel %vm383, %v286, 0
      %v391 = vsel %vm383, %v289, 0
      %v394 = vsel %vm383, %v292, 0
      %v397 = vsel %vm383, %v295, 0
      %v400 = vsel %vm383, %v298, 0
      %v403 = vsel %vm383, %v301, 0
      %v406 = vsel %vm383, %v304, 0
      %v409 = vsel %vm383, %v307, 0
      %v412 = vsel %vm383, %v310, 0
      %v415 = vsel %vm383, %v313, 0
      %v418 = vsel %vm383, %v316, 0
      %v421 = vsel %vm383, %v319, 0
      %v424 = vsel %vm383, %v322, 0
      %v427 = vsel %vm383, %v325, 0
      %v430 = vsel %vm383, %v328, 0
      %v433 = vsel %vm383, %v331, 0
      %v436 = vsel %vm383, %v334, 0
      %vm438 = vcmask 1043456
      %v440 = vsel %vm438, %v375, 0
      %442 = vmatprep.subr.mxu0 0.0
      %443 = vmatpush1.msra.mxu0 %v350
      %444 = vmatprep.subr.mxu0 0.0
      %445 = vmatpush1.msra.mxu0 %v349
      %446 = vmatprep.subr.mxu0 0.0
      %447 = vmatpush1.msra.mxu0 %v348
      %448 = vmatprep.subr.mxu0 0.0
      %449 = vmatpush1.msra.mxu0 %v347
      %450 = vmatprep.subr.mxu0 0.0
      %451 = vmatpush1.msra.mxu0 %v346
      %452 = vmatprep.subr.mxu0 0.0
      %453 = vmatpush1.msra.mxu0 %v345
      %454 = vmatprep.subr.mxu0 0.0
      %455 = vmatpush1.msra.mxu0 %v344
      %456 = vmatprep.subr.mxu0 0.0
      %457 = vmatpush1.msra.mxu0 %v343
      %458 = vmatprep.subr.mxu0 0.0
      %459 = vmatpush1.msra.mxu0 %v342
      %460 = vmatprep.subr.mxu0 0.0
      %461 = vmatpush1.msra.mxu0 %v341
      %462 = vmatprep.subr.mxu0 0.0
      %463 = vmatpush1.msra.mxu0 %v340
      %464 = vmatprep.subr.mxu0 0.0
      %465 = vmatpush1.msra.mxu0 %v339
      %466 = vmatprep.subr.mxu0 0.0
      %467 = vmatpush1.msra.mxu0 %v338
      %468 = vmatprep.subr.mxu0 0.0
      %469 = vmatpush1.msra.mxu0 %v337
      %470 = vmatprep.subr.mxu0 0.0
      %471 = vmatpush1.msra.mxu0 %v336
      %472 = vmatprep.subr.mxu0 0.0
      %473 = vmatpush1.msra.mxu0 %v335
      %474 = vmatprep.subr.mxu0 0.0
      %475 = vmatpush2.msra.mxu0 %v366
      %476 = vmatprep.subr.mxu0 0.0
      %477 = vmatpush2.msra.mxu0 %v365
      %478 = vmatprep.subr.mxu0 0.0
      %479 = vmatpush2.msra.mxu0 %v364
      %480 = vmatprep.subr.mxu0 0.0
      %481 = vmatpush2.msra.mxu0 %v363
      %482 = vmatprep.subr.mxu0 0.0
      %483 = vmatpush2.msra.mxu0 %v362
      %484 = vmatprep.subr.mxu0 0.0
      %485 = vmatpush2.msra.mxu0 %v361
      %486 = vmatprep.subr.mxu0 0.0
      %487 = vmatpush2.msra.mxu0 %v360
      %488 = vmatprep.subr.mxu0 0.0
      %489 = vmatpush2.msra.mxu0 %v359
      %490 = vmatprep.subr.mxu0 0.0
      %491 = vmatpush2.msra.mxu0 %v358
      %492 = vmatprep.subr.mxu0 0.0
      %493 = vmatpush2.msra.mxu0 %v357
      %494 = vmatprep.subr.mxu0 0.0
      %495 = vmatpush2.msra.mxu0 %v356
      %496 = vmatprep.subr.mxu0 0.0
      %497 = vmatpush2.msra.mxu0 %v355
      %498 = vmatprep.subr.mxu0 0.0
      %499 = vmatpush2.msra.mxu0 %v354
      %500 = vmatprep.subr.mxu0 0.0
      %501 = vmatpush2.msra.mxu0 %v353
      %502 = vmatprep.subr.mxu0 0.0
      %503 = vmatpush2.msra.mxu0 %v352
      %504 = vmatprep.subr.mxu0 0.0
      %505 = vmatpush2.msra.mxu0 %v351
      %506 = vmatprep.mubr.f32.mxu0 %v282
      %507 = vmatmul.mubr.f32.gmra.mxu0 %v281
      %v508 = vpop.f32.mrf.mxu0
      %v509 = vadd.f32 %v381, %v508
      %v510 = vpop.f32.mrf.mxu0
      %511 = vmatprep.mubr.f32.mxu0 %v285
      %512 = vmatmul.mubr.f32.gmra.mxu0 %v284
      %v513 = vpop.f32.mrf.mxu0
      %v514 = vadd.f32 %v381, %v513
      %v515 = vpop.f32.mrf.mxu0
      %516 = vmatprep.mubr.f32.mxu0 %v288
      %517 = vmatmul.mubr.f32.gmra.mxu0 %v287
      %v518 = vpop.f32.mrf.mxu0
      %v519 = vadd.f32 %v381, %v518
      %v520 = vpop.f32.mrf.mxu0
      %521 = vmatprep.mubr.f32.mxu0 %v291
      %522 = vmatmul.mubr.f32.gmra.mxu0 %v290
      %v523 = vpop.f32.mrf.mxu0
      %v524 = vadd.f32 %v381, %v523
      %v525 = vpop.f32.mrf.mxu0
      %526 = vmatprep.mubr.f32.mxu0 %v294
      %527 = vmatmul.mubr.f32.gmra.mxu0 %v293
      %v528 = vpop.f32.mrf.mxu0
      %v529 = vadd.f32 %v381, %v528
      %v530 = vpop.f32.mrf.mxu0
      %531 = vmatprep.mubr.f32.mxu0 %v297
      %532 = vmatmul.mubr.f32.gmra.mxu0 %v296
      %v533 = vpop.f32.mrf.mxu0
      %v534 = vadd.f32 %v381, %v533
      %v535 = vpop.f32.mrf.mxu0
      %536 = vmatprep.mubr.f32.mxu0 %v300
      %537 = vmatmul.mubr.f32.gmra.mxu0 %v299
      %v538 = vpop.f32.mrf.mxu0
      %v539 = vadd.f32 %v381, %v538
      %v540 = vpop.f32.mrf.mxu0
      %541 = vmatprep.mubr.f32.mxu0 %v303
      %542 = vmatmul.mubr.f32.gmra.mxu0 %v302
      %v543 = vpop.f32.mrf.mxu0
      %v544 = vadd.f32 %v381, %v543
      %v545 = vpop.f32.mrf.mxu0
      %546 = vmatprep.mubr.f32.mxu0 %v306
      %547 = vmatmul.mubr.f32.gmra.mxu0 %v305
      %v548 = vpop.f32.mrf.mxu0
      %v549 = vadd.f32 %v381, %v548
      %v550 = vpop.f32.mrf.mxu0
      %551 = vmatprep.mubr.f32.mxu0 %v309
      %552 = vmatmul.mubr.f32.gmra.mxu0 %v308
      %v553 = vpop.f32.mrf.mxu0
      %v554 = vadd.f32 %v381, %v553
      %v555 = vpop.f32.mrf.mxu0
      %556 = vmatprep.mubr.f32.mxu0 %v312
      %557 = vmatmul.mubr.f32.gmra.mxu0 %v311
      %v558 = vpop.f32.mrf.mxu0
      %v559 = vadd.f32 %v381, %v558
      %v560 = vpop.f32.mrf.mxu0
      %561 = vmatprep.mubr.f32.mxu0 %v315
      %562 = vmatmul.mubr.f32.gmra.mxu0 %v314
      %v563 = vpop.f32.mrf.mxu0
      %v564 = vadd.f32 %v381, %v563
      %v565 = vpop.f32.mrf.mxu0
      %566 = vmatprep.mubr.f32.mxu0 %v318
      %567 = vmatmul.mubr.f32.gmra.mxu0 %v317
      %v568 = vpop.f32.mrf.mxu0
      %v569 = vadd.f32 %v381, %v568
      %v570 = vpop.f32.mrf.mxu0
      %571 = vmatprep.mubr.f32.mxu0 %v321
      %572 = vmatmul.mubr.f32.gmra.mxu0 %v320
      %v573 = vpop.f32.mrf.mxu0
      %v574 = vadd.f32 %v381, %v573
      %v575 = vpop.f32.mrf.mxu0
      %576 = vmatprep.mubr.f32.mxu0 %v324
      %577 = vmatmul.mubr.f32.gmra.mxu0 %v323
      %v578 = vpop.f32.mrf.mxu0
      %v579 = vadd.f32 %v381, %v578
      %v580 = vpop.f32.mrf.mxu0
      %581 = vmatprep.mubr.f32.mxu0 %v327
      %582 = vmatmul.mubr.f32.gmra.mxu0 %v326
      %v583 = vpop.f32.mrf.mxu0
      %v584 = vadd.f32 %v381, %v583
      %v585 = vpop.f32.mrf.mxu0
      %586 = vmatprep.mubr.f32.mxu0 %v330
      %587 = vmatmul.mubr.f32.gmra.mxu0 %v329
      %v588 = vpop.f32.mrf.mxu0
      %v589 = vadd.f32 %v381, %v588
      %v590 = vpop.f32.mrf.mxu0
      %591 = vmatprep.mubr.f32.mxu0 %v333
      %592 = vmatmul.mubr.f32.gmra.mxu0 %v332
      %v593 = vpop.f32.mrf.mxu0
      %v594 = vadd.f32 %v381, %v593
      %v595 = vpop.f32.mrf.mxu0
      %596 = vdwg.mxu0
      %597 = vmatprep.subr.mxu0 0.0
      %598 = vmatpush1.msra.mxu0 0.0
      %599 = vmatprep.subr.mxu0 0.0
      %600 = vmatpush1.msra.mxu0 0.0
      %601 = vmatprep.subr.mxu0 0.0
      %602 = vmatpush1.msra.mxu0 0.0
      %603 = vmatprep.subr.mxu0 0.0
      %604 = vmatpush1.msra.mxu0 0.0
      %605 = vmatprep.subr.mxu0 0.0
      %606 = vmatpush1.msra.mxu0 0.0
      %607 = vmatprep.subr.mxu0 0.0
      %608 = vmatpush1.msra.mxu0 0.0
      %609 = vmatprep.subr.mxu0 0.0
      %610 = vmatpush1.msra.mxu0 0.0
      %611 = vmatprep.subr.mxu0 0.0
      %612 = vmatpush1.msra.mxu0 %v440
      %613 = vmatprep.subr.mxu0 0.0
      %614 = vmatpush1.msra.mxu0 %v374
      %615 = vmatprep.subr.mxu0 0.0
      %616 = vmatpush1.msra.mxu0 %v373
      %617 = vmatprep.subr.mxu0 0.0
      %618 = vmatpush1.msra.mxu0 %v372
      %619 = vmatprep.subr.mxu0 0.0
      %620 = vmatpush1.msra.mxu0 %v371
      %621 = vmatprep.subr.mxu0 0.0
      %622 = vmatpush1.msra.mxu0 %v370
      %623 = vmatprep.subr.mxu0 0.0
      %624 = vmatpush1.msra.mxu0 %v369
      %625 = vmatprep.subr.mxu0 0.0
      %626 = vmatpush1.msra.mxu0 %v368
      %627 = vmatprep.subr.mxu0 0.0
      %628 = vmatpush1.msra.mxu0 %v367
      %629 = vmatprep.subr.mxu0 0.0
      %630 = vmatpush2.msra.mxu0 0.0
      %631 = vmatprep.subr.mxu0 0.0
      %632 = vmatpush2.msra.mxu0 0.0
      %633 = vmatprep.subr.mxu0 0.0
      %634 = vmatpush2.msra.mxu0 0.0
      %635 = vmatprep.subr.mxu0 0.0
      %636 = vmatpush2.msra.mxu0 0.0
      %637 = vmatprep.subr.mxu0 0.0
      %638 = vmatpush2.msra.mxu0 0.0
      %639 = vmatprep.subr.mxu0 0.0
      %640 = vmatpush2.msra.mxu0 0.0
      %641 = vmatprep.subr.mxu0 0.0
      %642 = vmatpush2.msra.mxu0 0.0
      %643 = vmatprep.subr.mxu0 0.0
      %644 = vmatpush2.msra.mxu0 0.0
      %645 = vmatprep.subr.mxu0 0.0
      %646 = vmatpush2.msra.mxu0 0.0
      %647 = vmatprep.subr.mxu0 0.0
      %648 = vmatpush2.msra.mxu0 0.0
      %649 = vmatprep.subr.mxu0 0.0
      %650 = vmatpush2.msra.mxu0 0.0
      %651 = vmatprep.subr.mxu0 0.0
      %652 = vmatpush2.msra.mxu0 0.0
      %653 = vmatprep.subr.mxu0 0.0
      %654 = vmatpush2.msra.mxu0 0.0
      %655 = vmatprep.subr.mxu0 0.0
      %656 = vmatpush2.msra.mxu0 0.0
      %657 = vmatprep.subr.mxu0 0.0
      %658 = vmatpush2.msra.mxu0 0.0
      %659 = vmatprep.subr.mxu0 0.0
      %660 = vmatpush2.msra.mxu0 0.0
      %661 = vmatprep.mubr.f32.mxu0 0.0
      %662 = vmatmul.mubr.f32.gmra.mxu0 %v385
      %v663 = vpop.f32.mrf.mxu0
      %v664 = vadd.f32 %v509, %v663
      %v665 = vpop.f32.mrf.mxu0
      %666 = vmatprep.mubr.f32.mxu0 0.0
      %667 = vmatmul.mubr.f32.gmra.mxu0 %v388
      %v668 = vpop.f32.mrf.mxu0
      %v669 = vadd.f32 %v514, %v668
      %v670 = vpop.f32.mrf.mxu0
      %671 = vmatprep.mubr.f32.mxu0 0.0
      %672 = vmatmul.mubr.f32.gmra.mxu0 %v391
      %v673 = vpop.f32.mrf.mxu0
      %v674 = vadd.f32 %v519, %v673
      %v675 = vpop.f32.mrf.mxu0
      %676 = vmatprep.mubr.f32.mxu0 0.0
      %677 = vmatmul.mubr.f32.gmra.mxu0 %v394
      %v678 = vpop.f32.mrf.mxu0
      %v679 = vadd.f32 %v524, %v678
      %v680 = vpop.f32.mrf.mxu0
      %681 = vmatprep.mubr.f32.mxu0 0.0
      %682 = vmatmul.mubr.f32.gmra.mxu0 %v397
      %v683 = vpop.f32.mrf.mxu0
      %v684 = vadd.f32 %v529, %v683
      %v685 = vpop.f32.mrf.mxu0
      %686 = vmatprep.mubr.f32.mxu0 0.0
      %687 = vmatmul.mubr.f32.gmra.mxu0 %v400
      %v688 = vpop.f32.mrf.mxu0
      %v689 = vadd.f32 %v534, %v688
      %v690 = vpop.f32.mrf.mxu0
      %691 = vmatprep.mubr.f32.mxu0 0.0
      %692 = vmatmul.mubr.f32.gmra.mxu0 %v403
      %v693 = vpop.f32.mrf.mxu0
      %v694 = vadd.f32 %v539, %v693
      %v695 = vpop.f32.mrf.mxu0
      %696 = vmatprep.mubr.f32.mxu0 0.0
      %697 = vmatmul.mubr.f32.gmra.mxu0 %v406
      %v698 = vpop.f32.mrf.mxu0
      %v699 = vadd.f32 %v544, %v698
      %v700 = vpop.f32.mrf.mxu0
      %701 = vmatprep.mubr.f32.mxu0 0.0
      %702 = vmatmul.mubr.f32.gmra.mxu0 %v409
      %v703 = vpop.f32.mrf.mxu0
      %v704 = vadd.f32 %v549, %v703
      %v705 = vpop.f32.mrf.mxu0
      %706 = vmatprep.mubr.f32.mxu0 0.0
      %707 = vmatmul.mubr.f32.gmra.mxu0 %v412
      %v708 = vpop.f32.mrf.mxu0
      %v709 = vadd.f32 %v554, %v708
      %v710 = vpop.f32.mrf.mxu0
      %711 = vmatprep.mubr.f32.mxu0 0.0
      %712 = vmatmul.mubr.f32.gmra.mxu0 %v415
      %v713 = vpop.f32.mrf.mxu0
      %v714 = vadd.f32 %v559, %v713
      %v715 = vpop.f32.mrf.mxu0
      %716 = vmatprep.mubr.f32.mxu0 0.0
      %717 = vmatmul.mubr.f32.gmra.mxu0 %v418
      %v718 = vpop.f32.mrf.mxu0
      %v719 = vadd.f32 %v564, %v718
      %v720 = vpop.f32.mrf.mxu0
      %721 = vmatprep.mubr.f32.mxu0 0.0
      %722 = vmatmul.mubr.f32.gmra.mxu0 %v421
      %v723 = vpop.f32.mrf.mxu0
      %v724 = vadd.f32 %v569, %v723
      %v725 = vpop.f32.mrf.mxu0
      %726 = vmatprep.mubr.f32.mxu0 0.0
      %727 = vmatmul.mubr.f32.gmra.mxu0 %v424
      %v728 = vpop.f32.mrf.mxu0
      %v729 = vadd.f32 %v574, %v728
      %v730 = vpop.f32.mrf.mxu0
      %731 = vmatprep.mubr.f32.mxu0 0.0
      %732 = vmatmul.mubr.f32.gmra.mxu0 %v427
      %v733 = vpop.f32.mrf.mxu0
      %v734 = vadd.f32 %v579, %v733
      %v735 = vpop.f32.mrf.mxu0
      %736 = vmatprep.mubr.f32.mxu0 0.0
      %737 = vmatmul.mubr.f32.gmra.mxu0 %v430
      %v738 = vpop.f32.mrf.mxu0
      %v739 = vadd.f32 %v584, %v738
      %v740 = vpop.f32.mrf.mxu0
      %741 = vmatprep.mubr.f32.mxu0 0.0
      %742 = vmatmul.mubr.f32.gmra.mxu0 %v433
      %v743 = vpop.f32.mrf.mxu0
      %v744 = vadd.f32 %v589, %v743
      %v745 = vpop.f32.mrf.mxu0
      %746 = vmatprep.mubr.f32.mxu0 0.0
      %747 = vmatmul.mubr.f32.gmra.mxu0 %v436
      %v748 = vpop.f32.mrf.mxu0
      %v749 = vadd.f32 %v594, %v748
      %v750 = vpop.f32.mrf.mxu0
      %751 = vdwg.mxu0
      %v752 = vmax.f32 %v664, 0.0
      %v753 = vmax.f32 %v669, 0.0
      %v754 = vmax.f32 %v674, 0.0
      %v755 = vmax.f32 %v679, 0.0
      %v756 = vmax.f32 %v684, 0.0
      %v757 = vmax.f32 %v689, 0.0
      %v758 = vmax.f32 %v694, 0.0
      %v759 = vmax.f32 %v699, 0.0
      %v760 = vmax.f32 %v704, 0.0
      %v761 = vmax.f32 %v709, 0.0
      %v762 = vmax.f32 %v714, 0.0
      %v763 = vmax.f32 %v719, 0.0
      %v764 = vmax.f32 %v724, 0.0
      %v765 = vmax.f32 %v729, 0.0
      %v766 = vmax.f32 %v734, 0.0
      %v767 = vmax.f32 %v739, 0.0
      %v768 = vmax.f32 %v744, 0.0
      %v769 = vmax.f32 %v749, 0.0
      %v770 = vld [vmem:[%s3] sm:$0xff]
      %v771 = vld [vmem:[%s3 + $0x8] sm:$0xff]
      %v772 = vld [vmem:[%s3 + $0x10] sm:$0xff]
      %v773 = vld [vmem:[%s3 + $0x18] sm:$0xff]
      %v774 = vld [vmem:[%s3 + $0x20] sm:$0xff]
      %v775 = vld [vmem:[%s3 + $0x28] sm:$0xff]
      %v776 = vld [vmem:[%s3 + $0x30] sm:$0xff]
      %v777 = vld [vmem:[%s3 + $0x38] sm:$0xff]
      %v778 = vld [vmem:[%s4] sm:$0x1]
      %v780 = vlaneseq
      %v781 = vshrl.u32 %v780, 7
      %v782 = vsub.s32 0, %v781
      %v783 = vrot.slane %v778, %v782
      %vm785 = vcmask 523264
      %v787 = vsel %vm785, %v752, 0
      %v790 = vsel %vm785, %v753, 0
      %v793 = vsel %vm785, %v754, 0
      %v796 = vsel %vm785, %v755, 0
      %v799 = vsel %vm785, %v756, 0
      %v802 = vsel %vm785, %v757, 0
      %v805 = vsel %vm785, %v758, 0
      %v808 = vsel %vm785, %v759, 0
      %v811 = vsel %vm785, %v760, 0
      %v814 = vsel %vm785, %v761, 0
      %v817 = vsel %vm785, %v762, 0
      %v820 = vsel %vm785, %v763, 0
      %v823 = vsel %vm785, %v764, 0
      %v826 = vsel %vm785, %v765, 0
      %v829 = vsel %vm785, %v766, 0
      %v832 = vsel %vm785, %v767, 0
      %v835 = vsel %vm785, %v768, 0
      %v838 = vsel %vm785, %v769, 0
      %840 = vmatprep.subr.mxu0 0.0
      %841 = vmatpush1.msra.mxu0 0.0
      %842 = vmatprep.subr.mxu0 0.0
      %843 = vmatpush1.msra.mxu0 0.0
      %844 = vmatprep.subr.mxu0 0.0
      %845 = vmatpush1.msra.mxu0 0.0
      %846 = vmatprep.subr.mxu0 0.0
      %847 = vmatpush1.msra.mxu0 0.0
      %848 = vmatprep.subr.mxu0 0.0
      %849 = vmatpush1.msra.mxu0 0.0
      %850 = vmatprep.subr.mxu0 0.0
      %851 = vmatpush1.msra.mxu0 0.0
      %852 = vmatprep.subr.mxu0 0.0
      %853 = vmatpush1.msra.mxu0 0.0
      %854 = vmatprep.subr.mxu0 0.0
      %855 = vmatpush1.msra.mxu0 0.0
      %856 = vmatprep.subr.mxu0 0.0
      %857 = vmatpush1.msra.mxu0 %v777
      %858 = vmatprep.subr.mxu0 0.0
      %859 = vmatpush1.msra.mxu0 %v776
      %860 = vmatprep.subr.mxu0 0.0
      %861 = vmatpush1.msra.mxu0 %v775
      %862 = vmatprep.subr.mxu0 0.0
      %863 = vmatpush1.msra.mxu0 %v774
      %864 = vmatprep.subr.mxu0 0.0
      %865 = vmatpush1.msra.mxu0 %v773
      %866 = vmatprep.subr.mxu0 0.0
      %867 = vmatpush1.msra.mxu0 %v772
      %868 = vmatprep.subr.mxu0 0.0
      %869 = vmatpush1.msra.mxu0 %v771
      %870 = vmatprep.subr.mxu0 0.0
      %871 = vmatpush1.msra.mxu0 %v770
      %872 = vmatprep.subr.mxu0 0.0
      %873 = vmatpush2.msra.mxu0 0.0
      %874 = vmatprep.subr.mxu0 0.0
      %875 = vmatpush2.msra.mxu0 0.0
      %876 = vmatprep.subr.mxu0 0.0
      %877 = vmatpush2.msra.mxu0 0.0
      %878 = vmatprep.subr.mxu0 0.0
      %879 = vmatpush2.msra.mxu0 0.0
      %880 = vmatprep.subr.mxu0 0.0
      %881 = vmatpush2.msra.mxu0 0.0
      %882 = vmatprep.subr.mxu0 0.0
      %883 = vmatpush2.msra.mxu0 0.0
      %884 = vmatprep.subr.mxu0 0.0
      %885 = vmatpush2.msra.mxu0 0.0
      %886 = vmatprep.subr.mxu0 0.0
      %887 = vmatpush2.msra.mxu0 0.0
      %888 = vmatprep.subr.mxu0 0.0
      %889 = vmatpush2.msra.mxu0 0.0
      %890 = vmatprep.subr.mxu0 0.0
      %891 = vmatpush2.msra.mxu0 0.0
      %892 = vmatprep.subr.mxu0 0.0
      %893 = vmatpush2.msra.mxu0 0.0
      %894 = vmatprep.subr.mxu0 0.0
      %895 = vmatpush2.msra.mxu0 0.0
      %896 = vmatprep.subr.mxu0 0.0
      %897 = vmatpush2.msra.mxu0 0.0
      %898 = vmatprep.subr.mxu0 0.0
      %899 = vmatpush2.msra.mxu0 0.0
      %900 = vmatprep.subr.mxu0 0.0
      %901 = vmatpush2.msra.mxu0 0.0
      %902 = vmatprep.subr.mxu0 0.0
      %903 = vmatpush2.msra.mxu0 0.0
      %904 = vmatprep.mubr.f32.mxu0 0.0
      %905 = vmatmul.mubr.f32.gmra.mxu0 %v787
      %v906 = vpop.f32.mrf.mxu0
      %v907 = vadd.f32 %v783, %v906
      %v908 = vpop.f32.mrf.mxu0
      %909 = vmatprep.mubr.f32.mxu0 0.0
      %910 = vmatmul.mubr.f32.gmra.mxu0 %v790
      %v911 = vpop.f32.mrf.mxu0
      %v912 = vadd.f32 %v783, %v911
      %v913 = vpop.f32.mrf.mxu0
      %914 = vmatprep.mubr.f32.mxu0 0.0
      %915 = vmatmul.mubr.f32.gmra.mxu0 %v793
      %v916 = vpop.f32.mrf.mxu0
      %v917 = vadd.f32 %v783, %v916
      %v918 = vpop.f32.mrf.mxu0
      %919 = vmatprep.mubr.f32.mxu0 0.0
      %920 = vmatmul.mubr.f32.gmra.mxu0 %v796
      %v921 = vpop.f32.mrf.mxu0
      %v922 = vadd.f32 %v783, %v921
      %v923 = vpop.f32.mrf.mxu0
      %924 = vmatprep.mubr.f32.mxu0 0.0
      %925 = vmatmul.mubr.f32.gmra.mxu0 %v799
      %v926 = vpop.f32.mrf.mxu0
      %v927 = vadd.f32 %v783, %v926
      %v928 = vpop.f32.mrf.mxu0
      %929 = vmatprep.mubr.f32.mxu0 0.0
      %930 = vmatmul.mubr.f32.gmra.mxu0 %v802
      %v931 = vpop.f32.mrf.mxu0
      %v932 = vadd.f32 %v783, %v931
      %v933 = vpop.f32.mrf.mxu0
      %934 = vmatprep.mubr.f32.mxu0 0.0
      %935 = vmatmul.mubr.f32.gmra.mxu0 %v805
      %v936 = vpop.f32.mrf.mxu0
      %v937 = vadd.f32 %v783, %v936
      %v938 = vpop.f32.mrf.mxu0
      %939 = vmatprep.mubr.f32.mxu0 0.0
      %940 = vmatmul.mubr.f32.gmra.mxu0 %v808
      %v941 = vpop.f32.mrf.mxu0
      %v942 = vadd.f32 %v783, %v941
      %v943 = vpop.f32.mrf.mxu0
      %944 = vmatprep.mubr.f32.mxu0 0.0
      %945 = vmatmul.mubr.f32.gmra.mxu0 %v811
      %v946 = vpop.f32.mrf.mxu0
      %v947 = vadd.f32 %v783, %v946
      %v948 = vpop.f32.mrf.mxu0
      %949 = vmatprep.mubr.f32.mxu0 0.0
      %950 = vmatmul.mubr.f32.gmra.mxu0 %v814
      %v951 = vpop.f32.mrf.mxu0
      %v952 = vadd.f32 %v783, %v951
      %v953 = vpop.f32.mrf.mxu0
      %954 = vmatprep.mubr.f32.mxu0 0.0
      %955 = vmatmul.mubr.f32.gmra.mxu0 %v817
      %v956 = vpop.f32.mrf.mxu0
      %v957 = vadd.f32 %v783, %v956
      %v958 = vpop.f32.mrf.mxu0
      %959 = vmatprep.mubr.f32.mxu0 0.0
      %960 = vmatmul.mubr.f32.gmra.mxu0 %v820
      %v961 = vpop.f32.mrf.mxu0
      %v962 = vadd.f32 %v783, %v961
      %v963 = vpop.f32.mrf.mxu0
      %964 = vmatprep.mubr.f32.mxu0 0.0
      %965 = vmatmul.mubr.f32.gmra.mxu0 %v823
      %v966 = vpop.f32.mrf.mxu0
      %v967 = vadd.f32 %v783, %v966
      %v968 = vpop.f32.mrf.mxu0
      %969 = vmatprep.mubr.f32.mxu0 0.0
      %970 = vmatmul.mubr.f32.gmra.mxu0 %v826
      %v971 = vpop.f32.mrf.mxu0
      %v972 = vadd.f32 %v783, %v971
      %v973 = vpop.f32.mrf.mxu0
      %974 = vmatprep.mubr.f32.mxu0 0.0
      %975 = vmatmul.mubr.f32.gmra.mxu0 %v829
      %v976 = vpop.f32.mrf.mxu0
      %v977 = vadd.f32 %v783, %v976
      %v978 = vpop.f32.mrf.mxu0
      %979 = vmatprep.mubr.f32.mxu0 0.0
      %980 = vmatmul.mubr.f32.gmra.mxu0 %v832
      %v981 = vpop.f32.mrf.mxu0
      %v982 = vadd.f32 %v783, %v981
      %v983 = vpop.f32.mrf.mxu0
      %984 = vmatprep.mubr.f32.mxu0 0.0
      %985 = vmatmul.mubr.f32.gmra.mxu0 %v835
      %v986 = vpop.f32.mrf.mxu0
      %v987 = vadd.f32 %v783, %v986
      %v988 = vpop.f32.mrf.mxu0
      %989 = vmatprep.mubr.f32.mxu0 0.0
      %990 = vmatmul.mubr.f32.gmra.mxu0 %v838
      %v991 = vpop.f32.mrf.mxu0
      %v992 = vadd.f32 %v783, %v991
      %v993 = vpop.f32.mrf.mxu0
      %994 = vdwg.mxu0
      %v995 = vmax.f32 %v907, 0.0
      %v996 = vmax.f32 %v912, 0.0
      %v997 = vmax.f32 %v917, 0.0
      %v998 = vmax.f32 %v922, 0.0
      %v999 = vmax.f32 %v927, 0.0
      %v1000 = vmax.f32 %v932, 0.0
      %v1001 = vmax.f32 %v937, 0.0
      %v1002 = vmax.f32 %v942, 0.0
      %v1003 = vmax.f32 %v947, 0.0
      %v1004 = vmax.f32 %v952, 0.0
      %v1005 = vmax.f32 %v957, 0.0
      %v1006 = vmax.f32 %v962, 0.0
      %v1007 = vmax.f32 %v967, 0.0
      %v1008 = vmax.f32 %v972, 0.0
      %v1009 = vmax.f32 %v977, 0.0
      %v1010 = vmax.f32 %v982, 0.0
      %v1011 = vmax.f32 %v987, 0.0
      %v1012 = vmax.f32 %v992, 0.0
      %s1013 = scalar_lea.vmem [#allocation2], 96
      %vm1014 = vcmask 261120
      %1015 = vst.msk [vmem:[%s1013 + $0x4] sm:$0xff] %vm1014, %v995
      %vm1016 = vcmask 257024
      %1017 = vst.msk [vmem:[%s1013 + $0xc] sm:$0xf] %vm1016, %v996
      %s1018 = scalar_lea.vmem [#allocation2], 120
      %vm1019 = vcmask 261124
      %1020 = vst.msk [vmem:[%s1018] sm:$0xf0] %vm1019, %v996
      %1021 = vst.msk [vmem:[%s1018 + $0x8] sm:$0xff] %vm1014, %v997
      %s1022 = scalar_lea.vmem [#allocation2], 144
      %1023 = vst.msk [vmem:[%s1022 + $0x4] sm:$0xff] %vm1014, %v998
      %1024 = vst.msk [vmem:[%s1022 + $0xc] sm:$0xf] %vm1016, %v999
      %s1025 = scalar_lea.vmem [#allocation2], 168
      %1026 = vst.msk [vmem:[%s1025] sm:$0xf0] %vm1019, %v999
      %1027 = vst.msk [vmem:[%s1025 + $0x8] sm:$0xff] %vm1014, %v1000
      %s1028 = scalar_lea.vmem [#allocation2], 192
      %1029 = vst.msk [vmem:[%s1028 + $0x4] sm:$0xff] %vm1014, %v1001
      %1030 = vst.msk [vmem:[%s1028 + $0xc] sm:$0xf] %vm1016, %v1002
      %s1031 = scalar_lea.vmem [#allocation2], 216
      %1032 = vst.msk [vmem:[%s1031] sm:$0xf0] %vm1019, %v1002
      %1033 = vst.msk [vmem:[%s1031 + $0x8] sm:$0xff] %vm1014, %v1003
      %s1034 = scalar_lea.vmem [#allocation2], 240
      %1035 = vst.msk [vmem:[%s1034 + $0x4] sm:$0xff] %vm1014, %v1004
      %1036 = vst.msk [vmem:[%s1034 + $0xc] sm:$0xf] %vm1016, %v1005
      %s1037 = scalar_lea.vmem [#allocation2], 264
      %1038 = vst.msk [vmem:[%s1037] sm:$0xf0] %vm1019, %v1005
      %1039 = vst.msk [vmem:[%s1037 + $0x8] sm:$0xff] %vm1014, %v1006
      %s1040 = scalar_lea.vmem [#allocation2], 288
      %1041 = vst.msk [vmem:[%s1040 + $0x4] sm:$0xff] %vm1014, %v1007
      %1042 = vst.msk [vmem:[%s1040 + $0xc] sm:$0xf] %vm1016, %v1008
      %s1043 = scalar_lea.vmem [#allocation2], 312
      %1044 = vst.msk [vmem:[%s1043] sm:$0xf0] %vm1019, %v1008
      %1045 = vst.msk [vmem:[%s1043 + $0x8] sm:$0xff] %vm1014, %v1009
      %s1046 = scalar_lea.vmem [#allocation2], 336
      %1047 = vst.msk [vmem:[%s1046 + $0x4] sm:$0xff] %vm1014, %v1010
      %1048 = vst.msk [vmem:[%s1046 + $0xc] sm:$0xf] %vm1016, %v1011
      %s1049 = scalar_lea.vmem [#allocation2], 360
      %1050 = vst.msk [vmem:[%s1049] sm:$0xf0] %vm1019, %v1011
      %1051 = vst.msk [vmem:[%s1049 + $0x8] sm:$0xff] %vm1014, %v1012
      %v1052 = vld [vmem:[%s1013 + $0x4] sm:$0x1]
      %v1053 = vld [vmem:[%s1013 + $0x1c] sm:$0x1]
      %v1054 = vld [vmem:[%s1013 + $0x34] sm:$0x1]
      %v1055 = vld [vmem:[%s1013 + $0x4c] sm:$0x1]
      %v1056 = vld [vmem:[%s1013 + $0x64] sm:$0x1]
      %v1057 = vld [vmem:[%s1013 + $0x7c] sm:$0x1]
      %v1058 = vld [vmem:[%s1013 + $0x94] sm:$0x1]
      %v1059 = vld [vmem:[%s1013 + $0xac] sm:$0x1]
      %v1060 = vld [vmem:[%s1013 + $0xc4] sm:$0x1]
      %v1061 = vld [vmem:[%s1013 + $0xdc] sm:$0x1]
      %v1062 = vld [vmem:[%s1013 + $0xf4] sm:$0x1]
      %v1063 = vld [vmem:[%s1013 + $0x10c] sm:$0x1]
      %v1064 = vlaneseq
      %v1065 = vshrl.u32 %v1064, 7
      %v1066 = vsub.s32 0, %v1065
      %v1067 = vrot.slane %v1052, %v1066
      %v1068 = vlaneseq
      %v1069 = vshrl.u32 %v1068, 7
      %v1070 = vsub.s32 0, %v1069
      %v1071 = vrot.slane %v1053, %v1070
      %v1072 = vlaneseq
      %v1073 = vshrl.u32 %v1072, 7
      %v1074 = vsub.s32 0, %v1073
      %v1075 = vrot.slane %v1054, %v1074
      %v1076 = vlaneseq
      %v1077 = vshrl.u32 %v1076, 7
      %v1078 = vsub.s32 0, %v1077
      %v1079 = vrot.slane %v1055, %v1078
      %v1080 = vlaneseq
      %v1081 = vshrl.u32 %v1080, 7
      %v1082 = vsub.s32 0, %v1081
      %v1083 = vrot.slane %v1056, %v1082
      %v1084 = vlaneseq
      %v1085 = vshrl.u32 %v1084, 7
      %v1086 = vsub.s32 0, %v1085
      %v1087 = vrot.slane %v1057, %v1086
      %v1088 = vlaneseq
      %v1089 = vshrl.u32 %v1088, 7
      %v1090 = vsub.s32 0, %v1089
      %v1091 = vrot.slane %v1058, %v1090
      %v1092 = vlaneseq
      %v1093 = vshrl.u32 %v1092, 7
      %v1094 = vsub.s32 0, %v1093
      %v1095 = vrot.slane %v1059, %v1094
      %v1096 = vlaneseq
      %v1097 = vshrl.u32 %v1096, 7
      %v1098 = vsub.s32 0, %v1097
      %v1099 = vrot.slane %v1060, %v1098
      %v1100 = vlaneseq
      %v1101 = vshrl.u32 %v1100, 7
      %v1102 = vsub.s32 0, %v1101
      %v1103 = vrot.slane %v1061, %v1102
      %v1104 = vlaneseq
      %v1105 = vshrl.u32 %v1104, 7
      %v1106 = vsub.s32 0, %v1105
      %v1107 = vrot.slane %v1062, %v1106
      %v1108 = vlaneseq
      %v1109 = vshrl.u32 %v1108, 7
      %v1110 = vsub.s32 0, %v1109
      %v1111 = vrot.slane %v1063, %v1110
      %1112 = vst.msk [vmem:[%s1013] sm:$0xf] %vm1016, %v1067
      %1113 = vst.msk [vmem:[%s1013 + $0x18] sm:$0xf] %vm1016, %v1071
      %1114 = vst.msk [vmem:[%s1013 + $0x30] sm:$0xf] %vm1016, %v1075
      %1115 = vst.msk [vmem:[%s1013 + $0x48] sm:$0xf] %vm1016, %v1079
      %1116 = vst.msk [vmem:[%s1013 + $0x60] sm:$0xf] %vm1016, %v1083
      %1117 = vst.msk [vmem:[%s1013 + $0x78] sm:$0xf] %vm1016, %v1087
      %1118 = vst.msk [vmem:[%s1013 + $0x90] sm:$0xf] %vm1016, %v1091
      %1119 = vst.msk [vmem:[%s1013 + $0xa8] sm:$0xf] %vm1016, %v1095
      %1120 = vst.msk [vmem:[%s1013 + $0xc0] sm:$0xf] %vm1016, %v1099
      %1121 = vst.msk [vmem:[%s1013 + $0xd8] sm:$0xf] %vm1016, %v1103
      %1122 = vst.msk [vmem:[%s1013 + $0xf0] sm:$0xf] %vm1016, %v1107
      %1123 = vst.msk [vmem:[%s1013 + $0x108] sm:$0xf] %vm1016, %v1111
      %v1124 = vld [vmem:[%s1013 + $0xf] sm:$0x1]
      %v1125 = vld [vmem:[%s1013 + $0x27] sm:$0x1]
      %v1126 = vld [vmem:[%s1013 + $0x3f] sm:$0x1]
      %v1127 = vld [vmem:[%s1013 + $0x57] sm:$0x1]
      %v1128 = vld [vmem:[%s1013 + $0x6f] sm:$0x1]
      %v1129 = vld [vmem:[%s1013 + $0x87] sm:$0x1]
      %v1130 = vld [vmem:[%s1013 + $0x9f] sm:$0x1]
      %v1131 = vld [vmem:[%s1013 + $0xb7] sm:$0x1]
      %v1132 = vld [vmem:[%s1013 + $0xcf] sm:$0x1]
      %v1133 = vld [vmem:[%s1013 + $0xe7] sm:$0x1]
      %v1134 = vld [vmem:[%s1013 + $0xff] sm:$0x1]
      %v1135 = vld [vmem:[%s1013 + $0x117] sm:$0x1]
      %v1136 = vlaneseq
      %v1137 = vshrl.u32 %v1136, 7
      %v1138 = vsub.s32 0, %v1137
      %v1139 = vrot.slane %v1124, %v1138
      %v1140 = vlaneseq
      %v1141 = vshrl.u32 %v1140, 7
      %v1142 = vsub.s32 0, %v1141
      %v1143 = vrot.slane %v1125, %v1142
      %v1144 = vlaneseq
      %v1145 = vshrl.u32 %v1144, 7
      %v1146 = vsub.s32 0, %v1145
      %v1147 = vrot.slane %v1126, %v1146
      %v1148 = vlaneseq
      %v1149 = vshrl.u32 %v1148, 7
      %v1150 = vsub.s32 0, %v1149
      %v1151 = vrot.slane %v1127, %v1150
      %v1152 = vlaneseq
      %v1153 = vshrl.u32 %v1152, 7
      %v1154 = vsub.s32 0, %v1153
      %v1155 = vrot.slane %v1128, %v1154
      %v1156 = vlaneseq
      %v1157 = vshrl.u32 %v1156, 7
      %v1158 = vsub.s32 0, %v1157
      %v1159 = vrot.slane %v1129, %v1158
      %v1160 = vlaneseq
      %v1161 = vshrl.u32 %v1160, 7
      %v1162 = vsub.s32 0, %v1161
      %v1163 = vrot.slane %v1130, %v1162
      %v1164 = vlaneseq
      %v1165 = vshrl.u32 %v1164, 7
      %v1166 = vsub.s32 0, %v1165
      %v1167 = vrot.slane %v1131, %v1166
      %v1168 = vlaneseq
      %v1169 = vshrl.u32 %v1168, 7
      %v1170 = vsub.s32 0, %v1169
      %v1171 = vrot.slane %v1132, %v1170
      %v1172 = vlaneseq
      %v1173 = vshrl.u32 %v1172, 7
      %v1174 = vsub.s32 0, %v1173
      %v1175 = vrot.slane %v1133, %v1174
      %v1176 = vlaneseq
      %v1177 = vshrl.u32 %v1176, 7
      %v1178 = vsub.s32 0, %v1177
      %v1179 = vrot.slane %v1134, %v1178
      %v1180 = vlaneseq
      %v1181 = vshrl.u32 %v1180, 7
      %v1182 = vsub.s32 0, %v1181
      %v1183 = vrot.slane %v1135, %v1182
      %1184 = vst.msk [vmem:[%s1013 + $0x10] sm:$0xf] %vm1016, %v1139
      %1185 = vst.msk [vmem:[%s1013 + $0x28] sm:$0xf] %vm1016, %v1143
      %1186 = vst.msk [vmem:[%s1013 + $0x40] sm:$0xf] %vm1016, %v1147
      %1187 = vst.msk [vmem:[%s1013 + $0x58] sm:$0xf] %vm1016, %v1151
      %1188 = vst.msk [vmem:[%s1013 + $0x70] sm:$0xf] %vm1016, %v1155
      %1189 = vst.msk [vmem:[%s1013 + $0x88] sm:$0xf] %vm1016, %v1159
      %1190 = vst.msk [vmem:[%s1013 + $0xa0] sm:$0xf] %vm1016, %v1163
      %1191 = vst.msk [vmem:[%s1013 + $0xb8] sm:$0xf] %vm1016, %v1167
      %1192 = vst.msk [vmem:[%s1013 + $0xd0] sm:$0xf] %vm1016, %v1171
      %1193 = vst.msk [vmem:[%s1013 + $0xe8] sm:$0xf] %vm1016, %v1175
      %1194 = vst.msk [vmem:[%s1013 + $0x100] sm:$0xf] %vm1016, %v1179
      %1195 = vst.msk [vmem:[%s1013 + $0x118] sm:$0xf] %vm1016, %v1183
      %v1196 = vld [vmem:[%s1013] sm:$0xff]
      %v1197 = vld [vmem:[%s1013 + $0x8] sm:$0xff]
      %v1198 = vld [vmem:[%s1013 + $0x10] sm:$0xf]
      %1199 = vst.msk [vmem:[#allocation2] sm:$0xff] %vm1014, %v1196
      %1200 = vst.msk [vmem:[#allocation2 + $0x8] sm:$0xff] %vm1014, %v1197
      %1201 = vst.msk [vmem:[#allocation2 + $0x10] sm:$0xf] %vm1016, %v1198
      %1202 = vst.msk [vmem:[#allocation2 + $0x18] sm:$0xff] %vm1014, %v1196
      %1203 = vst.msk [vmem:[#allocation2 + $0x20] sm:$0xff] %vm1014, %v1197
      %1204 = vst.msk [vmem:[#allocation2 + $0x28] sm:$0xf] %vm1016, %v1198
      %1205 = vst.msk [vmem:[#allocation2 + $0x30] sm:$0xff] %vm1014, %v1196
      %1206 = vst.msk [vmem:[#allocation2 + $0x38] sm:$0xff] %vm1014, %v1197
      %1207 = vst.msk [vmem:[#allocation2 + $0x40] sm:$0xf] %vm1016, %v1198
      %1208 = vst.msk [vmem:[#allocation2 + $0x48] sm:$0xff] %vm1014, %v1196
      %1209 = vst.msk [vmem:[#allocation2 + $0x50] sm:$0xff] %vm1014, %v1197
      %1210 = vst.msk [vmem:[#allocation2 + $0x58] sm:$0xf] %vm1016, %v1198
      %v1211 = vld [vmem:[%s1049] sm:$0xff]
      %v1212 = vld [vmem:[%s1049 + $0x8] sm:$0xff]
      %v1213 = vld [vmem:[%s1049 + $0x10] sm:$0xf]
      %s1214 = scalar_lea.vmem [#allocation2], 384
      %1215 = vst.msk [vmem:[%s1214] sm:$0xff] %vm1014, %v1211
      %1216 = vst.msk [vmem:[%s1214 + $0x8] sm:$0xff] %vm1014, %v1212
      %1217 = vst.msk [vmem:[%s1214 + $0x10] sm:$0xf] %vm1016, %v1213
      %1218 = vst.msk [vmem:[%s1214 + $0x18] sm:$0xff] %vm1014, %v1211
      %1219 = vst.msk [vmem:[%s1214 + $0x20] sm:$0xff] %vm1014, %v1212
      %1220 = vst.msk [vmem:[%s1214 + $0x28] sm:$0xf] %vm1016, %v1213
      %1221 = vst.msk [vmem:[%s1214 + $0x30] sm:$0xff] %vm1014, %v1211
      %1222 = vst.msk [vmem:[%s1214 + $0x38] sm:$0xff] %vm1014, %v1212
      %1223 = vst.msk [vmem:[%s1214 + $0x40] sm:$0xf] %vm1016, %v1213
      %1224 = vst.msk [vmem:[%s1214 + $0x48] sm:$0xff] %vm1014, %v1211
      %1225 = vst.msk [vmem:[%s1214 + $0x50] sm:$0xff] %vm1014, %v1212
      %1226 = vst.msk [vmem:[%s1214 + $0x58] sm:$0xf] %vm1016, %v1213
      %v1227 = vld [vmem:[#allocation2] sm:$0xff]
      %v1228 = vld [vmem:[#allocation2 + $0x8] sm:$0xff]
      %v1229 = vld [vmem:[#allocation2 + $0x18] sm:$0xff]
      %v1230 = vld [vmem:[#allocation2 + $0x20] sm:$0xff]
      %v1231 = vld [vmem:[#allocation2 + $0x30] sm:$0xff]
      %v1232 = vld [vmem:[#allocation2 + $0x38] sm:$0xff]
      %v1233 = vld [vmem:[#allocation2 + $0x48] sm:$0xff]
      %v1234 = vld [vmem:[#allocation2 + $0x50] sm:$0xff]
      %v1235 = vld [vmem:[#allocation2 + $0x60] sm:$0xff]
      %v1236 = vld [vmem:[#allocation2 + $0x68] sm:$0xff]
      %v1237 = vld [vmem:[#allocation2 + $0x78] sm:$0xff]
      %v1238 = vld [vmem:[#allocation2 + $0x80] sm:$0xff]
      %v1239 = vld [vmem:[#allocation2 + $0x90] sm:$0xff]
      %v1240 = vld [vmem:[#allocation2 + $0x98] sm:$0xff]
      %v1241 = vld [vmem:[#allocation2 + $0xa8] sm:$0xff]
      %v1242 = vld [vmem:[#allocation2 + $0xb0] sm:$0xff]
      %v1243 = vld [vmem:[#allocation2 + $0xc0] sm:$0xff]
      %v1244 = vld [vmem:[#allocation2 + $0xc8] sm:$0xff]
      %v1245 = vld [vmem:[#allocation2 + $0xd8] sm:$0xff]
      %v1246 = vld [vmem:[#allocation2 + $0xe0] sm:$0xff]
      %v1247 = vld [vmem:[#allocation2 + $0xf0] sm:$0xff]
      %v1248 = vld [vmem:[#allocation2 + $0xf8] sm:$0xff]
      %v1249 = vld [vmem:[#allocation2 + $0x108] sm:$0xff]
      %v1250 = vld [vmem:[#allocation2 + $0x110] sm:$0xff]
      %v1251 = vld [vmem:[#allocation2 + $0x120] sm:$0xff]
      %v1252 = vld [vmem:[#allocation2 + $0x128] sm:$0xff]
      %v1253 = vld [vmem:[#allocation2 + $0x138] sm:$0xff]
      %v1254 = vld [vmem:[#allocation2 + $0x140] sm:$0xff]
      %v1255 = vld [vmem:[#allocation2 + $0x150] sm:$0xff]
      %v1256 = vld [vmem:[#allocation2 + $0x158] sm:$0xff]
      %v1257 = vld [vmem:[#allocation2 + $0x168] sm:$0xff]
      %v1258 = vld [vmem:[#allocation2 + $0x170] sm:$0xff]
      %v1259 = vld [vmem:[%s5] sm:$0x1]
      %v1260 = vlaneseq
      %v1261 = vshrl.u32 %v1260, 7
      %v1262 = vsub.s32 0, %v1261
      %v1263 = vrot.slane %v1259, %v1262
      %v1264 = vmul.f32 %v1227, %v1263
      %v1265 = vmul.f32 %v1228, %v1263
      %v1266 = vmul.f32 %v1229, %v1263
      %v1267 = vmul.f32 %v1230, %v1263
      %v1268 = vmul.f32 %v1231, %v1263
      %v1269 = vmul.f32 %v1232, %v1263
      %v1270 = vmul.f32 %v1233, %v1263
      %v1271 = vmul.f32 %v1234, %v1263
      %v1272 = vmul.f32 %v1235, %v1263
      %v1273 = vmul.f32 %v1236, %v1263
      %v1274 = vmul.f32 %v1237, %v1263
      %v1275 = vmul.f32 %v1238, %v1263
      %v1276 = vmul.f32 %v1239, %v1263
      %v1277 = vmul.f32 %v1240, %v1263
      %v1278 = vmul.f32 %v1241, %v1263
      %v1279 = vmul.f32 %v1242, %v1263
      %v1280 = vmul.f32 %v1243, %v1263
      %v1281 = vmul.f32 %v1244, %v1263
      %v1282 = vmul.f32 %v1245, %v1263
      %v1283 = vmul.f32 %v1246, %v1263
      %v1284 = vmul.f32 %v1247, %v1263
      %v1285 = vmul.f32 %v1248, %v1263
      %v1286 = vmul.f32 %v1249, %v1263
      %v1287 = vmul.f32 %v1250, %v1263
      %v1288 = vmul.f32 %v1251, %v1263
      %v1289 = vmul.f32 %v1252, %v1263
      %v1290 = vmul.f32 %v1253, %v1263
      %v1291 = vmul.f32 %v1254, %v1263
      %v1292 = vmul.f32 %v1255, %v1263
      %v1293 = vmul.f32 %v1256, %v1263
      %v1294 = vmul.f32 %v1257, %v1263
      %v1295 = vmul.f32 %v1258, %v1263
      %v1296 = vsel %vm1014, %v1264, 0.0
      %1297 = vadd.xlane.f32.xlu0 %v1296
      %v1298 = vpop.xlane.xlu0 %1297
      %v1299 = vsel %vm1014, %v1265, 0.0
      %1300 = vadd.xlane.f32.xlu0 %v1299
      %v1301 = vpop.xlane.xlu0 %1300
      %v1302 = vsel %vm1014, %v1266, 0.0
      %1303 = vadd.xlane.f32.xlu0 %v1302
      %v1304 = vpop.xlane.xlu0 %1303
      %v1305 = vsel %vm1014, %v1267, 0.0
      %1306 = vadd.xlane.f32.xlu0 %v1305
      %v1307 = vpop.xlane.xlu0 %1306
      %v1308 = vsel %vm1014, %v1268, 0.0
      %1309 = vadd.xlane.f32.xlu0 %v1308
      %v1310 = vpop.xlane.xlu0 %1309
      %v1311 = vsel %vm1014, %v1269, 0.0
      %1312 = vadd.xlane.f32.xlu0 %v1311
      %v1313 = vpop.xlane.xlu0 %1312
      %v1314 = vsel %vm1014, %v1270, 0.0
      %1315 = vadd.xlane.f32.xlu0 %v1314
      %v1316 = vpop.xlane.xlu0 %1315
      %v1317 = vsel %vm1014, %v1271, 0.0
      %1318 = vadd.xlane.f32.xlu0 %v1317
      %v1319 = vpop.xlane.xlu0 %1318
      %v1320 = vsel %vm1014, %v1272, 0.0
      %1321 = vadd.xlane.f32.xlu0 %v1320
      %v1322 = vpop.xlane.xlu0 %1321
      %v1323 = vsel %vm1014, %v1273, 0.0
      %1324 = vadd.xlane.f32.xlu0 %v1323
      %v1325 = vpop.xlane.xlu0 %1324
      %v1326 = vsel %vm1014, %v1274, 0.0
      %1327 = vadd.xlane.f32.xlu0 %v1326
      %v1328 = vpop.xlane.xlu0 %1327
      %v1329 = vsel %vm1014, %v1275, 0.0
      %1330 = vadd.xlane.f32.xlu0 %v1329
      %v1331 = vpop.xlane.xlu0 %1330
      %v1332 = vsel %vm1014, %v1276, 0.0
      %1333 = vadd.xlane.f32.xlu0 %v1332
      %v1334 = vpop.xlane.xlu0 %1333
      %v1335 = vsel %vm1014, %v1277, 0.0
      %1336 = vadd.xlane.f32.xlu0 %v1335
      %v1337 = vpop.xlane.xlu0 %1336
      %v1338 = vsel %vm1014, %v1278, 0.0
      %1339 = vadd.xlane.f32.xlu0 %v1338
      %v1340 = vpop.xlane.xlu0 %1339
      %v1341 = vsel %vm1014, %v1279, 0.0
      %1342 = vadd.xlane.f32.xlu0 %v1341
      %v1343 = vpop.xlane.xlu0 %1342
      %v1344 = vsel %vm1014, %v1280, 0.0
      %1345 = vadd.xlane.f32.xlu0 %v1344
      %v1346 = vpop.xlane.xlu0 %1345
      %v1347 = vsel %vm1014, %v1281, 0.0
      %1348 = vadd.xlane.f32.xlu0 %v1347
      %v1349 = vpop.xlane.xlu0 %1348
      %v1350 = vsel %vm1014, %v1282, 0.0
      %1351 = vadd.xlane.f32.xlu0 %v1350
      %v1352 = vpop.xlane.xlu0 %1351
      %v1353 = vsel %vm1014, %v1283, 0.0
      %1354 = vadd.xlane.f32.xlu0 %v1353
      %v1355 = vpop.xlane.xlu0 %1354
      %v1356 = vsel %vm1014, %v1284, 0.0
      %1357 = vadd.xlane.f32.xlu0 %v1356
      %v1358 = vpop.xlane.xlu0 %1357
      %v1359 = vsel %vm1014, %v1285, 0.0
      %1360 = vadd.xlane.f32.xlu0 %v1359
      %v1361 = vpop.xlane.xlu0 %1360
      %v1362 = vsel %vm1014, %v1286, 0.0
      %1363 = vadd.xlane.f32.xlu0 %v1362
      %v1364 = vpop.xlane.xlu0 %1363
      %v1365 = vsel %vm1014, %v1287, 0.0
      %1366 = vadd.xlane.f32.xlu0 %v1365
      %v1367 = vpop.xlane.xlu0 %1366
      %v1368 = vsel %vm1014, %v1288, 0.0
      %1369 = vadd.xlane.f32.xlu0 %v1368
      %v1370 = vpop.xlane.xlu0 %1369
      %v1371 = vsel %vm1014, %v1289, 0.0
      %1372 = vadd.xlane.f32.xlu0 %v1371
      %v1373 = vpop.xlane.xlu0 %1372
      %v1374 = vsel %vm1014, %v1290, 0.0
      %1375 = vadd.xlane.f32.xlu0 %v1374
      %v1376 = vpop.xlane.xlu0 %1375
      %v1377 = vsel %vm1014, %v1291, 0.0
      %1378 = vadd.xlane.f32.xlu0 %v1377
      %v1379 = vpop.xlane.xlu0 %1378
      %v1380 = vsel %vm1014, %v1292, 0.0
      %1381 = vadd.xlane.f32.xlu0 %v1380
      %v1382 = vpop.xlane.xlu0 %1381
      %v1383 = vsel %vm1014, %v1293, 0.0
      %1384 = vadd.xlane.f32.xlu0 %v1383
      %v1385 = vpop.xlane.xlu0 %1384
      %v1386 = vsel %vm1014, %v1294, 0.0
      %1387 = vadd.xlane.f32.xlu0 %v1386
      %v1388 = vpop.xlane.xlu0 %1387
      %v1389 = vsel %vm1014, %v1295, 0.0
      %1390 = vadd.xlane.f32.xlu0 %v1389
      %v1391 = vpop.xlane.xlu0 %1390
      %v1392 = vadd.f32 %v1298, 0.0
      %v1393 = vadd.f32 %v1301, 0.0
      %v1394 = vadd.f32 %v1304, 0.0
      %v1395 = vadd.f32 %v1307, 0.0
      %v1396 = vadd.f32 %v1310, 0.0
      %v1397 = vadd.f32 %v1313, 0.0
      %v1398 = vadd.f32 %v1316, 0.0
      %v1399 = vadd.f32 %v1319, 0.0
      %v1400 = vadd.f32 %v1322, 0.0
      %v1401 = vadd.f32 %v1325, 0.0
      %v1402 = vadd.f32 %v1328, 0.0
      %v1403 = vadd.f32 %v1331, 0.0
      %v1404 = vadd.f32 %v1334, 0.0
      %v1405 = vadd.f32 %v1337, 0.0
      %v1406 = vadd.f32 %v1340, 0.0
      %v1407 = vadd.f32 %v1343, 0.0
      %v1408 = vadd.f32 %v1346, 0.0
      %v1409 = vadd.f32 %v1349, 0.0
      %v1410 = vadd.f32 %v1352, 0.0
      %v1411 = vadd.f32 %v1355, 0.0
      %v1412 = vadd.f32 %v1358, 0.0
      %v1413 = vadd.f32 %v1361, 0.0
      %v1414 = vadd.f32 %v1364, 0.0
      %v1415 = vadd.f32 %v1367, 0.0
      %v1416 = vadd.f32 %v1370, 0.0
      %v1417 = vadd.f32 %v1373, 0.0
      %v1418 = vadd.f32 %v1376, 0.0
      %v1419 = vadd.f32 %v1379, 0.0
      %v1420 = vadd.f32 %v1382, 0.0
      %v1421 = vadd.f32 %v1385, 0.0
      %v1422 = vadd.f32 %v1388, 0.0
      %v1423 = vadd.f32 %v1391, 0.0
      %v1424 = vld [vmem:[#allocation2 + $0x1] sm:$0xff]
      %v1425 = vld [vmem:[#allocation2 + $0x9] sm:$0xff]
      %v1426 = vld [vmem:[#allocation2 + $0x19] sm:$0xff]
      %v1427 = vld [vmem:[#allocation2 + $0x21] sm:$0xff]
      %v1428 = vld [vmem:[#allocation2 + $0x31] sm:$0xff]
      %v1429 = vld [vmem:[#allocation2 + $0x39] sm:$0xff]
      %v1430 = vld [vmem:[#allocation2 + $0x49] sm:$0xff]
      %v1431 = vld [vmem:[#allocation2 + $0x51] sm:$0xff]
      %v1432 = vld [vmem:[#allocation2 + $0x61] sm:$0xff]
      %v1433 = vld [vmem:[#allocation2 + $0x69] sm:$0xff]
      %v1434 = vld [vmem:[#allocation2 + $0x79] sm:$0xff]
      %v1435 = vld [vmem:[#allocation2 + $0x81] sm:$0xff]
      %v1436 = vld [vmem:[#allocation2 + $0x91] sm:$0xff]
      %v1437 = vld [vmem:[#allocation2 + $0x99] sm:$0xff]
      %v1438 = vld [vmem:[#allocation2 + $0xa9] sm:$0xff]
      %v1439 = vld [vmem:[#allocation2 + $0xb1] sm:$0xff]
      %v1440 = vld [vmem:[#allocation2 + $0xc1] sm:$0xff]
      %v1441 = vld [vmem:[#allocation2 + $0xc9] sm:$0xff]
      %v1442 = vld [vmem:[#allocation2 + $0xd9] sm:$0xff]
      %v1443 = vld [vmem:[#allocation2 + $0xe1] sm:$0xff]
      %v1444 = vld [vmem:[#allocation2 + $0xf1] sm:$0xff]
      %v1445 = vld [vmem:[#allocation2 + $0xf9] sm:$0xff]
      %v1446 = vld [vmem:[#allocation2 + $0x109] sm:$0xff]
      %v1447 = vld [vmem:[#allocation2 + $0x111] sm:$0xff]
      %v1448 = vld [vmem:[#allocation2 + $0x121] sm:$0xff]
      %v1449 = vld [vmem:[#allocation2 + $0x129] sm:$0xff]
      %v1450 = vld [vmem:[#allocation2 + $0x139] sm:$0xff]
      %v1451 = vld [vmem:[#allocation2 + $0x141] sm:$0xff]
      %v1452 = vld [vmem:[#allocation2 + $0x151] sm:$0xff]
      %v1453 = vld [vmem:[#allocation2 + $0x159] sm:$0xff]
      %v1454 = vld [vmem:[#allocation2 + $0x169] sm:$0xff]
      %v1455 = vld [vmem:[#allocation2 + $0x171] sm:$0xff]
      %v1456 = vld [vmem:[%s5 + $0x1] sm:$0x1]
      %v1457 = vlaneseq
      %v1458 = vshrl.u32 %v1457, 7
      %v1459 = vsub.s32 0, %v1458
      %v1460 = vrot.slane %v1456, %v1459
      %v1461 = vmul.f32 %v1424, %v1460
      %v1462 = vmul.f32 %v1425, %v1460
      %v1463 = vmul.f32 %v1426, %v1460
      %v1464 = vmul.f32 %v1427, %v1460
      %v1465 = vmul.f32 %v1428, %v1460
      %v1466 = vmul.f32 %v1429, %v1460
      %v1467 = vmul.f32 %v1430, %v1460
      %v1468 = vmul.f32 %v1431, %v1460
      %v1469 = vmul.f32 %v1432, %v1460
      %v1470 = vmul.f32 %v1433, %v1460
      %v1471 = vmul.f32 %v1434, %v1460
      %v1472 = vmul.f32 %v1435, %v1460
      %v1473 = vmul.f32 %v1436, %v1460
      %v1474 = vmul.f32 %v1437, %v1460
      %v1475 = vmul.f32 %v1438, %v1460
      %v1476 = vmul.f32 %v1439, %v1460
      %v1477 = vmul.f32 %v1440, %v1460
      %v1478 = vmul.f32 %v1441, %v1460
      %v1479 = vmul.f32 %v1442, %v1460
      %v1480 = vmul.f32 %v1443, %v1460
      %v1481 = vmul.f32 %v1444, %v1460
      %v1482 = vmul.f32 %v1445, %v1460
      %v1483 = vmul.f32 %v1446, %v1460
      %v1484 = vmul.f32 %v1447, %v1460
      %v1485 = vmul.f32 %v1448, %v1460
      %v1486 = vmul.f32 %v1449, %v1460
      %v1487 = vmul.f32 %v1450, %v1460
      %v1488 = vmul.f32 %v1451, %v1460
      %v1489 = vmul.f32 %v1452, %v1460
      %v1490 = vmul.f32 %v1453, %v1460
      %v1491 = vmul.f32 %v1454, %v1460
      %v1492 = vmul.f32 %v1455, %v1460
      %v1493 = vsel %vm1014, %v1461, 0.0
      %1494 = vadd.xlane.f32.xlu0 %v1493
      %v1495 = vpop.xlane.xlu0 %1494
      %v1496 = vsel %vm1014, %v1462, 0.0
      %1497 = vadd.xlane.f32.xlu0 %v1496
      %v1498 = vpop.xlane.xlu0 %1497
      %v1499 = vsel %vm1014, %v1463, 0.0
      %1500 = vadd.xlane.f32.xlu0 %v1499
      %v1501 = vpop.xlane.xlu0 %1500
      %v1502 = vsel %vm1014, %v1464, 0.0
      %1503 = vadd.xlane.f32.xlu0 %v1502
      %v1504 = vpop.xlane.xlu0 %1503
      %v1505 = vsel %vm1014, %v1465, 0.0
      %1506 = vadd.xlane.f32.xlu0 %v1505
      %v1507 = vpop.xlane.xlu0 %1506
      %v1508 = vsel %vm1014, %v1466, 0.0
      %1509 = vadd.xlane.f32.xlu0 %v1508
      %v1510 = vpop.xlane.xlu0 %1509
      %v1511 = vsel %vm1014, %v1467, 0.0
      %1512 = vadd.xlane.f32.xlu0 %v1511
      %v1513 = vpop.xlane.xlu0 %1512
      %v1514 = vsel %vm1014, %v1468, 0.0
      %1515 = vadd.xlane.f32.xlu0 %v1514
      %v1516 = vpop.xlane.xlu0 %1515
      %v1517 = vsel %vm1014, %v1469, 0.0
      %1518 = vadd.xlane.f32.xlu0 %v1517
      %v1519 = vpop.xlane.xlu0 %1518
      %v1520 = vsel %vm1014, %v1470, 0.0
      %1521 = vadd.xlane.f32.xlu0 %v1520
      %v1522 = vpop.xlane.xlu0 %1521
      %v1523 = vsel %vm1014, %v1471, 0.0
      %1524 = vadd.xlane.f32.xlu0 %v1523
      %v1525 = vpop.xlane.xlu0 %1524
      %v1526 = vsel %vm1014, %v1472, 0.0
      %1527 = vadd.xlane.f32.xlu0 %v1526
      %v1528 = vpop.xlane.xlu0 %1527
      %v1529 = vsel %vm1014, %v1473, 0.0
      %1530 = vadd.xlane.f32.xlu0 %v1529
      %v1531 = vpop.xlane.xlu0 %1530
      %v1532 = vsel %vm1014, %v1474, 0.0
      %1533 = vadd.xlane.f32.xlu0 %v1532
      %v1534 = vpop.xlane.xlu0 %1533
      %v1535 = vsel %vm1014, %v1475, 0.0
      %1536 = vadd.xlane.f32.xlu0 %v1535
      %v1537 = vpop.xlane.xlu0 %1536
      %v1538 = vsel %vm1014, %v1476, 0.0
      %1539 = vadd.xlane.f32.xlu0 %v1538
      %v1540 = vpop.xlane.xlu0 %1539
      %v1541 = vsel %vm1014, %v1477, 0.0
      %1542 = vadd.xlane.f32.xlu0 %v1541
      %v1543 = vpop.xlane.xlu0 %1542
      %v1544 = vsel %vm1014, %v1478, 0.0
      %1545 = vadd.xlane.f32.xlu0 %v1544
      %v1546 = vpop.xlane.xlu0 %1545
      %v1547 = vsel %vm1014, %v1479, 0.0
      %1548 = vadd.xlane.f32.xlu0 %v1547
      %v1549 = vpop.xlane.xlu0 %1548
      %v1550 = vsel %vm1014, %v1480, 0.0
      %1551 = vadd.xlane.f32.xlu0 %v1550
      %v1552 = vpop.xlane.xlu0 %1551
      %v1553 = vsel %vm1014, %v1481, 0.0
      %1554 = vadd.xlane.f32.xlu0 %v1553
      %v1555 = vpop.xlane.xlu0 %1554
      %v1556 = vsel %vm1014, %v1482, 0.0
      %1557 = vadd.xlane.f32.xlu0 %v1556
      %v1558 = vpop.xlane.xlu0 %1557
      %v1559 = vsel %vm1014, %v1483, 0.0
      %1560 = vadd.xlane.f32.xlu0 %v1559
      %v1561 = vpop.xlane.xlu0 %1560
      %v1562 = vsel %vm1014, %v1484, 0.0
      %1563 = vadd.xlane.f32.xlu0 %v1562
      %v1564 = vpop.xlane.xlu0 %1563
      %v1565 = vsel %vm1014, %v1485, 0.0
      %1566 = vadd.xlane.f32.xlu0 %v1565
      %v1567 = vpop.xlane.xlu0 %1566
      %v1568 = vsel %vm1014, %v1486, 0.0
      %1569 = vadd.xlane.f32.xlu0 %v1568
      %v1570 = vpop.xlane.xlu0 %1569
      %v1571 = vsel %vm1014, %v1487, 0.0
      %1572 = vadd.xlane.f32.xlu0 %v1571
      %v1573 = vpop.xlane.xlu0 %1572
      %v1574 = vsel %vm1014, %v1488, 0.0
      %1575 = vadd.xlane.f32.xlu0 %v1574
      %v1576 = vpop.xlane.xlu0 %1575
      %v1577 = vsel %vm1014, %v1489, 0.0
      %1578 = vadd.xlane.f32.xlu0 %v1577
      %v1579 = vpop.xlane.xlu0 %1578
      %v1580 = vsel %vm1014, %v1490, 0.0
      %1581 = vadd.xlane.f32.xlu0 %v1580
      %v1582 = vpop.xlane.xlu0 %1581
      %v1583 = vsel %vm1014, %v1491, 0.0
      %1584 = vadd.xlane.f32.xlu0 %v1583
      %v1585 = vpop.xlane.xlu0 %1584
      %v1586 = vsel %vm1014, %v1492, 0.0
      %1587 = vadd.xlane.f32.xlu0 %v1586
      %v1588 = vpop.xlane.xlu0 %1587
      %v1589 = vadd.f32 %v1392, %v1495
      %v1590 = vadd.f32 %v1393, %v1498
      %v1591 = vadd.f32 %v1394, %v1501
      %v1592 = vadd.f32 %v1395, %v1504
      %v1593 = vadd.f32 %v1396, %v1507
      %v1594 = vadd.f32 %v1397, %v1510
      %v1595 = vadd.f32 %v1398, %v1513
      %v1596 = vadd.f32 %v1399, %v1516
      %v1597 = vadd.f32 %v1400, %v1519
      %v1598 = vadd.f32 %v1401, %v1522
      %v1599 = vadd.f32 %v1402, %v1525
      %v1600 = vadd.f32 %v1403, %v1528
      %v1601 = vadd.f32 %v1404, %v1531
      %v1602 = vadd.f32 %v1405, %v1534
      %v1603 = vadd.f32 %v1406, %v1537
      %v1604 = vadd.f32 %v1407, %v1540
      %v1605 = vadd.f32 %v1408, %v1543
      %v1606 = vadd.f32 %v1409, %v1546
      %v1607 = vadd.f32 %v1410, %v1549
      %v1608 = vadd.f32 %v1411, %v1552
      %v1609 = vadd.f32 %v1412, %v1555
      %v1610 = vadd.f32 %v1413, %v1558
      %v1611 = vadd.f32 %v1414, %v1561
      %v1612 = vadd.f32 %v1415, %v1564
      %v1613 = vadd.f32 %v1416, %v1567
      %v1614 = vadd.f32 %v1417, %v1570
      %v1615 = vadd.f32 %v1418, %v1573
      %v1616 = vadd.f32 %v1419, %v1576
      %v1617 = vadd.f32 %v1420, %v1579
      %v1618 = vadd.f32 %v1421, %v1582
      %v1619 = vadd.f32 %v1422, %v1585
      %v1620 = vadd.f32 %v1423, %v1588
      %v1621 = vld [vmem:[#allocation2 + $0x2] sm:$0xff]
      %v1622 = vld [vmem:[#allocation2 + $0xa] sm:$0xff]
      %v1623 = vld [vmem:[#allocation2 + $0x1a] sm:$0xff]
      %v1624 = vld [vmem:[#allocation2 + $0x22] sm:$0xff]
      %v1625 = vld [vmem:[#allocation2 + $0x32] sm:$0xff]
      %v1626 = vld [vmem:[#allocation2 + $0x3a] sm:$0xff]
      %v1627 = vld [vmem:[#allocation2 + $0x4a] sm:$0xff]
      %v1628 = vld [vmem:[#allocation2 + $0x52] sm:$0xff]
      %v1629 = vld [vmem:[#allocation2 + $0x62] sm:$0xff]
      %v1630 = vld [vmem:[#allocation2 + $0x6a] sm:$0xff]
      %v1631 = vld [vmem:[#allocation2 + $0x7a] sm:$0xff]
      %v1632 = vld [vmem:[#allocation2 + $0x82] sm:$0xff]
      %v1633 = vld [vmem:[#allocation2 + $0x92] sm:$0xff]
      %v1634 = vld [vmem:[#allocation2 + $0x9a] sm:$0xff]
      %v1635 = vld [vmem:[#allocation2 + $0xaa] sm:$0xff]
      %v1636 = vld [vmem:[#allocation2 + $0xb2] sm:$0xff]
      %v1637 = vld [vmem:[#allocation2 + $0xc2] sm:$0xff]
      %v1638 = vld [vmem:[#allocation2 + $0xca] sm:$0xff]
      %v1639 = vld [vmem:[#allocation2 + $0xda] sm:$0xff]
      %v1640 = vld [vmem:[#allocation2 + $0xe2] sm:$0xff]
      %v1641 = vld [vmem:[#allocation2 + $0xf2] sm:$0xff]
      %v1642 = vld [vmem:[#allocation2 + $0xfa] sm:$0xff]
      %v1643 = vld [vmem:[#allocation2 + $0x10a] sm:$0xff]
      %v1644 = vld [vmem:[#allocation2 + $0x112] sm:$0xff]
      %v1645 = vld [vmem:[#allocation2 + $0x122] sm:$0xff]
      %v1646 = vld [vmem:[#allocation2 + $0x12a] sm:$0xff]
      %v1647 = vld [vmem:[#allocation2 + $0x13a] sm:$0xff]
      %v1648 = vld [vmem:[#allocation2 + $0x142] sm:$0xff]
      %v1649 = vld [vmem:[#allocation2 + $0x152] sm:$0xff]
      %v1650 = vld [vmem:[#allocation2 + $0x15a] sm:$0xff]
      %v1651 = vld [vmem:[#allocation2 + $0x16a] sm:$0xff]
      %v1652 = vld [vmem:[#allocation2 + $0x172] sm:$0xff]
      %v1653 = vld [vmem:[%s5 + $0x2] sm:$0x1]
      %v1654 = vlaneseq
      %v1655 = vshrl.u32 %v1654, 7
      %v1656 = vsub.s32 0, %v1655
      %v1657 = vrot.slane %v1653, %v1656
      %v1658 = vmul.f32 %v1621, %v1657
      %v1659 = vmul.f32 %v1622, %v1657
      %v1660 = vmul.f32 %v1623, %v1657
      %v1661 = vmul.f32 %v1624, %v1657
      %v1662 = vmul.f32 %v1625, %v1657
      %v1663 = vmul.f32 %v1626, %v1657
      %v1664 = vmul.f32 %v1627, %v1657
      %v1665 = vmul.f32 %v1628, %v1657
      %v1666 = vmul.f32 %v1629, %v1657
      %v1667 = vmul.f32 %v1630, %v1657
      %v1668 = vmul.f32 %v1631, %v1657
      %v1669 = vmul.f32 %v1632, %v1657
      %v1670 = vmul.f32 %v1633, %v1657
      %v1671 = vmul.f32 %v1634, %v1657
      %v1672 = vmul.f32 %v1635, %v1657
      %v1673 = vmul.f32 %v1636, %v1657
      %v1674 = vmul.f32 %v1637, %v1657
      %v1675 = vmul.f32 %v1638, %v1657
      %v1676 = vmul.f32 %v1639, %v1657
      %v1677 = vmul.f32 %v1640, %v1657
      %v1678 = vmul.f32 %v1641, %v1657
      %v1679 = vmul.f32 %v1642, %v1657
      %v1680 = vmul.f32 %v1643, %v1657
      %v1681 = vmul.f32 %v1644, %v1657
      %v1682 = vmul.f32 %v1645, %v1657
      %v1683 = vmul.f32 %v1646, %v1657
      %v1684 = vmul.f32 %v1647, %v1657
      %v1685 = vmul.f32 %v1648, %v1657
      %v1686 = vmul.f32 %v1649, %v1657
      %v1687 = vmul.f32 %v1650, %v1657
      %v1688 = vmul.f32 %v1651, %v1657
      %v1689 = vmul.f32 %v1652, %v1657
      %v1690 = vsel %vm1014, %v1658, 0.0
      %1691 = vadd.xlane.f32.xlu0 %v1690
      %v1692 = vpop.xlane.xlu0 %1691
      %v1693 = vsel %vm1014, %v1659, 0.0
      %1694 = vadd.xlane.f32.xlu0 %v1693
      %v1695 = vpop.xlane.xlu0 %1694
      %v1696 = vsel %vm1014, %v1660, 0.0
      %1697 = vadd.xlane.f32.xlu0 %v1696
      %v1698 = vpop.xlane.xlu0 %1697
      %v1699 = vsel %vm1014, %v1661, 0.0
      %1700 = vadd.xlane.f32.xlu0 %v1699
      %v1701 = vpop.xlane.xlu0 %1700
      %v1702 = vsel %vm1014, %v1662, 0.0
      %1703 = vadd.xlane.f32.xlu0 %v1702
      %v1704 = vpop.xlane.xlu0 %1703
      %v1705 = vsel %vm1014, %v1663, 0.0
      %1706 = vadd.xlane.f32.xlu0 %v1705
      %v1707 = vpop.xlane.xlu0 %1706
      %v1708 = vsel %vm1014, %v1664, 0.0
      %1709 = vadd.xlane.f32.xlu0 %v1708
      %v1710 = vpop.xlane.xlu0 %1709
      %v1711 = vsel %vm1014, %v1665, 0.0
      %1712 = vadd.xlane.f32.xlu0 %v1711
      %v1713 = vpop.xlane.xlu0 %1712
      %v1714 = vsel %vm1014, %v1666, 0.0
      %1715 = vadd.xlane.f32.xlu0 %v1714
      %v1716 = vpop.xlane.xlu0 %1715
      %v1717 = vsel %vm1014, %v1667, 0.0
      %1718 = vadd.xlane.f32.xlu0 %v1717
      %v1719 = vpop.xlane.xlu0 %1718
      %v1720 = vsel %vm1014, %v1668, 0.0
      %1721 = vadd.xlane.f32.xlu0 %v1720
      %v1722 = vpop.xlane.xlu0 %1721
      %v1723 = vsel %vm1014, %v1669, 0.0
      %1724 = vadd.xlane.f32.xlu0 %v1723
      %v1725 = vpop.xlane.xlu0 %1724
      %v1726 = vsel %vm1014, %v1670, 0.0
      %1727 = vadd.xlane.f32.xlu0 %v1726
      %v1728 = vpop.xlane.xlu0 %1727
      %v1729 = vsel %vm1014, %v1671, 0.0
      %1730 = vadd.xlane.f32.xlu0 %v1729
      %v1731 = vpop.xlane.xlu0 %1730
      %v1732 = vsel %vm1014, %v1672, 0.0
      %1733 = vadd.xlane.f32.xlu0 %v1732
      %v1734 = vpop.xlane.xlu0 %1733
      %v1735 = vsel %vm1014, %v1673, 0.0
      %1736 = vadd.xlane.f32.xlu0 %v1735
      %v1737 = vpop.xlane.xlu0 %1736
      %v1738 = vsel %vm1014, %v1674, 0.0
      %1739 = vadd.xlane.f32.xlu0 %v1738
      %v1740 = vpop.xlane.xlu0 %1739
      %v1741 = vsel %vm1014, %v1675, 0.0
      %1742 = vadd.xlane.f32.xlu0 %v1741
      %v1743 = vpop.xlane.xlu0 %1742
      %v1744 = vsel %vm1014, %v1676, 0.0
      %1745 = vadd.xlane.f32.xlu0 %v1744
      %v1746 = vpop.xlane.xlu0 %1745
      %v1747 = vsel %vm1014, %v1677, 0.0
      %1748 = vadd.xlane.f32.xlu0 %v1747
      %v1749 = vpop.xlane.xlu0 %1748
      %v1750 = vsel %vm1014, %v1678, 0.0
      %1751 = vadd.xlane.f32.xlu0 %v1750
      %v1752 = vpop.xlane.xlu0 %1751
      %v1753 = vsel %vm1014, %v1679, 0.0
      %1754 = vadd.xlane.f32.xlu0 %v1753
      %v1755 = vpop.xlane.xlu0 %1754
      %v1756 = vsel %vm1014, %v1680, 0.0
      %1757 = vadd.xlane.f32.xlu0 %v1756
      %v1758 = vpop.xlane.xlu0 %1757
      %v1759 = vsel %vm1014, %v1681, 0.0
      %1760 = vadd.xlane.f32.xlu0 %v1759
      %v1761 = vpop.xlane.xlu0 %1760
      %v1762 = vsel %vm1014, %v1682, 0.0
      %1763 = vadd.xlane.f32.xlu0 %v1762
      %v1764 = vpop.xlane.xlu0 %1763
      %v1765 = vsel %vm1014, %v1683, 0.0
      %1766 = vadd.xlane.f32.xlu0 %v1765
      %v1767 = vpop.xlane.xlu0 %1766
      %v1768 = vsel %vm1014, %v1684, 0.0
      %1769 = vadd.xlane.f32.xlu0 %v1768
      %v1770 = vpop.xlane.xlu0 %1769
      %v1771 = vsel %vm1014, %v1685, 0.0
      %1772 = vadd.xlane.f32.xlu0 %v1771
      %v1773 = vpop.xlane.xlu0 %1772
      %v1774 = vsel %vm1014, %v1686, 0.0
      %1775 = vadd.xlane.f32.xlu0 %v1774
      %v1776 = vpop.xlane.xlu0 %1775
      %v1777 = vsel %vm1014, %v1687, 0.0
      %1778 = vadd.xlane.f32.xlu0 %v1777
      %v1779 = vpop.xlane.xlu0 %1778
      %v1780 = vsel %vm1014, %v1688, 0.0
      %1781 = vadd.xlane.f32.xlu0 %v1780
      %v1782 = vpop.xlane.xlu0 %1781
      %v1783 = vsel %vm1014, %v1689, 0.0
      %1784 = vadd.xlane.f32.xlu0 %v1783
      %v1785 = vpop.xlane.xlu0 %1784
      %v1786 = vadd.f32 %v1589, %v1692
      %v1787 = vadd.f32 %v1590, %v1695
      %v1788 = vadd.f32 %v1591, %v1698
      %v1789 = vadd.f32 %v1592, %v1701
      %v1790 = vadd.f32 %v1593, %v1704
      %v1791 = vadd.f32 %v1594, %v1707
      %v1792 = vadd.f32 %v1595, %v1710
      %v1793 = vadd.f32 %v1596, %v1713
      %v1794 = vadd.f32 %v1597, %v1716
      %v1795 = vadd.f32 %v1598, %v1719
      %v1796 = vadd.f32 %v1599, %v1722
      %v1797 = vadd.f32 %v1600, %v1725
      %v1798 = vadd.f32 %v1601, %v1728
      %v1799 = vadd.f32 %v1602, %v1731
      %v1800 = vadd.f32 %v1603, %v1734
      %v1801 = vadd.f32 %v1604, %v1737
      %v1802 = vadd.f32 %v1605, %v1740
      %v1803 = vadd.f32 %v1606, %v1743
      %v1804 = vadd.f32 %v1607, %v1746
      %v1805 = vadd.f32 %v1608, %v1749
      %v1806 = vadd.f32 %v1609, %v1752
      %v1807 = vadd.f32 %v1610, %v1755
      %v1808 = vadd.f32 %v1611, %v1758
      %v1809 = vadd.f32 %v1612, %v1761
      %v1810 = vadd.f32 %v1613, %v1764
      %v1811 = vadd.f32 %v1614, %v1767
      %v1812 = vadd.f32 %v1615, %v1770
      %v1813 = vadd.f32 %v1616, %v1773
      %v1814 = vadd.f32 %v1617, %v1776
      %v1815 = vadd.f32 %v1618, %v1779
      %v1816 = vadd.f32 %v1619, %v1782
      %v1817 = vadd.f32 %v1620, %v1785
      %v1818 = vld [vmem:[#allocation2 + $0x3] sm:$0xff]
      %v1819 = vld [vmem:[#allocation2 + $0xb] sm:$0xff]
      %v1820 = vld [vmem:[#allocation2 + $0x1b] sm:$0xff]
      %v1821 = vld [vmem:[#allocation2 + $0x23] sm:$0xff]
      %v1822 = vld [vmem:[#allocation2 + $0x33] sm:$0xff]
      %v1823 = vld [vmem:[#allocation2 + $0x3b] sm:$0xff]
      %v1824 = vld [vmem:[#allocation2 + $0x4b] sm:$0xff]
      %v1825 = vld [vmem:[#allocation2 + $0x53] sm:$0xff]
      %v1826 = vld [vmem:[#allocation2 + $0x63] sm:$0xff]
      %v1827 = vld [vmem:[#allocation2 + $0x6b] sm:$0xff]
      %v1828 = vld [vmem:[#allocation2 + $0x7b] sm:$0xff]
      %v1829 = vld [vmem:[#allocation2 + $0x83] sm:$0xff]
      %v1830 = vld [vmem:[#allocation2 + $0x93] sm:$0xff]
      %v1831 = vld [vmem:[#allocation2 + $0x9b] sm:$0xff]
      %v1832 = vld [vmem:[#allocation2 + $0xab] sm:$0xff]
      %v1833 = vld [vmem:[#allocation2 + $0xb3] sm:$0xff]
      %v1834 = vld [vmem:[#allocation2 + $0xc3] sm:$0xff]
      %v1835 = vld [vmem:[#allocation2 + $0xcb] sm:$0xff]
      %v1836 = vld [vmem:[#allocation2 + $0xdb] sm:$0xff]
      %v1837 = vld [vmem:[#allocation2 + $0xe3] sm:$0xff]
      %v1838 = vld [vmem:[#allocation2 + $0xf3] sm:$0xff]
      %v1839 = vld [vmem:[#allocation2 + $0xfb] sm:$0xff]
      %v1840 = vld [vmem:[#allocation2 + $0x10b] sm:$0xff]
      %v1841 = vld [vmem:[#allocation2 + $0x113] sm:$0xff]
      %v1842 = vld [vmem:[#allocation2 + $0x123] sm:$0xff]
      %v1843 = vld [vmem:[#allocation2 + $0x12b] sm:$0xff]
      %v1844 = vld [vmem:[#allocation2 + $0x13b] sm:$0xff]
      %v1845 = vld [vmem:[#allocation2 + $0x143] sm:$0xff]
      %v1846 = vld [vmem:[#allocation2 + $0x153] sm:$0xff]
      %v1847 = vld [vmem:[#allocation2 + $0x15b] sm:$0xff]
      %v1848 = vld [vmem:[#allocation2 + $0x16b] sm:$0xff]
      %v1849 = vld [vmem:[#allocation2 + $0x173] sm:$0xff]
      %v1850 = vld [vmem:[%s5 + $0x3] sm:$0x1]
      %v1851 = vlaneseq
      %v1852 = vshrl.u32 %v1851, 7
      %v1853 = vsub.s32 0, %v1852
      %v1854 = vrot.slane %v1850, %v1853
      %v1855 = vmul.f32 %v1818, %v1854
      %v1856 = vmul.f32 %v1819, %v1854
      %v1857 = vmul.f32 %v1820, %v1854
      %v1858 = vmul.f32 %v1821, %v1854
      %v1859 = vmul.f32 %v1822, %v1854
      %v1860 = vmul.f32 %v1823, %v1854
      %v1861 = vmul.f32 %v1824, %v1854
      %v1862 = vmul.f32 %v1825, %v1854
      %v1863 = vmul.f32 %v1826, %v1854
      %v1864 = vmul.f32 %v1827, %v1854
      %v1865 = vmul.f32 %v1828, %v1854
      %v1866 = vmul.f32 %v1829, %v1854
      %v1867 = vmul.f32 %v1830, %v1854
      %v1868 = vmul.f32 %v1831, %v1854
      %v1869 = vmul.f32 %v1832, %v1854
      %v1870 = vmul.f32 %v1833, %v1854
      %v1871 = vmul.f32 %v1834, %v1854
      %v1872 = vmul.f32 %v1835, %v1854
      %v1873 = vmul.f32 %v1836, %v1854
      %v1874 = vmul.f32 %v1837, %v1854
      %v1875 = vmul.f32 %v1838, %v1854
      %v1876 = vmul.f32 %v1839, %v1854
      %v1877 = vmul.f32 %v1840, %v1854
      %v1878 = vmul.f32 %v1841, %v1854
      %v1879 = vmul.f32 %v1842, %v1854
      %v1880 = vmul.f32 %v1843, %v1854
      %v1881 = vmul.f32 %v1844, %v1854
      %v1882 = vmul.f32 %v1845, %v1854
      %v1883 = vmul.f32 %v1846, %v1854
      %v1884 = vmul.f32 %v1847, %v1854
      %v1885 = vmul.f32 %v1848, %v1854
      %v1886 = vmul.f32 %v1849, %v1854
      %v1887 = vsel %vm1014, %v1855, 0.0
      %1888 = vadd.xlane.f32.xlu0 %v1887
      %v1889 = vpop.xlane.xlu0 %1888
      %v1890 = vsel %vm1014, %v1856, 0.0
      %1891 = vadd.xlane.f32.xlu0 %v1890
      %v1892 = vpop.xlane.xlu0 %1891
      %v1893 = vsel %vm1014, %v1857, 0.0
      %1894 = vadd.xlane.f32.xlu0 %v1893
      %v1895 = vpop.xlane.xlu0 %1894
      %v1896 = vsel %vm1014, %v1858, 0.0
      %1897 = vadd.xlane.f32.xlu0 %v1896
      %v1898 = vpop.xlane.xlu0 %1897
      %v1899 = vsel %vm1014, %v1859, 0.0
      %1900 = vadd.xlane.f32.xlu0 %v1899
      %v1901 = vpop.xlane.xlu0 %1900
      %v1902 = vsel %vm1014, %v1860, 0.0
      %1903 = vadd.xlane.f32.xlu0 %v1902
      %v1904 = vpop.xlane.xlu0 %1903
      %v1905 = vsel %vm1014, %v1861, 0.0
      %1906 = vadd.xlane.f32.xlu0 %v1905
      %v1907 = vpop.xlane.xlu0 %1906
      %v1908 = vsel %vm1014, %v1862, 0.0
      %1909 = vadd.xlane.f32.xlu0 %v1908
      %v1910 = vpop.xlane.xlu0 %1909
      %v1911 = vsel %vm1014, %v1863, 0.0
      %1912 = vadd.xlane.f32.xlu0 %v1911
      %v1913 = vpop.xlane.xlu0 %1912
      %v1914 = vsel %vm1014, %v1864, 0.0
      %1915 = vadd.xlane.f32.xlu0 %v1914
      %v1916 = vpop.xlane.xlu0 %1915
      %v1917 = vsel %vm1014, %v1865, 0.0
      %1918 = vadd.xlane.f32.xlu0 %v1917
      %v1919 = vpop.xlane.xlu0 %1918
      %v1920 = vsel %vm1014, %v1866, 0.0
      %1921 = vadd.xlane.f32.xlu0 %v1920
      %v1922 = vpop.xlane.xlu0 %1921
      %v1923 = vsel %vm1014, %v1867, 0.0
      %1924 = vadd.xlane.f32.xlu0 %v1923
      %v1925 = vpop.xlane.xlu0 %1924
      %v1926 = vsel %vm1014, %v1868, 0.0
      %1927 = vadd.xlane.f32.xlu0 %v1926
      %v1928 = vpop.xlane.xlu0 %1927
      %v1929 = vsel %vm1014, %v1869, 0.0
      %1930 = vadd.xlane.f32.xlu0 %v1929
      %v1931 = vpop.xlane.xlu0 %1930
      %v1932 = vsel %vm1014, %v1870, 0.0
      %1933 = vadd.xlane.f32.xlu0 %v1932
      %v1934 = vpop.xlane.xlu0 %1933
      %v1935 = vsel %vm1014, %v1871, 0.0
      %1936 = vadd.xlane.f32.xlu0 %v1935
      %v1937 = vpop.xlane.xlu0 %1936
      %v1938 = vsel %vm1014, %v1872, 0.0
      %1939 = vadd.xlane.f32.xlu0 %v1938
      %v1940 = vpop.xlane.xlu0 %1939
      %v1941 = vsel %vm1014, %v1873, 0.0
      %1942 = vadd.xlane.f32.xlu0 %v1941
      %v1943 = vpop.xlane.xlu0 %1942
      %v1944 = vsel %vm1014, %v1874, 0.0
      %1945 = vadd.xlane.f32.xlu0 %v1944
      %v1946 = vpop.xlane.xlu0 %1945
      %v1947 = vsel %vm1014, %v1875, 0.0
      %1948 = vadd.xlane.f32.xlu0 %v1947
      %v1949 = vpop.xlane.xlu0 %1948
      %v1950 = vsel %vm1014, %v1876, 0.0
      %1951 = vadd.xlane.f32.xlu0 %v1950
      %v1952 = vpop.xlane.xlu0 %1951
      %v1953 = vsel %vm1014, %v1877, 0.0
      %1954 = vadd.xlane.f32.xlu0 %v1953
      %v1955 = vpop.xlane.xlu0 %1954
      %v1956 = vsel %vm1014, %v1878, 0.0
      %1957 = vadd.xlane.f32.xlu0 %v1956
      %v1958 = vpop.xlane.xlu0 %1957
      %v1959 = vsel %vm1014, %v1879, 0.0
      %1960 = vadd.xlane.f32.xlu0 %v1959
      %v1961 = vpop.xlane.xlu0 %1960
      %v1962 = vsel %vm1014, %v1880, 0.0
      %1963 = vadd.xlane.f32.xlu0 %v1962
      %v1964 = vpop.xlane.xlu0 %1963
      %v1965 = vsel %vm1014, %v1881, 0.0
      %1966 = vadd.xlane.f32.xlu0 %v1965
      %v1967 = vpop.xlane.xlu0 %1966
      %v1968 = vsel %vm1014, %v1882, 0.0
      %1969 = vadd.xlane.f32.xlu0 %v1968
      %v1970 = vpop.xlane.xlu0 %1969
      %v1971 = vsel %vm1014, %v1883, 0.0
      %1972 = vadd.xlane.f32.xlu0 %v1971
      %v1973 = vpop.xlane.xlu0 %1972
      %v1974 = vsel %vm1014, %v1884, 0.0
      %1975 = vadd.xlane.f32.xlu0 %v1974
      %v1976 = vpop.xlane.xlu0 %1975
      %v1977 = vsel %vm1014, %v1885, 0.0
      %1978 = vadd.xlane.f32.xlu0 %v1977
      %v1979 = vpop.xlane.xlu0 %1978
      %v1980 = vsel %vm1014, %v1886, 0.0
      %1981 = vadd.xlane.f32.xlu0 %v1980
      %v1982 = vpop.xlane.xlu0 %1981
      %v1983 = vadd.f32 %v1786, %v1889
      %v1984 = vadd.f32 %v1787, %v1892
      %v1985 = vadd.f32 %v1788, %v1895
      %v1986 = vadd.f32 %v1789, %v1898
      %v1987 = vadd.f32 %v1790, %v1901
      %v1988 = vadd.f32 %v1791, %v1904
      %v1989 = vadd.f32 %v1792, %v1907
      %v1990 = vadd.f32 %v1793, %v1910
      %v1991 = vadd.f32 %v1794, %v1913
      %v1992 = vadd.f32 %v1795, %v1916
      %v1993 = vadd.f32 %v1796, %v1919
      %v1994 = vadd.f32 %v1797, %v1922
      %v1995 = vadd.f32 %v1798, %v1925
      %v1996 = vadd.f32 %v1799, %v1928
      %v1997 = vadd.f32 %v1800, %v1931
      %v1998 = vadd.f32 %v1801, %v1934
      %v1999 = vadd.f32 %v1802, %v1937
      %v2000 = vadd.f32 %v1803, %v1940
      %v2001 = vadd.f32 %v1804, %v1943
      %v2002 = vadd.f32 %v1805, %v1946
      %v2003 = vadd.f32 %v1806, %v1949
      %v2004 = vadd.f32 %v1807, %v1952
      %v2005 = vadd.f32 %v1808, %v1955
      %v2006 = vadd.f32 %v1809, %v1958
      %v2007 = vadd.f32 %v1810, %v1961
      %v2008 = vadd.f32 %v1811, %v1964
      %v2009 = vadd.f32 %v1812, %v1967
      %v2010 = vadd.f32 %v1813, %v1970
      %v2011 = vadd.f32 %v1814, %v1973
      %v2012 = vadd.f32 %v1815, %v1976
      %v2013 = vadd.f32 %v1816, %v1979
      %v2014 = vadd.f32 %v1817, %v1982
      %v2015 = vld [vmem:[#allocation2 + $0x4] sm:$0xff]
      %v2016 = vld [vmem:[#allocation2 + $0xc] sm:$0xff]
      %v2017 = vld [vmem:[#allocation2 + $0x1c] sm:$0xff]
      %v2018 = vld [vmem:[#allocation2 + $0x24] sm:$0xff]
      %v2019 = vld [vmem:[#allocation2 + $0x34] sm:$0xff]
      %v2020 = vld [vmem:[#allocation2 + $0x3c] sm:$0xff]
      %v2021 = vld [vmem:[#allocation2 + $0x4c] sm:$0xff]
      %v2022 = vld [vmem:[#allocation2 + $0x54] sm:$0xff]
      %v2023 = vld [vmem:[#allocation2 + $0x64] sm:$0xff]
      %v2024 = vld [vmem:[#allocation2 + $0x6c] sm:$0xff]
      %v2025 = vld [vmem:[#allocation2 + $0x7c] sm:$0xff]
      %v2026 = vld [vmem:[#allocation2 + $0x84] sm:$0xff]
      %v2027 = vld [vmem:[#allocation2 + $0x94] sm:$0xff]
      %v2028 = vld [vmem:[#allocation2 + $0x9c] sm:$0xff]
      %v2029 = vld [vmem:[#allocation2 + $0xac] sm:$0xff]
      %v2030 = vld [vmem:[#allocation2 + $0xb4] sm:$0xff]
      %v2031 = vld [vmem:[#allocation2 + $0xc4] sm:$0xff]
      %v2032 = vld [vmem:[#allocation2 + $0xcc] sm:$0xff]
      %v2033 = vld [vmem:[#allocation2 + $0xdc] sm:$0xff]
      %v2034 = vld [vmem:[#allocation2 + $0xe4] sm:$0xff]
      %v2035 = vld [vmem:[#allocation2 + $0xf4] sm:$0xff]
      %v2036 = vld [vmem:[#allocation2 + $0xfc] sm:$0xff]
      %v2037 = vld [vmem:[#allocation2 + $0x10c] sm:$0xff]
      %v2038 = vld [vmem:[#allocation2 + $0x114] sm:$0xff]
      %v2039 = vld [vmem:[#allocation2 + $0x124] sm:$0xff]
      %v2040 = vld [vmem:[#allocation2 + $0x12c] sm:$0xff]
      %v2041 = vld [vmem:[#allocation2 + $0x13c] sm:$0xff]
      %v2042 = vld [vmem:[#allocation2 + $0x144] sm:$0xff]
      %v2043 = vld [vmem:[#allocation2 + $0x154] sm:$0xff]
      %v2044 = vld [vmem:[#allocation2 + $0x15c] sm:$0xff]
      %v2045 = vld [vmem:[#allocation2 + $0x16c] sm:$0xff]
      %v2046 = vld [vmem:[#allocation2 + $0x174] sm:$0xff]
      %v2047 = vld [vmem:[%s5 + $0x4] sm:$0x1]
      %v2048 = vlaneseq
      %v2049 = vshrl.u32 %v2048, 7
      %v2050 = vsub.s32 0, %v2049
      %v2051 = vrot.slane %v2047, %v2050
      %v2052 = vmul.f32 %v2015, %v2051
      %v2053 = vmul.f32 %v2016, %v2051
      %v2054 = vmul.f32 %v2017, %v2051
      %v2055 = vmul.f32 %v2018, %v2051
      %v2056 = vmul.f32 %v2019, %v2051
      %v2057 = vmul.f32 %v2020, %v2051
      %v2058 = vmul.f32 %v2021, %v2051
      %v2059 = vmul.f32 %v2022, %v2051
      %v2060 = vmul.f32 %v2023, %v2051
      %v2061 = vmul.f32 %v2024, %v2051
      %v2062 = vmul.f32 %v2025, %v2051
      %v2063 = vmul.f32 %v2026, %v2051
      %v2064 = vmul.f32 %v2027, %v2051
      %v2065 = vmul.f32 %v2028, %v2051
      %v2066 = vmul.f32 %v2029, %v2051
      %v2067 = vmul.f32 %v2030, %v2051
      %v2068 = vmul.f32 %v2031, %v2051
      %v2069 = vmul.f32 %v2032, %v2051
      %v2070 = vmul.f32 %v2033, %v2051
      %v2071 = vmul.f32 %v2034, %v2051
      %v2072 = vmul.f32 %v2035, %v2051
      %v2073 = vmul.f32 %v2036, %v2051
      %v2074 = vmul.f32 %v2037, %v2051
      %v2075 = vmul.f32 %v2038, %v2051
      %v2076 = vmul.f32 %v2039, %v2051
      %v2077 = vmul.f32 %v2040, %v2051
      %v2078 = vmul.f32 %v2041, %v2051
      %v2079 = vmul.f32 %v2042, %v2051
      %v2080 = vmul.f32 %v2043, %v2051
      %v2081 = vmul.f32 %v2044, %v2051
      %v2082 = vmul.f32 %v2045, %v2051
      %v2083 = vmul.f32 %v2046, %v2051
      %v2084 = vsel %vm1014, %v2052, 0.0
      %2085 = vadd.xlane.f32.xlu0 %v2084
      %v2086 = vpop.xlane.xlu0 %2085
      %v2087 = vsel %vm1014, %v2053, 0.0
      %2088 = vadd.xlane.f32.xlu0 %v2087
      %v2089 = vpop.xlane.xlu0 %2088
      %v2090 = vsel %vm1014, %v2054, 0.0
      %2091 = vadd.xlane.f32.xlu0 %v2090
      %v2092 = vpop.xlane.xlu0 %2091
      %v2093 = vsel %vm1014, %v2055, 0.0
      %2094 = vadd.xlane.f32.xlu0 %v2093
      %v2095 = vpop.xlane.xlu0 %2094
      %v2096 = vsel %vm1014, %v2056, 0.0
      %2097 = vadd.xlane.f32.xlu0 %v2096
      %v2098 = vpop.xlane.xlu0 %2097
      %v2099 = vsel %vm1014, %v2057, 0.0
      %2100 = vadd.xlane.f32.xlu0 %v2099
      %v2101 = vpop.xlane.xlu0 %2100
      %v2102 = vsel %vm1014, %v2058, 0.0
      %2103 = vadd.xlane.f32.xlu0 %v2102
      %v2104 = vpop.xlane.xlu0 %2103
      %v2105 = vsel %vm1014, %v2059, 0.0
      %2106 = vadd.xlane.f32.xlu0 %v2105
      %v2107 = vpop.xlane.xlu0 %2106
      %v2108 = vsel %vm1014, %v2060, 0.0
      %2109 = vadd.xlane.f32.xlu0 %v2108
      %v2110 = vpop.xlane.xlu0 %2109
      %v2111 = vsel %vm1014, %v2061, 0.0
      %2112 = vadd.xlane.f32.xlu0 %v2111
      %v2113 = vpop.xlane.xlu0 %2112
      %v2114 = vsel %vm1014, %v2062, 0.0
      %2115 = vadd.xlane.f32.xlu0 %v2114
      %v2116 = vpop.xlane.xlu0 %2115
      %v2117 = vsel %vm1014, %v2063, 0.0
      %2118 = vadd.xlane.f32.xlu0 %v2117
      %v2119 = vpop.xlane.xlu0 %2118
      %v2120 = vsel %vm1014, %v2064, 0.0
      %2121 = vadd.xlane.f32.xlu0 %v2120
      %v2122 = vpop.xlane.xlu0 %2121
      %v2123 = vsel %vm1014, %v2065, 0.0
      %2124 = vadd.xlane.f32.xlu0 %v2123
      %v2125 = vpop.xlane.xlu0 %2124
      %v2126 = vsel %vm1014, %v2066, 0.0
      %2127 = vadd.xlane.f32.xlu0 %v2126
      %v2128 = vpop.xlane.xlu0 %2127
      %v2129 = vsel %vm1014, %v2067, 0.0
      %2130 = vadd.xlane.f32.xlu0 %v2129
      %v2131 = vpop.xlane.xlu0 %2130
      %v2132 = vsel %vm1014, %v2068, 0.0
      %2133 = vadd.xlane.f32.xlu0 %v2132
      %v2134 = vpop.xlane.xlu0 %2133
      %v2135 = vsel %vm1014, %v2069, 0.0
      %2136 = vadd.xlane.f32.xlu0 %v2135
      %v2137 = vpop.xlane.xlu0 %2136
      %v2138 = vsel %vm1014, %v2070, 0.0
      %2139 = vadd.xlane.f32.xlu0 %v2138
      %v2140 = vpop.xlane.xlu0 %2139
      %v2141 = vsel %vm1014, %v2071, 0.0
      %2142 = vadd.xlane.f32.xlu0 %v2141
      %v2143 = vpop.xlane.xlu0 %2142
      %v2144 = vsel %vm1014, %v2072, 0.0
      %2145 = vadd.xlane.f32.xlu0 %v2144
      %v2146 = vpop.xlane.xlu0 %2145
      %v2147 = vsel %vm1014, %v2073, 0.0
      %2148 = vadd.xlane.f32.xlu0 %v2147
      %v2149 = vpop.xlane.xlu0 %2148
      %v2150 = vsel %vm1014, %v2074, 0.0
      %2151 = vadd.xlane.f32.xlu0 %v2150
      %v2152 = vpop.xlane.xlu0 %2151
      %v2153 = vsel %vm1014, %v2075, 0.0
      %2154 = vadd.xlane.f32.xlu0 %v2153
      %v2155 = vpop.xlane.xlu0 %2154
      %v2156 = vsel %vm1014, %v2076, 0.0
      %2157 = vadd.xlane.f32.xlu0 %v2156
      %v2158 = vpop.xlane.xlu0 %2157
      %v2159 = vsel %vm1014, %v2077, 0.0
      %2160 = vadd.xlane.f32.xlu0 %v2159
      %v2161 = vpop.xlane.xlu0 %2160
      %v2162 = vsel %vm1014, %v2078, 0.0
      %2163 = vadd.xlane.f32.xlu0 %v2162
      %v2164 = vpop.xlane.xlu0 %2163
      %v2165 = vsel %vm1014, %v2079, 0.0
      %2166 = vadd.xlane.f32.xlu0 %v2165
      %v2167 = vpop.xlane.xlu0 %2166
      %v2168 = vsel %vm1014, %v2080, 0.0
      %2169 = vadd.xlane.f32.xlu0 %v2168
      %v2170 = vpop.xlane.xlu0 %2169
      %v2171 = vsel %vm1014, %v2081, 0.0
      %2172 = vadd.xlane.f32.xlu0 %v2171
      %v2173 = vpop.xlane.xlu0 %2172
      %v2174 = vsel %vm1014, %v2082, 0.0
      %2175 = vadd.xlane.f32.xlu0 %v2174
      %v2176 = vpop.xlane.xlu0 %2175
      %v2177 = vsel %vm1014, %v2083, 0.0
      %2178 = vadd.xlane.f32.xlu0 %v2177
      %v2179 = vpop.xlane.xlu0 %2178
      %v2180 = vadd.f32 %v1983, %v2086
      %v2181 = vadd.f32 %v1984, %v2089
      %v2182 = vadd.f32 %v1985, %v2092
      %v2183 = vadd.f32 %v1986, %v2095
      %v2184 = vadd.f32 %v1987, %v2098
      %v2185 = vadd.f32 %v1988, %v2101
      %v2186 = vadd.f32 %v1989, %v2104
      %v2187 = vadd.f32 %v1990, %v2107
      %v2188 = vadd.f32 %v1991, %v2110
      %v2189 = vadd.f32 %v1992, %v2113
      %v2190 = vadd.f32 %v1993, %v2116
      %v2191 = vadd.f32 %v1994, %v2119
      %v2192 = vadd.f32 %v1995, %v2122
      %v2193 = vadd.f32 %v1996, %v2125
      %v2194 = vadd.f32 %v1997, %v2128
      %v2195 = vadd.f32 %v1998, %v2131
      %v2196 = vadd.f32 %v1999, %v2134
      %v2197 = vadd.f32 %v2000, %v2137
      %v2198 = vadd.f32 %v2001, %v2140
      %v2199 = vadd.f32 %v2002, %v2143
      %v2200 = vadd.f32 %v2003, %v2146
      %v2201 = vadd.f32 %v2004, %v2149
      %v2202 = vadd.f32 %v2005, %v2152
      %v2203 = vadd.f32 %v2006, %v2155
      %v2204 = vadd.f32 %v2007, %v2158
      %v2205 = vadd.f32 %v2008, %v2161
      %v2206 = vadd.f32 %v2009, %v2164
      %v2207 = vadd.f32 %v2010, %v2167
      %v2208 = vadd.f32 %v2011, %v2170
      %v2209 = vadd.f32 %v2012, %v2173
      %v2210 = vadd.f32 %v2013, %v2176
      %v2211 = vadd.f32 %v2014, %v2179
      %s2212 = scalar_lea.vmem [#allocation2], 24
      %v2213 = vld [vmem:[%s2212] sm:$0xff]
      %v2214 = vld [vmem:[%s2212 + $0x8] sm:$0xff]
      %v2215 = vld [vmem:[%s2212 + $0x18] sm:$0xff]
      %v2216 = vld [vmem:[%s2212 + $0x20] sm:$0xff]
      %v2217 = vld [vmem:[%s2212 + $0x30] sm:$0xff]
      %v2218 = vld [vmem:[%s2212 + $0x38] sm:$0xff]
      %v2219 = vld [vmem:[%s2212 + $0x48] sm:$0xff]
      %v2220 = vld [vmem:[%s2212 + $0x50] sm:$0xff]
      %v2221 = vld [vmem:[%s2212 + $0x60] sm:$0xff]
      %v2222 = vld [vmem:[%s2212 + $0x68] sm:$0xff]
      %v2223 = vld [vmem:[%s2212 + $0x78] sm:$0xff]
      %v2224 = vld [vmem:[%s2212 + $0x80] sm:$0xff]
      %v2225 = vld [vmem:[%s2212 + $0x90] sm:$0xff]
      %v2226 = vld [vmem:[%s2212 + $0x98] sm:$0xff]
      %v2227 = vld [vmem:[%s2212 + $0xa8] sm:$0xff]
      %v2228 = vld [vmem:[%s2212 + $0xb0] sm:$0xff]
      %v2229 = vld [vmem:[%s2212 + $0xc0] sm:$0xff]
      %v2230 = vld [vmem:[%s2212 + $0xc8] sm:$0xff]
      %v2231 = vld [vmem:[%s2212 + $0xd8] sm:$0xff]
      %v2232 = vld [vmem:[%s2212 + $0xe0] sm:$0xff]
      %v2233 = vld [vmem:[%s2212 + $0xf0] sm:$0xff]
      %v2234 = vld [vmem:[%s2212 + $0xf8] sm:$0xff]
      %v2235 = vld [vmem:[%s2212 + $0x108] sm:$0xff]
      %v2236 = vld [vmem:[%s2212 + $0x110] sm:$0xff]
      %v2237 = vld [vmem:[%s2212 + $0x120] sm:$0xff]
      %v2238 = vld [vmem:[%s2212 + $0x128] sm:$0xff]
      %v2239 = vld [vmem:[%s2212 + $0x138] sm:$0xff]
      %v2240 = vld [vmem:[%s2212 + $0x140] sm:$0xff]
      %v2241 = vld [vmem:[%s2212 + $0x150] sm:$0xff]
      %v2242 = vld [vmem:[%s2212 + $0x158] sm:$0xff]
      %v2243 = vld [vmem:[%s2212 + $0x168] sm:$0xff]
      %v2244 = vld [vmem:[%s2212 + $0x170] sm:$0xff]
      %s2245 = scalar_lea.vmem %s5, 8
      %v2246 = vld [vmem:[%s2245] sm:$0x1]
      %v2247 = vlaneseq
      %v2248 = vshrl.u32 %v2247, 7
      %v2249 = vsub.s32 0, %v2248
      %v2250 = vrot.slane %v2246, %v2249
      %v2251 = vmul.f32 %v2213, %v2250
      %v2252 = vmul.f32 %v2214, %v2250
      %v2253 = vmul.f32 %v2215, %v2250
      %v2254 = vmul.f32 %v2216, %v2250
      %v2255 = vmul.f32 %v2217, %v2250
      %v2256 = vmul.f32 %v2218, %v2250
      %v2257 = vmul.f32 %v2219, %v2250
      %v2258 = vmul.f32 %v2220, %v2250
      %v2259 = vmul.f32 %v2221, %v2250
      %v2260 = vmul.f32 %v2222, %v2250
      %v2261 = vmul.f32 %v2223, %v2250
      %v2262 = vmul.f32 %v2224, %v2250
      %v2263 = vmul.f32 %v2225, %v2250
      %v2264 = vmul.f32 %v2226, %v2250
      %v2265 = vmul.f32 %v2227, %v2250
      %v2266 = vmul.f32 %v2228, %v2250
      %v2267 = vmul.f32 %v2229, %v2250
      %v2268 = vmul.f32 %v2230, %v2250
      %v2269 = vmul.f32 %v2231, %v2250
      %v2270 = vmul.f32 %v2232, %v2250
      %v2271 = vmul.f32 %v2233, %v2250
      %v2272 = vmul.f32 %v2234, %v2250
      %v2273 = vmul.f32 %v2235, %v2250
      %v2274 = vmul.f32 %v2236, %v2250
      %v2275 = vmul.f32 %v2237, %v2250
      %v2276 = vmul.f32 %v2238, %v2250
      %v2277 = vmul.f32 %v2239, %v2250
      %v2278 = vmul.f32 %v2240, %v2250
      %v2279 = vmul.f32 %v2241, %v2250
      %v2280 = vmul.f32 %v2242, %v2250
      %v2281 = vmul.f32 %v2243, %v2250
      %v2282 = vmul.f32 %v2244, %v2250
      %v2283 = vsel %vm1014, %v2251, 0.0
      %2284 = vadd.xlane.f32.xlu0 %v2283
      %v2285 = vpop.xlane.xlu0 %2284
      %v2286 = vsel %vm1014, %v2252, 0.0
      %2287 = vadd.xlane.f32.xlu0 %v2286
      %v2288 = vpop.xlane.xlu0 %2287
      %v2289 = vsel %vm1014, %v2253, 0.0
      %2290 = vadd.xlane.f32.xlu0 %v2289
      %v2291 = vpop.xlane.xlu0 %2290
      %v2292 = vsel %vm1014, %v2254, 0.0
      %2293 = vadd.xlane.f32.xlu0 %v2292
      %v2294 = vpop.xlane.xlu0 %2293
      %v2295 = vsel %vm1014, %v2255, 0.0
      %2296 = vadd.xlane.f32.xlu0 %v2295
      %v2297 = vpop.xlane.xlu0 %2296
      %v2298 = vsel %vm1014, %v2256, 0.0
      %2299 = vadd.xlane.f32.xlu0 %v2298
      %v2300 = vpop.xlane.xlu0 %2299
      %v2301 = vsel %vm1014, %v2257, 0.0
      %2302 = vadd.xlane.f32.xlu0 %v2301
      %v2303 = vpop.xlane.xlu0 %2302
      %v2304 = vsel %vm1014, %v2258, 0.0
      %2305 = vadd.xlane.f32.xlu0 %v2304
      %v2306 = vpop.xlane.xlu0 %2305
      %v2307 = vsel %vm1014, %v2259, 0.0
      %2308 = vadd.xlane.f32.xlu0 %v2307
      %v2309 = vpop.xlane.xlu0 %2308
      %v2310 = vsel %vm1014, %v2260, 0.0
      %2311 = vadd.xlane.f32.xlu0 %v2310
      %v2312 = vpop.xlane.xlu0 %2311
      %v2313 = vsel %vm1014, %v2261, 0.0
      %2314 = vadd.xlane.f32.xlu0 %v2313
      %v2315 = vpop.xlane.xlu0 %2314
      %v2316 = vsel %vm1014, %v2262, 0.0
      %2317 = vadd.xlane.f32.xlu0 %v2316
      %v2318 = vpop.xlane.xlu0 %2317
      %v2319 = vsel %vm1014, %v2263, 0.0
      %2320 = vadd.xlane.f32.xlu0 %v2319
      %v2321 = vpop.xlane.xlu0 %2320
      %v2322 = vsel %vm1014, %v2264, 0.0
      %2323 = vadd.xlane.f32.xlu0 %v2322
      %v2324 = vpop.xlane.xlu0 %2323
      %v2325 = vsel %vm1014, %v2265, 0.0
      %2326 = vadd.xlane.f32.xlu0 %v2325
      %v2327 = vpop.xlane.xlu0 %2326
      %v2328 = vsel %vm1014, %v2266, 0.0
      %2329 = vadd.xlane.f32.xlu0 %v2328
      %v2330 = vpop.xlane.xlu0 %2329
      %v2331 = vsel %vm1014, %v2267, 0.0
      %2332 = vadd.xlane.f32.xlu0 %v2331
      %v2333 = vpop.xlane.xlu0 %2332
      %v2334 = vsel %vm1014, %v2268, 0.0
      %2335 = vadd.xlane.f32.xlu0 %v2334
      %v2336 = vpop.xlane.xlu0 %2335
      %v2337 = vsel %vm1014, %v2269, 0.0
      %2338 = vadd.xlane.f32.xlu0 %v2337
      %v2339 = vpop.xlane.xlu0 %2338
      %v2340 = vsel %vm1014, %v2270, 0.0
      %2341 = vadd.xlane.f32.xlu0 %v2340
      %v2342 = vpop.xlane.xlu0 %2341
      %v2343 = vsel %vm1014, %v2271, 0.0
      %2344 = vadd.xlane.f32.xlu0 %v2343
      %v2345 = vpop.xlane.xlu0 %2344
      %v2346 = vsel %vm1014, %v2272, 0.0
      %2347 = vadd.xlane.f32.xlu0 %v2346
      %v2348 = vpop.xlane.xlu0 %2347
      %v2349 = vsel %vm1014, %v2273, 0.0
      %2350 = vadd.xlane.f32.xlu0 %v2349
      %v2351 = vpop.xlane.xlu0 %2350
      %v2352 = vsel %vm1014, %v2274, 0.0
      %2353 = vadd.xlane.f32.xlu0 %v2352
      %v2354 = vpop.xlane.xlu0 %2353
      %v2355 = vsel %vm1014, %v2275, 0.0
      %2356 = vadd.xlane.f32.xlu0 %v2355
      %v2357 = vpop.xlane.xlu0 %2356
      %v2358 = vsel %vm1014, %v2276, 0.0
      %2359 = vadd.xlane.f32.xlu0 %v2358
      %v2360 = vpop.xlane.xlu0 %2359
      %v2361 = vsel %vm1014, %v2277, 0.0
      %2362 = vadd.xlane.f32.xlu0 %v2361
      %v2363 = vpop.xlane.xlu0 %2362
      %v2364 = vsel %vm1014, %v2278, 0.0
      %2365 = vadd.xlane.f32.xlu0 %v2364
      %v2366 = vpop.xlane.xlu0 %2365
      %v2367 = vsel %vm1014, %v2279, 0.0
      %2368 = vadd.xlane.f32.xlu0 %v2367
      %v2369 = vpop.xlane.xlu0 %2368
      %v2370 = vsel %vm1014, %v2280, 0.0
      %2371 = vadd.xlane.f32.xlu0 %v2370
      %v2372 = vpop.xlane.xlu0 %2371
      %v2373 = vsel %vm1014, %v2281, 0.0
      %2374 = vadd.xlane.f32.xlu0 %v2373
      %v2375 = vpop.xlane.xlu0 %2374
      %v2376 = vsel %vm1014, %v2282, 0.0
      %2377 = vadd.xlane.f32.xlu0 %v2376
      %v2378 = vpop.xlane.xlu0 %2377
      %v2379 = vadd.f32 %v2180, %v2285
      %v2380 = vadd.f32 %v2181, %v2288
      %v2381 = vadd.f32 %v2182, %v2291
      %v2382 = vadd.f32 %v2183, %v2294
      %v2383 = vadd.f32 %v2184, %v2297
      %v2384 = vadd.f32 %v2185, %v2300
      %v2385 = vadd.f32 %v2186, %v2303
      %v2386 = vadd.f32 %v2187, %v2306
      %v2387 = vadd.f32 %v2188, %v2309
      %v2388 = vadd.f32 %v2189, %v2312
      %v2389 = vadd.f32 %v2190, %v2315
      %v2390 = vadd.f32 %v2191, %v2318
      %v2391 = vadd.f32 %v2192, %v2321
      %v2392 = vadd.f32 %v2193, %v2324
      %v2393 = vadd.f32 %v2194, %v2327
      %v2394 = vadd.f32 %v2195, %v2330
      %v2395 = vadd.f32 %v2196, %v2333
      %v2396 = vadd.f32 %v2197, %v2336
      %v2397 = vadd.f32 %v2198, %v2339
      %v2398 = vadd.f32 %v2199, %v2342
      %v2399 = vadd.f32 %v2200, %v2345
      %v2400 = vadd.f32 %v2201, %v2348
      %v2401 = vadd.f32 %v2202, %v2351
      %v2402 = vadd.f32 %v2203, %v2354
      %v2403 = vadd.f32 %v2204, %v2357
      %v2404 = vadd.f32 %v2205, %v2360
      %v2405 = vadd.f32 %v2206, %v2363
      %v2406 = vadd.f32 %v2207, %v2366
      %v2407 = vadd.f32 %v2208, %v2369
      %v2408 = vadd.f32 %v2209, %v2372
      %v2409 = vadd.f32 %v2210, %v2375
      %v2410 = vadd.f32 %v2211, %v2378
      %v2411 = vld [vmem:[%s2212 + $0x1] sm:$0xff]
      %v2412 = vld [vmem:[%s2212 + $0x9] sm:$0xff]
      %v2413 = vld [vmem:[%s2212 + $0x19] sm:$0xff]
      %v2414 = vld [vmem:[%s2212 + $0x21] sm:$0xff]
      %v2415 = vld [vmem:[%s2212 + $0x31] sm:$0xff]
      %v2416 = vld [vmem:[%s2212 + $0x39] sm:$0xff]
      %v2417 = vld [vmem:[%s2212 + $0x49] sm:$0xff]
      %v2418 = vld [vmem:[%s2212 + $0x51] sm:$0xff]
      %v2419 = vld [vmem:[%s2212 + $0x61] sm:$0xff]
      %v2420 = vld [vmem:[%s2212 + $0x69] sm:$0xff]
      %v2421 = vld [vmem:[%s2212 + $0x79] sm:$0xff]
      %v2422 = vld [vmem:[%s2212 + $0x81] sm:$0xff]
      %v2423 = vld [vmem:[%s2212 + $0x91] sm:$0xff]
      %v2424 = vld [vmem:[%s2212 + $0x99] sm:$0xff]
      %v2425 = vld [vmem:[%s2212 + $0xa9] sm:$0xff]
      %v2426 = vld [vmem:[%s2212 + $0xb1] sm:$0xff]
      %v2427 = vld [vmem:[%s2212 + $0xc1] sm:$0xff]
      %v2428 = vld [vmem:[%s2212 + $0xc9] sm:$0xff]
      %v2429 = vld [vmem:[%s2212 + $0xd9] sm:$0xff]
      %v2430 = vld [vmem:[%s2212 + $0xe1] sm:$0xff]
      %v2431 = vld [vmem:[%s2212 + $0xf1] sm:$0xff]
      %v2432 = vld [vmem:[%s2212 + $0xf9] sm:$0xff]
      %v2433 = vld [vmem:[%s2212 + $0x109] sm:$0xff]
      %v2434 = vld [vmem:[%s2212 + $0x111] sm:$0xff]
      %v2435 = vld [vmem:[%s2212 + $0x121] sm:$0xff]
      %v2436 = vld [vmem:[%s2212 + $0x129] sm:$0xff]
      %v2437 = vld [vmem:[%s2212 + $0x139] sm:$0xff]
      %v2438 = vld [vmem:[%s2212 + $0x141] sm:$0xff]
      %v2439 = vld [vmem:[%s2212 + $0x151] sm:$0xff]
      %v2440 = vld [vmem:[%s2212 + $0x159] sm:$0xff]
      %v2441 = vld [vmem:[%s2212 + $0x169] sm:$0xff]
      %v2442 = vld [vmem:[%s2212 + $0x171] sm:$0xff]
      %v2443 = vld [vmem:[%s2245 + $0x1] sm:$0x1]
      %v2444 = vlaneseq
      %v2445 = vshrl.u32 %v2444, 7
      %v2446 = vsub.s32 0, %v2445
      %v2447 = vrot.slane %v2443, %v2446
      %v2448 = vmul.f32 %v2411, %v2447
      %v2449 = vmul.f32 %v2412, %v2447
      %v2450 = vmul.f32 %v2413, %v2447
      %v2451 = vmul.f32 %v2414, %v2447
      %v2452 = vmul.f32 %v2415, %v2447
      %v2453 = vmul.f32 %v2416, %v2447
      %v2454 = vmul.f32 %v2417, %v2447
      %v2455 = vmul.f32 %v2418, %v2447
      %v2456 = vmul.f32 %v2419, %v2447
      %v2457 = vmul.f32 %v2420, %v2447
      %v2458 = vmul.f32 %v2421, %v2447
      %v2459 = vmul.f32 %v2422, %v2447
      %v2460 = vmul.f32 %v2423, %v2447
      %v2461 = vmul.f32 %v2424, %v2447
      %v2462 = vmul.f32 %v2425, %v2447
      %v2463 = vmul.f32 %v2426, %v2447
      %v2464 = vmul.f32 %v2427, %v2447
      %v2465 = vmul.f32 %v2428, %v2447
      %v2466 = vmul.f32 %v2429, %v2447
      %v2467 = vmul.f32 %v2430, %v2447
      %v2468 = vmul.f32 %v2431, %v2447
      %v2469 = vmul.f32 %v2432, %v2447
      %v2470 = vmul.f32 %v2433, %v2447
      %v2471 = vmul.f32 %v2434, %v2447
      %v2472 = vmul.f32 %v2435, %v2447
      %v2473 = vmul.f32 %v2436, %v2447
      %v2474 = vmul.f32 %v2437, %v2447
      %v2475 = vmul.f32 %v2438, %v2447
      %v2476 = vmul.f32 %v2439, %v2447
      %v2477 = vmul.f32 %v2440, %v2447
      %v2478 = vmul.f32 %v2441, %v2447
      %v2479 = vmul.f32 %v2442, %v2447
      %v2480 = vsel %vm1014, %v2448, 0.0
      %2481 = vadd.xlane.f32.xlu0 %v2480
      %v2482 = vpop.xlane.xlu0 %2481
      %v2483 = vsel %vm1014, %v2449, 0.0
      %2484 = vadd.xlane.f32.xlu0 %v2483
      %v2485 = vpop.xlane.xlu0 %2484
      %v2486 = vsel %vm1014, %v2450, 0.0
      %2487 = vadd.xlane.f32.xlu0 %v2486
      %v2488 = vpop.xlane.xlu0 %2487
      %v2489 = vsel %vm1014, %v2451, 0.0
      %2490 = vadd.xlane.f32.xlu0 %v2489
      %v2491 = vpop.xlane.xlu0 %2490
      %v2492 = vsel %vm1014, %v2452, 0.0
      %2493 = vadd.xlane.f32.xlu0 %v2492
      %v2494 = vpop.xlane.xlu0 %2493
      %v2495 = vsel %vm1014, %v2453, 0.0
      %2496 = vadd.xlane.f32.xlu0 %v2495
      %v2497 = vpop.xlane.xlu0 %2496
      %v2498 = vsel %vm1014, %v2454, 0.0
      %2499 = vadd.xlane.f32.xlu0 %v2498
      %v2500 = vpop.xlane.xlu0 %2499
      %v2501 = vsel %vm1014, %v2455, 0.0
      %2502 = vadd.xlane.f32.xlu0 %v2501
      %v2503 = vpop.xlane.xlu0 %2502
      %v2504 = vsel %vm1014, %v2456, 0.0
      %2505 = vadd.xlane.f32.xlu0 %v2504
      %v2506 = vpop.xlane.xlu0 %2505
      %v2507 = vsel %vm1014, %v2457, 0.0
      %2508 = vadd.xlane.f32.xlu0 %v2507
      %v2509 = vpop.xlane.xlu0 %2508
      %v2510 = vsel %vm1014, %v2458, 0.0
      %2511 = vadd.xlane.f32.xlu0 %v2510
      %v2512 = vpop.xlane.xlu0 %2511
      %v2513 = vsel %vm1014, %v2459, 0.0
      %2514 = vadd.xlane.f32.xlu0 %v2513
      %v2515 = vpop.xlane.xlu0 %2514
      %v2516 = vsel %vm1014, %v2460, 0.0
      %2517 = vadd.xlane.f32.xlu0 %v2516
      %v2518 = vpop.xlane.xlu0 %2517
      %v2519 = vsel %vm1014, %v2461, 0.0
      %2520 = vadd.xlane.f32.xlu0 %v2519
      %v2521 = vpop.xlane.xlu0 %2520
      %v2522 = vsel %vm1014, %v2462, 0.0
      %2523 = vadd.xlane.f32.xlu0 %v2522
      %v2524 = vpop.xlane.xlu0 %2523
      %v2525 = vsel %vm1014, %v2463, 0.0
      %2526 = vadd.xlane.f32.xlu0 %v2525
      %v2527 = vpop.xlane.xlu0 %2526
      %v2528 = vsel %vm1014, %v2464, 0.0
      %2529 = vadd.xlane.f32.xlu0 %v2528
      %v2530 = vpop.xlane.xlu0 %2529
      %v2531 = vsel %vm1014, %v2465, 0.0
      %2532 = vadd.xlane.f32.xlu0 %v2531
      %v2533 = vpop.xlane.xlu0 %2532
      %v2534 = vsel %vm1014, %v2466, 0.0
      %2535 = vadd.xlane.f32.xlu0 %v2534
      %v2536 = vpop.xlane.xlu0 %2535
      %v2537 = vsel %vm1014, %v2467, 0.0
      %2538 = vadd.xlane.f32.xlu0 %v2537
      %v2539 = vpop.xlane.xlu0 %2538
      %v2540 = vsel %vm1014, %v2468, 0.0
      %2541 = vadd.xlane.f32.xlu0 %v2540
      %v2542 = vpop.xlane.xlu0 %2541
      %v2543 = vsel %vm1014, %v2469, 0.0
      %2544 = vadd.xlane.f32.xlu0 %v2543
      %v2545 = vpop.xlane.xlu0 %2544
      %v2546 = vsel %vm1014, %v2470, 0.0
      %2547 = vadd.xlane.f32.xlu0 %v2546
      %v2548 = vpop.xlane.xlu0 %2547
      %v2549 = vsel %vm1014, %v2471, 0.0
      %2550 = vadd.xlane.f32.xlu0 %v2549
      %v2551 = vpop.xlane.xlu0 %2550
      %v2552 = vsel %vm1014, %v2472, 0.0
      %2553 = vadd.xlane.f32.xlu0 %v2552
      %v2554 = vpop.xlane.xlu0 %2553
      %v2555 = vsel %vm1014, %v2473, 0.0
      %2556 = vadd.xlane.f32.xlu0 %v2555
      %v2557 = vpop.xlane.xlu0 %2556
      %v2558 = vsel %vm1014, %v2474, 0.0
      %2559 = vadd.xlane.f32.xlu0 %v2558
      %v2560 = vpop.xlane.xlu0 %2559
      %v2561 = vsel %vm1014, %v2475, 0.0
      %2562 = vadd.xlane.f32.xlu0 %v2561
      %v2563 = vpop.xlane.xlu0 %2562
      %v2564 = vsel %vm1014, %v2476, 0.0
      %2565 = vadd.xlane.f32.xlu0 %v2564
      %v2566 = vpop.xlane.xlu0 %2565
      %v2567 = vsel %vm1014, %v2477, 0.0
      %2568 = vadd.xlane.f32.xlu0 %v2567
      %v2569 = vpop.xlane.xlu0 %2568
      %v2570 = vsel %vm1014, %v2478, 0.0
      %2571 = vadd.xlane.f32.xlu0 %v2570
      %v2572 = vpop.xlane.xlu0 %2571
      %v2573 = vsel %vm1014, %v2479, 0.0
      %2574 = vadd.xlane.f32.xlu0 %v2573
      %v2575 = vpop.xlane.xlu0 %2574
      %v2576 = vadd.f32 %v2379, %v2482
      %v2577 = vadd.f32 %v2380, %v2485
      %v2578 = vadd.f32 %v2381, %v2488
      %v2579 = vadd.f32 %v2382, %v2491
      %v2580 = vadd.f32 %v2383, %v2494
      %v2581 = vadd.f32 %v2384, %v2497
      %v2582 = vadd.f32 %v2385, %v2500
      %v2583 = vadd.f32 %v2386, %v2503
      %v2584 = vadd.f32 %v2387, %v2506
      %v2585 = vadd.f32 %v2388, %v2509
      %v2586 = vadd.f32 %v2389, %v2512
      %v2587 = vadd.f32 %v2390, %v2515
      %v2588 = vadd.f32 %v2391, %v2518
      %v2589 = vadd.f32 %v2392, %v2521
      %v2590 = vadd.f32 %v2393, %v2524
      %v2591 = vadd.f32 %v2394, %v2527
      %v2592 = vadd.f32 %v2395, %v2530
      %v2593 = vadd.f32 %v2396, %v2533
      %v2594 = vadd.f32 %v2397, %v2536
      %v2595 = vadd.f32 %v2398, %v2539
      %v2596 = vadd.f32 %v2399, %v2542
      %v2597 = vadd.f32 %v2400, %v2545
      %v2598 = vadd.f32 %v2401, %v2548
      %v2599 = vadd.f32 %v2402, %v2551
      %v2600 = vadd.f32 %v2403, %v2554
      %v2601 = vadd.f32 %v2404, %v2557
      %v2602 = vadd.f32 %v2405, %v2560
      %v2603 = vadd.f32 %v2406, %v2563
      %v2604 = vadd.f32 %v2407, %v2566
      %v2605 = vadd.f32 %v2408, %v2569
      %v2606 = vadd.f32 %v2409, %v2572
      %v2607 = vadd.f32 %v2410, %v2575
      %v2608 = vld [vmem:[%s2212 + $0x2] sm:$0xff]
      %v2609 = vld [vmem:[%s2212 + $0xa] sm:$0xff]
      %v2610 = vld [vmem:[%s2212 + $0x1a] sm:$0xff]
      %v2611 = vld [vmem:[%s2212 + $0x22] sm:$0xff]
      %v2612 = vld [vmem:[%s2212 + $0x32] sm:$0xff]
      %v2613 = vld [vmem:[%s2212 + $0x3a] sm:$0xff]
      %v2614 = vld [vmem:[%s2212 + $0x4a] sm:$0xff]
      %v2615 = vld [vmem:[%s2212 + $0x52] sm:$0xff]
      %v2616 = vld [vmem:[%s2212 + $0x62] sm:$0xff]
      %v2617 = vld [vmem:[%s2212 + $0x6a] sm:$0xff]
      %v2618 = vld [vmem:[%s2212 + $0x7a] sm:$0xff]
      %v2619 = vld [vmem:[%s2212 + $0x82] sm:$0xff]
      %v2620 = vld [vmem:[%s2212 + $0x92] sm:$0xff]
      %v2621 = vld [vmem:[%s2212 + $0x9a] sm:$0xff]
      %v2622 = vld [vmem:[%s2212 + $0xaa] sm:$0xff]
      %v2623 = vld [vmem:[%s2212 + $0xb2] sm:$0xff]
      %v2624 = vld [vmem:[%s2212 + $0xc2] sm:$0xff]
      %v2625 = vld [vmem:[%s2212 + $0xca] sm:$0xff]
      %v2626 = vld [vmem:[%s2212 + $0xda] sm:$0xff]
      %v2627 = vld [vmem:[%s2212 + $0xe2] sm:$0xff]
      %v2628 = vld [vmem:[%s2212 + $0xf2] sm:$0xff]
      %v2629 = vld [vmem:[%s2212 + $0xfa] sm:$0xff]
      %v2630 = vld [vmem:[%s2212 + $0x10a] sm:$0xff]
      %v2631 = vld [vmem:[%s2212 + $0x112] sm:$0xff]
      %v2632 = vld [vmem:[%s2212 + $0x122] sm:$0xff]
      %v2633 = vld [vmem:[%s2212 + $0x12a] sm:$0xff]
      %v2634 = vld [vmem:[%s2212 + $0x13a] sm:$0xff]
      %v2635 = vld [vmem:[%s2212 + $0x142] sm:$0xff]
      %v2636 = vld [vmem:[%s2212 + $0x152] sm:$0xff]
      %v2637 = vld [vmem:[%s2212 + $0x15a] sm:$0xff]
      %v2638 = vld [vmem:[%s2212 + $0x16a] sm:$0xff]
      %v2639 = vld [vmem:[%s2212 + $0x172] sm:$0xff]
      %v2640 = vld [vmem:[%s2245 + $0x2] sm:$0x1]
      %v2641 = vlaneseq
      %v2642 = vshrl.u32 %v2641, 7
      %v2643 = vsub.s32 0, %v2642
      %v2644 = vrot.slane %v2640, %v2643
      %v2645 = vmul.f32 %v2608, %v2644
      %v2646 = vmul.f32 %v2609, %v2644
      %v2647 = vmul.f32 %v2610, %v2644
      %v2648 = vmul.f32 %v2611, %v2644
      %v2649 = vmul.f32 %v2612, %v2644
      %v2650 = vmul.f32 %v2613, %v2644
      %v2651 = vmul.f32 %v2614, %v2644
      %v2652 = vmul.f32 %v2615, %v2644
      %v2653 = vmul.f32 %v2616, %v2644
      %v2654 = vmul.f32 %v2617, %v2644
      %v2655 = vmul.f32 %v2618, %v2644
      %v2656 = vmul.f32 %v2619, %v2644
      %v2657 = vmul.f32 %v2620, %v2644
      %v2658 = vmul.f32 %v2621, %v2644
      %v2659 = vmul.f32 %v2622, %v2644
      %v2660 = vmul.f32 %v2623, %v2644
      %v2661 = vmul.f32 %v2624, %v2644
      %v2662 = vmul.f32 %v2625, %v2644
      %v2663 = vmul.f32 %v2626, %v2644
      %v2664 = vmul.f32 %v2627, %v2644
      %v2665 = vmul.f32 %v2628, %v2644
      %v2666 = vmul.f32 %v2629, %v2644
      %v2667 = vmul.f32 %v2630, %v2644
      %v2668 = vmul.f32 %v2631, %v2644
      %v2669 = vmul.f32 %v2632, %v2644
      %v2670 = vmul.f32 %v2633, %v2644
      %v2671 = vmul.f32 %v2634, %v2644
      %v2672 = vmul.f32 %v2635, %v2644
      %v2673 = vmul.f32 %v2636, %v2644
      %v2674 = vmul.f32 %v2637, %v2644
      %v2675 = vmul.f32 %v2638, %v2644
      %v2676 = vmul.f32 %v2639, %v2644
      %v2677 = vsel %vm1014, %v2645, 0.0
      %2678 = vadd.xlane.f32.xlu0 %v2677
      %v2679 = vpop.xlane.xlu0 %2678
      %v2680 = vsel %vm1014, %v2646, 0.0
      %2681 = vadd.xlane.f32.xlu0 %v2680
      %v2682 = vpop.xlane.xlu0 %2681
      %v2683 = vsel %vm1014, %v2647, 0.0
      %2684 = vadd.xlane.f32.xlu0 %v2683
      %v2685 = vpop.xlane.xlu0 %2684
      %v2686 = vsel %vm1014, %v2648, 0.0
      %2687 = vadd.xlane.f32.xlu0 %v2686
      %v2688 = vpop.xlane.xlu0 %2687
      %v2689 = vsel %vm1014, %v2649, 0.0
      %2690 = vadd.xlane.f32.xlu0 %v2689
      %v2691 = vpop.xlane.xlu0 %2690
      %v2692 = vsel %vm1014, %v2650, 0.0
      %2693 = vadd.xlane.f32.xlu0 %v2692
      %v2694 = vpop.xlane.xlu0 %2693
      %v2695 = vsel %vm1014, %v2651, 0.0
      %2696 = vadd.xlane.f32.xlu0 %v2695
      %v2697 = vpop.xlane.xlu0 %2696
      %v2698 = vsel %vm1014, %v2652, 0.0
      %2699 = vadd.xlane.f32.xlu0 %v2698
      %v2700 = vpop.xlane.xlu0 %2699
      %v2701 = vsel %vm1014, %v2653, 0.0
      %2702 = vadd.xlane.f32.xlu0 %v2701
      %v2703 = vpop.xlane.xlu0 %2702
      %v2704 = vsel %vm1014, %v2654, 0.0
      %2705 = vadd.xlane.f32.xlu0 %v2704
      %v2706 = vpop.xlane.xlu0 %2705
      %v2707 = vsel %vm1014, %v2655, 0.0
      %2708 = vadd.xlane.f32.xlu0 %v2707
      %v2709 = vpop.xlane.xlu0 %2708
      %v2710 = vsel %vm1014, %v2656, 0.0
      %2711 = vadd.xlane.f32.xlu0 %v2710
      %v2712 = vpop.xlane.xlu0 %2711
      %v2713 = vsel %vm1014, %v2657, 0.0
      %2714 = vadd.xlane.f32.xlu0 %v2713
      %v2715 = vpop.xlane.xlu0 %2714
      %v2716 = vsel %vm1014, %v2658, 0.0
      %2717 = vadd.xlane.f32.xlu0 %v2716
      %v2718 = vpop.xlane.xlu0 %2717
      %v2719 = vsel %vm1014, %v2659, 0.0
      %2720 = vadd.xlane.f32.xlu0 %v2719
      %v2721 = vpop.xlane.xlu0 %2720
      %v2722 = vsel %vm1014, %v2660, 0.0
      %2723 = vadd.xlane.f32.xlu0 %v2722
      %v2724 = vpop.xlane.xlu0 %2723
      %v2725 = vsel %vm1014, %v2661, 0.0
      %2726 = vadd.xlane.f32.xlu0 %v2725
      %v2727 = vpop.xlane.xlu0 %2726
      %v2728 = vsel %vm1014, %v2662, 0.0
      %2729 = vadd.xlane.f32.xlu0 %v2728
      %v2730 = vpop.xlane.xlu0 %2729
      %v2731 = vsel %vm1014, %v2663, 0.0
      %2732 = vadd.xlane.f32.xlu0 %v2731
      %v2733 = vpop.xlane.xlu0 %2732
      %v2734 = vsel %vm1014, %v2664, 0.0
      %2735 = vadd.xlane.f32.xlu0 %v2734
      %v2736 = vpop.xlane.xlu0 %2735
      %v2737 = vsel %vm1014, %v2665, 0.0
      %2738 = vadd.xlane.f32.xlu0 %v2737
      %v2739 = vpop.xlane.xlu0 %2738
      %v2740 = vsel %vm1014, %v2666, 0.0
      %2741 = vadd.xlane.f32.xlu0 %v2740
      %v2742 = vpop.xlane.xlu0 %2741
      %v2743 = vsel %vm1014, %v2667, 0.0
      %2744 = vadd.xlane.f32.xlu0 %v2743
      %v2745 = vpop.xlane.xlu0 %2744
      %v2746 = vsel %vm1014, %v2668, 0.0
      %2747 = vadd.xlane.f32.xlu0 %v2746
      %v2748 = vpop.xlane.xlu0 %2747
      %v2749 = vsel %vm1014, %v2669, 0.0
      %2750 = vadd.xlane.f32.xlu0 %v2749
      %v2751 = vpop.xlane.xlu0 %2750
      %v2752 = vsel %vm1014, %v2670, 0.0
      %2753 = vadd.xlane.f32.xlu0 %v2752
      %v2754 = vpop.xlane.xlu0 %2753
      %v2755 = vsel %vm1014, %v2671, 0.0
      %2756 = vadd.xlane.f32.xlu0 %v2755
      %v2757 = vpop.xlane.xlu0 %2756
      %v2758 = vsel %vm1014, %v2672, 0.0
      %2759 = vadd.xlane.f32.xlu0 %v2758
      %v2760 = vpop.xlane.xlu0 %2759
      %v2761 = vsel %vm1014, %v2673, 0.0
      %2762 = vadd.xlane.f32.xlu0 %v2761
      %v2763 = vpop.xlane.xlu0 %2762
      %v2764 = vsel %vm1014, %v2674, 0.0
      %2765 = vadd.xlane.f32.xlu0 %v2764
      %v2766 = vpop.xlane.xlu0 %2765
      %v2767 = vsel %vm1014, %v2675, 0.0
      %2768 = vadd.xlane.f32.xlu0 %v2767
      %v2769 = vpop.xlane.xlu0 %2768
      %v2770 = vsel %vm1014, %v2676, 0.0
      %2771 = vadd.xlane.f32.xlu0 %v2770
      %v2772 = vpop.xlane.xlu0 %2771
      %v2773 = vadd.f32 %v2576, %v2679
      %v2774 = vadd.f32 %v2577, %v2682
      %v2775 = vadd.f32 %v2578, %v2685
      %v2776 = vadd.f32 %v2579, %v2688
      %v2777 = vadd.f32 %v2580, %v2691
      %v2778 = vadd.f32 %v2581, %v2694
      %v2779 = vadd.f32 %v2582, %v2697
      %v2780 = vadd.f32 %v2583, %v2700
      %v2781 = vadd.f32 %v2584, %v2703
      %v2782 = vadd.f32 %v2585, %v2706
      %v2783 = vadd.f32 %v2586, %v2709
      %v2784 = vadd.f32 %v2587, %v2712
      %v2785 = vadd.f32 %v2588, %v2715
      %v2786 = vadd.f32 %v2589, %v2718
      %v2787 = vadd.f32 %v2590, %v2721
      %v2788 = vadd.f32 %v2591, %v2724
      %v2789 = vadd.f32 %v2592, %v2727
      %v2790 = vadd.f32 %v2593, %v2730
      %v2791 = vadd.f32 %v2594, %v2733
      %v2792 = vadd.f32 %v2595, %v2736
      %v2793 = vadd.f32 %v2596, %v2739
      %v2794 = vadd.f32 %v2597, %v2742
      %v2795 = vadd.f32 %v2598, %v2745
      %v2796 = vadd.f32 %v2599, %v2748
      %v2797 = vadd.f32 %v2600, %v2751
      %v2798 = vadd.f32 %v2601, %v2754
      %v2799 = vadd.f32 %v2602, %v2757
      %v2800 = vadd.f32 %v2603, %v2760
      %v2801 = vadd.f32 %v2604, %v2763
      %v2802 = vadd.f32 %v2605, %v2766
      %v2803 = vadd.f32 %v2606, %v2769
      %v2804 = vadd.f32 %v2607, %v2772
      %v2805 = vld [vmem:[%s2212 + $0x3] sm:$0xff]
      %v2806 = vld [vmem:[%s2212 + $0xb] sm:$0xff]
      %v2807 = vld [vmem:[%s2212 + $0x1b] sm:$0xff]
      %v2808 = vld [vmem:[%s2212 + $0x23] sm:$0xff]
      %v2809 = vld [vmem:[%s2212 + $0x33] sm:$0xff]
      %v2810 = vld [vmem:[%s2212 + $0x3b] sm:$0xff]
      %v2811 = vld [vmem:[%s2212 + $0x4b] sm:$0xff]
      %v2812 = vld [vmem:[%s2212 + $0x53] sm:$0xff]
      %v2813 = vld [vmem:[%s2212 + $0x63] sm:$0xff]
      %v2814 = vld [vmem:[%s2212 + $0x6b] sm:$0xff]
      %v2815 = vld [vmem:[%s2212 + $0x7b] sm:$0xff]
      %v2816 = vld [vmem:[%s2212 + $0x83] sm:$0xff]
      %v2817 = vld [vmem:[%s2212 + $0x93] sm:$0xff]
      %v2818 = vld [vmem:[%s2212 + $0x9b] sm:$0xff]
      %v2819 = vld [vmem:[%s2212 + $0xab] sm:$0xff]
      %v2820 = vld [vmem:[%s2212 + $0xb3] sm:$0xff]
      %v2821 = vld [vmem:[%s2212 + $0xc3] sm:$0xff]
      %v2822 = vld [vmem:[%s2212 + $0xcb] sm:$0xff]
      %v2823 = vld [vmem:[%s2212 + $0xdb] sm:$0xff]
      %v2824 = vld [vmem:[%s2212 + $0xe3] sm:$0xff]
      %v2825 = vld [vmem:[%s2212 + $0xf3] sm:$0xff]
      %v2826 = vld [vmem:[%s2212 + $0xfb] sm:$0xff]
      %v2827 = vld [vmem:[%s2212 + $0x10b] sm:$0xff]
      %v2828 = vld [vmem:[%s2212 + $0x113] sm:$0xff]
      %v2829 = vld [vmem:[%s2212 + $0x123] sm:$0xff]
      %v2830 = vld [vmem:[%s2212 + $0x12b] sm:$0xff]
      %v2831 = vld [vmem:[%s2212 + $0x13b] sm:$0xff]
      %v2832 = vld [vmem:[%s2212 + $0x143] sm:$0xff]
      %v2833 = vld [vmem:[%s2212 + $0x153] sm:$0xff]
      %v2834 = vld [vmem:[%s2212 + $0x15b] sm:$0xff]
      %v2835 = vld [vmem:[%s2212 + $0x16b] sm:$0xff]
      %v2836 = vld [vmem:[%s2212 + $0x173] sm:$0xff]
      %v2837 = vld [vmem:[%s2245 + $0x3] sm:$0x1]
      %v2838 = vlaneseq
      %v2839 = vshrl.u32 %v2838, 7
      %v2840 = vsub.s32 0, %v2839
      %v2841 = vrot.slane %v2837, %v2840
      %v2842 = vmul.f32 %v2805, %v2841
      %v2843 = vmul.f32 %v2806, %v2841
      %v2844 = vmul.f32 %v2807, %v2841
      %v2845 = vmul.f32 %v2808, %v2841
      %v2846 = vmul.f32 %v2809, %v2841
      %v2847 = vmul.f32 %v2810, %v2841
      %v2848 = vmul.f32 %v2811, %v2841
      %v2849 = vmul.f32 %v2812, %v2841
      %v2850 = vmul.f32 %v2813, %v2841
      %v2851 = vmul.f32 %v2814, %v2841
      %v2852 = vmul.f32 %v2815, %v2841
      %v2853 = vmul.f32 %v2816, %v2841
      %v2854 = vmul.f32 %v2817, %v2841
      %v2855 = vmul.f32 %v2818, %v2841
      %v2856 = vmul.f32 %v2819, %v2841
      %v2857 = vmul.f32 %v2820, %v2841
      %v2858 = vmul.f32 %v2821, %v2841
      %v2859 = vmul.f32 %v2822, %v2841
      %v2860 = vmul.f32 %v2823, %v2841
      %v2861 = vmul.f32 %v2824, %v2841
      %v2862 = vmul.f32 %v2825, %v2841
      %v2863 = vmul.f32 %v2826, %v2841
      %v2864 = vmul.f32 %v2827, %v2841
      %v2865 = vmul.f32 %v2828, %v2841
      %v2866 = vmul.f32 %v2829, %v2841
      %v2867 = vmul.f32 %v2830, %v2841
      %v2868 = vmul.f32 %v2831, %v2841
      %v2869 = vmul.f32 %v2832, %v2841
      %v2870 = vmul.f32 %v2833, %v2841
      %v2871 = vmul.f32 %v2834, %v2841
      %v2872 = vmul.f32 %v2835, %v2841
      %v2873 = vmul.f32 %v2836, %v2841
      %v2874 = vsel %vm1014, %v2842, 0.0
      %2875 = vadd.xlane.f32.xlu0 %v2874
      %v2876 = vpop.xlane.xlu0 %2875
      %v2877 = vsel %vm1014, %v2843, 0.0
      %2878 = vadd.xlane.f32.xlu0 %v2877
      %v2879 = vpop.xlane.xlu0 %2878
      %v2880 = vsel %vm1014, %v2844, 0.0
      %2881 = vadd.xlane.f32.xlu0 %v2880
      %v2882 = vpop.xlane.xlu0 %2881
      %v2883 = vsel %vm1014, %v2845, 0.0
      %2884 = vadd.xlane.f32.xlu0 %v2883
      %v2885 = vpop.xlane.xlu0 %2884
      %v2886 = vsel %vm1014, %v2846, 0.0
      %2887 = vadd.xlane.f32.xlu0 %v2886
      %v2888 = vpop.xlane.xlu0 %2887
      %v2889 = vsel %vm1014, %v2847, 0.0
      %2890 = vadd.xlane.f32.xlu0 %v2889
      %v2891 = vpop.xlane.xlu0 %2890
      %v2892 = vsel %vm1014, %v2848, 0.0
      %2893 = vadd.xlane.f32.xlu0 %v2892
      %v2894 = vpop.xlane.xlu0 %2893
      %v2895 = vsel %vm1014, %v2849, 0.0
      %2896 = vadd.xlane.f32.xlu0 %v2895
      %v2897 = vpop.xlane.xlu0 %2896
      %v2898 = vsel %vm1014, %v2850, 0.0
      %2899 = vadd.xlane.f32.xlu0 %v2898
      %v2900 = vpop.xlane.xlu0 %2899
      %v2901 = vsel %vm1014, %v2851, 0.0
      %2902 = vadd.xlane.f32.xlu0 %v2901
      %v2903 = vpop.xlane.xlu0 %2902
      %v2904 = vsel %vm1014, %v2852, 0.0
      %2905 = vadd.xlane.f32.xlu0 %v2904
      %v2906 = vpop.xlane.xlu0 %2905
      %v2907 = vsel %vm1014, %v2853, 0.0
      %2908 = vadd.xlane.f32.xlu0 %v2907
      %v2909 = vpop.xlane.xlu0 %2908
      %v2910 = vsel %vm1014, %v2854, 0.0
      %2911 = vadd.xlane.f32.xlu0 %v2910
      %v2912 = vpop.xlane.xlu0 %2911
      %v2913 = vsel %vm1014, %v2855, 0.0
      %2914 = vadd.xlane.f32.xlu0 %v2913
      %v2915 = vpop.xlane.xlu0 %2914
      %v2916 = vsel %vm1014, %v2856, 0.0
      %2917 = vadd.xlane.f32.xlu0 %v2916
      %v2918 = vpop.xlane.xlu0 %2917
      %v2919 = vsel %vm1014, %v2857, 0.0
      %2920 = vadd.xlane.f32.xlu0 %v2919
      %v2921 = vpop.xlane.xlu0 %2920
      %v2922 = vsel %vm1014, %v2858, 0.0
      %2923 = vadd.xlane.f32.xlu0 %v2922
      %v2924 = vpop.xlane.xlu0 %2923
      %v2925 = vsel %vm1014, %v2859, 0.0
      %2926 = vadd.xlane.f32.xlu0 %v2925
      %v2927 = vpop.xlane.xlu0 %2926
      %v2928 = vsel %vm1014, %v2860, 0.0
      %2929 = vadd.xlane.f32.xlu0 %v2928
      %v2930 = vpop.xlane.xlu0 %2929
      %v2931 = vsel %vm1014, %v2861, 0.0
      %2932 = vadd.xlane.f32.xlu0 %v2931
      %v2933 = vpop.xlane.xlu0 %2932
      %v2934 = vsel %vm1014, %v2862, 0.0
      %2935 = vadd.xlane.f32.xlu0 %v2934
      %v2936 = vpop.xlane.xlu0 %2935
      %v2937 = vsel %vm1014, %v2863, 0.0
      %2938 = vadd.xlane.f32.xlu0 %v2937
      %v2939 = vpop.xlane.xlu0 %2938
      %v2940 = vsel %vm1014, %v2864, 0.0
      %2941 = vadd.xlane.f32.xlu0 %v2940
      %v2942 = vpop.xlane.xlu0 %2941
      %v2943 = vsel %vm1014, %v2865, 0.0
      %2944 = vadd.xlane.f32.xlu0 %v2943
      %v2945 = vpop.xlane.xlu0 %2944
      %v2946 = vsel %vm1014, %v2866, 0.0
      %2947 = vadd.xlane.f32.xlu0 %v2946
      %v2948 = vpop.xlane.xlu0 %2947
      %v2949 = vsel %vm1014, %v2867, 0.0
      %2950 = vadd.xlane.f32.xlu0 %v2949
      %v2951 = vpop.xlane.xlu0 %2950
      %v2952 = vsel %vm1014, %v2868, 0.0
      %2953 = vadd.xlane.f32.xlu0 %v2952
      %v2954 = vpop.xlane.xlu0 %2953
      %v2955 = vsel %vm1014, %v2869, 0.0
      %2956 = vadd.xlane.f32.xlu0 %v2955
      %v2957 = vpop.xlane.xlu0 %2956
      %v2958 = vsel %vm1014, %v2870, 0.0
      %2959 = vadd.xlane.f32.xlu0 %v2958
      %v2960 = vpop.xlane.xlu0 %2959
      %v2961 = vsel %vm1014, %v2871, 0.0
      %2962 = vadd.xlane.f32.xlu0 %v2961
      %v2963 = vpop.xlane.xlu0 %2962
      %v2964 = vsel %vm1014, %v2872, 0.0
      %2965 = vadd.xlane.f32.xlu0 %v2964
      %v2966 = vpop.xlane.xlu0 %2965
      %v2967 = vsel %vm1014, %v2873, 0.0
      %2968 = vadd.xlane.f32.xlu0 %v2967
      %v2969 = vpop.xlane.xlu0 %2968
      %v2970 = vadd.f32 %v2773, %v2876
      %v2971 = vadd.f32 %v2774, %v2879
      %v2972 = vadd.f32 %v2775, %v2882
      %v2973 = vadd.f32 %v2776, %v2885
      %v2974 = vadd.f32 %v2777, %v2888
      %v2975 = vadd.f32 %v2778, %v2891
      %v2976 = vadd.f32 %v2779, %v2894
      %v2977 = vadd.f32 %v2780, %v2897
      %v2978 = vadd.f32 %v2781, %v2900
      %v2979 = vadd.f32 %v2782, %v2903
      %v2980 = vadd.f32 %v2783, %v2906
      %v2981 = vadd.f32 %v2784, %v2909
      %v2982 = vadd.f32 %v2785, %v2912
      %v2983 = vadd.f32 %v2786, %v2915
      %v2984 = vadd.f32 %v2787, %v2918
      %v2985 = vadd.f32 %v2788, %v2921
      %v2986 = vadd.f32 %v2789, %v2924
      %v2987 = vadd.f32 %v2790, %v2927
      %v2988 = vadd.f32 %v2791, %v2930
      %v2989 = vadd.f32 %v2792, %v2933
      %v2990 = vadd.f32 %v2793, %v2936
      %v2991 = vadd.f32 %v2794, %v2939
      %v2992 = vadd.f32 %v2795, %v2942
      %v2993 = vadd.f32 %v2796, %v2945
      %v2994 = vadd.f32 %v2797, %v2948
      %v2995 = vadd.f32 %v2798, %v2951
      %v2996 = vadd.f32 %v2799, %v2954
      %v2997 = vadd.f32 %v2800, %v2957
      %v2998 = vadd.f32 %v2801, %v2960
      %v2999 = vadd.f32 %v2802, %v2963
      %v3000 = vadd.f32 %v2803, %v2966
      %v3001 = vadd.f32 %v2804, %v2969
      %v3002 = vld [vmem:[%s2212 + $0x4] sm:$0xff]
      %v3003 = vld [vmem:[%s2212 + $0xc] sm:$0xff]
      %v3004 = vld [vmem:[%s2212 + $0x1c] sm:$0xff]
      %v3005 = vld [vmem:[%s2212 + $0x24] sm:$0xff]
      %v3006 = vld [vmem:[%s2212 + $0x34] sm:$0xff]
      %v3007 = vld [vmem:[%s2212 + $0x3c] sm:$0xff]
      %v3008 = vld [vmem:[%s2212 + $0x4c] sm:$0xff]
      %v3009 = vld [vmem:[%s2212 + $0x54] sm:$0xff]
      %v3010 = vld [vmem:[%s2212 + $0x64] sm:$0xff]
      %v3011 = vld [vmem:[%s2212 + $0x6c] sm:$0xff]
      %v3012 = vld [vmem:[%s2212 + $0x7c] sm:$0xff]
      %v3013 = vld [vmem:[%s2212 + $0x84] sm:$0xff]
      %v3014 = vld [vmem:[%s2212 + $0x94] sm:$0xff]
      %v3015 = vld [vmem:[%s2212 + $0x9c] sm:$0xff]
      %v3016 = vld [vmem:[%s2212 + $0xac] sm:$0xff]
      %v3017 = vld [vmem:[%s2212 + $0xb4] sm:$0xff]
      %v3018 = vld [vmem:[%s2212 + $0xc4] sm:$0xff]
      %v3019 = vld [vmem:[%s2212 + $0xcc] sm:$0xff]
      %v3020 = vld [vmem:[%s2212 + $0xdc] sm:$0xff]
      %v3021 = vld [vmem:[%s2212 + $0xe4] sm:$0xff]
      %v3022 = vld [vmem:[%s2212 + $0xf4] sm:$0xff]
      %v3023 = vld [vmem:[%s2212 + $0xfc] sm:$0xff]
      %v3024 = vld [vmem:[%s2212 + $0x10c] sm:$0xff]
      %v3025 = vld [vmem:[%s2212 + $0x114] sm:$0xff]
      %v3026 = vld [vmem:[%s2212 + $0x124] sm:$0xff]
      %v3027 = vld [vmem:[%s2212 + $0x12c] sm:$0xff]
      %v3028 = vld [vmem:[%s2212 + $0x13c] sm:$0xff]
      %v3029 = vld [vmem:[%s2212 + $0x144] sm:$0xff]
      %v3030 = vld [vmem:[%s2212 + $0x154] sm:$0xff]
      %v3031 = vld [vmem:[%s2212 + $0x15c] sm:$0xff]
      %v3032 = vld [vmem:[%s2212 + $0x16c] sm:$0xff]
      %v3033 = vld [vmem:[%s2212 + $0x174] sm:$0xff]
      %v3034 = vld [vmem:[%s2245 + $0x4] sm:$0x1]
      %v3035 = vlaneseq
      %v3036 = vshrl.u32 %v3035, 7
      %v3037 = vsub.s32 0, %v3036
      %v3038 = vrot.slane %v3034, %v3037
      %v3039 = vmul.f32 %v3002, %v3038
      %v3040 = vmul.f32 %v3003, %v3038
      %v3041 = vmul.f32 %v3004, %v3038
      %v3042 = vmul.f32 %v3005, %v3038
      %v3043 = vmul.f32 %v3006, %v3038
      %v3044 = vmul.f32 %v3007, %v3038
      %v3045 = vmul.f32 %v3008, %v3038
      %v3046 = vmul.f32 %v3009, %v3038
      %v3047 = vmul.f32 %v3010, %v3038
      %v3048 = vmul.f32 %v3011, %v3038
      %v3049 = vmul.f32 %v3012, %v3038
      %v3050 = vmul.f32 %v3013, %v3038
      %v3051 = vmul.f32 %v3014, %v3038
      %v3052 = vmul.f32 %v3015, %v3038
      %v3053 = vmul.f32 %v3016, %v3038
      %v3054 = vmul.f32 %v3017, %v3038
      %v3055 = vmul.f32 %v3018, %v3038
      %v3056 = vmul.f32 %v3019, %v3038
      %v3057 = vmul.f32 %v3020, %v3038
      %v3058 = vmul.f32 %v3021, %v3038
      %v3059 = vmul.f32 %v3022, %v3038
      %v3060 = vmul.f32 %v3023, %v3038
      %v3061 = vmul.f32 %v3024, %v3038
      %v3062 = vmul.f32 %v3025, %v3038
      %v3063 = vmul.f32 %v3026, %v3038
      %v3064 = vmul.f32 %v3027, %v3038
      %v3065 = vmul.f32 %v3028, %v3038
      %v3066 = vmul.f32 %v3029, %v3038
      %v3067 = vmul.f32 %v3030, %v3038
      %v3068 = vmul.f32 %v3031, %v3038
      %v3069 = vmul.f32 %v3032, %v3038
      %v3070 = vmul.f32 %v3033, %v3038
      %v3071 = vsel %vm1014, %v3039, 0.0
      %3072 = vadd.xlane.f32.xlu0 %v3071
      %v3073 = vpop.xlane.xlu0 %3072
      %v3074 = vsel %vm1014, %v3040, 0.0
      %3075 = vadd.xlane.f32.xlu0 %v3074
      %v3076 = vpop.xlane.xlu0 %3075
      %v3077 = vsel %vm1014, %v3041, 0.0
      %3078 = vadd.xlane.f32.xlu0 %v3077
      %v3079 = vpop.xlane.xlu0 %3078
      %v3080 = vsel %vm1014, %v3042, 0.0
      %3081 = vadd.xlane.f32.xlu0 %v3080
      %v3082 = vpop.xlane.xlu0 %3081
      %v3083 = vsel %vm1014, %v3043, 0.0
      %3084 = vadd.xlane.f32.xlu0 %v3083
      %v3085 = vpop.xlane.xlu0 %3084
      %v3086 = vsel %vm1014, %v3044, 0.0
      %3087 = vadd.xlane.f32.xlu0 %v3086
      %v3088 = vpop.xlane.xlu0 %3087
      %v3089 = vsel %vm1014, %v3045, 0.0
      %3090 = vadd.xlane.f32.xlu0 %v3089
      %v3091 = vpop.xlane.xlu0 %3090
      %v3092 = vsel %vm1014, %v3046, 0.0
      %3093 = vadd.xlane.f32.xlu0 %v3092
      %v3094 = vpop.xlane.xlu0 %3093
      %v3095 = vsel %vm1014, %v3047, 0.0
      %3096 = vadd.xlane.f32.xlu0 %v3095
      %v3097 = vpop.xlane.xlu0 %3096
      %v3098 = vsel %vm1014, %v3048, 0.0
      %3099 = vadd.xlane.f32.xlu0 %v3098
      %v3100 = vpop.xlane.xlu0 %3099
      %v3101 = vsel %vm1014, %v3049, 0.0
      %3102 = vadd.xlane.f32.xlu0 %v3101
      %v3103 = vpop.xlane.xlu0 %3102
      %v3104 = vsel %vm1014, %v3050, 0.0
      %3105 = vadd.xlane.f32.xlu0 %v3104
      %v3106 = vpop.xlane.xlu0 %3105
      %v3107 = vsel %vm1014, %v3051, 0.0
      %3108 = vadd.xlane.f32.xlu0 %v3107
      %v3109 = vpop.xlane.xlu0 %3108
      %v3110 = vsel %vm1014, %v3052, 0.0
      %3111 = vadd.xlane.f32.xlu0 %v3110
      %v3112 = vpop.xlane.xlu0 %3111
      %v3113 = vsel %vm1014, %v3053, 0.0
      %3114 = vadd.xlane.f32.xlu0 %v3113
      %v3115 = vpop.xlane.xlu0 %3114
      %v3116 = vsel %vm1014, %v3054, 0.0
      %3117 = vadd.xlane.f32.xlu0 %v3116
      %v3118 = vpop.xlane.xlu0 %3117
      %v3119 = vsel %vm1014, %v3055, 0.0
      %3120 = vadd.xlane.f32.xlu0 %v3119
      %v3121 = vpop.xlane.xlu0 %3120
      %v3122 = vsel %vm1014, %v3056, 0.0
      %3123 = vadd.xlane.f32.xlu0 %v3122
      %v3124 = vpop.xlane.xlu0 %3123
      %v3125 = vsel %vm1014, %v3057, 0.0
      %3126 = vadd.xlane.f32.xlu0 %v3125
      %v3127 = vpop.xlane.xlu0 %3126
      %v3128 = vsel %vm1014, %v3058, 0.0
      %3129 = vadd.xlane.f32.xlu0 %v3128
      %v3130 = vpop.xlane.xlu0 %3129
      %v3131 = vsel %vm1014, %v3059, 0.0
      %3132 = vadd.xlane.f32.xlu0 %v3131
      %v3133 = vpop.xlane.xlu0 %3132
      %v3134 = vsel %vm1014, %v3060, 0.0
      %3135 = vadd.xlane.f32.xlu0 %v3134
      %v3136 = vpop.xlane.xlu0 %3135
      %v3137 = vsel %vm1014, %v3061, 0.0
      %3138 = vadd.xlane.f32.xlu0 %v3137
      %v3139 = vpop.xlane.xlu0 %3138
      %v3140 = vsel %vm1014, %v3062, 0.0
      %3141 = vadd.xlane.f32.xlu0 %v3140
      %v3142 = vpop.xlane.xlu0 %3141
      %v3143 = vsel %vm1014, %v3063, 0.0
      %3144 = vadd.xlane.f32.xlu0 %v3143
      %v3145 = vpop.xlane.xlu0 %3144
      %v3146 = vsel %vm1014, %v3064, 0.0
      %3147 = vadd.xlane.f32.xlu0 %v3146
      %v3148 = vpop.xlane.xlu0 %3147
      %v3149 = vsel %vm1014, %v3065, 0.0
      %3150 = vadd.xlane.f32.xlu0 %v3149
      %v3151 = vpop.xlane.xlu0 %3150
      %v3152 = vsel %vm1014, %v3066, 0.0
      %3153 = vadd.xlane.f32.xlu0 %v3152
      %v3154 = vpop.xlane.xlu0 %3153
      %v3155 = vsel %vm1014, %v3067, 0.0
      %3156 = vadd.xlane.f32.xlu0 %v3155
      %v3157 = vpop.xlane.xlu0 %3156
      %v3158 = vsel %vm1014, %v3068, 0.0
      %3159 = vadd.xlane.f32.xlu0 %v3158
      %v3160 = vpop.xlane.xlu0 %3159
      %v3161 = vsel %vm1014, %v3069, 0.0
      %3162 = vadd.xlane.f32.xlu0 %v3161
      %v3163 = vpop.xlane.xlu0 %3162
      %v3164 = vsel %vm1014, %v3070, 0.0
      %3165 = vadd.xlane.f32.xlu0 %v3164
      %v3166 = vpop.xlane.xlu0 %3165
      %v3167 = vadd.f32 %v2970, %v3073
      %v3168 = vadd.f32 %v2971, %v3076
      %v3169 = vadd.f32 %v2972, %v3079
      %v3170 = vadd.f32 %v2973, %v3082
      %v3171 = vadd.f32 %v2974, %v3085
      %v3172 = vadd.f32 %v2975, %v3088
      %v3173 = vadd.f32 %v2976, %v3091
      %v3174 = vadd.f32 %v2977, %v3094
      %v3175 = vadd.f32 %v2978, %v3097
      %v3176 = vadd.f32 %v2979, %v3100
      %v3177 = vadd.f32 %v2980, %v3103
      %v3178 = vadd.f32 %v2981, %v3106
      %v3179 = vadd.f32 %v2982, %v3109
      %v3180 = vadd.f32 %v2983, %v3112
      %v3181 = vadd.f32 %v2984, %v3115
      %v3182 = vadd.f32 %v2985, %v3118
      %v3183 = vadd.f32 %v2986, %v3121
      %v3184 = vadd.f32 %v2987, %v3124
      %v3185 = vadd.f32 %v2988, %v3127
      %v3186 = vadd.f32 %v2989, %v3130
      %v3187 = vadd.f32 %v2990, %v3133
      %v3188 = vadd.f32 %v2991, %v3136
      %v3189 = vadd.f32 %v2992, %v3139
      %v3190 = vadd.f32 %v2993, %v3142
      %v3191 = vadd.f32 %v2994, %v3145
      %v3192 = vadd.f32 %v2995, %v3148
      %v3193 = vadd.f32 %v2996, %v3151
      %v3194 = vadd.f32 %v2997, %v3154
      %v3195 = vadd.f32 %v2998, %v3157
      %v3196 = vadd.f32 %v2999, %v3160
      %v3197 = vadd.f32 %v3000, %v3163
      %v3198 = vadd.f32 %v3001, %v3166
      %s3199 = scalar_lea.vmem [#allocation2], 48
      %v3200 = vld [vmem:[%s3199] sm:$0xff]
      %v3201 = vld [vmem:[%s3199 + $0x8] sm:$0xff]
      %v3202 = vld [vmem:[%s3199 + $0x18] sm:$0xff]
      %v3203 = vld [vmem:[%s3199 + $0x20] sm:$0xff]
      %v3204 = vld [vmem:[%s3199 + $0x30] sm:$0xff]
      %v3205 = vld [vmem:[%s3199 + $0x38] sm:$0xff]
      %v3206 = vld [vmem:[%s3199 + $0x48] sm:$0xff]
      %v3207 = vld [vmem:[%s3199 + $0x50] sm:$0xff]
      %v3208 = vld [vmem:[%s3199 + $0x60] sm:$0xff]
      %v3209 = vld [vmem:[%s3199 + $0x68] sm:$0xff]
      %v3210 = vld [vmem:[%s3199 + $0x78] sm:$0xff]
      %v3211 = vld [vmem:[%s3199 + $0x80] sm:$0xff]
      %v3212 = vld [vmem:[%s3199 + $0x90] sm:$0xff]
      %v3213 = vld [vmem:[%s3199 + $0x98] sm:$0xff]
      %v3214 = vld [vmem:[%s3199 + $0xa8] sm:$0xff]
      %v3215 = vld [vmem:[%s3199 + $0xb0] sm:$0xff]
      %v3216 = vld [vmem:[%s3199 + $0xc0] sm:$0xff]
      %v3217 = vld [vmem:[%s3199 + $0xc8] sm:$0xff]
      %v3218 = vld [vmem:[%s3199 + $0xd8] sm:$0xff]
      %v3219 = vld [vmem:[%s3199 + $0xe0] sm:$0xff]
      %v3220 = vld [vmem:[%s3199 + $0xf0] sm:$0xff]
      %v3221 = vld [vmem:[%s3199 + $0xf8] sm:$0xff]
      %v3222 = vld [vmem:[%s3199 + $0x108] sm:$0xff]
      %v3223 = vld [vmem:[%s3199 + $0x110] sm:$0xff]
      %v3224 = vld [vmem:[%s3199 + $0x120] sm:$0xff]
      %v3225 = vld [vmem:[%s3199 + $0x128] sm:$0xff]
      %v3226 = vld [vmem:[%s3199 + $0x138] sm:$0xff]
      %v3227 = vld [vmem:[%s3199 + $0x140] sm:$0xff]
      %v3228 = vld [vmem:[%s3199 + $0x150] sm:$0xff]
      %v3229 = vld [vmem:[%s3199 + $0x158] sm:$0xff]
      %v3230 = vld [vmem:[%s3199 + $0x168] sm:$0xff]
      %v3231 = vld [vmem:[%s3199 + $0x170] sm:$0xff]
      %s3232 = scalar_lea.vmem %s5, 16
      %v3233 = vld [vmem:[%s3232] sm:$0x1]
      %v3234 = vlaneseq
      %v3235 = vshrl.u32 %v3234, 7
      %v3236 = vsub.s32 0, %v3235
      %v3237 = vrot.slane %v3233, %v3236
      %v3238 = vmul.f32 %v3200, %v3237
      %v3239 = vmul.f32 %v3201, %v3237
      %v3240 = vmul.f32 %v3202, %v3237
      %v3241 = vmul.f32 %v3203, %v3237
      %v3242 = vmul.f32 %v3204, %v3237
      %v3243 = vmul.f32 %v3205, %v3237
      %v3244 = vmul.f32 %v3206, %v3237
      %v3245 = vmul.f32 %v3207, %v3237
      %v3246 = vmul.f32 %v3208, %v3237
      %v3247 = vmul.f32 %v3209, %v3237
      %v3248 = vmul.f32 %v3210, %v3237
      %v3249 = vmul.f32 %v3211, %v3237
      %v3250 = vmul.f32 %v3212, %v3237
      %v3251 = vmul.f32 %v3213, %v3237
      %v3252 = vmul.f32 %v3214, %v3237
      %v3253 = vmul.f32 %v3215, %v3237
      %v3254 = vmul.f32 %v3216, %v3237
      %v3255 = vmul.f32 %v3217, %v3237
      %v3256 = vmul.f32 %v3218, %v3237
      %v3257 = vmul.f32 %v3219, %v3237
      %v3258 = vmul.f32 %v3220, %v3237
      %v3259 = vmul.f32 %v3221, %v3237
      %v3260 = vmul.f32 %v3222, %v3237
      %v3261 = vmul.f32 %v3223, %v3237
      %v3262 = vmul.f32 %v3224, %v3237
      %v3263 = vmul.f32 %v3225, %v3237
      %v3264 = vmul.f32 %v3226, %v3237
      %v3265 = vmul.f32 %v3227, %v3237
      %v3266 = vmul.f32 %v3228, %v3237
      %v3267 = vmul.f32 %v3229, %v3237
      %v3268 = vmul.f32 %v3230, %v3237
      %v3269 = vmul.f32 %v3231, %v3237
      %v3270 = vsel %vm1014, %v3238, 0.0
      %3271 = vadd.xlane.f32.xlu0 %v3270
      %v3272 = vpop.xlane.xlu0 %3271
      %v3273 = vsel %vm1014, %v3239, 0.0
      %3274 = vadd.xlane.f32.xlu0 %v3273
      %v3275 = vpop.xlane.xlu0 %3274
      %v3276 = vsel %vm1014, %v3240, 0.0
      %3277 = vadd.xlane.f32.xlu0 %v3276
      %v3278 = vpop.xlane.xlu0 %3277
      %v3279 = vsel %vm1014, %v3241, 0.0
      %3280 = vadd.xlane.f32.xlu0 %v3279
      %v3281 = vpop.xlane.xlu0 %3280
      %v3282 = vsel %vm1014, %v3242, 0.0
      %3283 = vadd.xlane.f32.xlu0 %v3282
      %v3284 = vpop.xlane.xlu0 %3283
      %v3285 = vsel %vm1014, %v3243, 0.0
      %3286 = vadd.xlane.f32.xlu0 %v3285
      %v3287 = vpop.xlane.xlu0 %3286
      %v3288 = vsel %vm1014, %v3244, 0.0
      %3289 = vadd.xlane.f32.xlu0 %v3288
      %v3290 = vpop.xlane.xlu0 %3289
      %v3291 = vsel %vm1014, %v3245, 0.0
      %3292 = vadd.xlane.f32.xlu0 %v3291
      %v3293 = vpop.xlane.xlu0 %3292
      %v3294 = vsel %vm1014, %v3246, 0.0
      %3295 = vadd.xlane.f32.xlu0 %v3294
      %v3296 = vpop.xlane.xlu0 %3295
      %v3297 = vsel %vm1014, %v3247, 0.0
      %3298 = vadd.xlane.f32.xlu0 %v3297
      %v3299 = vpop.xlane.xlu0 %3298
      %v3300 = vsel %vm1014, %v3248, 0.0
      %3301 = vadd.xlane.f32.xlu0 %v3300
      %v3302 = vpop.xlane.xlu0 %3301
      %v3303 = vsel %vm1014, %v3249, 0.0
      %3304 = vadd.xlane.f32.xlu0 %v3303
      %v3305 = vpop.xlane.xlu0 %3304
      %v3306 = vsel %vm1014, %v3250, 0.0
      %3307 = vadd.xlane.f32.xlu0 %v3306
      %v3308 = vpop.xlane.xlu0 %3307
      %v3309 = vsel %vm1014, %v3251, 0.0
      %3310 = vadd.xlane.f32.xlu0 %v3309
      %v3311 = vpop.xlane.xlu0 %3310
      %v3312 = vsel %vm1014, %v3252, 0.0
      %3313 = vadd.xlane.f32.xlu0 %v3312
      %v3314 = vpop.xlane.xlu0 %3313
      %v3315 = vsel %vm1014, %v3253, 0.0
      %3316 = vadd.xlane.f32.xlu0 %v3315
      %v3317 = vpop.xlane.xlu0 %3316
      %v3318 = vsel %vm1014, %v3254, 0.0
      %3319 = vadd.xlane.f32.xlu0 %v3318
      %v3320 = vpop.xlane.xlu0 %3319
      %v3321 = vsel %vm1014, %v3255, 0.0
      %3322 = vadd.xlane.f32.xlu0 %v3321
      %v3323 = vpop.xlane.xlu0 %3322
      %v3324 = vsel %vm1014, %v3256, 0.0
      %3325 = vadd.xlane.f32.xlu0 %v3324
      %v3326 = vpop.xlane.xlu0 %3325
      %v3327 = vsel %vm1014, %v3257, 0.0
      %3328 = vadd.xlane.f32.xlu0 %v3327
      %v3329 = vpop.xlane.xlu0 %3328
      %v3330 = vsel %vm1014, %v3258, 0.0
      %3331 = vadd.xlane.f32.xlu0 %v3330
      %v3332 = vpop.xlane.xlu0 %3331
      %v3333 = vsel %vm1014, %v3259, 0.0
      %3334 = vadd.xlane.f32.xlu0 %v3333
      %v3335 = vpop.xlane.xlu0 %3334
      %v3336 = vsel %vm1014, %v3260, 0.0
      %3337 = vadd.xlane.f32.xlu0 %v3336
      %v3338 = vpop.xlane.xlu0 %3337
      %v3339 = vsel %vm1014, %v3261, 0.0
      %3340 = vadd.xlane.f32.xlu0 %v3339
      %v3341 = vpop.xlane.xlu0 %3340
      %v3342 = vsel %vm1014, %v3262, 0.0
      %3343 = vadd.xlane.f32.xlu0 %v3342
      %v3344 = vpop.xlane.xlu0 %3343
      %v3345 = vsel %vm1014, %v3263, 0.0
      %3346 = vadd.xlane.f32.xlu0 %v3345
      %v3347 = vpop.xlane.xlu0 %3346
      %v3348 = vsel %vm1014, %v3264, 0.0
      %3349 = vadd.xlane.f32.xlu0 %v3348
      %v3350 = vpop.xlane.xlu0 %3349
      %v3351 = vsel %vm1014, %v3265, 0.0
      %3352 = vadd.xlane.f32.xlu0 %v3351
      %v3353 = vpop.xlane.xlu0 %3352
      %v3354 = vsel %vm1014, %v3266, 0.0
      %3355 = vadd.xlane.f32.xlu0 %v3354
      %v3356 = vpop.xlane.xlu0 %3355
      %v3357 = vsel %vm1014, %v3267, 0.0
      %3358 = vadd.xlane.f32.xlu0 %v3357
      %v3359 = vpop.xlane.xlu0 %3358
      %v3360 = vsel %vm1014, %v3268, 0.0
      %3361 = vadd.xlane.f32.xlu0 %v3360
      %v3362 = vpop.xlane.xlu0 %3361
      %v3363 = vsel %vm1014, %v3269, 0.0
      %3364 = vadd.xlane.f32.xlu0 %v3363
      %v3365 = vpop.xlane.xlu0 %3364
      %v3366 = vadd.f32 %v3167, %v3272
      %v3367 = vadd.f32 %v3168, %v3275
      %v3368 = vadd.f32 %v3169, %v3278
      %v3369 = vadd.f32 %v3170, %v3281
      %v3370 = vadd.f32 %v3171, %v3284
      %v3371 = vadd.f32 %v3172, %v3287
      %v3372 = vadd.f32 %v3173, %v3290
      %v3373 = vadd.f32 %v3174, %v3293
      %v3374 = vadd.f32 %v3175, %v3296
      %v3375 = vadd.f32 %v3176, %v3299
      %v3376 = vadd.f32 %v3177, %v3302
      %v3377 = vadd.f32 %v3178, %v3305
      %v3378 = vadd.f32 %v3179, %v3308
      %v3379 = vadd.f32 %v3180, %v3311
      %v3380 = vadd.f32 %v3181, %v3314
      %v3381 = vadd.f32 %v3182, %v3317
      %v3382 = vadd.f32 %v3183, %v3320
      %v3383 = vadd.f32 %v3184, %v3323
      %v3384 = vadd.f32 %v3185, %v3326
      %v3385 = vadd.f32 %v3186, %v3329
      %v3386 = vadd.f32 %v3187, %v3332
      %v3387 = vadd.f32 %v3188, %v3335
      %v3388 = vadd.f32 %v3189, %v3338
      %v3389 = vadd.f32 %v3190, %v3341
      %v3390 = vadd.f32 %v3191, %v3344
      %v3391 = vadd.f32 %v3192, %v3347
      %v3392 = vadd.f32 %v3193, %v3350
      %v3393 = vadd.f32 %v3194, %v3353
      %v3394 = vadd.f32 %v3195, %v3356
      %v3395 = vadd.f32 %v3196, %v3359
      %v3396 = vadd.f32 %v3197, %v3362
      %v3397 = vadd.f32 %v3198, %v3365
      %v3398 = vld [vmem:[%s3199 + $0x1] sm:$0xff]
      %v3399 = vld [vmem:[%s3199 + $0x9] sm:$0xff]
      %v3400 = vld [vmem:[%s3199 + $0x19] sm:$0xff]
      %v3401 = vld [vmem:[%s3199 + $0x21] sm:$0xff]
      %v3402 = vld [vmem:[%s3199 + $0x31] sm:$0xff]
      %v3403 = vld [vmem:[%s3199 + $0x39] sm:$0xff]
      %v3404 = vld [vmem:[%s3199 + $0x49] sm:$0xff]
      %v3405 = vld [vmem:[%s3199 + $0x51] sm:$0xff]
      %v3406 = vld [vmem:[%s3199 + $0x61] sm:$0xff]
      %v3407 = vld [vmem:[%s3199 + $0x69] sm:$0xff]
      %v3408 = vld [vmem:[%s3199 + $0x79] sm:$0xff]
      %v3409 = vld [vmem:[%s3199 + $0x81] sm:$0xff]
      %v3410 = vld [vmem:[%s3199 + $0x91] sm:$0xff]
      %v3411 = vld [vmem:[%s3199 + $0x99] sm:$0xff]
      %v3412 = vld [vmem:[%s3199 + $0xa9] sm:$0xff]
      %v3413 = vld [vmem:[%s3199 + $0xb1] sm:$0xff]
      %v3414 = vld [vmem:[%s3199 + $0xc1] sm:$0xff]
      %v3415 = vld [vmem:[%s3199 + $0xc9] sm:$0xff]
      %v3416 = vld [vmem:[%s3199 + $0xd9] sm:$0xff]
      %v3417 = vld [vmem:[%s3199 + $0xe1] sm:$0xff]
      %v3418 = vld [vmem:[%s3199 + $0xf1] sm:$0xff]
      %v3419 = vld [vmem:[%s3199 + $0xf9] sm:$0xff]
      %v3420 = vld [vmem:[%s3199 + $0x109] sm:$0xff]
      %v3421 = vld [vmem:[%s3199 + $0x111] sm:$0xff]
      %v3422 = vld [vmem:[%s3199 + $0x121] sm:$0xff]
      %v3423 = vld [vmem:[%s3199 + $0x129] sm:$0xff]
      %v3424 = vld [vmem:[%s3199 + $0x139] sm:$0xff]
      %v3425 = vld [vmem:[%s3199 + $0x141] sm:$0xff]
      %v3426 = vld [vmem:[%s3199 + $0x151] sm:$0xff]
      %v3427 = vld [vmem:[%s3199 + $0x159] sm:$0xff]
      %v3428 = vld [vmem:[%s3199 + $0x169] sm:$0xff]
      %v3429 = vld [vmem:[%s3199 + $0x171] sm:$0xff]
      %v3430 = vld [vmem:[%s3232 + $0x1] sm:$0x1]
      %v3431 = vlaneseq
      %v3432 = vshrl.u32 %v3431, 7
      %v3433 = vsub.s32 0, %v3432
      %v3434 = vrot.slane %v3430, %v3433
      %v3435 = vmul.f32 %v3398, %v3434
      %v3436 = vmul.f32 %v3399, %v3434
      %v3437 = vmul.f32 %v3400, %v3434
      %v3438 = vmul.f32 %v3401, %v3434
      %v3439 = vmul.f32 %v3402, %v3434
      %v3440 = vmul.f32 %v3403, %v3434
      %v3441 = vmul.f32 %v3404, %v3434
      %v3442 = vmul.f32 %v3405, %v3434
      %v3443 = vmul.f32 %v3406, %v3434
      %v3444 = vmul.f32 %v3407, %v3434
      %v3445 = vmul.f32 %v3408, %v3434
      %v3446 = vmul.f32 %v3409, %v3434
      %v3447 = vmul.f32 %v3410, %v3434
      %v3448 = vmul.f32 %v3411, %v3434
      %v3449 = vmul.f32 %v3412, %v3434
      %v3450 = vmul.f32 %v3413, %v3434
      %v3451 = vmul.f32 %v3414, %v3434
      %v3452 = vmul.f32 %v3415, %v3434
      %v3453 = vmul.f32 %v3416, %v3434
      %v3454 = vmul.f32 %v3417, %v3434
      %v3455 = vmul.f32 %v3418, %v3434
      %v3456 = vmul.f32 %v3419, %v3434
      %v3457 = vmul.f32 %v3420, %v3434
      %v3458 = vmul.f32 %v3421, %v3434
      %v3459 = vmul.f32 %v3422, %v3434
      %v3460 = vmul.f32 %v3423, %v3434
      %v3461 = vmul.f32 %v3424, %v3434
      %v3462 = vmul.f32 %v3425, %v3434
      %v3463 = vmul.f32 %v3426, %v3434
      %v3464 = vmul.f32 %v3427, %v3434
      %v3465 = vmul.f32 %v3428, %v3434
      %v3466 = vmul.f32 %v3429, %v3434
      %v3467 = vsel %vm1014, %v3435, 0.0
      %3468 = vadd.xlane.f32.xlu0 %v3467
      %v3469 = vpop.xlane.xlu0 %3468
      %v3470 = vsel %vm1014, %v3436, 0.0
      %3471 = vadd.xlane.f32.xlu0 %v3470
      %v3472 = vpop.xlane.xlu0 %3471
      %v3473 = vsel %vm1014, %v3437, 0.0
      %3474 = vadd.xlane.f32.xlu0 %v3473
      %v3475 = vpop.xlane.xlu0 %3474
      %v3476 = vsel %vm1014, %v3438, 0.0
      %3477 = vadd.xlane.f32.xlu0 %v3476
      %v3478 = vpop.xlane.xlu0 %3477
      %v3479 = vsel %vm1014, %v3439, 0.0
      %3480 = vadd.xlane.f32.xlu0 %v3479
      %v3481 = vpop.xlane.xlu0 %3480
      %v3482 = vsel %vm1014, %v3440, 0.0
      %3483 = vadd.xlane.f32.xlu0 %v3482
      %v3484 = vpop.xlane.xlu0 %3483
      %v3485 = vsel %vm1014, %v3441, 0.0
      %3486 = vadd.xlane.f32.xlu0 %v3485
      %v3487 = vpop.xlane.xlu0 %3486
      %v3488 = vsel %vm1014, %v3442, 0.0
      %3489 = vadd.xlane.f32.xlu0 %v3488
      %v3490 = vpop.xlane.xlu0 %3489
      %v3491 = vsel %vm1014, %v3443, 0.0
      %3492 = vadd.xlane.f32.xlu0 %v3491
      %v3493 = vpop.xlane.xlu0 %3492
      %v3494 = vsel %vm1014, %v3444, 0.0
      %3495 = vadd.xlane.f32.xlu0 %v3494
      %v3496 = vpop.xlane.xlu0 %3495
      %v3497 = vsel %vm1014, %v3445, 0.0
      %3498 = vadd.xlane.f32.xlu0 %v3497
      %v3499 = vpop.xlane.xlu0 %3498
      %v3500 = vsel %vm1014, %v3446, 0.0
      %3501 = vadd.xlane.f32.xlu0 %v3500
      %v3502 = vpop.xlane.xlu0 %3501
      %v3503 = vsel %vm1014, %v3447, 0.0
      %3504 = vadd.xlane.f32.xlu0 %v3503
      %v3505 = vpop.xlane.xlu0 %3504
      %v3506 = vsel %vm1014, %v3448, 0.0
      %3507 = vadd.xlane.f32.xlu0 %v3506
      %v3508 = vpop.xlane.xlu0 %3507
      %v3509 = vsel %vm1014, %v3449, 0.0
      %3510 = vadd.xlane.f32.xlu0 %v3509
      %v3511 = vpop.xlane.xlu0 %3510
      %v3512 = vsel %vm1014, %v3450, 0.0
      %3513 = vadd.xlane.f32.xlu0 %v3512
      %v3514 = vpop.xlane.xlu0 %3513
      %v3515 = vsel %vm1014, %v3451, 0.0
      %3516 = vadd.xlane.f32.xlu0 %v3515
      %v3517 = vpop.xlane.xlu0 %3516
      %v3518 = vsel %vm1014, %v3452, 0.0
      %3519 = vadd.xlane.f32.xlu0 %v3518
      %v3520 = vpop.xlane.xlu0 %3519
      %v3521 = vsel %vm1014, %v3453, 0.0
      %3522 = vadd.xlane.f32.xlu0 %v3521
      %v3523 = vpop.xlane.xlu0 %3522
      %v3524 = vsel %vm1014, %v3454, 0.0
      %3525 = vadd.xlane.f32.xlu0 %v3524
      %v3526 = vpop.xlane.xlu0 %3525
      %v3527 = vsel %vm1014, %v3455, 0.0
      %3528 = vadd.xlane.f32.xlu0 %v3527
      %v3529 = vpop.xlane.xlu0 %3528
      %v3530 = vsel %vm1014, %v3456, 0.0
      %3531 = vadd.xlane.f32.xlu0 %v3530
      %v3532 = vpop.xlane.xlu0 %3531
      %v3533 = vsel %vm1014, %v3457, 0.0
      %3534 = vadd.xlane.f32.xlu0 %v3533
      %v3535 = vpop.xlane.xlu0 %3534
      %v3536 = vsel %vm1014, %v3458, 0.0
      %3537 = vadd.xlane.f32.xlu0 %v3536
      %v3538 = vpop.xlane.xlu0 %3537
      %v3539 = vsel %vm1014, %v3459, 0.0
      %3540 = vadd.xlane.f32.xlu0 %v3539
      %v3541 = vpop.xlane.xlu0 %3540
      %v3542 = vsel %vm1014, %v3460, 0.0
      %3543 = vadd.xlane.f32.xlu0 %v3542
      %v3544 = vpop.xlane.xlu0 %3543
      %v3545 = vsel %vm1014, %v3461, 0.0
      %3546 = vadd.xlane.f32.xlu0 %v3545
      %v3547 = vpop.xlane.xlu0 %3546
      %v3548 = vsel %vm1014, %v3462, 0.0
      %3549 = vadd.xlane.f32.xlu0 %v3548
      %v3550 = vpop.xlane.xlu0 %3549
      %v3551 = vsel %vm1014, %v3463, 0.0
      %3552 = vadd.xlane.f32.xlu0 %v3551
      %v3553 = vpop.xlane.xlu0 %3552
      %v3554 = vsel %vm1014, %v3464, 0.0
      %3555 = vadd.xlane.f32.xlu0 %v3554
      %v3556 = vpop.xlane.xlu0 %3555
      %v3557 = vsel %vm1014, %v3465, 0.0
      %3558 = vadd.xlane.f32.xlu0 %v3557
      %v3559 = vpop.xlane.xlu0 %3558
      %v3560 = vsel %vm1014, %v3466, 0.0
      %3561 = vadd.xlane.f32.xlu0 %v3560
      %v3562 = vpop.xlane.xlu0 %3561
      %v3563 = vadd.f32 %v3366, %v3469
      %v3564 = vadd.f32 %v3367, %v3472
      %v3565 = vadd.f32 %v3368, %v3475
      %v3566 = vadd.f32 %v3369, %v3478
      %v3567 = vadd.f32 %v3370, %v3481
      %v3568 = vadd.f32 %v3371, %v3484
      %v3569 = vadd.f32 %v3372, %v3487
      %v3570 = vadd.f32 %v3373, %v3490
      %v3571 = vadd.f32 %v3374, %v3493
      %v3572 = vadd.f32 %v3375, %v3496
      %v3573 = vadd.f32 %v3376, %v3499
      %v3574 = vadd.f32 %v3377, %v3502
      %v3575 = vadd.f32 %v3378, %v3505
      %v3576 = vadd.f32 %v3379, %v3508
      %v3577 = vadd.f32 %v3380, %v3511
      %v3578 = vadd.f32 %v3381, %v3514
      %v3579 = vadd.f32 %v3382, %v3517
      %v3580 = vadd.f32 %v3383, %v3520
      %v3581 = vadd.f32 %v3384, %v3523
      %v3582 = vadd.f32 %v3385, %v3526
      %v3583 = vadd.f32 %v3386, %v3529
      %v3584 = vadd.f32 %v3387, %v3532
      %v3585 = vadd.f32 %v3388, %v3535
      %v3586 = vadd.f32 %v3389, %v3538
      %v3587 = vadd.f32 %v3390, %v3541
      %v3588 = vadd.f32 %v3391, %v3544
      %v3589 = vadd.f32 %v3392, %v3547
      %v3590 = vadd.f32 %v3393, %v3550
      %v3591 = vadd.f32 %v3394, %v3553
      %v3592 = vadd.f32 %v3395, %v3556
      %v3593 = vadd.f32 %v3396, %v3559
      %v3594 = vadd.f32 %v3397, %v3562
      %v3595 = vld [vmem:[%s3199 + $0x2] sm:$0xff]
      %v3596 = vld [vmem:[%s3199 + $0xa] sm:$0xff]
      %v3597 = vld [vmem:[%s3199 + $0x1a] sm:$0xff]
      %v3598 = vld [vmem:[%s3199 + $0x22] sm:$0xff]
      %v3599 = vld [vmem:[%s3199 + $0x32] sm:$0xff]
      %v3600 = vld [vmem:[%s3199 + $0x3a] sm:$0xff]
      %v3601 = vld [vmem:[%s3199 + $0x4a] sm:$0xff]
      %v3602 = vld [vmem:[%s3199 + $0x52] sm:$0xff]
      %v3603 = vld [vmem:[%s3199 + $0x62] sm:$0xff]
      %v3604 = vld [vmem:[%s3199 + $0x6a] sm:$0xff]
      %v3605 = vld [vmem:[%s3199 + $0x7a] sm:$0xff]
      %v3606 = vld [vmem:[%s3199 + $0x82] sm:$0xff]
      %v3607 = vld [vmem:[%s3199 + $0x92] sm:$0xff]
      %v3608 = vld [vmem:[%s3199 + $0x9a] sm:$0xff]
      %v3609 = vld [vmem:[%s3199 + $0xaa] sm:$0xff]
      %v3610 = vld [vmem:[%s3199 + $0xb2] sm:$0xff]
      %v3611 = vld [vmem:[%s3199 + $0xc2] sm:$0xff]
      %v3612 = vld [vmem:[%s3199 + $0xca] sm:$0xff]
      %v3613 = vld [vmem:[%s3199 + $0xda] sm:$0xff]
      %v3614 = vld [vmem:[%s3199 + $0xe2] sm:$0xff]
      %v3615 = vld [vmem:[%s3199 + $0xf2] sm:$0xff]
      %v3616 = vld [vmem:[%s3199 + $0xfa] sm:$0xff]
      %v3617 = vld [vmem:[%s3199 + $0x10a] sm:$0xff]
      %v3618 = vld [vmem:[%s3199 + $0x112] sm:$0xff]
      %v3619 = vld [vmem:[%s3199 + $0x122] sm:$0xff]
      %v3620 = vld [vmem:[%s3199 + $0x12a] sm:$0xff]
      %v3621 = vld [vmem:[%s3199 + $0x13a] sm:$0xff]
      %v3622 = vld [vmem:[%s3199 + $0x142] sm:$0xff]
      %v3623 = vld [vmem:[%s3199 + $0x152] sm:$0xff]
      %v3624 = vld [vmem:[%s3199 + $0x15a] sm:$0xff]
      %v3625 = vld [vmem:[%s3199 + $0x16a] sm:$0xff]
      %v3626 = vld [vmem:[%s3199 + $0x172] sm:$0xff]
      %v3627 = vld [vmem:[%s3232 + $0x2] sm:$0x1]
      %v3628 = vlaneseq
      %v3629 = vshrl.u32 %v3628, 7
      %v3630 = vsub.s32 0, %v3629
      %v3631 = vrot.slane %v3627, %v3630
      %v3632 = vmul.f32 %v3595, %v3631
      %v3633 = vmul.f32 %v3596, %v3631
      %v3634 = vmul.f32 %v3597, %v3631
      %v3635 = vmul.f32 %v3598, %v3631
      %v3636 = vmul.f32 %v3599, %v3631
      %v3637 = vmul.f32 %v3600, %v3631
      %v3638 = vmul.f32 %v3601, %v3631
      %v3639 = vmul.f32 %v3602, %v3631
      %v3640 = vmul.f32 %v3603, %v3631
      %v3641 = vmul.f32 %v3604, %v3631
      %v3642 = vmul.f32 %v3605, %v3631
      %v3643 = vmul.f32 %v3606, %v3631
      %v3644 = vmul.f32 %v3607, %v3631
      %v3645 = vmul.f32 %v3608, %v3631
      %v3646 = vmul.f32 %v3609, %v3631
      %v3647 = vmul.f32 %v3610, %v3631
      %v3648 = vmul.f32 %v3611, %v3631
      %v3649 = vmul.f32 %v3612, %v3631
      %v3650 = vmul.f32 %v3613, %v3631
      %v3651 = vmul.f32 %v3614, %v3631
      %v3652 = vmul.f32 %v3615, %v3631
      %v3653 = vmul.f32 %v3616, %v3631
      %v3654 = vmul.f32 %v3617, %v3631
      %v3655 = vmul.f32 %v3618, %v3631
      %v3656 = vmul.f32 %v3619, %v3631
      %v3657 = vmul.f32 %v3620, %v3631
      %v3658 = vmul.f32 %v3621, %v3631
      %v3659 = vmul.f32 %v3622, %v3631
      %v3660 = vmul.f32 %v3623, %v3631
      %v3661 = vmul.f32 %v3624, %v3631
      %v3662 = vmul.f32 %v3625, %v3631
      %v3663 = vmul.f32 %v3626, %v3631
      %v3664 = vsel %vm1014, %v3632, 0.0
      %3665 = vadd.xlane.f32.xlu0 %v3664
      %v3666 = vpop.xlane.xlu0 %3665
      %v3667 = vsel %vm1014, %v3633, 0.0
      %3668 = vadd.xlane.f32.xlu0 %v3667
      %v3669 = vpop.xlane.xlu0 %3668
      %v3670 = vsel %vm1014, %v3634, 0.0
      %3671 = vadd.xlane.f32.xlu0 %v3670
      %v3672 = vpop.xlane.xlu0 %3671
      %v3673 = vsel %vm1014, %v3635, 0.0
      %3674 = vadd.xlane.f32.xlu0 %v3673
      %v3675 = vpop.xlane.xlu0 %3674
      %v3676 = vsel %vm1014, %v3636, 0.0
      %3677 = vadd.xlane.f32.xlu0 %v3676
      %v3678 = vpop.xlane.xlu0 %3677
      %v3679 = vsel %vm1014, %v3637, 0.0
      %3680 = vadd.xlane.f32.xlu0 %v3679
      %v3681 = vpop.xlane.xlu0 %3680
      %v3682 = vsel %vm1014, %v3638, 0.0
      %3683 = vadd.xlane.f32.xlu0 %v3682
      %v3684 = vpop.xlane.xlu0 %3683
      %v3685 = vsel %vm1014, %v3639, 0.0
      %3686 = vadd.xlane.f32.xlu0 %v3685
      %v3687 = vpop.xlane.xlu0 %3686
      %v3688 = vsel %vm1014, %v3640, 0.0
      %3689 = vadd.xlane.f32.xlu0 %v3688
      %v3690 = vpop.xlane.xlu0 %3689
      %v3691 = vsel %vm1014, %v3641, 0.0
      %3692 = vadd.xlane.f32.xlu0 %v3691
      %v3693 = vpop.xlane.xlu0 %3692
      %v3694 = vsel %vm1014, %v3642, 0.0
      %3695 = vadd.xlane.f32.xlu0 %v3694
      %v3696 = vpop.xlane.xlu0 %3695
      %v3697 = vsel %vm1014, %v3643, 0.0
      %3698 = vadd.xlane.f32.xlu0 %v3697
      %v3699 = vpop.xlane.xlu0 %3698
      %v3700 = vsel %vm1014, %v3644, 0.0
      %3701 = vadd.xlane.f32.xlu0 %v3700
      %v3702 = vpop.xlane.xlu0 %3701
      %v3703 = vsel %vm1014, %v3645, 0.0
      %3704 = vadd.xlane.f32.xlu0 %v3703
      %v3705 = vpop.xlane.xlu0 %3704
      %v3706 = vsel %vm1014, %v3646, 0.0
      %3707 = vadd.xlane.f32.xlu0 %v3706
      %v3708 = vpop.xlane.xlu0 %3707
      %v3709 = vsel %vm1014, %v3647, 0.0
      %3710 = vadd.xlane.f32.xlu0 %v3709
      %v3711 = vpop.xlane.xlu0 %3710
      %v3712 = vsel %vm1014, %v3648, 0.0
      %3713 = vadd.xlane.f32.xlu0 %v3712
      %v3714 = vpop.xlane.xlu0 %3713
      %v3715 = vsel %vm1014, %v3649, 0.0
      %3716 = vadd.xlane.f32.xlu0 %v3715
      %v3717 = vpop.xlane.xlu0 %3716
      %v3718 = vsel %vm1014, %v3650, 0.0
      %3719 = vadd.xlane.f32.xlu0 %v3718
      %v3720 = vpop.xlane.xlu0 %3719
      %v3721 = vsel %vm1014, %v3651, 0.0
      %3722 = vadd.xlane.f32.xlu0 %v3721
      %v3723 = vpop.xlane.xlu0 %3722
      %v3724 = vsel %vm1014, %v3652, 0.0
      %3725 = vadd.xlane.f32.xlu0 %v3724
      %v3726 = vpop.xlane.xlu0 %3725
      %v3727 = vsel %vm1014, %v3653, 0.0
      %3728 = vadd.xlane.f32.xlu0 %v3727
      %v3729 = vpop.xlane.xlu0 %3728
      %v3730 = vsel %vm1014, %v3654, 0.0
      %3731 = vadd.xlane.f32.xlu0 %v3730
      %v3732 = vpop.xlane.xlu0 %3731
      %v3733 = vsel %vm1014, %v3655, 0.0
      %3734 = vadd.xlane.f32.xlu0 %v3733
      %v3735 = vpop.xlane.xlu0 %3734
      %v3736 = vsel %vm1014, %v3656, 0.0
      %3737 = vadd.xlane.f32.xlu0 %v3736
      %v3738 = vpop.xlane.xlu0 %3737
      %v3739 = vsel %vm1014, %v3657, 0.0
      %3740 = vadd.xlane.f32.xlu0 %v3739
      %v3741 = vpop.xlane.xlu0 %3740
      %v3742 = vsel %vm1014, %v3658, 0.0
      %3743 = vadd.xlane.f32.xlu0 %v3742
      %v3744 = vpop.xlane.xlu0 %3743
      %v3745 = vsel %vm1014, %v3659, 0.0
      %3746 = vadd.xlane.f32.xlu0 %v3745
      %v3747 = vpop.xlane.xlu0 %3746
      %v3748 = vsel %vm1014, %v3660, 0.0
      %3749 = vadd.xlane.f32.xlu0 %v3748
      %v3750 = vpop.xlane.xlu0 %3749
      %v3751 = vsel %vm1014, %v3661, 0.0
      %3752 = vadd.xlane.f32.xlu0 %v3751
      %v3753 = vpop.xlane.xlu0 %3752
      %v3754 = vsel %vm1014, %v3662, 0.0
      %3755 = vadd.xlane.f32.xlu0 %v3754
      %v3756 = vpop.xlane.xlu0 %3755
      %v3757 = vsel %vm1014, %v3663, 0.0
      %3758 = vadd.xlane.f32.xlu0 %v3757
      %v3759 = vpop.xlane.xlu0 %3758
      %v3760 = vadd.f32 %v3563, %v3666
      %v3761 = vadd.f32 %v3564, %v3669
      %v3762 = vadd.f32 %v3565, %v3672
      %v3763 = vadd.f32 %v3566, %v3675
      %v3764 = vadd.f32 %v3567, %v3678
      %v3765 = vadd.f32 %v3568, %v3681
      %v3766 = vadd.f32 %v3569, %v3684
      %v3767 = vadd.f32 %v3570, %v3687
      %v3768 = vadd.f32 %v3571, %v3690
      %v3769 = vadd.f32 %v3572, %v3693
      %v3770 = vadd.f32 %v3573, %v3696
      %v3771 = vadd.f32 %v3574, %v3699
      %v3772 = vadd.f32 %v3575, %v3702
      %v3773 = vadd.f32 %v3576, %v3705
      %v3774 = vadd.f32 %v3577, %v3708
      %v3775 = vadd.f32 %v3578, %v3711
      %v3776 = vadd.f32 %v3579, %v3714
      %v3777 = vadd.f32 %v3580, %v3717
      %v3778 = vadd.f32 %v3581, %v3720
      %v3779 = vadd.f32 %v3582, %v3723
      %v3780 = vadd.f32 %v3583, %v3726
      %v3781 = vadd.f32 %v3584, %v3729
      %v3782 = vadd.f32 %v3585, %v3732
      %v3783 = vadd.f32 %v3586, %v3735
      %v3784 = vadd.f32 %v3587, %v3738
      %v3785 = vadd.f32 %v3588, %v3741
      %v3786 = vadd.f32 %v3589, %v3744
      %v3787 = vadd.f32 %v3590, %v3747
      %v3788 = vadd.f32 %v3591, %v3750
      %v3789 = vadd.f32 %v3592, %v3753
      %v3790 = vadd.f32 %v3593, %v3756
      %v3791 = vadd.f32 %v3594, %v3759
      %v3792 = vld [vmem:[%s3199 + $0x3] sm:$0xff]
      %v3793 = vld [vmem:[%s3199 + $0xb] sm:$0xff]
      %v3794 = vld [vmem:[%s3199 + $0x1b] sm:$0xff]
      %v3795 = vld [vmem:[%s3199 + $0x23] sm:$0xff]
      %v3796 = vld [vmem:[%s3199 + $0x33] sm:$0xff]
      %v3797 = vld [vmem:[%s3199 + $0x3b] sm:$0xff]
      %v3798 = vld [vmem:[%s3199 + $0x4b] sm:$0xff]
      %v3799 = vld [vmem:[%s3199 + $0x53] sm:$0xff]
      %v3800 = vld [vmem:[%s3199 + $0x63] sm:$0xff]
      %v3801 = vld [vmem:[%s3199 + $0x6b] sm:$0xff]
      %v3802 = vld [vmem:[%s3199 + $0x7b] sm:$0xff]
      %v3803 = vld [vmem:[%s3199 + $0x83] sm:$0xff]
      %v3804 = vld [vmem:[%s3199 + $0x93] sm:$0xff]
      %v3805 = vld [vmem:[%s3199 + $0x9b] sm:$0xff]
      %v3806 = vld [vmem:[%s3199 + $0xab] sm:$0xff]
      %v3807 = vld [vmem:[%s3199 + $0xb3] sm:$0xff]
      %v3808 = vld [vmem:[%s3199 + $0xc3] sm:$0xff]
      %v3809 = vld [vmem:[%s3199 + $0xcb] sm:$0xff]
      %v3810 = vld [vmem:[%s3199 + $0xdb] sm:$0xff]
      %v3811 = vld [vmem:[%s3199 + $0xe3] sm:$0xff]
      %v3812 = vld [vmem:[%s3199 + $0xf3] sm:$0xff]
      %v3813 = vld [vmem:[%s3199 + $0xfb] sm:$0xff]
      %v3814 = vld [vmem:[%s3199 + $0x10b] sm:$0xff]
      %v3815 = vld [vmem:[%s3199 + $0x113] sm:$0xff]
      %v3816 = vld [vmem:[%s3199 + $0x123] sm:$0xff]
      %v3817 = vld [vmem:[%s3199 + $0x12b] sm:$0xff]
      %v3818 = vld [vmem:[%s3199 + $0x13b] sm:$0xff]
      %v3819 = vld [vmem:[%s3199 + $0x143] sm:$0xff]
      %v3820 = vld [vmem:[%s3199 + $0x153] sm:$0xff]
      %v3821 = vld [vmem:[%s3199 + $0x15b] sm:$0xff]
      %v3822 = vld [vmem:[%s3199 + $0x16b] sm:$0xff]
      %v3823 = vld [vmem:[%s3199 + $0x173] sm:$0xff]
      %v3824 = vld [vmem:[%s3232 + $0x3] sm:$0x1]
      %v3825 = vlaneseq
      %v3826 = vshrl.u32 %v3825, 7
      %v3827 = vsub.s32 0, %v3826
      %v3828 = vrot.slane %v3824, %v3827
      %v3829 = vmul.f32 %v3792, %v3828
      %v3830 = vmul.f32 %v3793, %v3828
      %v3831 = vmul.f32 %v3794, %v3828
      %v3832 = vmul.f32 %v3795, %v3828
      %v3833 = vmul.f32 %v3796, %v3828
      %v3834 = vmul.f32 %v3797, %v3828
      %v3835 = vmul.f32 %v3798, %v3828
      %v3836 = vmul.f32 %v3799, %v3828
      %v3837 = vmul.f32 %v3800, %v3828
      %v3838 = vmul.f32 %v3801, %v3828
      %v3839 = vmul.f32 %v3802, %v3828
      %v3840 = vmul.f32 %v3803, %v3828
      %v3841 = vmul.f32 %v3804, %v3828
      %v3842 = vmul.f32 %v3805, %v3828
      %v3843 = vmul.f32 %v3806, %v3828
      %v3844 = vmul.f32 %v3807, %v3828
      %v3845 = vmul.f32 %v3808, %v3828
      %v3846 = vmul.f32 %v3809, %v3828
      %v3847 = vmul.f32 %v3810, %v3828
      %v3848 = vmul.f32 %v3811, %v3828
      %v3849 = vmul.f32 %v3812, %v3828
      %v3850 = vmul.f32 %v3813, %v3828
      %v3851 = vmul.f32 %v3814, %v3828
      %v3852 = vmul.f32 %v3815, %v3828
      %v3853 = vmul.f32 %v3816, %v3828
      %v3854 = vmul.f32 %v3817, %v3828
      %v3855 = vmul.f32 %v3818, %v3828
      %v3856 = vmul.f32 %v3819, %v3828
      %v3857 = vmul.f32 %v3820, %v3828
      %v3858 = vmul.f32 %v3821, %v3828
      %v3859 = vmul.f32 %v3822, %v3828
      %v3860 = vmul.f32 %v3823, %v3828
      %v3861 = vsel %vm1014, %v3829, 0.0
      %3862 = vadd.xlane.f32.xlu0 %v3861
      %v3863 = vpop.xlane.xlu0 %3862
      %v3864 = vsel %vm1014, %v3830, 0.0
      %3865 = vadd.xlane.f32.xlu0 %v3864
      %v3866 = vpop.xlane.xlu0 %3865
      %v3867 = vsel %vm1014, %v3831, 0.0
      %3868 = vadd.xlane.f32.xlu0 %v3867
      %v3869 = vpop.xlane.xlu0 %3868
      %v3870 = vsel %vm1014, %v3832, 0.0
      %3871 = vadd.xlane.f32.xlu0 %v3870
      %v3872 = vpop.xlane.xlu0 %3871
      %v3873 = vsel %vm1014, %v3833, 0.0
      %3874 = vadd.xlane.f32.xlu0 %v3873
      %v3875 = vpop.xlane.xlu0 %3874
      %v3876 = vsel %vm1014, %v3834, 0.0
      %3877 = vadd.xlane.f32.xlu0 %v3876
      %v3878 = vpop.xlane.xlu0 %3877
      %v3879 = vsel %vm1014, %v3835, 0.0
      %3880 = vadd.xlane.f32.xlu0 %v3879
      %v3881 = vpop.xlane.xlu0 %3880
      %v3882 = vsel %vm1014, %v3836, 0.0
      %3883 = vadd.xlane.f32.xlu0 %v3882
      %v3884 = vpop.xlane.xlu0 %3883
      %v3885 = vsel %vm1014, %v3837, 0.0
      %3886 = vadd.xlane.f32.xlu0 %v3885
      %v3887 = vpop.xlane.xlu0 %3886
      %v3888 = vsel %vm1014, %v3838, 0.0
      %3889 = vadd.xlane.f32.xlu0 %v3888
      %v3890 = vpop.xlane.xlu0 %3889
      %v3891 = vsel %vm1014, %v3839, 0.0
      %3892 = vadd.xlane.f32.xlu0 %v3891
      %v3893 = vpop.xlane.xlu0 %3892
      %v3894 = vsel %vm1014, %v3840, 0.0
      %3895 = vadd.xlane.f32.xlu0 %v3894
      %v3896 = vpop.xlane.xlu0 %3895
      %v3897 = vsel %vm1014, %v3841, 0.0
      %3898 = vadd.xlane.f32.xlu0 %v3897
      %v3899 = vpop.xlane.xlu0 %3898
      %v3900 = vsel %vm1014, %v3842, 0.0
      %3901 = vadd.xlane.f32.xlu0 %v3900
      %v3902 = vpop.xlane.xlu0 %3901
      %v3903 = vsel %vm1014, %v3843, 0.0
      %3904 = vadd.xlane.f32.xlu0 %v3903
      %v3905 = vpop.xlane.xlu0 %3904
      %v3906 = vsel %vm1014, %v3844, 0.0
      %3907 = vadd.xlane.f32.xlu0 %v3906
      %v3908 = vpop.xlane.xlu0 %3907
      %v3909 = vsel %vm1014, %v3845, 0.0
      %3910 = vadd.xlane.f32.xlu0 %v3909
      %v3911 = vpop.xlane.xlu0 %3910
      %v3912 = vsel %vm1014, %v3846, 0.0
      %3913 = vadd.xlane.f32.xlu0 %v3912
      %v3914 = vpop.xlane.xlu0 %3913
      %v3915 = vsel %vm1014, %v3847, 0.0
      %3916 = vadd.xlane.f32.xlu0 %v3915
      %v3917 = vpop.xlane.xlu0 %3916
      %v3918 = vsel %vm1014, %v3848, 0.0
      %3919 = vadd.xlane.f32.xlu0 %v3918
      %v3920 = vpop.xlane.xlu0 %3919
      %v3921 = vsel %vm1014, %v3849, 0.0
      %3922 = vadd.xlane.f32.xlu0 %v3921
      %v3923 = vpop.xlane.xlu0 %3922
      %v3924 = vsel %vm1014, %v3850, 0.0
      %3925 = vadd.xlane.f32.xlu0 %v3924
      %v3926 = vpop.xlane.xlu0 %3925
      %v3927 = vsel %vm1014, %v3851, 0.0
      %3928 = vadd.xlane.f32.xlu0 %v3927
      %v3929 = vpop.xlane.xlu0 %3928
      %v3930 = vsel %vm1014, %v3852, 0.0
      %3931 = vadd.xlane.f32.xlu0 %v3930
      %v3932 = vpop.xlane.xlu0 %3931
      %v3933 = vsel %vm1014, %v3853, 0.0
      %3934 = vadd.xlane.f32.xlu0 %v3933
      %v3935 = vpop.xlane.xlu0 %3934
      %v3936 = vsel %vm1014, %v3854, 0.0
      %3937 = vadd.xlane.f32.xlu0 %v3936
      %v3938 = vpop.xlane.xlu0 %3937
      %v3939 = vsel %vm1014, %v3855, 0.0
      %3940 = vadd.xlane.f32.xlu0 %v3939
      %v3941 = vpop.xlane.xlu0 %3940
      %v3942 = vsel %vm1014, %v3856, 0.0
      %3943 = vadd.xlane.f32.xlu0 %v3942
      %v3944 = vpop.xlane.xlu0 %3943
      %v3945 = vsel %vm1014, %v3857, 0.0
      %3946 = vadd.xlane.f32.xlu0 %v3945
      %v3947 = vpop.xlane.xlu0 %3946
      %v3948 = vsel %vm1014, %v3858, 0.0
      %3949 = vadd.xlane.f32.xlu0 %v3948
      %v3950 = vpop.xlane.xlu0 %3949
      %v3951 = vsel %vm1014, %v3859, 0.0
      %3952 = vadd.xlane.f32.xlu0 %v3951
      %v3953 = vpop.xlane.xlu0 %3952
      %v3954 = vsel %vm1014, %v3860, 0.0
      %3955 = vadd.xlane.f32.xlu0 %v3954
      %v3956 = vpop.xlane.xlu0 %3955
      %v3957 = vadd.f32 %v3760, %v3863
      %v3958 = vadd.f32 %v3761, %v3866
      %v3959 = vadd.f32 %v3762, %v3869
      %v3960 = vadd.f32 %v3763, %v3872
      %v3961 = vadd.f32 %v3764, %v3875
      %v3962 = vadd.f32 %v3765, %v3878
      %v3963 = vadd.f32 %v3766, %v3881
      %v3964 = vadd.f32 %v3767, %v3884
      %v3965 = vadd.f32 %v3768, %v3887
      %v3966 = vadd.f32 %v3769, %v3890
      %v3967 = vadd.f32 %v3770, %v3893
      %v3968 = vadd.f32 %v3771, %v3896
      %v3969 = vadd.f32 %v3772, %v3899
      %v3970 = vadd.f32 %v3773, %v3902
      %v3971 = vadd.f32 %v3774, %v3905
      %v3972 = vadd.f32 %v3775, %v3908
      %v3973 = vadd.f32 %v3776, %v3911
      %v3974 = vadd.f32 %v3777, %v3914
      %v3975 = vadd.f32 %v3778, %v3917
      %v3976 = vadd.f32 %v3779, %v3920
      %v3977 = vadd.f32 %v3780, %v3923
      %v3978 = vadd.f32 %v3781, %v3926
      %v3979 = vadd.f32 %v3782, %v3929
      %v3980 = vadd.f32 %v3783, %v3932
      %v3981 = vadd.f32 %v3784, %v3935
      %v3982 = vadd.f32 %v3785, %v3938
      %v3983 = vadd.f32 %v3786, %v3941
      %v3984 = vadd.f32 %v3787, %v3944
      %v3985 = vadd.f32 %v3788, %v3947
      %v3986 = vadd.f32 %v3789, %v3950
      %v3987 = vadd.f32 %v3790, %v3953
      %v3988 = vadd.f32 %v3791, %v3956
      %v3989 = vld [vmem:[%s3199 + $0x4] sm:$0xff]
      %v3990 = vld [vmem:[%s3199 + $0xc] sm:$0xff]
      %v3991 = vld [vmem:[%s3199 + $0x1c] sm:$0xff]
      %v3992 = vld [vmem:[%s3199 + $0x24] sm:$0xff]
      %v3993 = vld [vmem:[%s3199 + $0x34] sm:$0xff]
      %v3994 = vld [vmem:[%s3199 + $0x3c] sm:$0xff]
      %v3995 = vld [vmem:[%s3199 + $0x4c] sm:$0xff]
      %v3996 = vld [vmem:[%s3199 + $0x54] sm:$0xff]
      %v3997 = vld [vmem:[%s3199 + $0x64] sm:$0xff]
      %v3998 = vld [vmem:[%s3199 + $0x6c] sm:$0xff]
      %v3999 = vld [vmem:[%s3199 + $0x7c] sm:$0xff]
      %v4000 = vld [vmem:[%s3199 + $0x84] sm:$0xff]
      %v4001 = vld [vmem:[%s3199 + $0x94] sm:$0xff]
      %v4002 = vld [vmem:[%s3199 + $0x9c] sm:$0xff]
      %v4003 = vld [vmem:[%s3199 + $0xac] sm:$0xff]
      %v4004 = vld [vmem:[%s3199 + $0xb4] sm:$0xff]
      %v4005 = vld [vmem:[%s3199 + $0xc4] sm:$0xff]
      %v4006 = vld [vmem:[%s3199 + $0xcc] sm:$0xff]
      %v4007 = vld [vmem:[%s3199 + $0xdc] sm:$0xff]
      %v4008 = vld [vmem:[%s3199 + $0xe4] sm:$0xff]
      %v4009 = vld [vmem:[%s3199 + $0xf4] sm:$0xff]
      %v4010 = vld [vmem:[%s3199 + $0xfc] sm:$0xff]
      %v4011 = vld [vmem:[%s3199 + $0x10c] sm:$0xff]
      %v4012 = vld [vmem:[%s3199 + $0x114] sm:$0xff]
      %v4013 = vld [vmem:[%s3199 + $0x124] sm:$0xff]
      %v4014 = vld [vmem:[%s3199 + $0x12c] sm:$0xff]
      %v4015 = vld [vmem:[%s3199 + $0x13c] sm:$0xff]
      %v4016 = vld [vmem:[%s3199 + $0x144] sm:$0xff]
      %v4017 = vld [vmem:[%s3199 + $0x154] sm:$0xff]
      %v4018 = vld [vmem:[%s3199 + $0x15c] sm:$0xff]
      %v4019 = vld [vmem:[%s3199 + $0x16c] sm:$0xff]
      %v4020 = vld [vmem:[%s3199 + $0x174] sm:$0xff]
      %v4021 = vld [vmem:[%s3232 + $0x4] sm:$0x1]
      %v4022 = vlaneseq
      %v4023 = vshrl.u32 %v4022, 7
      %v4024 = vsub.s32 0, %v4023
      %v4025 = vrot.slane %v4021, %v4024
      %v4026 = vmul.f32 %v3989, %v4025
      %v4027 = vmul.f32 %v3990, %v4025
      %v4028 = vmul.f32 %v3991, %v4025
      %v4029 = vmul.f32 %v3992, %v4025
      %v4030 = vmul.f32 %v3993, %v4025
      %v4031 = vmul.f32 %v3994, %v4025
      %v4032 = vmul.f32 %v3995, %v4025
      %v4033 = vmul.f32 %v3996, %v4025
      %v4034 = vmul.f32 %v3997, %v4025
      %v4035 = vmul.f32 %v3998, %v4025
      %v4036 = vmul.f32 %v3999, %v4025
      %v4037 = vmul.f32 %v4000, %v4025
      %v4038 = vmul.f32 %v4001, %v4025
      %v4039 = vmul.f32 %v4002, %v4025
      %v4040 = vmul.f32 %v4003, %v4025
      %v4041 = vmul.f32 %v4004, %v4025
      %v4042 = vmul.f32 %v4005, %v4025
      %v4043 = vmul.f32 %v4006, %v4025
      %v4044 = vmul.f32 %v4007, %v4025
      %v4045 = vmul.f32 %v4008, %v4025
      %v4046 = vmul.f32 %v4009, %v4025
      %v4047 = vmul.f32 %v4010, %v4025
      %v4048 = vmul.f32 %v4011, %v4025
      %v4049 = vmul.f32 %v4012, %v4025
      %v4050 = vmul.f32 %v4013, %v4025
      %v4051 = vmul.f32 %v4014, %v4025
      %v4052 = vmul.f32 %v4015, %v4025
      %v4053 = vmul.f32 %v4016, %v4025
      %v4054 = vmul.f32 %v4017, %v4025
      %v4055 = vmul.f32 %v4018, %v4025
      %v4056 = vmul.f32 %v4019, %v4025
      %v4057 = vmul.f32 %v4020, %v4025
      %v4058 = vsel %vm1014, %v4026, 0.0
      %4059 = vadd.xlane.f32.xlu0 %v4058
      %v4060 = vpop.xlane.xlu0 %4059
      %v4061 = vsel %vm1014, %v4027, 0.0
      %4062 = vadd.xlane.f32.xlu0 %v4061
      %v4063 = vpop.xlane.xlu0 %4062
      %v4064 = vsel %vm1014, %v4028, 0.0
      %4065 = vadd.xlane.f32.xlu0 %v4064
      %v4066 = vpop.xlane.xlu0 %4065
      %v4067 = vsel %vm1014, %v4029, 0.0
      %4068 = vadd.xlane.f32.xlu0 %v4067
      %v4069 = vpop.xlane.xlu0 %4068
      %v4070 = vsel %vm1014, %v4030, 0.0
      %4071 = vadd.xlane.f32.xlu0 %v4070
      %v4072 = vpop.xlane.xlu0 %4071
      %v4073 = vsel %vm1014, %v4031, 0.0
      %4074 = vadd.xlane.f32.xlu0 %v4073
      %v4075 = vpop.xlane.xlu0 %4074
      %v4076 = vsel %vm1014, %v4032, 0.0
      %4077 = vadd.xlane.f32.xlu0 %v4076
      %v4078 = vpop.xlane.xlu0 %4077
      %v4079 = vsel %vm1014, %v4033, 0.0
      %4080 = vadd.xlane.f32.xlu0 %v4079
      %v4081 = vpop.xlane.xlu0 %4080
      %v4082 = vsel %vm1014, %v4034, 0.0
      %4083 = vadd.xlane.f32.xlu0 %v4082
      %v4084 = vpop.xlane.xlu0 %4083
      %v4085 = vsel %vm1014, %v4035, 0.0
      %4086 = vadd.xlane.f32.xlu0 %v4085
      %v4087 = vpop.xlane.xlu0 %4086
      %v4088 = vsel %vm1014, %v4036, 0.0
      %4089 = vadd.xlane.f32.xlu0 %v4088
      %v4090 = vpop.xlane.xlu0 %4089
      %v4091 = vsel %vm1014, %v4037, 0.0
      %4092 = vadd.xlane.f32.xlu0 %v4091
      %v4093 = vpop.xlane.xlu0 %4092
      %v4094 = vsel %vm1014, %v4038, 0.0
      %4095 = vadd.xlane.f32.xlu0 %v4094
      %v4096 = vpop.xlane.xlu0 %4095
      %v4097 = vsel %vm1014, %v4039, 0.0
      %4098 = vadd.xlane.f32.xlu0 %v4097
      %v4099 = vpop.xlane.xlu0 %4098
      %v4100 = vsel %vm1014, %v4040, 0.0
      %4101 = vadd.xlane.f32.xlu0 %v4100
      %v4102 = vpop.xlane.xlu0 %4101
      %v4103 = vsel %vm1014, %v4041, 0.0
      %4104 = vadd.xlane.f32.xlu0 %v4103
      %v4105 = vpop.xlane.xlu0 %4104
      %v4106 = vsel %vm1014, %v4042, 0.0
      %4107 = vadd.xlane.f32.xlu0 %v4106
      %v4108 = vpop.xlane.xlu0 %4107
      %v4109 = vsel %vm1014, %v4043, 0.0
      %4110 = vadd.xlane.f32.xlu0 %v4109
      %v4111 = vpop.xlane.xlu0 %4110
      %v4112 = vsel %vm1014, %v4044, 0.0
      %4113 = vadd.xlane.f32.xlu0 %v4112
      %v4114 = vpop.xlane.xlu0 %4113
      %v4115 = vsel %vm1014, %v4045, 0.0
      %4116 = vadd.xlane.f32.xlu0 %v4115
      %v4117 = vpop.xlane.xlu0 %4116
      %v4118 = vsel %vm1014, %v4046, 0.0
      %4119 = vadd.xlane.f32.xlu0 %v4118
      %v4120 = vpop.xlane.xlu0 %4119
      %v4121 = vsel %vm1014, %v4047, 0.0
      %4122 = vadd.xlane.f32.xlu0 %v4121
      %v4123 = vpop.xlane.xlu0 %4122
      %v4124 = vsel %vm1014, %v4048, 0.0
      %4125 = vadd.xlane.f32.xlu0 %v4124
      %v4126 = vpop.xlane.xlu0 %4125
      %v4127 = vsel %vm1014, %v4049, 0.0
      %4128 = vadd.xlane.f32.xlu0 %v4127
      %v4129 = vpop.xlane.xlu0 %4128
      %v4130 = vsel %vm1014, %v4050, 0.0
      %4131 = vadd.xlane.f32.xlu0 %v4130
      %v4132 = vpop.xlane.xlu0 %4131
      %v4133 = vsel %vm1014, %v4051, 0.0
      %4134 = vadd.xlane.f32.xlu0 %v4133
      %v4135 = vpop.xlane.xlu0 %4134
      %v4136 = vsel %vm1014, %v4052, 0.0
      %4137 = vadd.xlane.f32.xlu0 %v4136
      %v4138 = vpop.xlane.xlu0 %4137
      %v4139 = vsel %vm1014, %v4053, 0.0
      %4140 = vadd.xlane.f32.xlu0 %v4139
      %v4141 = vpop.xlane.xlu0 %4140
      %v4142 = vsel %vm1014, %v4054, 0.0
      %4143 = vadd.xlane.f32.xlu0 %v4142
      %v4144 = vpop.xlane.xlu0 %4143
      %v4145 = vsel %vm1014, %v4055, 0.0
      %4146 = vadd.xlane.f32.xlu0 %v4145
      %v4147 = vpop.xlane.xlu0 %4146
      %v4148 = vsel %vm1014, %v4056, 0.0
      %4149 = vadd.xlane.f32.xlu0 %v4148
      %v4150 = vpop.xlane.xlu0 %4149
      %v4151 = vsel %vm1014, %v4057, 0.0
      %4152 = vadd.xlane.f32.xlu0 %v4151
      %v4153 = vpop.xlane.xlu0 %4152
      %v4154 = vadd.f32 %v3957, %v4060
      %v4155 = vadd.f32 %v3958, %v4063
      %v4156 = vadd.f32 %v3959, %v4066
      %v4157 = vadd.f32 %v3960, %v4069
      %v4158 = vadd.f32 %v3961, %v4072
      %v4159 = vadd.f32 %v3962, %v4075
      %v4160 = vadd.f32 %v3963, %v4078
      %v4161 = vadd.f32 %v3964, %v4081
      %v4162 = vadd.f32 %v3965, %v4084
      %v4163 = vadd.f32 %v3966, %v4087
      %v4164 = vadd.f32 %v3967, %v4090
      %v4165 = vadd.f32 %v3968, %v4093
      %v4166 = vadd.f32 %v3969, %v4096
      %v4167 = vadd.f32 %v3970, %v4099
      %v4168 = vadd.f32 %v3971, %v4102
      %v4169 = vadd.f32 %v3972, %v4105
      %v4170 = vadd.f32 %v3973, %v4108
      %v4171 = vadd.f32 %v3974, %v4111
      %v4172 = vadd.f32 %v3975, %v4114
      %v4173 = vadd.f32 %v3976, %v4117
      %v4174 = vadd.f32 %v3977, %v4120
      %v4175 = vadd.f32 %v3978, %v4123
      %v4176 = vadd.f32 %v3979, %v4126
      %v4177 = vadd.f32 %v3980, %v4129
      %v4178 = vadd.f32 %v3981, %v4132
      %v4179 = vadd.f32 %v3982, %v4135
      %v4180 = vadd.f32 %v3983, %v4138
      %v4181 = vadd.f32 %v3984, %v4141
      %v4182 = vadd.f32 %v3985, %v4144
      %v4183 = vadd.f32 %v3986, %v4147
      %v4184 = vadd.f32 %v3987, %v4150
      %v4185 = vadd.f32 %v3988, %v4153
      %s4186 = scalar_lea.vmem [#allocation2], 72
      %v4187 = vld [vmem:[%s4186] sm:$0xff]
      %v4188 = vld [vmem:[%s4186 + $0x8] sm:$0xff]
      %v4189 = vld [vmem:[%s4186 + $0x18] sm:$0xff]
      %v4190 = vld [vmem:[%s4186 + $0x20] sm:$0xff]
      %v4191 = vld [vmem:[%s4186 + $0x30] sm:$0xff]
      %v4192 = vld [vmem:[%s4186 + $0x38] sm:$0xff]
      %v4193 = vld [vmem:[%s4186 + $0x48] sm:$0xff]
      %v4194 = vld [vmem:[%s4186 + $0x50] sm:$0xff]
      %v4195 = vld [vmem:[%s4186 + $0x60] sm:$0xff]
      %v4196 = vld [vmem:[%s4186 + $0x68] sm:$0xff]
      %v4197 = vld [vmem:[%s4186 + $0x78] sm:$0xff]
      %v4198 = vld [vmem:[%s4186 + $0x80] sm:$0xff]
      %v4199 = vld [vmem:[%s4186 + $0x90] sm:$0xff]
      %v4200 = vld [vmem:[%s4186 + $0x98] sm:$0xff]
      %v4201 = vld [vmem:[%s4186 + $0xa8] sm:$0xff]
      %v4202 = vld [vmem:[%s4186 + $0xb0] sm:$0xff]
      %v4203 = vld [vmem:[%s4186 + $0xc0] sm:$0xff]
      %v4204 = vld [vmem:[%s4186 + $0xc8] sm:$0xff]
      %v4205 = vld [vmem:[%s4186 + $0xd8] sm:$0xff]
      %v4206 = vld [vmem:[%s4186 + $0xe0] sm:$0xff]
      %v4207 = vld [vmem:[%s4186 + $0xf0] sm:$0xff]
      %v4208 = vld [vmem:[%s4186 + $0xf8] sm:$0xff]
      %v4209 = vld [vmem:[%s4186 + $0x108] sm:$0xff]
      %v4210 = vld [vmem:[%s4186 + $0x110] sm:$0xff]
      %v4211 = vld [vmem:[%s4186 + $0x120] sm:$0xff]
      %v4212 = vld [vmem:[%s4186 + $0x128] sm:$0xff]
      %v4213 = vld [vmem:[%s4186 + $0x138] sm:$0xff]
      %v4214 = vld [vmem:[%s4186 + $0x140] sm:$0xff]
      %v4215 = vld [vmem:[%s4186 + $0x150] sm:$0xff]
      %v4216 = vld [vmem:[%s4186 + $0x158] sm:$0xff]
      %v4217 = vld [vmem:[%s4186 + $0x168] sm:$0xff]
      %v4218 = vld [vmem:[%s4186 + $0x170] sm:$0xff]
      %s4219 = scalar_lea.vmem %s5, 24
      %v4220 = vld [vmem:[%s4219] sm:$0x1]
      %v4221 = vlaneseq
      %v4222 = vshrl.u32 %v4221, 7
      %v4223 = vsub.s32 0, %v4222
      %v4224 = vrot.slane %v4220, %v4223
      %v4225 = vmul.f32 %v4187, %v4224
      %v4226 = vmul.f32 %v4188, %v4224
      %v4227 = vmul.f32 %v4189, %v4224
      %v4228 = vmul.f32 %v4190, %v4224
      %v4229 = vmul.f32 %v4191, %v4224
      %v4230 = vmul.f32 %v4192, %v4224
      %v4231 = vmul.f32 %v4193, %v4224
      %v4232 = vmul.f32 %v4194, %v4224
      %v4233 = vmul.f32 %v4195, %v4224
      %v4234 = vmul.f32 %v4196, %v4224
      %v4235 = vmul.f32 %v4197, %v4224
      %v4236 = vmul.f32 %v4198, %v4224
      %v4237 = vmul.f32 %v4199, %v4224
      %v4238 = vmul.f32 %v4200, %v4224
      %v4239 = vmul.f32 %v4201, %v4224
      %v4240 = vmul.f32 %v4202, %v4224
      %v4241 = vmul.f32 %v4203, %v4224
      %v4242 = vmul.f32 %v4204, %v4224
      %v4243 = vmul.f32 %v4205, %v4224
      %v4244 = vmul.f32 %v4206, %v4224
      %v4245 = vmul.f32 %v4207, %v4224
      %v4246 = vmul.f32 %v4208, %v4224
      %v4247 = vmul.f32 %v4209, %v4224
      %v4248 = vmul.f32 %v4210, %v4224
      %v4249 = vmul.f32 %v4211, %v4224
      %v4250 = vmul.f32 %v4212, %v4224
      %v4251 = vmul.f32 %v4213, %v4224
      %v4252 = vmul.f32 %v4214, %v4224
      %v4253 = vmul.f32 %v4215, %v4224
      %v4254 = vmul.f32 %v4216, %v4224
      %v4255 = vmul.f32 %v4217, %v4224
      %v4256 = vmul.f32 %v4218, %v4224
      %v4257 = vsel %vm1014, %v4225, 0.0
      %4258 = vadd.xlane.f32.xlu0 %v4257
      %v4259 = vpop.xlane.xlu0 %4258
      %v4260 = vsel %vm1014, %v4226, 0.0
      %4261 = vadd.xlane.f32.xlu0 %v4260
      %v4262 = vpop.xlane.xlu0 %4261
      %v4263 = vsel %vm1014, %v4227, 0.0
      %4264 = vadd.xlane.f32.xlu0 %v4263
      %v4265 = vpop.xlane.xlu0 %4264
      %v4266 = vsel %vm1014, %v4228, 0.0
      %4267 = vadd.xlane.f32.xlu0 %v4266
      %v4268 = vpop.xlane.xlu0 %4267
      %v4269 = vsel %vm1014, %v4229, 0.0
      %4270 = vadd.xlane.f32.xlu0 %v4269
      %v4271 = vpop.xlane.xlu0 %4270
      %v4272 = vsel %vm1014, %v4230, 0.0
      %4273 = vadd.xlane.f32.xlu0 %v4272
      %v4274 = vpop.xlane.xlu0 %4273
      %v4275 = vsel %vm1014, %v4231, 0.0
      %4276 = vadd.xlane.f32.xlu0 %v4275
      %v4277 = vpop.xlane.xlu0 %4276
      %v4278 = vsel %vm1014, %v4232, 0.0
      %4279 = vadd.xlane.f32.xlu0 %v4278
      %v4280 = vpop.xlane.xlu0 %4279
      %v4281 = vsel %vm1014, %v4233, 0.0
      %4282 = vadd.xlane.f32.xlu0 %v4281
      %v4283 = vpop.xlane.xlu0 %4282
      %v4284 = vsel %vm1014, %v4234, 0.0
      %4285 = vadd.xlane.f32.xlu0 %v4284
      %v4286 = vpop.xlane.xlu0 %4285
      %v4287 = vsel %vm1014, %v4235, 0.0
      %4288 = vadd.xlane.f32.xlu0 %v4287
      %v4289 = vpop.xlane.xlu0 %4288
      %v4290 = vsel %vm1014, %v4236, 0.0
      %4291 = vadd.xlane.f32.xlu0 %v4290
      %v4292 = vpop.xlane.xlu0 %4291
      %v4293 = vsel %vm1014, %v4237, 0.0
      %4294 = vadd.xlane.f32.xlu0 %v4293
      %v4295 = vpop.xlane.xlu0 %4294
      %v4296 = vsel %vm1014, %v4238, 0.0
      %4297 = vadd.xlane.f32.xlu0 %v4296
      %v4298 = vpop.xlane.xlu0 %4297
      %v4299 = vsel %vm1014, %v4239, 0.0
      %4300 = vadd.xlane.f32.xlu0 %v4299
      %v4301 = vpop.xlane.xlu0 %4300
      %v4302 = vsel %vm1014, %v4240, 0.0
      %4303 = vadd.xlane.f32.xlu0 %v4302
      %v4304 = vpop.xlane.xlu0 %4303
      %v4305 = vsel %vm1014, %v4241, 0.0
      %4306 = vadd.xlane.f32.xlu0 %v4305
      %v4307 = vpop.xlane.xlu0 %4306
      %v4308 = vsel %vm1014, %v4242, 0.0
      %4309 = vadd.xlane.f32.xlu0 %v4308
      %v4310 = vpop.xlane.xlu0 %4309
      %v4311 = vsel %vm1014, %v4243, 0.0
      %4312 = vadd.xlane.f32.xlu0 %v4311
      %v4313 = vpop.xlane.xlu0 %4312
      %v4314 = vsel %vm1014, %v4244, 0.0
      %4315 = vadd.xlane.f32.xlu0 %v4314
      %v4316 = vpop.xlane.xlu0 %4315
      %v4317 = vsel %vm1014, %v4245, 0.0
      %4318 = vadd.xlane.f32.xlu0 %v4317
      %v4319 = vpop.xlane.xlu0 %4318
      %v4320 = vsel %vm1014, %v4246, 0.0
      %4321 = vadd.xlane.f32.xlu0 %v4320
      %v4322 = vpop.xlane.xlu0 %4321
      %v4323 = vsel %vm1014, %v4247, 0.0
      %4324 = vadd.xlane.f32.xlu0 %v4323
      %v4325 = vpop.xlane.xlu0 %4324
      %v4326 = vsel %vm1014, %v4248, 0.0
      %4327 = vadd.xlane.f32.xlu0 %v4326
      %v4328 = vpop.xlane.xlu0 %4327
      %v4329 = vsel %vm1014, %v4249, 0.0
      %4330 = vadd.xlane.f32.xlu0 %v4329
      %v4331 = vpop.xlane.xlu0 %4330
      %v4332 = vsel %vm1014, %v4250, 0.0
      %4333 = vadd.xlane.f32.xlu0 %v4332
      %v4334 = vpop.xlane.xlu0 %4333
      %v4335 = vsel %vm1014, %v4251, 0.0
      %4336 = vadd.xlane.f32.xlu0 %v4335
      %v4337 = vpop.xlane.xlu0 %4336
      %v4338 = vsel %vm1014, %v4252, 0.0
      %4339 = vadd.xlane.f32.xlu0 %v4338
      %v4340 = vpop.xlane.xlu0 %4339
      %v4341 = vsel %vm1014, %v4253, 0.0
      %4342 = vadd.xlane.f32.xlu0 %v4341
      %v4343 = vpop.xlane.xlu0 %4342
      %v4344 = vsel %vm1014, %v4254, 0.0
      %4345 = vadd.xlane.f32.xlu0 %v4344
      %v4346 = vpop.xlane.xlu0 %4345
      %v4347 = vsel %vm1014, %v4255, 0.0
      %4348 = vadd.xlane.f32.xlu0 %v4347
      %v4349 = vpop.xlane.xlu0 %4348
      %v4350 = vsel %vm1014, %v4256, 0.0
      %4351 = vadd.xlane.f32.xlu0 %v4350
      %v4352 = vpop.xlane.xlu0 %4351
      %v4353 = vadd.f32 %v4154, %v4259
      %v4354 = vadd.f32 %v4155, %v4262
      %v4355 = vadd.f32 %v4156, %v4265
      %v4356 = vadd.f32 %v4157, %v4268
      %v4357 = vadd.f32 %v4158, %v4271
      %v4358 = vadd.f32 %v4159, %v4274
      %v4359 = vadd.f32 %v4160, %v4277
      %v4360 = vadd.f32 %v4161, %v4280
      %v4361 = vadd.f32 %v4162, %v4283
      %v4362 = vadd.f32 %v4163, %v4286
      %v4363 = vadd.f32 %v4164, %v4289
      %v4364 = vadd.f32 %v4165, %v4292
      %v4365 = vadd.f32 %v4166, %v4295
      %v4366 = vadd.f32 %v4167, %v4298
      %v4367 = vadd.f32 %v4168, %v4301
      %v4368 = vadd.f32 %v4169, %v4304
      %v4369 = vadd.f32 %v4170, %v4307
      %v4370 = vadd.f32 %v4171, %v4310
      %v4371 = vadd.f32 %v4172, %v4313
      %v4372 = vadd.f32 %v4173, %v4316
      %v4373 = vadd.f32 %v4174, %v4319
      %v4374 = vadd.f32 %v4175, %v4322
      %v4375 = vadd.f32 %v4176, %v4325
      %v4376 = vadd.f32 %v4177, %v4328
      %v4377 = vadd.f32 %v4178, %v4331
      %v4378 = vadd.f32 %v4179, %v4334
      %v4379 = vadd.f32 %v4180, %v4337
      %v4380 = vadd.f32 %v4181, %v4340
      %v4381 = vadd.f32 %v4182, %v4343
      %v4382 = vadd.f32 %v4183, %v4346
      %v4383 = vadd.f32 %v4184, %v4349
      %v4384 = vadd.f32 %v4185, %v4352
      %v4385 = vld [vmem:[%s4186 + $0x1] sm:$0xff]
      %v4386 = vld [vmem:[%s4186 + $0x9] sm:$0xff]
      %v4387 = vld [vmem:[%s4186 + $0x19] sm:$0xff]
      %v4388 = vld [vmem:[%s4186 + $0x21] sm:$0xff]
      %v4389 = vld [vmem:[%s4186 + $0x31] sm:$0xff]
      %v4390 = vld [vmem:[%s4186 + $0x39] sm:$0xff]
      %v4391 = vld [vmem:[%s4186 + $0x49] sm:$0xff]
      %v4392 = vld [vmem:[%s4186 + $0x51] sm:$0xff]
      %v4393 = vld [vmem:[%s4186 + $0x61] sm:$0xff]
      %v4394 = vld [vmem:[%s4186 + $0x69] sm:$0xff]
      %v4395 = vld [vmem:[%s4186 + $0x79] sm:$0xff]
      %v4396 = vld [vmem:[%s4186 + $0x81] sm:$0xff]
      %v4397 = vld [vmem:[%s4186 + $0x91] sm:$0xff]
      %v4398 = vld [vmem:[%s4186 + $0x99] sm:$0xff]
      %v4399 = vld [vmem:[%s4186 + $0xa9] sm:$0xff]
      %v4400 = vld [vmem:[%s4186 + $0xb1] sm:$0xff]
      %v4401 = vld [vmem:[%s4186 + $0xc1] sm:$0xff]
      %v4402 = vld [vmem:[%s4186 + $0xc9] sm:$0xff]
      %v4403 = vld [vmem:[%s4186 + $0xd9] sm:$0xff]
      %v4404 = vld [vmem:[%s4186 + $0xe1] sm:$0xff]
      %v4405 = vld [vmem:[%s4186 + $0xf1] sm:$0xff]
      %v4406 = vld [vmem:[%s4186 + $0xf9] sm:$0xff]
      %v4407 = vld [vmem:[%s4186 + $0x109] sm:$0xff]
      %v4408 = vld [vmem:[%s4186 + $0x111] sm:$0xff]
      %v4409 = vld [vmem:[%s4186 + $0x121] sm:$0xff]
      %v4410 = vld [vmem:[%s4186 + $0x129] sm:$0xff]
      %v4411 = vld [vmem:[%s4186 + $0x139] sm:$0xff]
      %v4412 = vld [vmem:[%s4186 + $0x141] sm:$0xff]
      %v4413 = vld [vmem:[%s4186 + $0x151] sm:$0xff]
      %v4414 = vld [vmem:[%s4186 + $0x159] sm:$0xff]
      %v4415 = vld [vmem:[%s4186 + $0x169] sm:$0xff]
      %v4416 = vld [vmem:[%s4186 + $0x171] sm:$0xff]
      %v4417 = vld [vmem:[%s4219 + $0x1] sm:$0x1]
      %v4418 = vlaneseq
      %v4419 = vshrl.u32 %v4418, 7
      %v4420 = vsub.s32 0, %v4419
      %v4421 = vrot.slane %v4417, %v4420
      %v4422 = vmul.f32 %v4385, %v4421
      %v4423 = vmul.f32 %v4386, %v4421
      %v4424 = vmul.f32 %v4387, %v4421
      %v4425 = vmul.f32 %v4388, %v4421
      %v4426 = vmul.f32 %v4389, %v4421
      %v4427 = vmul.f32 %v4390, %v4421
      %v4428 = vmul.f32 %v4391, %v4421
      %v4429 = vmul.f32 %v4392, %v4421
      %v4430 = vmul.f32 %v4393, %v4421
      %v4431 = vmul.f32 %v4394, %v4421
      %v4432 = vmul.f32 %v4395, %v4421
      %v4433 = vmul.f32 %v4396, %v4421
      %v4434 = vmul.f32 %v4397, %v4421
      %v4435 = vmul.f32 %v4398, %v4421
      %v4436 = vmul.f32 %v4399, %v4421
      %v4437 = vmul.f32 %v4400, %v4421
      %v4438 = vmul.f32 %v4401, %v4421
      %v4439 = vmul.f32 %v4402, %v4421
      %v4440 = vmul.f32 %v4403, %v4421
      %v4441 = vmul.f32 %v4404, %v4421
      %v4442 = vmul.f32 %v4405, %v4421
      %v4443 = vmul.f32 %v4406, %v4421
      %v4444 = vmul.f32 %v4407, %v4421
      %v4445 = vmul.f32 %v4408, %v4421
      %v4446 = vmul.f32 %v4409, %v4421
      %v4447 = vmul.f32 %v4410, %v4421
      %v4448 = vmul.f32 %v4411, %v4421
      %v4449 = vmul.f32 %v4412, %v4421
      %v4450 = vmul.f32 %v4413, %v4421
      %v4451 = vmul.f32 %v4414, %v4421
      %v4452 = vmul.f32 %v4415, %v4421
      %v4453 = vmul.f32 %v4416, %v4421
      %v4454 = vsel %vm1014, %v4422, 0.0
      %4455 = vadd.xlane.f32.xlu0 %v4454
      %v4456 = vpop.xlane.xlu0 %4455
      %v4457 = vsel %vm1014, %v4423, 0.0
      %4458 = vadd.xlane.f32.xlu0 %v4457
      %v4459 = vpop.xlane.xlu0 %4458
      %v4460 = vsel %vm1014, %v4424, 0.0
      %4461 = vadd.xlane.f32.xlu0 %v4460
      %v4462 = vpop.xlane.xlu0 %4461
      %v4463 = vsel %vm1014, %v4425, 0.0
      %4464 = vadd.xlane.f32.xlu0 %v4463
      %v4465 = vpop.xlane.xlu0 %4464
      %v4466 = vsel %vm1014, %v4426, 0.0
      %4467 = vadd.xlane.f32.xlu0 %v4466
      %v4468 = vpop.xlane.xlu0 %4467
      %v4469 = vsel %vm1014, %v4427, 0.0
      %4470 = vadd.xlane.f32.xlu0 %v4469
      %v4471 = vpop.xlane.xlu0 %4470
      %v4472 = vsel %vm1014, %v4428, 0.0
      %4473 = vadd.xlane.f32.xlu0 %v4472
      %v4474 = vpop.xlane.xlu0 %4473
      %v4475 = vsel %vm1014, %v4429, 0.0
      %4476 = vadd.xlane.f32.xlu0 %v4475
      %v4477 = vpop.xlane.xlu0 %4476
      %v4478 = vsel %vm1014, %v4430, 0.0
      %4479 = vadd.xlane.f32.xlu0 %v4478
      %v4480 = vpop.xlane.xlu0 %4479
      %v4481 = vsel %vm1014, %v4431, 0.0
      %4482 = vadd.xlane.f32.xlu0 %v4481
      %v4483 = vpop.xlane.xlu0 %4482
      %v4484 = vsel %vm1014, %v4432, 0.0
      %4485 = vadd.xlane.f32.xlu0 %v4484
      %v4486 = vpop.xlane.xlu0 %4485
      %v4487 = vsel %vm1014, %v4433, 0.0
      %4488 = vadd.xlane.f32.xlu0 %v4487
      %v4489 = vpop.xlane.xlu0 %4488
      %v4490 = vsel %vm1014, %v4434, 0.0
      %4491 = vadd.xlane.f32.xlu0 %v4490
      %v4492 = vpop.xlane.xlu0 %4491
      %v4493 = vsel %vm1014, %v4435, 0.0
      %4494 = vadd.xlane.f32.xlu0 %v4493
      %v4495 = vpop.xlane.xlu0 %4494
      %v4496 = vsel %vm1014, %v4436, 0.0
      %4497 = vadd.xlane.f32.xlu0 %v4496
      %v4498 = vpop.xlane.xlu0 %4497
      %v4499 = vsel %vm1014, %v4437, 0.0
      %4500 = vadd.xlane.f32.xlu0 %v4499
      %v4501 = vpop.xlane.xlu0 %4500
      %v4502 = vsel %vm1014, %v4438, 0.0
      %4503 = vadd.xlane.f32.xlu0 %v4502
      %v4504 = vpop.xlane.xlu0 %4503
      %v4505 = vsel %vm1014, %v4439, 0.0
      %4506 = vadd.xlane.f32.xlu0 %v4505
      %v4507 = vpop.xlane.xlu0 %4506
      %v4508 = vsel %vm1014, %v4440, 0.0
      %4509 = vadd.xlane.f32.xlu0 %v4508
      %v4510 = vpop.xlane.xlu0 %4509
      %v4511 = vsel %vm1014, %v4441, 0.0
      %4512 = vadd.xlane.f32.xlu0 %v4511
      %v4513 = vpop.xlane.xlu0 %4512
      %v4514 = vsel %vm1014, %v4442, 0.0
      %4515 = vadd.xlane.f32.xlu0 %v4514
      %v4516 = vpop.xlane.xlu0 %4515
      %v4517 = vsel %vm1014, %v4443, 0.0
      %4518 = vadd.xlane.f32.xlu0 %v4517
      %v4519 = vpop.xlane.xlu0 %4518
      %v4520 = vsel %vm1014, %v4444, 0.0
      %4521 = vadd.xlane.f32.xlu0 %v4520
      %v4522 = vpop.xlane.xlu0 %4521
      %v4523 = vsel %vm1014, %v4445, 0.0
      %4524 = vadd.xlane.f32.xlu0 %v4523
      %v4525 = vpop.xlane.xlu0 %4524
      %v4526 = vsel %vm1014, %v4446, 0.0
      %4527 = vadd.xlane.f32.xlu0 %v4526
      %v4528 = vpop.xlane.xlu0 %4527
      %v4529 = vsel %vm1014, %v4447, 0.0
      %4530 = vadd.xlane.f32.xlu0 %v4529
      %v4531 = vpop.xlane.xlu0 %4530
      %v4532 = vsel %vm1014, %v4448, 0.0
      %4533 = vadd.xlane.f32.xlu0 %v4532
      %v4534 = vpop.xlane.xlu0 %4533
      %v4535 = vsel %vm1014, %v4449, 0.0
      %4536 = vadd.xlane.f32.xlu0 %v4535
      %v4537 = vpop.xlane.xlu0 %4536
      %v4538 = vsel %vm1014, %v4450, 0.0
      %4539 = vadd.xlane.f32.xlu0 %v4538
      %v4540 = vpop.xlane.xlu0 %4539
      %v4541 = vsel %vm1014, %v4451, 0.0
      %4542 = vadd.xlane.f32.xlu0 %v4541
      %v4543 = vpop.xlane.xlu0 %4542
      %v4544 = vsel %vm1014, %v4452, 0.0
      %4545 = vadd.xlane.f32.xlu0 %v4544
      %v4546 = vpop.xlane.xlu0 %4545
      %v4547 = vsel %vm1014, %v4453, 0.0
      %4548 = vadd.xlane.f32.xlu0 %v4547
      %v4549 = vpop.xlane.xlu0 %4548
      %v4550 = vadd.f32 %v4353, %v4456
      %v4551 = vadd.f32 %v4354, %v4459
      %v4552 = vadd.f32 %v4355, %v4462
      %v4553 = vadd.f32 %v4356, %v4465
      %v4554 = vadd.f32 %v4357, %v4468
      %v4555 = vadd.f32 %v4358, %v4471
      %v4556 = vadd.f32 %v4359, %v4474
      %v4557 = vadd.f32 %v4360, %v4477
      %v4558 = vadd.f32 %v4361, %v4480
      %v4559 = vadd.f32 %v4362, %v4483
      %v4560 = vadd.f32 %v4363, %v4486
      %v4561 = vadd.f32 %v4364, %v4489
      %v4562 = vadd.f32 %v4365, %v4492
      %v4563 = vadd.f32 %v4366, %v4495
      %v4564 = vadd.f32 %v4367, %v4498
      %v4565 = vadd.f32 %v4368, %v4501
      %v4566 = vadd.f32 %v4369, %v4504
      %v4567 = vadd.f32 %v4370, %v4507
      %v4568 = vadd.f32 %v4371, %v4510
      %v4569 = vadd.f32 %v4372, %v4513
      %v4570 = vadd.f32 %v4373, %v4516
      %v4571 = vadd.f32 %v4374, %v4519
      %v4572 = vadd.f32 %v4375, %v4522
      %v4573 = vadd.f32 %v4376, %v4525
      %v4574 = vadd.f32 %v4377, %v4528
      %v4575 = vadd.f32 %v4378, %v4531
      %v4576 = vadd.f32 %v4379, %v4534
      %v4577 = vadd.f32 %v4380, %v4537
      %v4578 = vadd.f32 %v4381, %v4540
      %v4579 = vadd.f32 %v4382, %v4543
      %v4580 = vadd.f32 %v4383, %v4546
      %v4581 = vadd.f32 %v4384, %v4549
      %v4582 = vld [vmem:[%s4186 + $0x2] sm:$0xff]
      %v4583 = vld [vmem:[%s4186 + $0xa] sm:$0xff]
      %v4584 = vld [vmem:[%s4186 + $0x1a] sm:$0xff]
      %v4585 = vld [vmem:[%s4186 + $0x22] sm:$0xff]
      %v4586 = vld [vmem:[%s4186 + $0x32] sm:$0xff]
      %v4587 = vld [vmem:[%s4186 + $0x3a] sm:$0xff]
      %v4588 = vld [vmem:[%s4186 + $0x4a] sm:$0xff]
      %v4589 = vld [vmem:[%s4186 + $0x52] sm:$0xff]
      %v4590 = vld [vmem:[%s4186 + $0x62] sm:$0xff]
      %v4591 = vld [vmem:[%s4186 + $0x6a] sm:$0xff]
      %v4592 = vld [vmem:[%s4186 + $0x7a] sm:$0xff]
      %v4593 = vld [vmem:[%s4186 + $0x82] sm:$0xff]
      %v4594 = vld [vmem:[%s4186 + $0x92] sm:$0xff]
      %v4595 = vld [vmem:[%s4186 + $0x9a] sm:$0xff]
      %v4596 = vld [vmem:[%s4186 + $0xaa] sm:$0xff]
      %v4597 = vld [vmem:[%s4186 + $0xb2] sm:$0xff]
      %v4598 = vld [vmem:[%s4186 + $0xc2] sm:$0xff]
      %v4599 = vld [vmem:[%s4186 + $0xca] sm:$0xff]
      %v4600 = vld [vmem:[%s4186 + $0xda] sm:$0xff]
      %v4601 = vld [vmem:[%s4186 + $0xe2] sm:$0xff]
      %v4602 = vld [vmem:[%s4186 + $0xf2] sm:$0xff]
      %v4603 = vld [vmem:[%s4186 + $0xfa] sm:$0xff]
      %v4604 = vld [vmem:[%s4186 + $0x10a] sm:$0xff]
      %v4605 = vld [vmem:[%s4186 + $0x112] sm:$0xff]
      %v4606 = vld [vmem:[%s4186 + $0x122] sm:$0xff]
      %v4607 = vld [vmem:[%s4186 + $0x12a] sm:$0xff]
      %v4608 = vld [vmem:[%s4186 + $0x13a] sm:$0xff]
      %v4609 = vld [vmem:[%s4186 + $0x142] sm:$0xff]
      %v4610 = vld [vmem:[%s4186 + $0x152] sm:$0xff]
      %v4611 = vld [vmem:[%s4186 + $0x15a] sm:$0xff]
      %v4612 = vld [vmem:[%s4186 + $0x16a] sm:$0xff]
      %v4613 = vld [vmem:[%s4186 + $0x172] sm:$0xff]
      %v4614 = vld [vmem:[%s4219 + $0x2] sm:$0x1]
      %v4615 = vlaneseq
      %v4616 = vshrl.u32 %v4615, 7
      %v4617 = vsub.s32 0, %v4616
      %v4618 = vrot.slane %v4614, %v4617
      %v4619 = vmul.f32 %v4582, %v4618
      %v4620 = vmul.f32 %v4583, %v4618
      %v4621 = vmul.f32 %v4584, %v4618
      %v4622 = vmul.f32 %v4585, %v4618
      %v4623 = vmul.f32 %v4586, %v4618
      %v4624 = vmul.f32 %v4587, %v4618
      %v4625 = vmul.f32 %v4588, %v4618
      %v4626 = vmul.f32 %v4589, %v4618
      %v4627 = vmul.f32 %v4590, %v4618
      %v4628 = vmul.f32 %v4591, %v4618
      %v4629 = vmul.f32 %v4592, %v4618
      %v4630 = vmul.f32 %v4593, %v4618
      %v4631 = vmul.f32 %v4594, %v4618
      %v4632 = vmul.f32 %v4595, %v4618
      %v4633 = vmul.f32 %v4596, %v4618
      %v4634 = vmul.f32 %v4597, %v4618
      %v4635 = vmul.f32 %v4598, %v4618
      %v4636 = vmul.f32 %v4599, %v4618
      %v4637 = vmul.f32 %v4600, %v4618
      %v4638 = vmul.f32 %v4601, %v4618
      %v4639 = vmul.f32 %v4602, %v4618
      %v4640 = vmul.f32 %v4603, %v4618
      %v4641 = vmul.f32 %v4604, %v4618
      %v4642 = vmul.f32 %v4605, %v4618
      %v4643 = vmul.f32 %v4606, %v4618
      %v4644 = vmul.f32 %v4607, %v4618
      %v4645 = vmul.f32 %v4608, %v4618
      %v4646 = vmul.f32 %v4609, %v4618
      %v4647 = vmul.f32 %v4610, %v4618
      %v4648 = vmul.f32 %v4611, %v4618
      %v4649 = vmul.f32 %v4612, %v4618
      %v4650 = vmul.f32 %v4613, %v4618
      %v4651 = vsel %vm1014, %v4619, 0.0
      %4652 = vadd.xlane.f32.xlu0 %v4651
      %v4653 = vpop.xlane.xlu0 %4652
      %v4654 = vsel %vm1014, %v4620, 0.0
      %4655 = vadd.xlane.f32.xlu0 %v4654
      %v4656 = vpop.xlane.xlu0 %4655
      %v4657 = vsel %vm1014, %v4621, 0.0
      %4658 = vadd.xlane.f32.xlu0 %v4657
      %v4659 = vpop.xlane.xlu0 %4658
      %v4660 = vsel %vm1014, %v4622, 0.0
      %4661 = vadd.xlane.f32.xlu0 %v4660
      %v4662 = vpop.xlane.xlu0 %4661
      %v4663 = vsel %vm1014, %v4623, 0.0
      %4664 = vadd.xlane.f32.xlu0 %v4663
      %v4665 = vpop.xlane.xlu0 %4664
      %v4666 = vsel %vm1014, %v4624, 0.0
      %4667 = vadd.xlane.f32.xlu0 %v4666
      %v4668 = vpop.xlane.xlu0 %4667
      %v4669 = vsel %vm1014, %v4625, 0.0
      %4670 = vadd.xlane.f32.xlu0 %v4669
      %v4671 = vpop.xlane.xlu0 %4670
      %v4672 = vsel %vm1014, %v4626, 0.0
      %4673 = vadd.xlane.f32.xlu0 %v4672
      %v4674 = vpop.xlane.xlu0 %4673
      %v4675 = vsel %vm1014, %v4627, 0.0
      %4676 = vadd.xlane.f32.xlu0 %v4675
      %v4677 = vpop.xlane.xlu0 %4676
      %v4678 = vsel %vm1014, %v4628, 0.0
      %4679 = vadd.xlane.f32.xlu0 %v4678
      %v4680 = vpop.xlane.xlu0 %4679
      %v4681 = vsel %vm1014, %v4629, 0.0
      %4682 = vadd.xlane.f32.xlu0 %v4681
      %v4683 = vpop.xlane.xlu0 %4682
      %v4684 = vsel %vm1014, %v4630, 0.0
      %4685 = vadd.xlane.f32.xlu0 %v4684
      %v4686 = vpop.xlane.xlu0 %4685
      %v4687 = vsel %vm1014, %v4631, 0.0
      %4688 = vadd.xlane.f32.xlu0 %v4687
      %v4689 = vpop.xlane.xlu0 %4688
      %v4690 = vsel %vm1014, %v4632, 0.0
      %4691 = vadd.xlane.f32.xlu0 %v4690
      %v4692 = vpop.xlane.xlu0 %4691
      %v4693 = vsel %vm1014, %v4633, 0.0
      %4694 = vadd.xlane.f32.xlu0 %v4693
      %v4695 = vpop.xlane.xlu0 %4694
      %v4696 = vsel %vm1014, %v4634, 0.0
      %4697 = vadd.xlane.f32.xlu0 %v4696
      %v4698 = vpop.xlane.xlu0 %4697
      %v4699 = vsel %vm1014, %v4635, 0.0
      %4700 = vadd.xlane.f32.xlu0 %v4699
      %v4701 = vpop.xlane.xlu0 %4700
      %v4702 = vsel %vm1014, %v4636, 0.0
      %4703 = vadd.xlane.f32.xlu0 %v4702
      %v4704 = vpop.xlane.xlu0 %4703
      %v4705 = vsel %vm1014, %v4637, 0.0
      %4706 = vadd.xlane.f32.xlu0 %v4705
      %v4707 = vpop.xlane.xlu0 %4706
      %v4708 = vsel %vm1014, %v4638, 0.0
      %4709 = vadd.xlane.f32.xlu0 %v4708
      %v4710 = vpop.xlane.xlu0 %4709
      %v4711 = vsel %vm1014, %v4639, 0.0
      %4712 = vadd.xlane.f32.xlu0 %v4711
      %v4713 = vpop.xlane.xlu0 %4712
      %v4714 = vsel %vm1014, %v4640, 0.0
      %4715 = vadd.xlane.f32.xlu0 %v4714
      %v4716 = vpop.xlane.xlu0 %4715
      %v4717 = vsel %vm1014, %v4641, 0.0
      %4718 = vadd.xlane.f32.xlu0 %v4717
      %v4719 = vpop.xlane.xlu0 %4718
      %v4720 = vsel %vm1014, %v4642, 0.0
      %4721 = vadd.xlane.f32.xlu0 %v4720
      %v4722 = vpop.xlane.xlu0 %4721
      %v4723 = vsel %vm1014, %v4643, 0.0
      %4724 = vadd.xlane.f32.xlu0 %v4723
      %v4725 = vpop.xlane.xlu0 %4724
      %v4726 = vsel %vm1014, %v4644, 0.0
      %4727 = vadd.xlane.f32.xlu0 %v4726
      %v4728 = vpop.xlane.xlu0 %4727
      %v4729 = vsel %vm1014, %v4645, 0.0
      %4730 = vadd.xlane.f32.xlu0 %v4729
      %v4731 = vpop.xlane.xlu0 %4730
      %v4732 = vsel %vm1014, %v4646, 0.0
      %4733 = vadd.xlane.f32.xlu0 %v4732
      %v4734 = vpop.xlane.xlu0 %4733
      %v4735 = vsel %vm1014, %v4647, 0.0
      %4736 = vadd.xlane.f32.xlu0 %v4735
      %v4737 = vpop.xlane.xlu0 %4736
      %v4738 = vsel %vm1014, %v4648, 0.0
      %4739 = vadd.xlane.f32.xlu0 %v4738
      %v4740 = vpop.xlane.xlu0 %4739
      %v4741 = vsel %vm1014, %v4649, 0.0
      %4742 = vadd.xlane.f32.xlu0 %v4741
      %v4743 = vpop.xlane.xlu0 %4742
      %v4744 = vsel %vm1014, %v4650, 0.0
      %4745 = vadd.xlane.f32.xlu0 %v4744
      %v4746 = vpop.xlane.xlu0 %4745
      %v4747 = vadd.f32 %v4550, %v4653
      %v4748 = vadd.f32 %v4551, %v4656
      %v4749 = vadd.f32 %v4552, %v4659
      %v4750 = vadd.f32 %v4553, %v4662
      %v4751 = vadd.f32 %v4554, %v4665
      %v4752 = vadd.f32 %v4555, %v4668
      %v4753 = vadd.f32 %v4556, %v4671
      %v4754 = vadd.f32 %v4557, %v4674
      %v4755 = vadd.f32 %v4558, %v4677
      %v4756 = vadd.f32 %v4559, %v4680
      %v4757 = vadd.f32 %v4560, %v4683
      %v4758 = vadd.f32 %v4561, %v4686
      %v4759 = vadd.f32 %v4562, %v4689
      %v4760 = vadd.f32 %v4563, %v4692
      %v4761 = vadd.f32 %v4564, %v4695
      %v4762 = vadd.f32 %v4565, %v4698
      %v4763 = vadd.f32 %v4566, %v4701
      %v4764 = vadd.f32 %v4567, %v4704
      %v4765 = vadd.f32 %v4568, %v4707
      %v4766 = vadd.f32 %v4569, %v4710
      %v4767 = vadd.f32 %v4570, %v4713
      %v4768 = vadd.f32 %v4571, %v4716
      %v4769 = vadd.f32 %v4572, %v4719
      %v4770 = vadd.f32 %v4573, %v4722
      %v4771 = vadd.f32 %v4574, %v4725
      %v4772 = vadd.f32 %v4575, %v4728
      %v4773 = vadd.f32 %v4576, %v4731
      %v4774 = vadd.f32 %v4577, %v4734
      %v4775 = vadd.f32 %v4578, %v4737
      %v4776 = vadd.f32 %v4579, %v4740
      %v4777 = vadd.f32 %v4580, %v4743
      %v4778 = vadd.f32 %v4581, %v4746
      %v4779 = vld [vmem:[%s4186 + $0x3] sm:$0xff]
      %v4780 = vld [vmem:[%s4186 + $0xb] sm:$0xff]
      %v4781 = vld [vmem:[%s4186 + $0x1b] sm:$0xff]
      %v4782 = vld [vmem:[%s4186 + $0x23] sm:$0xff]
      %v4783 = vld [vmem:[%s4186 + $0x33] sm:$0xff]
      %v4784 = vld [vmem:[%s4186 + $0x3b] sm:$0xff]
      %v4785 = vld [vmem:[%s4186 + $0x4b] sm:$0xff]
      %v4786 = vld [vmem:[%s4186 + $0x53] sm:$0xff]
      %v4787 = vld [vmem:[%s4186 + $0x63] sm:$0xff]
      %v4788 = vld [vmem:[%s4186 + $0x6b] sm:$0xff]
      %v4789 = vld [vmem:[%s4186 + $0x7b] sm:$0xff]
      %v4790 = vld [vmem:[%s4186 + $0x83] sm:$0xff]
      %v4791 = vld [vmem:[%s4186 + $0x93] sm:$0xff]
      %v4792 = vld [vmem:[%s4186 + $0x9b] sm:$0xff]
      %v4793 = vld [vmem:[%s4186 + $0xab] sm:$0xff]
      %v4794 = vld [vmem:[%s4186 + $0xb3] sm:$0xff]
      %v4795 = vld [vmem:[%s4186 + $0xc3] sm:$0xff]
      %v4796 = vld [vmem:[%s4186 + $0xcb] sm:$0xff]
      %v4797 = vld [vmem:[%s4186 + $0xdb] sm:$0xff]
      %v4798 = vld [vmem:[%s4186 + $0xe3] sm:$0xff]
      %v4799 = vld [vmem:[%s4186 + $0xf3] sm:$0xff]
      %v4800 = vld [vmem:[%s4186 + $0xfb] sm:$0xff]
      %v4801 = vld [vmem:[%s4186 + $0x10b] sm:$0xff]
      %v4802 = vld [vmem:[%s4186 + $0x113] sm:$0xff]
      %v4803 = vld [vmem:[%s4186 + $0x123] sm:$0xff]
      %v4804 = vld [vmem:[%s4186 + $0x12b] sm:$0xff]
      %v4805 = vld [vmem:[%s4186 + $0x13b] sm:$0xff]
      %v4806 = vld [vmem:[%s4186 + $0x143] sm:$0xff]
      %v4807 = vld [vmem:[%s4186 + $0x153] sm:$0xff]
      %v4808 = vld [vmem:[%s4186 + $0x15b] sm:$0xff]
      %v4809 = vld [vmem:[%s4186 + $0x16b] sm:$0xff]
      %v4810 = vld [vmem:[%s4186 + $0x173] sm:$0xff]
      %v4811 = vld [vmem:[%s4219 + $0x3] sm:$0x1]
      %v4812 = vlaneseq
      %v4813 = vshrl.u32 %v4812, 7
      %v4814 = vsub.s32 0, %v4813
      %v4815 = vrot.slane %v4811, %v4814
      %v4816 = vmul.f32 %v4779, %v4815
      %v4817 = vmul.f32 %v4780, %v4815
      %v4818 = vmul.f32 %v4781, %v4815
      %v4819 = vmul.f32 %v4782, %v4815
      %v4820 = vmul.f32 %v4783, %v4815
      %v4821 = vmul.f32 %v4784, %v4815
      %v4822 = vmul.f32 %v4785, %v4815
      %v4823 = vmul.f32 %v4786, %v4815
      %v4824 = vmul.f32 %v4787, %v4815
      %v4825 = vmul.f32 %v4788, %v4815
      %v4826 = vmul.f32 %v4789, %v4815
      %v4827 = vmul.f32 %v4790, %v4815
      %v4828 = vmul.f32 %v4791, %v4815
      %v4829 = vmul.f32 %v4792, %v4815
      %v4830 = vmul.f32 %v4793, %v4815
      %v4831 = vmul.f32 %v4794, %v4815
      %v4832 = vmul.f32 %v4795, %v4815
      %v4833 = vmul.f32 %v4796, %v4815
      %v4834 = vmul.f32 %v4797, %v4815
      %v4835 = vmul.f32 %v4798, %v4815
      %v4836 = vmul.f32 %v4799, %v4815
      %v4837 = vmul.f32 %v4800, %v4815
      %v4838 = vmul.f32 %v4801, %v4815
      %v4839 = vmul.f32 %v4802, %v4815
      %v4840 = vmul.f32 %v4803, %v4815
      %v4841 = vmul.f32 %v4804, %v4815
      %v4842 = vmul.f32 %v4805, %v4815
      %v4843 = vmul.f32 %v4806, %v4815
      %v4844 = vmul.f32 %v4807, %v4815
      %v4845 = vmul.f32 %v4808, %v4815
      %v4846 = vmul.f32 %v4809, %v4815
      %v4847 = vmul.f32 %v4810, %v4815
      %v4848 = vsel %vm1014, %v4816, 0.0
      %4849 = vadd.xlane.f32.xlu0 %v4848
      %v4850 = vpop.xlane.xlu0 %4849
      %v4851 = vsel %vm1014, %v4817, 0.0
      %4852 = vadd.xlane.f32.xlu0 %v4851
      %v4853 = vpop.xlane.xlu0 %4852
      %v4854 = vsel %vm1014, %v4818, 0.0
      %4855 = vadd.xlane.f32.xlu0 %v4854
      %v4856 = vpop.xlane.xlu0 %4855
      %v4857 = vsel %vm1014, %v4819, 0.0
      %4858 = vadd.xlane.f32.xlu0 %v4857
      %v4859 = vpop.xlane.xlu0 %4858
      %v4860 = vsel %vm1014, %v4820, 0.0
      %4861 = vadd.xlane.f32.xlu0 %v4860
      %v4862 = vpop.xlane.xlu0 %4861
      %v4863 = vsel %vm1014, %v4821, 0.0
      %4864 = vadd.xlane.f32.xlu0 %v4863
      %v4865 = vpop.xlane.xlu0 %4864
      %v4866 = vsel %vm1014, %v4822, 0.0
      %4867 = vadd.xlane.f32.xlu0 %v4866
      %v4868 = vpop.xlane.xlu0 %4867
      %v4869 = vsel %vm1014, %v4823, 0.0
      %4870 = vadd.xlane.f32.xlu0 %v4869
      %v4871 = vpop.xlane.xlu0 %4870
      %v4872 = vsel %vm1014, %v4824, 0.0
      %4873 = vadd.xlane.f32.xlu0 %v4872
      %v4874 = vpop.xlane.xlu0 %4873
      %v4875 = vsel %vm1014, %v4825, 0.0
      %4876 = vadd.xlane.f32.xlu0 %v4875
      %v4877 = vpop.xlane.xlu0 %4876
      %v4878 = vsel %vm1014, %v4826, 0.0
      %4879 = vadd.xlane.f32.xlu0 %v4878
      %v4880 = vpop.xlane.xlu0 %4879
      %v4881 = vsel %vm1014, %v4827, 0.0
      %4882 = vadd.xlane.f32.xlu0 %v4881
      %v4883 = vpop.xlane.xlu0 %4882
      %v4884 = vsel %vm1014, %v4828, 0.0
      %4885 = vadd.xlane.f32.xlu0 %v4884
      %v4886 = vpop.xlane.xlu0 %4885
      %v4887 = vsel %vm1014, %v4829, 0.0
      %4888 = vadd.xlane.f32.xlu0 %v4887
      %v4889 = vpop.xlane.xlu0 %4888
      %v4890 = vsel %vm1014, %v4830, 0.0
      %4891 = vadd.xlane.f32.xlu0 %v4890
      %v4892 = vpop.xlane.xlu0 %4891
      %v4893 = vsel %vm1014, %v4831, 0.0
      %4894 = vadd.xlane.f32.xlu0 %v4893
      %v4895 = vpop.xlane.xlu0 %4894
      %v4896 = vsel %vm1014, %v4832, 0.0
      %4897 = vadd.xlane.f32.xlu0 %v4896
      %v4898 = vpop.xlane.xlu0 %4897
      %v4899 = vsel %vm1014, %v4833, 0.0
      %4900 = vadd.xlane.f32.xlu0 %v4899
      %v4901 = vpop.xlane.xlu0 %4900
      %v4902 = vsel %vm1014, %v4834, 0.0
      %4903 = vadd.xlane.f32.xlu0 %v4902
      %v4904 = vpop.xlane.xlu0 %4903
      %v4905 = vsel %vm1014, %v4835, 0.0
      %4906 = vadd.xlane.f32.xlu0 %v4905
      %v4907 = vpop.xlane.xlu0 %4906
      %v4908 = vsel %vm1014, %v4836, 0.0
      %4909 = vadd.xlane.f32.xlu0 %v4908
      %v4910 = vpop.xlane.xlu0 %4909
      %v4911 = vsel %vm1014, %v4837, 0.0
      %4912 = vadd.xlane.f32.xlu0 %v4911
      %v4913 = vpop.xlane.xlu0 %4912
      %v4914 = vsel %vm1014, %v4838, 0.0
      %4915 = vadd.xlane.f32.xlu0 %v4914
      %v4916 = vpop.xlane.xlu0 %4915
      %v4917 = vsel %vm1014, %v4839, 0.0
      %4918 = vadd.xlane.f32.xlu0 %v4917
      %v4919 = vpop.xlane.xlu0 %4918
      %v4920 = vsel %vm1014, %v4840, 0.0
      %4921 = vadd.xlane.f32.xlu0 %v4920
      %v4922 = vpop.xlane.xlu0 %4921
      %v4923 = vsel %vm1014, %v4841, 0.0
      %4924 = vadd.xlane.f32.xlu0 %v4923
      %v4925 = vpop.xlane.xlu0 %4924
      %v4926 = vsel %vm1014, %v4842, 0.0
      %4927 = vadd.xlane.f32.xlu0 %v4926
      %v4928 = vpop.xlane.xlu0 %4927
      %v4929 = vsel %vm1014, %v4843, 0.0
      %4930 = vadd.xlane.f32.xlu0 %v4929
      %v4931 = vpop.xlane.xlu0 %4930
      %v4932 = vsel %vm1014, %v4844, 0.0
      %4933 = vadd.xlane.f32.xlu0 %v4932
      %v4934 = vpop.xlane.xlu0 %4933
      %v4935 = vsel %vm1014, %v4845, 0.0
      %4936 = vadd.xlane.f32.xlu0 %v4935
      %v4937 = vpop.xlane.xlu0 %4936
      %v4938 = vsel %vm1014, %v4846, 0.0
      %4939 = vadd.xlane.f32.xlu0 %v4938
      %v4940 = vpop.xlane.xlu0 %4939
      %v4941 = vsel %vm1014, %v4847, 0.0
      %4942 = vadd.xlane.f32.xlu0 %v4941
      %v4943 = vpop.xlane.xlu0 %4942
      %v4944 = vadd.f32 %v4747, %v4850
      %v4945 = vadd.f32 %v4748, %v4853
      %v4946 = vadd.f32 %v4749, %v4856
      %v4947 = vadd.f32 %v4750, %v4859
      %v4948 = vadd.f32 %v4751, %v4862
      %v4949 = vadd.f32 %v4752, %v4865
      %v4950 = vadd.f32 %v4753, %v4868
      %v4951 = vadd.f32 %v4754, %v4871
      %v4952 = vadd.f32 %v4755, %v4874
      %v4953 = vadd.f32 %v4756, %v4877
      %v4954 = vadd.f32 %v4757, %v4880
      %v4955 = vadd.f32 %v4758, %v4883
      %v4956 = vadd.f32 %v4759, %v4886
      %v4957 = vadd.f32 %v4760, %v4889
      %v4958 = vadd.f32 %v4761, %v4892
      %v4959 = vadd.f32 %v4762, %v4895
      %v4960 = vadd.f32 %v4763, %v4898
      %v4961 = vadd.f32 %v4764, %v4901
      %v4962 = vadd.f32 %v4765, %v4904
      %v4963 = vadd.f32 %v4766, %v4907
      %v4964 = vadd.f32 %v4767, %v4910
      %v4965 = vadd.f32 %v4768, %v4913
      %v4966 = vadd.f32 %v4769, %v4916
      %v4967 = vadd.f32 %v4770, %v4919
      %v4968 = vadd.f32 %v4771, %v4922
      %v4969 = vadd.f32 %v4772, %v4925
      %v4970 = vadd.f32 %v4773, %v4928
      %v4971 = vadd.f32 %v4774, %v4931
      %v4972 = vadd.f32 %v4775, %v4934
      %v4973 = vadd.f32 %v4776, %v4937
      %v4974 = vadd.f32 %v4777, %v4940
      %v4975 = vadd.f32 %v4778, %v4943
      %v4976 = vld [vmem:[%s4186 + $0x4] sm:$0xff]
      %v4977 = vld [vmem:[%s4186 + $0xc] sm:$0xff]
      %v4978 = vld [vmem:[%s4186 + $0x1c] sm:$0xff]
      %v4979 = vld [vmem:[%s4186 + $0x24] sm:$0xff]
      %v4980 = vld [vmem:[%s4186 + $0x34] sm:$0xff]
      %v4981 = vld [vmem:[%s4186 + $0x3c] sm:$0xff]
      %v4982 = vld [vmem:[%s4186 + $0x4c] sm:$0xff]
      %v4983 = vld [vmem:[%s4186 + $0x54] sm:$0xff]
      %v4984 = vld [vmem:[%s4186 + $0x64] sm:$0xff]
      %v4985 = vld [vmem:[%s4186 + $0x6c] sm:$0xff]
      %v4986 = vld [vmem:[%s4186 + $0x7c] sm:$0xff]
      %v4987 = vld [vmem:[%s4186 + $0x84] sm:$0xff]
      %v4988 = vld [vmem:[%s4186 + $0x94] sm:$0xff]
      %v4989 = vld [vmem:[%s4186 + $0x9c] sm:$0xff]
      %v4990 = vld [vmem:[%s4186 + $0xac] sm:$0xff]
      %v4991 = vld [vmem:[%s4186 + $0xb4] sm:$0xff]
      %v4992 = vld [vmem:[%s4186 + $0xc4] sm:$0xff]
      %v4993 = vld [vmem:[%s4186 + $0xcc] sm:$0xff]
      %v4994 = vld [vmem:[%s4186 + $0xdc] sm:$0xff]
      %v4995 = vld [vmem:[%s4186 + $0xe4] sm:$0xff]
      %v4996 = vld [vmem:[%s4186 + $0xf4] sm:$0xff]
      %v4997 = vld [vmem:[%s4186 + $0xfc] sm:$0xff]
      %v4998 = vld [vmem:[%s4186 + $0x10c] sm:$0xff]
      %v4999 = vld [vmem:[%s4186 + $0x114] sm:$0xff]
      %v5000 = vld [vmem:[%s4186 + $0x124] sm:$0xff]
      %v5001 = vld [vmem:[%s4186 + $0x12c] sm:$0xff]
      %v5002 = vld [vmem:[%s4186 + $0x13c] sm:$0xff]
      %v5003 = vld [vmem:[%s4186 + $0x144] sm:$0xff]
      %v5004 = vld [vmem:[%s4186 + $0x154] sm:$0xff]
      %v5005 = vld [vmem:[%s4186 + $0x15c] sm:$0xff]
      %v5006 = vld [vmem:[%s4186 + $0x16c] sm:$0xff]
      %v5007 = vld [vmem:[%s4186 + $0x174] sm:$0xff]
      %v5008 = vld [vmem:[%s4219 + $0x4] sm:$0x1]
      %v5009 = vlaneseq
      %v5010 = vshrl.u32 %v5009, 7
      %v5011 = vsub.s32 0, %v5010
      %v5012 = vrot.slane %v5008, %v5011
      %v5013 = vmul.f32 %v4976, %v5012
      %v5014 = vmul.f32 %v4977, %v5012
      %v5015 = vmul.f32 %v4978, %v5012
      %v5016 = vmul.f32 %v4979, %v5012
      %v5017 = vmul.f32 %v4980, %v5012
      %v5018 = vmul.f32 %v4981, %v5012
      %v5019 = vmul.f32 %v4982, %v5012
      %v5020 = vmul.f32 %v4983, %v5012
      %v5021 = vmul.f32 %v4984, %v5012
      %v5022 = vmul.f32 %v4985, %v5012
      %v5023 = vmul.f32 %v4986, %v5012
      %v5024 = vmul.f32 %v4987, %v5012
      %v5025 = vmul.f32 %v4988, %v5012
      %v5026 = vmul.f32 %v4989, %v5012
      %v5027 = vmul.f32 %v4990, %v5012
      %v5028 = vmul.f32 %v4991, %v5012
      %v5029 = vmul.f32 %v4992, %v5012
      %v5030 = vmul.f32 %v4993, %v5012
      %v5031 = vmul.f32 %v4994, %v5012
      %v5032 = vmul.f32 %v4995, %v5012
      %v5033 = vmul.f32 %v4996, %v5012
      %v5034 = vmul.f32 %v4997, %v5012
      %v5035 = vmul.f32 %v4998, %v5012
      %v5036 = vmul.f32 %v4999, %v5012
      %v5037 = vmul.f32 %v5000, %v5012
      %v5038 = vmul.f32 %v5001, %v5012
      %v5039 = vmul.f32 %v5002, %v5012
      %v5040 = vmul.f32 %v5003, %v5012
      %v5041 = vmul.f32 %v5004, %v5012
      %v5042 = vmul.f32 %v5005, %v5012
      %v5043 = vmul.f32 %v5006, %v5012
      %v5044 = vmul.f32 %v5007, %v5012
      %v5045 = vsel %vm1014, %v5013, 0.0
      %5046 = vadd.xlane.f32.xlu0 %v5045
      %v5047 = vpop.xlane.xlu0 %5046
      %v5048 = vsel %vm1014, %v5014, 0.0
      %5049 = vadd.xlane.f32.xlu0 %v5048
      %v5050 = vpop.xlane.xlu0 %5049
      %v5051 = vsel %vm1014, %v5015, 0.0
      %5052 = vadd.xlane.f32.xlu0 %v5051
      %v5053 = vpop.xlane.xlu0 %5052
      %v5054 = vsel %vm1014, %v5016, 0.0
      %5055 = vadd.xlane.f32.xlu0 %v5054
      %v5056 = vpop.xlane.xlu0 %5055
      %v5057 = vsel %vm1014, %v5017, 0.0
      %5058 = vadd.xlane.f32.xlu0 %v5057
      %v5059 = vpop.xlane.xlu0 %5058
      %v5060 = vsel %vm1014, %v5018, 0.0
      %5061 = vadd.xlane.f32.xlu0 %v5060
      %v5062 = vpop.xlane.xlu0 %5061
      %v5063 = vsel %vm1014, %v5019, 0.0
      %5064 = vadd.xlane.f32.xlu0 %v5063
      %v5065 = vpop.xlane.xlu0 %5064
      %v5066 = vsel %vm1014, %v5020, 0.0
      %5067 = vadd.xlane.f32.xlu0 %v5066
      %v5068 = vpop.xlane.xlu0 %5067
      %v5069 = vsel %vm1014, %v5021, 0.0
      %5070 = vadd.xlane.f32.xlu0 %v5069
      %v5071 = vpop.xlane.xlu0 %5070
      %v5072 = vsel %vm1014, %v5022, 0.0
      %5073 = vadd.xlane.f32.xlu0 %v5072
      %v5074 = vpop.xlane.xlu0 %5073
      %v5075 = vsel %vm1014, %v5023, 0.0
      %5076 = vadd.xlane.f32.xlu0 %v5075
      %v5077 = vpop.xlane.xlu0 %5076
      %v5078 = vsel %vm1014, %v5024, 0.0
      %5079 = vadd.xlane.f32.xlu0 %v5078
      %v5080 = vpop.xlane.xlu0 %5079
      %v5081 = vsel %vm1014, %v5025, 0.0
      %5082 = vadd.xlane.f32.xlu0 %v5081
      %v5083 = vpop.xlane.xlu0 %5082
      %v5084 = vsel %vm1014, %v5026, 0.0
      %5085 = vadd.xlane.f32.xlu0 %v5084
      %v5086 = vpop.xlane.xlu0 %5085
      %v5087 = vsel %vm1014, %v5027, 0.0
      %5088 = vadd.xlane.f32.xlu0 %v5087
      %v5089 = vpop.xlane.xlu0 %5088
      %v5090 = vsel %vm1014, %v5028, 0.0
      %5091 = vadd.xlane.f32.xlu0 %v5090
      %v5092 = vpop.xlane.xlu0 %5091
      %v5093 = vsel %vm1014, %v5029, 0.0
      %5094 = vadd.xlane.f32.xlu0 %v5093
      %v5095 = vpop.xlane.xlu0 %5094
      %v5096 = vsel %vm1014, %v5030, 0.0
      %5097 = vadd.xlane.f32.xlu0 %v5096
      %v5098 = vpop.xlane.xlu0 %5097
      %v5099 = vsel %vm1014, %v5031, 0.0
      %5100 = vadd.xlane.f32.xlu0 %v5099
      %v5101 = vpop.xlane.xlu0 %5100
      %v5102 = vsel %vm1014, %v5032, 0.0
      %5103 = vadd.xlane.f32.xlu0 %v5102
      %v5104 = vpop.xlane.xlu0 %5103
      %v5105 = vsel %vm1014, %v5033, 0.0
      %5106 = vadd.xlane.f32.xlu0 %v5105
      %v5107 = vpop.xlane.xlu0 %5106
      %v5108 = vsel %vm1014, %v5034, 0.0
      %5109 = vadd.xlane.f32.xlu0 %v5108
      %v5110 = vpop.xlane.xlu0 %5109
      %v5111 = vsel %vm1014, %v5035, 0.0
      %5112 = vadd.xlane.f32.xlu0 %v5111
      %v5113 = vpop.xlane.xlu0 %5112
      %v5114 = vsel %vm1014, %v5036, 0.0
      %5115 = vadd.xlane.f32.xlu0 %v5114
      %v5116 = vpop.xlane.xlu0 %5115
      %v5117 = vsel %vm1014, %v5037, 0.0
      %5118 = vadd.xlane.f32.xlu0 %v5117
      %v5119 = vpop.xlane.xlu0 %5118
      %v5120 = vsel %vm1014, %v5038, 0.0
      %5121 = vadd.xlane.f32.xlu0 %v5120
      %v5122 = vpop.xlane.xlu0 %5121
      %v5123 = vsel %vm1014, %v5039, 0.0
      %5124 = vadd.xlane.f32.xlu0 %v5123
      %v5125 = vpop.xlane.xlu0 %5124
      %v5126 = vsel %vm1014, %v5040, 0.0
      %5127 = vadd.xlane.f32.xlu0 %v5126
      %v5128 = vpop.xlane.xlu0 %5127
      %v5129 = vsel %vm1014, %v5041, 0.0
      %5130 = vadd.xlane.f32.xlu0 %v5129
      %v5131 = vpop.xlane.xlu0 %5130
      %v5132 = vsel %vm1014, %v5042, 0.0
      %5133 = vadd.xlane.f32.xlu0 %v5132
      %v5134 = vpop.xlane.xlu0 %5133
      %v5135 = vsel %vm1014, %v5043, 0.0
      %5136 = vadd.xlane.f32.xlu0 %v5135
      %v5137 = vpop.xlane.xlu0 %5136
      %v5138 = vsel %vm1014, %v5044, 0.0
      %5139 = vadd.xlane.f32.xlu0 %v5138
      %v5140 = vpop.xlane.xlu0 %5139
      %v5141 = vadd.f32 %v4944, %v5047
      %v5142 = vadd.f32 %v4945, %v5050
      %v5143 = vadd.f32 %v4946, %v5053
      %v5144 = vadd.f32 %v4947, %v5056
      %v5145 = vadd.f32 %v4948, %v5059
      %v5146 = vadd.f32 %v4949, %v5062
      %v5147 = vadd.f32 %v4950, %v5065
      %v5148 = vadd.f32 %v4951, %v5068
      %v5149 = vadd.f32 %v4952, %v5071
      %v5150 = vadd.f32 %v4953, %v5074
      %v5151 = vadd.f32 %v4954, %v5077
      %v5152 = vadd.f32 %v4955, %v5080
      %v5153 = vadd.f32 %v4956, %v5083
      %v5154 = vadd.f32 %v4957, %v5086
      %v5155 = vadd.f32 %v4958, %v5089
      %v5156 = vadd.f32 %v4959, %v5092
      %v5157 = vadd.f32 %v4960, %v5095
      %v5158 = vadd.f32 %v4961, %v5098
      %v5159 = vadd.f32 %v4962, %v5101
      %v5160 = vadd.f32 %v4963, %v5104
      %v5161 = vadd.f32 %v4964, %v5107
      %v5162 = vadd.f32 %v4965, %v5110
      %v5163 = vadd.f32 %v4966, %v5113
      %v5164 = vadd.f32 %v4967, %v5116
      %v5165 = vadd.f32 %v4968, %v5119
      %v5166 = vadd.f32 %v4969, %v5122
      %v5167 = vadd.f32 %v4970, %v5125
      %v5168 = vadd.f32 %v4971, %v5128
      %v5169 = vadd.f32 %v4972, %v5131
      %v5170 = vadd.f32 %v4973, %v5134
      %v5171 = vadd.f32 %v4974, %v5137
      %v5172 = vadd.f32 %v4975, %v5140
      %v5173 = vld [vmem:[%s1013] sm:$0xff]
      %v5174 = vld [vmem:[%s1013 + $0x8] sm:$0xff]
      %v5175 = vld [vmem:[%s1013 + $0x18] sm:$0xff]
      %v5176 = vld [vmem:[%s1013 + $0x20] sm:$0xff]
      %v5177 = vld [vmem:[%s1013 + $0x30] sm:$0xff]
      %v5178 = vld [vmem:[%s1013 + $0x38] sm:$0xff]
      %v5179 = vld [vmem:[%s1013 + $0x48] sm:$0xff]
      %v5180 = vld [vmem:[%s1013 + $0x50] sm:$0xff]
      %v5181 = vld [vmem:[%s1013 + $0x60] sm:$0xff]
      %v5182 = vld [vmem:[%s1013 + $0x68] sm:$0xff]
      %v5183 = vld [vmem:[%s1013 + $0x78] sm:$0xff]
      %v5184 = vld [vmem:[%s1013 + $0x80] sm:$0xff]
      %v5185 = vld [vmem:[%s1013 + $0x90] sm:$0xff]
      %v5186 = vld [vmem:[%s1013 + $0x98] sm:$0xff]
      %v5187 = vld [vmem:[%s1013 + $0xa8] sm:$0xff]
      %v5188 = vld [vmem:[%s1013 + $0xb0] sm:$0xff]
      %v5189 = vld [vmem:[%s1013 + $0xc0] sm:$0xff]
      %v5190 = vld [vmem:[%s1013 + $0xc8] sm:$0xff]
      %v5191 = vld [vmem:[%s1013 + $0xd8] sm:$0xff]
      %v5192 = vld [vmem:[%s1013 + $0xe0] sm:$0xff]
      %v5193 = vld [vmem:[%s1013 + $0xf0] sm:$0xff]
      %v5194 = vld [vmem:[%s1013 + $0xf8] sm:$0xff]
      %v5195 = vld [vmem:[%s1013 + $0x108] sm:$0xff]
      %v5196 = vld [vmem:[%s1013 + $0x110] sm:$0xff]
      %v5197 = vld [vmem:[%s1013 + $0x120] sm:$0xff]
      %v5198 = vld [vmem:[%s1013 + $0x128] sm:$0xff]
      %v5199 = vld [vmem:[%s1013 + $0x138] sm:$0xff]
      %v5200 = vld [vmem:[%s1013 + $0x140] sm:$0xff]
      %v5201 = vld [vmem:[%s1013 + $0x150] sm:$0xff]
      %v5202 = vld [vmem:[%s1013 + $0x158] sm:$0xff]
      %v5203 = vld [vmem:[%s1013 + $0x168] sm:$0xff]
      %v5204 = vld [vmem:[%s1013 + $0x170] sm:$0xff]
      %s5205 = scalar_lea.vmem %s5, 32
      %v5206 = vld [vmem:[%s5205] sm:$0x1]
      %v5207 = vlaneseq
      %v5208 = vshrl.u32 %v5207, 7
      %v5209 = vsub.s32 0, %v5208
      %v5210 = vrot.slane %v5206, %v5209
      %v5211 = vmul.f32 %v5173, %v5210
      %v5212 = vmul.f32 %v5174, %v5210
      %v5213 = vmul.f32 %v5175, %v5210
      %v5214 = vmul.f32 %v5176, %v5210
      %v5215 = vmul.f32 %v5177, %v5210
      %v5216 = vmul.f32 %v5178, %v5210
      %v5217 = vmul.f32 %v5179, %v5210
      %v5218 = vmul.f32 %v5180, %v5210
      %v5219 = vmul.f32 %v5181, %v5210
      %v5220 = vmul.f32 %v5182, %v5210
      %v5221 = vmul.f32 %v5183, %v5210
      %v5222 = vmul.f32 %v5184, %v5210
      %v5223 = vmul.f32 %v5185, %v5210
      %v5224 = vmul.f32 %v5186, %v5210
      %v5225 = vmul.f32 %v5187, %v5210
      %v5226 = vmul.f32 %v5188, %v5210
      %v5227 = vmul.f32 %v5189, %v5210
      %v5228 = vmul.f32 %v5190, %v5210
      %v5229 = vmul.f32 %v5191, %v5210
      %v5230 = vmul.f32 %v5192, %v5210
      %v5231 = vmul.f32 %v5193, %v5210
      %v5232 = vmul.f32 %v5194, %v5210
      %v5233 = vmul.f32 %v5195, %v5210
      %v5234 = vmul.f32 %v5196, %v5210
      %v5235 = vmul.f32 %v5197, %v5210
      %v5236 = vmul.f32 %v5198, %v5210
      %v5237 = vmul.f32 %v5199, %v5210
      %v5238 = vmul.f32 %v5200, %v5210
      %v5239 = vmul.f32 %v5201, %v5210
      %v5240 = vmul.f32 %v5202, %v5210
      %v5241 = vmul.f32 %v5203, %v5210
      %v5242 = vmul.f32 %v5204, %v5210
      %v5243 = vsel %vm1014, %v5211, 0.0
      %5244 = vadd.xlane.f32.xlu0 %v5243
      %v5245 = vpop.xlane.xlu0 %5244
      %v5246 = vsel %vm1014, %v5212, 0.0
      %5247 = vadd.xlane.f32.xlu0 %v5246
      %v5248 = vpop.xlane.xlu0 %5247
      %v5249 = vsel %vm1014, %v5213, 0.0
      %5250 = vadd.xlane.f32.xlu0 %v5249
      %v5251 = vpop.xlane.xlu0 %5250
      %v5252 = vsel %vm1014, %v5214, 0.0
      %5253 = vadd.xlane.f32.xlu0 %v5252
      %v5254 = vpop.xlane.xlu0 %5253
      %v5255 = vsel %vm1014, %v5215, 0.0
      %5256 = vadd.xlane.f32.xlu0 %v5255
      %v5257 = vpop.xlane.xlu0 %5256
      %v5258 = vsel %vm1014, %v5216, 0.0
      %5259 = vadd.xlane.f32.xlu0 %v5258
      %v5260 = vpop.xlane.xlu0 %5259
      %v5261 = vsel %vm1014, %v5217, 0.0
      %5262 = vadd.xlane.f32.xlu0 %v5261
      %v5263 = vpop.xlane.xlu0 %5262
      %v5264 = vsel %vm1014, %v5218, 0.0
      %5265 = vadd.xlane.f32.xlu0 %v5264
      %v5266 = vpop.xlane.xlu0 %5265
      %v5267 = vsel %vm1014, %v5219, 0.0
      %5268 = vadd.xlane.f32.xlu0 %v5267
      %v5269 = vpop.xlane.xlu0 %5268
      %v5270 = vsel %vm1014, %v5220, 0.0
      %5271 = vadd.xlane.f32.xlu0 %v5270
      %v5272 = vpop.xlane.xlu0 %5271
      %v5273 = vsel %vm1014, %v5221, 0.0
      %5274 = vadd.xlane.f32.xlu0 %v5273
      %v5275 = vpop.xlane.xlu0 %5274
      %v5276 = vsel %vm1014, %v5222, 0.0
      %5277 = vadd.xlane.f32.xlu0 %v5276
      %v5278 = vpop.xlane.xlu0 %5277
      %v5279 = vsel %vm1014, %v5223, 0.0
      %5280 = vadd.xlane.f32.xlu0 %v5279
      %v5281 = vpop.xlane.xlu0 %5280
      %v5282 = vsel %vm1014, %v5224, 0.0
      %5283 = vadd.xlane.f32.xlu0 %v5282
      %v5284 = vpop.xlane.xlu0 %5283
      %v5285 = vsel %vm1014, %v5225, 0.0
      %5286 = vadd.xlane.f32.xlu0 %v5285
      %v5287 = vpop.xlane.xlu0 %5286
      %v5288 = vsel %vm1014, %v5226, 0.0
      %5289 = vadd.xlane.f32.xlu0 %v5288
      %v5290 = vpop.xlane.xlu0 %5289
      %v5291 = vsel %vm1014, %v5227, 0.0
      %5292 = vadd.xlane.f32.xlu0 %v5291
      %v5293 = vpop.xlane.xlu0 %5292
      %v5294 = vsel %vm1014, %v5228, 0.0
      %5295 = vadd.xlane.f32.xlu0 %v5294
      %v5296 = vpop.xlane.xlu0 %5295
      %v5297 = vsel %vm1014, %v5229, 0.0
      %5298 = vadd.xlane.f32.xlu0 %v5297
      %v5299 = vpop.xlane.xlu0 %5298
      %v5300 = vsel %vm1014, %v5230, 0.0
      %5301 = vadd.xlane.f32.xlu0 %v5300
      %v5302 = vpop.xlane.xlu0 %5301
      %v5303 = vsel %vm1014, %v5231, 0.0
      %5304 = vadd.xlane.f32.xlu0 %v5303
      %v5305 = vpop.xlane.xlu0 %5304
      %v5306 = vsel %vm1014, %v5232, 0.0
      %5307 = vadd.xlane.f32.xlu0 %v5306
      %v5308 = vpop.xlane.xlu0 %5307
      %v5309 = vsel %vm1014, %v5233, 0.0
      %5310 = vadd.xlane.f32.xlu0 %v5309
      %v5311 = vpop.xlane.xlu0 %5310
      %v5312 = vsel %vm1014, %v5234, 0.0
      %5313 = vadd.xlane.f32.xlu0 %v5312
      %v5314 = vpop.xlane.xlu0 %5313
      %v5315 = vsel %vm1014, %v5235, 0.0
      %5316 = vadd.xlane.f32.xlu0 %v5315
      %v5317 = vpop.xlane.xlu0 %5316
      %v5318 = vsel %vm1014, %v5236, 0.0
      %5319 = vadd.xlane.f32.xlu0 %v5318
      %v5320 = vpop.xlane.xlu0 %5319
      %v5321 = vsel %vm1014, %v5237, 0.0
      %5322 = vadd.xlane.f32.xlu0 %v5321
      %v5323 = vpop.xlane.xlu0 %5322
      %v5324 = vsel %vm1014, %v5238, 0.0
      %5325 = vadd.xlane.f32.xlu0 %v5324
      %v5326 = vpop.xlane.xlu0 %5325
      %v5327 = vsel %vm1014, %v5239, 0.0
      %5328 = vadd.xlane.f32.xlu0 %v5327
      %v5329 = vpop.xlane.xlu0 %5328
      %v5330 = vsel %vm1014, %v5240, 0.0
      %5331 = vadd.xlane.f32.xlu0 %v5330
      %v5332 = vpop.xlane.xlu0 %5331
      %v5333 = vsel %vm1014, %v5241, 0.0
      %5334 = vadd.xlane.f32.xlu0 %v5333
      %v5335 = vpop.xlane.xlu0 %5334
      %v5336 = vsel %vm1014, %v5242, 0.0
      %5337 = vadd.xlane.f32.xlu0 %v5336
      %v5338 = vpop.xlane.xlu0 %5337
      %v5339 = vadd.f32 %v5141, %v5245
      %v5340 = vadd.f32 %v5142, %v5248
      %v5341 = vadd.f32 %v5143, %v5251
      %v5342 = vadd.f32 %v5144, %v5254
      %v5343 = vadd.f32 %v5145, %v5257
      %v5344 = vadd.f32 %v5146, %v5260
      %v5345 = vadd.f32 %v5147, %v5263
      %v5346 = vadd.f32 %v5148, %v5266
      %v5347 = vadd.f32 %v5149, %v5269
      %v5348 = vadd.f32 %v5150, %v5272
      %v5349 = vadd.f32 %v5151, %v5275
      %v5350 = vadd.f32 %v5152, %v5278
      %v5351 = vadd.f32 %v5153, %v5281
      %v5352 = vadd.f32 %v5154, %v5284
      %v5353 = vadd.f32 %v5155, %v5287
      %v5354 = vadd.f32 %v5156, %v5290
      %v5355 = vadd.f32 %v5157, %v5293
      %v5356 = vadd.f32 %v5158, %v5296
      %v5357 = vadd.f32 %v5159, %v5299
      %v5358 = vadd.f32 %v5160, %v5302
      %v5359 = vadd.f32 %v5161, %v5305
      %v5360 = vadd.f32 %v5162, %v5308
      %v5361 = vadd.f32 %v5163, %v5311
      %v5362 = vadd.f32 %v5164, %v5314
      %v5363 = vadd.f32 %v5165, %v5317
      %v5364 = vadd.f32 %v5166, %v5320
      %v5365 = vadd.f32 %v5167, %v5323
      %v5366 = vadd.f32 %v5168, %v5326
      %v5367 = vadd.f32 %v5169, %v5329
      %v5368 = vadd.f32 %v5170, %v5332
      %v5369 = vadd.f32 %v5171, %v5335
      %v5370 = vadd.f32 %v5172, %v5338
      %v5371 = vld [vmem:[%s1013 + $0x1] sm:$0xff]
      %v5372 = vld [vmem:[%s1013 + $0x9] sm:$0xff]
      %v5373 = vld [vmem:[%s1013 + $0x19] sm:$0xff]
      %v5374 = vld [vmem:[%s1013 + $0x21] sm:$0xff]
      %v5375 = vld [vmem:[%s1013 + $0x31] sm:$0xff]
      %v5376 = vld [vmem:[%s1013 + $0x39] sm:$0xff]
      %v5377 = vld [vmem:[%s1013 + $0x49] sm:$0xff]
      %v5378 = vld [vmem:[%s1013 + $0x51] sm:$0xff]
      %v5379 = vld [vmem:[%s1013 + $0x61] sm:$0xff]
      %v5380 = vld [vmem:[%s1013 + $0x69] sm:$0xff]
      %v5381 = vld [vmem:[%s1013 + $0x79] sm:$0xff]
      %v5382 = vld [vmem:[%s1013 + $0x81] sm:$0xff]
      %v5383 = vld [vmem:[%s1013 + $0x91] sm:$0xff]
      %v5384 = vld [vmem:[%s1013 + $0x99] sm:$0xff]
      %v5385 = vld [vmem:[%s1013 + $0xa9] sm:$0xff]
      %v5386 = vld [vmem:[%s1013 + $0xb1] sm:$0xff]
      %v5387 = vld [vmem:[%s1013 + $0xc1] sm:$0xff]
      %v5388 = vld [vmem:[%s1013 + $0xc9] sm:$0xff]
      %v5389 = vld [vmem:[%s1013 + $0xd9] sm:$0xff]
      %v5390 = vld [vmem:[%s1013 + $0xe1] sm:$0xff]
      %v5391 = vld [vmem:[%s1013 + $0xf1] sm:$0xff]
      %v5392 = vld [vmem:[%s1013 + $0xf9] sm:$0xff]
      %v5393 = vld [vmem:[%s1013 + $0x109] sm:$0xff]
      %v5394 = vld [vmem:[%s1013 + $0x111] sm:$0xff]
      %v5395 = vld [vmem:[%s1013 + $0x121] sm:$0xff]
      %v5396 = vld [vmem:[%s1013 + $0x129] sm:$0xff]
      %v5397 = vld [vmem:[%s1013 + $0x139] sm:$0xff]
      %v5398 = vld [vmem:[%s1013 + $0x141] sm:$0xff]
      %v5399 = vld [vmem:[%s1013 + $0x151] sm:$0xff]
      %v5400 = vld [vmem:[%s1013 + $0x159] sm:$0xff]
      %v5401 = vld [vmem:[%s1013 + $0x169] sm:$0xff]
      %v5402 = vld [vmem:[%s1013 + $0x171] sm:$0xff]
      %v5403 = vld [vmem:[%s5205 + $0x1] sm:$0x1]
      %v5404 = vlaneseq
      %v5405 = vshrl.u32 %v5404, 7
      %v5406 = vsub.s32 0, %v5405
      %v5407 = vrot.slane %v5403, %v5406
      %v5408 = vmul.f32 %v5371, %v5407
      %v5409 = vmul.f32 %v5372, %v5407
      %v5410 = vmul.f32 %v5373, %v5407
      %v5411 = vmul.f32 %v5374, %v5407
      %v5412 = vmul.f32 %v5375, %v5407
      %v5413 = vmul.f32 %v5376, %v5407
      %v5414 = vmul.f32 %v5377, %v5407
      %v5415 = vmul.f32 %v5378, %v5407
      %v5416 = vmul.f32 %v5379, %v5407
      %v5417 = vmul.f32 %v5380, %v5407
      %v5418 = vmul.f32 %v5381, %v5407
      %v5419 = vmul.f32 %v5382, %v5407
      %v5420 = vmul.f32 %v5383, %v5407
      %v5421 = vmul.f32 %v5384, %v5407
      %v5422 = vmul.f32 %v5385, %v5407
      %v5423 = vmul.f32 %v5386, %v5407
      %v5424 = vmul.f32 %v5387, %v5407
      %v5425 = vmul.f32 %v5388, %v5407
      %v5426 = vmul.f32 %v5389, %v5407
      %v5427 = vmul.f32 %v5390, %v5407
      %v5428 = vmul.f32 %v5391, %v5407
      %v5429 = vmul.f32 %v5392, %v5407
      %v5430 = vmul.f32 %v5393, %v5407
      %v5431 = vmul.f32 %v5394, %v5407
      %v5432 = vmul.f32 %v5395, %v5407
      %v5433 = vmul.f32 %v5396, %v5407
      %v5434 = vmul.f32 %v5397, %v5407
      %v5435 = vmul.f32 %v5398, %v5407
      %v5436 = vmul.f32 %v5399, %v5407
      %v5437 = vmul.f32 %v5400, %v5407
      %v5438 = vmul.f32 %v5401, %v5407
      %v5439 = vmul.f32 %v5402, %v5407
      %v5440 = vsel %vm1014, %v5408, 0.0
      %5441 = vadd.xlane.f32.xlu0 %v5440
      %v5442 = vpop.xlane.xlu0 %5441
      %v5443 = vsel %vm1014, %v5409, 0.0
      %5444 = vadd.xlane.f32.xlu0 %v5443
      %v5445 = vpop.xlane.xlu0 %5444
      %v5446 = vsel %vm1014, %v5410, 0.0
      %5447 = vadd.xlane.f32.xlu0 %v5446
      %v5448 = vpop.xlane.xlu0 %5447
      %v5449 = vsel %vm1014, %v5411, 0.0
      %5450 = vadd.xlane.f32.xlu0 %v5449
      %v5451 = vpop.xlane.xlu0 %5450
      %v5452 = vsel %vm1014, %v5412, 0.0
      %5453 = vadd.xlane.f32.xlu0 %v5452
      %v5454 = vpop.xlane.xlu0 %5453
      %v5455 = vsel %vm1014, %v5413, 0.0
      %5456 = vadd.xlane.f32.xlu0 %v5455
      %v5457 = vpop.xlane.xlu0 %5456
      %v5458 = vsel %vm1014, %v5414, 0.0
      %5459 = vadd.xlane.f32.xlu0 %v5458
      %v5460 = vpop.xlane.xlu0 %5459
      %v5461 = vsel %vm1014, %v5415, 0.0
      %5462 = vadd.xlane.f32.xlu0 %v5461
      %v5463 = vpop.xlane.xlu0 %5462
      %v5464 = vsel %vm1014, %v5416, 0.0
      %5465 = vadd.xlane.f32.xlu0 %v5464
      %v5466 = vpop.xlane.xlu0 %5465
      %v5467 = vsel %vm1014, %v5417, 0.0
      %5468 = vadd.xlane.f32.xlu0 %v5467
      %v5469 = vpop.xlane.xlu0 %5468
      %v5470 = vsel %vm1014, %v5418, 0.0
      %5471 = vadd.xlane.f32.xlu0 %v5470
      %v5472 = vpop.xlane.xlu0 %5471
      %v5473 = vsel %vm1014, %v5419, 0.0
      %5474 = vadd.xlane.f32.xlu0 %v5473
      %v5475 = vpop.xlane.xlu0 %5474
      %v5476 = vsel %vm1014, %v5420, 0.0
      %5477 = vadd.xlane.f32.xlu0 %v5476
      %v5478 = vpop.xlane.xlu0 %5477
      %v5479 = vsel %vm1014, %v5421, 0.0
      %5480 = vadd.xlane.f32.xlu0 %v5479
      %v5481 = vpop.xlane.xlu0 %5480
      %v5482 = vsel %vm1014, %v5422, 0.0
      %5483 = vadd.xlane.f32.xlu0 %v5482
      %v5484 = vpop.xlane.xlu0 %5483
      %v5485 = vsel %vm1014, %v5423, 0.0
      %5486 = vadd.xlane.f32.xlu0 %v5485
      %v5487 = vpop.xlane.xlu0 %5486
      %v5488 = vsel %vm1014, %v5424, 0.0
      %5489 = vadd.xlane.f32.xlu0 %v5488
      %v5490 = vpop.xlane.xlu0 %5489
      %v5491 = vsel %vm1014, %v5425, 0.0
      %5492 = vadd.xlane.f32.xlu0 %v5491
      %v5493 = vpop.xlane.xlu0 %5492
      %v5494 = vsel %vm1014, %v5426, 0.0
      %5495 = vadd.xlane.f32.xlu0 %v5494
      %v5496 = vpop.xlane.xlu0 %5495
      %v5497 = vsel %vm1014, %v5427, 0.0
      %5498 = vadd.xlane.f32.xlu0 %v5497
      %v5499 = vpop.xlane.xlu0 %5498
      %v5500 = vsel %vm1014, %v5428, 0.0
      %5501 = vadd.xlane.f32.xlu0 %v5500
      %v5502 = vpop.xlane.xlu0 %5501
      %v5503 = vsel %vm1014, %v5429, 0.0
      %5504 = vadd.xlane.f32.xlu0 %v5503
      %v5505 = vpop.xlane.xlu0 %5504
      %v5506 = vsel %vm1014, %v5430, 0.0
      %5507 = vadd.xlane.f32.xlu0 %v5506
      %v5508 = vpop.xlane.xlu0 %5507
      %v5509 = vsel %vm1014, %v5431, 0.0
      %5510 = vadd.xlane.f32.xlu0 %v5509
      %v5511 = vpop.xlane.xlu0 %5510
      %v5512 = vsel %vm1014, %v5432, 0.0
      %5513 = vadd.xlane.f32.xlu0 %v5512
      %v5514 = vpop.xlane.xlu0 %5513
      %v5515 = vsel %vm1014, %v5433, 0.0
      %5516 = vadd.xlane.f32.xlu0 %v5515
      %v5517 = vpop.xlane.xlu0 %5516
      %v5518 = vsel %vm1014, %v5434, 0.0
      %5519 = vadd.xlane.f32.xlu0 %v5518
      %v5520 = vpop.xlane.xlu0 %5519
      %v5521 = vsel %vm1014, %v5435, 0.0
      %5522 = vadd.xlane.f32.xlu0 %v5521
      %v5523 = vpop.xlane.xlu0 %5522
      %v5524 = vsel %vm1014, %v5436, 0.0
      %5525 = vadd.xlane.f32.xlu0 %v5524
      %v5526 = vpop.xlane.xlu0 %5525
      %v5527 = vsel %vm1014, %v5437, 0.0
      %5528 = vadd.xlane.f32.xlu0 %v5527
      %v5529 = vpop.xlane.xlu0 %5528
      %v5530 = vsel %vm1014, %v5438, 0.0
      %5531 = vadd.xlane.f32.xlu0 %v5530
      %v5532 = vpop.xlane.xlu0 %5531
      %v5533 = vsel %vm1014, %v5439, 0.0
      %5534 = vadd.xlane.f32.xlu0 %v5533
      %v5535 = vpop.xlane.xlu0 %5534
      %v5536 = vadd.f32 %v5339, %v5442
      %v5537 = vadd.f32 %v5340, %v5445
      %v5538 = vadd.f32 %v5341, %v5448
      %v5539 = vadd.f32 %v5342, %v5451
      %v5540 = vadd.f32 %v5343, %v5454
      %v5541 = vadd.f32 %v5344, %v5457
      %v5542 = vadd.f32 %v5345, %v5460
      %v5543 = vadd.f32 %v5346, %v5463
      %v5544 = vadd.f32 %v5347, %v5466
      %v5545 = vadd.f32 %v5348, %v5469
      %v5546 = vadd.f32 %v5349, %v5472
      %v5547 = vadd.f32 %v5350, %v5475
      %v5548 = vadd.f32 %v5351, %v5478
      %v5549 = vadd.f32 %v5352, %v5481
      %v5550 = vadd.f32 %v5353, %v5484
      %v5551 = vadd.f32 %v5354, %v5487
      %v5552 = vadd.f32 %v5355, %v5490
      %v5553 = vadd.f32 %v5356, %v5493
      %v5554 = vadd.f32 %v5357, %v5496
      %v5555 = vadd.f32 %v5358, %v5499
      %v5556 = vadd.f32 %v5359, %v5502
      %v5557 = vadd.f32 %v5360, %v5505
      %v5558 = vadd.f32 %v5361, %v5508
      %v5559 = vadd.f32 %v5362, %v5511
      %v5560 = vadd.f32 %v5363, %v5514
      %v5561 = vadd.f32 %v5364, %v5517
      %v5562 = vadd.f32 %v5365, %v5520
      %v5563 = vadd.f32 %v5366, %v5523
      %v5564 = vadd.f32 %v5367, %v5526
      %v5565 = vadd.f32 %v5368, %v5529
      %v5566 = vadd.f32 %v5369, %v5532
      %v5567 = vadd.f32 %v5370, %v5535
      %v5568 = vld [vmem:[%s1013 + $0x2] sm:$0xff]
      %v5569 = vld [vmem:[%s1013 + $0xa] sm:$0xff]
      %v5570 = vld [vmem:[%s1013 + $0x1a] sm:$0xff]
      %v5571 = vld [vmem:[%s1013 + $0x22] sm:$0xff]
      %v5572 = vld [vmem:[%s1013 + $0x32] sm:$0xff]
      %v5573 = vld [vmem:[%s1013 + $0x3a] sm:$0xff]
      %v5574 = vld [vmem:[%s1013 + $0x4a] sm:$0xff]
      %v5575 = vld [vmem:[%s1013 + $0x52] sm:$0xff]
      %v5576 = vld [vmem:[%s1013 + $0x62] sm:$0xff]
      %v5577 = vld [vmem:[%s1013 + $0x6a] sm:$0xff]
      %v5578 = vld [vmem:[%s1013 + $0x7a] sm:$0xff]
      %v5579 = vld [vmem:[%s1013 + $0x82] sm:$0xff]
      %v5580 = vld [vmem:[%s1013 + $0x92] sm:$0xff]
      %v5581 = vld [vmem:[%s1013 + $0x9a] sm:$0xff]
      %v5582 = vld [vmem:[%s1013 + $0xaa] sm:$0xff]
      %v5583 = vld [vmem:[%s1013 + $0xb2] sm:$0xff]
      %v5584 = vld [vmem:[%s1013 + $0xc2] sm:$0xff]
      %v5585 = vld [vmem:[%s1013 + $0xca] sm:$0xff]
      %v5586 = vld [vmem:[%s1013 + $0xda] sm:$0xff]
      %v5587 = vld [vmem:[%s1013 + $0xe2] sm:$0xff]
      %v5588 = vld [vmem:[%s1013 + $0xf2] sm:$0xff]
      %v5589 = vld [vmem:[%s1013 + $0xfa] sm:$0xff]
      %v5590 = vld [vmem:[%s1013 + $0x10a] sm:$0xff]
      %v5591 = vld [vmem:[%s1013 + $0x112] sm:$0xff]
      %v5592 = vld [vmem:[%s1013 + $0x122] sm:$0xff]
      %v5593 = vld [vmem:[%s1013 + $0x12a] sm:$0xff]
      %v5594 = vld [vmem:[%s1013 + $0x13a] sm:$0xff]
      %v5595 = vld [vmem:[%s1013 + $0x142] sm:$0xff]
      %v5596 = vld [vmem:[%s1013 + $0x152] sm:$0xff]
      %v5597 = vld [vmem:[%s1013 + $0x15a] sm:$0xff]
      %v5598 = vld [vmem:[%s1013 + $0x16a] sm:$0xff]
      %v5599 = vld [vmem:[%s1013 + $0x172] sm:$0xff]
      %v5600 = vld [vmem:[%s5205 + $0x2] sm:$0x1]
      %v5601 = vlaneseq
      %v5602 = vshrl.u32 %v5601, 7
      %v5603 = vsub.s32 0, %v5602
      %v5604 = vrot.slane %v5600, %v5603
      %v5605 = vmul.f32 %v5568, %v5604
      %v5606 = vmul.f32 %v5569, %v5604
      %v5607 = vmul.f32 %v5570, %v5604
      %v5608 = vmul.f32 %v5571, %v5604
      %v5609 = vmul.f32 %v5572, %v5604
      %v5610 = vmul.f32 %v5573, %v5604
      %v5611 = vmul.f32 %v5574, %v5604
      %v5612 = vmul.f32 %v5575, %v5604
      %v5613 = vmul.f32 %v5576, %v5604
      %v5614 = vmul.f32 %v5577, %v5604
      %v5615 = vmul.f32 %v5578, %v5604
      %v5616 = vmul.f32 %v5579, %v5604
      %v5617 = vmul.f32 %v5580, %v5604
      %v5618 = vmul.f32 %v5581, %v5604
      %v5619 = vmul.f32 %v5582, %v5604
      %v5620 = vmul.f32 %v5583, %v5604
      %v5621 = vmul.f32 %v5584, %v5604
      %v5622 = vmul.f32 %v5585, %v5604
      %v5623 = vmul.f32 %v5586, %v5604
      %v5624 = vmul.f32 %v5587, %v5604
      %v5625 = vmul.f32 %v5588, %v5604
      %v5626 = vmul.f32 %v5589, %v5604
      %v5627 = vmul.f32 %v5590, %v5604
      %v5628 = vmul.f32 %v5591, %v5604
      %v5629 = vmul.f32 %v5592, %v5604
      %v5630 = vmul.f32 %v5593, %v5604
      %v5631 = vmul.f32 %v5594, %v5604
      %v5632 = vmul.f32 %v5595, %v5604
      %v5633 = vmul.f32 %v5596, %v5604
      %v5634 = vmul.f32 %v5597, %v5604
      %v5635 = vmul.f32 %v5598, %v5604
      %v5636 = vmul.f32 %v5599, %v5604
      %v5637 = vsel %vm1014, %v5605, 0.0
      %5638 = vadd.xlane.f32.xlu0 %v5637
      %v5639 = vpop.xlane.xlu0 %5638
      %v5640 = vsel %vm1014, %v5606, 0.0
      %5641 = vadd.xlane.f32.xlu0 %v5640
      %v5642 = vpop.xlane.xlu0 %5641
      %v5643 = vsel %vm1014, %v5607, 0.0
      %5644 = vadd.xlane.f32.xlu0 %v5643
      %v5645 = vpop.xlane.xlu0 %5644
      %v5646 = vsel %vm1014, %v5608, 0.0
      %5647 = vadd.xlane.f32.xlu0 %v5646
      %v5648 = vpop.xlane.xlu0 %5647
      %v5649 = vsel %vm1014, %v5609, 0.0
      %5650 = vadd.xlane.f32.xlu0 %v5649
      %v5651 = vpop.xlane.xlu0 %5650
      %v5652 = vsel %vm1014, %v5610, 0.0
      %5653 = vadd.xlane.f32.xlu0 %v5652
      %v5654 = vpop.xlane.xlu0 %5653
      %v5655 = vsel %vm1014, %v5611, 0.0
      %5656 = vadd.xlane.f32.xlu0 %v5655
      %v5657 = vpop.xlane.xlu0 %5656
      %v5658 = vsel %vm1014, %v5612, 0.0
      %5659 = vadd.xlane.f32.xlu0 %v5658
      %v5660 = vpop.xlane.xlu0 %5659
      %v5661 = vsel %vm1014, %v5613, 0.0
      %5662 = vadd.xlane.f32.xlu0 %v5661
      %v5663 = vpop.xlane.xlu0 %5662
      %v5664 = vsel %vm1014, %v5614, 0.0
      %5665 = vadd.xlane.f32.xlu0 %v5664
      %v5666 = vpop.xlane.xlu0 %5665
      %v5667 = vsel %vm1014, %v5615, 0.0
      %5668 = vadd.xlane.f32.xlu0 %v5667
      %v5669 = vpop.xlane.xlu0 %5668
      %v5670 = vsel %vm1014, %v5616, 0.0
      %5671 = vadd.xlane.f32.xlu0 %v5670
      %v5672 = vpop.xlane.xlu0 %5671
      %v5673 = vsel %vm1014, %v5617, 0.0
      %5674 = vadd.xlane.f32.xlu0 %v5673
      %v5675 = vpop.xlane.xlu0 %5674
      %v5676 = vsel %vm1014, %v5618, 0.0
      %5677 = vadd.xlane.f32.xlu0 %v5676
      %v5678 = vpop.xlane.xlu0 %5677
      %v5679 = vsel %vm1014, %v5619, 0.0
      %5680 = vadd.xlane.f32.xlu0 %v5679
      %v5681 = vpop.xlane.xlu0 %5680
      %v5682 = vsel %vm1014, %v5620, 0.0
      %5683 = vadd.xlane.f32.xlu0 %v5682
      %v5684 = vpop.xlane.xlu0 %5683
      %v5685 = vsel %vm1014, %v5621, 0.0
      %5686 = vadd.xlane.f32.xlu0 %v5685
      %v5687 = vpop.xlane.xlu0 %5686
      %v5688 = vsel %vm1014, %v5622, 0.0
      %5689 = vadd.xlane.f32.xlu0 %v5688
      %v5690 = vpop.xlane.xlu0 %5689
      %v5691 = vsel %vm1014, %v5623, 0.0
      %5692 = vadd.xlane.f32.xlu0 %v5691
      %v5693 = vpop.xlane.xlu0 %5692
      %v5694 = vsel %vm1014, %v5624, 0.0
      %5695 = vadd.xlane.f32.xlu0 %v5694
      %v5696 = vpop.xlane.xlu0 %5695
      %v5697 = vsel %vm1014, %v5625, 0.0
      %5698 = vadd.xlane.f32.xlu0 %v5697
      %v5699 = vpop.xlane.xlu0 %5698
      %v5700 = vsel %vm1014, %v5626, 0.0
      %5701 = vadd.xlane.f32.xlu0 %v5700
      %v5702 = vpop.xlane.xlu0 %5701
      %v5703 = vsel %vm1014, %v5627, 0.0
      %5704 = vadd.xlane.f32.xlu0 %v5703
      %v5705 = vpop.xlane.xlu0 %5704
      %v5706 = vsel %vm1014, %v5628, 0.0
      %5707 = vadd.xlane.f32.xlu0 %v5706
      %v5708 = vpop.xlane.xlu0 %5707
      %v5709 = vsel %vm1014, %v5629, 0.0
      %5710 = vadd.xlane.f32.xlu0 %v5709
      %v5711 = vpop.xlane.xlu0 %5710
      %v5712 = vsel %vm1014, %v5630, 0.0
      %5713 = vadd.xlane.f32.xlu0 %v5712
      %v5714 = vpop.xlane.xlu0 %5713
      %v5715 = vsel %vm1014, %v5631, 0.0
      %5716 = vadd.xlane.f32.xlu0 %v5715
      %v5717 = vpop.xlane.xlu0 %5716
      %v5718 = vsel %vm1014, %v5632, 0.0
      %5719 = vadd.xlane.f32.xlu0 %v5718
      %v5720 = vpop.xlane.xlu0 %5719
      %v5721 = vsel %vm1014, %v5633, 0.0
      %5722 = vadd.xlane.f32.xlu0 %v5721
      %v5723 = vpop.xlane.xlu0 %5722
      %v5724 = vsel %vm1014, %v5634, 0.0
      %5725 = vadd.xlane.f32.xlu0 %v5724
      %v5726 = vpop.xlane.xlu0 %5725
      %v5727 = vsel %vm1014, %v5635, 0.0
      %5728 = vadd.xlane.f32.xlu0 %v5727
      %v5729 = vpop.xlane.xlu0 %5728
      %v5730 = vsel %vm1014, %v5636, 0.0
      %5731 = vadd.xlane.f32.xlu0 %v5730
      %v5732 = vpop.xlane.xlu0 %5731
      %v5733 = vadd.f32 %v5536, %v5639
      %v5734 = vadd.f32 %v5537, %v5642
      %v5735 = vadd.f32 %v5538, %v5645
      %v5736 = vadd.f32 %v5539, %v5648
      %v5737 = vadd.f32 %v5540, %v5651
      %v5738 = vadd.f32 %v5541, %v5654
      %v5739 = vadd.f32 %v5542, %v5657
      %v5740 = vadd.f32 %v5543, %v5660
      %v5741 = vadd.f32 %v5544, %v5663
      %v5742 = vadd.f32 %v5545, %v5666
      %v5743 = vadd.f32 %v5546, %v5669
      %v5744 = vadd.f32 %v5547, %v5672
      %v5745 = vadd.f32 %v5548, %v5675
      %v5746 = vadd.f32 %v5549, %v5678
      %v5747 = vadd.f32 %v5550, %v5681
      %v5748 = vadd.f32 %v5551, %v5684
      %v5749 = vadd.f32 %v5552, %v5687
      %v5750 = vadd.f32 %v5553, %v5690
      %v5751 = vadd.f32 %v5554, %v5693
      %v5752 = vadd.f32 %v5555, %v5696
      %v5753 = vadd.f32 %v5556, %v5699
      %v5754 = vadd.f32 %v5557, %v5702
      %v5755 = vadd.f32 %v5558, %v5705
      %v5756 = vadd.f32 %v5559, %v5708
      %v5757 = vadd.f32 %v5560, %v5711
      %v5758 = vadd.f32 %v5561, %v5714
      %v5759 = vadd.f32 %v5562, %v5717
      %v5760 = vadd.f32 %v5563, %v5720
      %v5761 = vadd.f32 %v5564, %v5723
      %v5762 = vadd.f32 %v5565, %v5726
      %v5763 = vadd.f32 %v5566, %v5729
      %v5764 = vadd.f32 %v5567, %v5732
      %v5765 = vld [vmem:[%s1013 + $0x3] sm:$0xff]
      %v5766 = vld [vmem:[%s1013 + $0xb] sm:$0xff]
      %v5767 = vld [vmem:[%s1013 + $0x1b] sm:$0xff]
      %v5768 = vld [vmem:[%s1013 + $0x23] sm:$0xff]
      %v5769 = vld [vmem:[%s1013 + $0x33] sm:$0xff]
      %v5770 = vld [vmem:[%s1013 + $0x3b] sm:$0xff]
      %v5771 = vld [vmem:[%s1013 + $0x4b] sm:$0xff]
      %v5772 = vld [vmem:[%s1013 + $0x53] sm:$0xff]
      %v5773 = vld [vmem:[%s1013 + $0x63] sm:$0xff]
      %v5774 = vld [vmem:[%s1013 + $0x6b] sm:$0xff]
      %v5775 = vld [vmem:[%s1013 + $0x7b] sm:$0xff]
      %v5776 = vld [vmem:[%s1013 + $0x83] sm:$0xff]
      %v5777 = vld [vmem:[%s1013 + $0x93] sm:$0xff]
      %v5778 = vld [vmem:[%s1013 + $0x9b] sm:$0xff]
      %v5779 = vld [vmem:[%s1013 + $0xab] sm:$0xff]
      %v5780 = vld [vmem:[%s1013 + $0xb3] sm:$0xff]
      %v5781 = vld [vmem:[%s1013 + $0xc3] sm:$0xff]
      %v5782 = vld [vmem:[%s1013 + $0xcb] sm:$0xff]
      %v5783 = vld [vmem:[%s1013 + $0xdb] sm:$0xff]
      %v5784 = vld [vmem:[%s1013 + $0xe3] sm:$0xff]
      %v5785 = vld [vmem:[%s1013 + $0xf3] sm:$0xff]
      %v5786 = vld [vmem:[%s1013 + $0xfb] sm:$0xff]
      %v5787 = vld [vmem:[%s1013 + $0x10b] sm:$0xff]
      %v5788 = vld [vmem:[%s1013 + $0x113] sm:$0xff]
      %v5789 = vld [vmem:[%s1013 + $0x123] sm:$0xff]
      %v5790 = vld [vmem:[%s1013 + $0x12b] sm:$0xff]
      %v5791 = vld [vmem:[%s1013 + $0x13b] sm:$0xff]
      %v5792 = vld [vmem:[%s1013 + $0x143] sm:$0xff]
      %v5793 = vld [vmem:[%s1013 + $0x153] sm:$0xff]
      %v5794 = vld [vmem:[%s1013 + $0x15b] sm:$0xff]
      %v5795 = vld [vmem:[%s1013 + $0x16b] sm:$0xff]
      %v5796 = vld [vmem:[%s1013 + $0x173] sm:$0xff]
      %v5797 = vld [vmem:[%s5205 + $0x3] sm:$0x1]
      %v5798 = vlaneseq
      %v5799 = vshrl.u32 %v5798, 7
      %v5800 = vsub.s32 0, %v5799
      %v5801 = vrot.slane %v5797, %v5800
      %v5802 = vmul.f32 %v5765, %v5801
      %v5803 = vmul.f32 %v5766, %v5801
      %v5804 = vmul.f32 %v5767, %v5801
      %v5805 = vmul.f32 %v5768, %v5801
      %v5806 = vmul.f32 %v5769, %v5801
      %v5807 = vmul.f32 %v5770, %v5801
      %v5808 = vmul.f32 %v5771, %v5801
      %v5809 = vmul.f32 %v5772, %v5801
      %v5810 = vmul.f32 %v5773, %v5801
      %v5811 = vmul.f32 %v5774, %v5801
      %v5812 = vmul.f32 %v5775, %v5801
      %v5813 = vmul.f32 %v5776, %v5801
      %v5814 = vmul.f32 %v5777, %v5801
      %v5815 = vmul.f32 %v5778, %v5801
      %v5816 = vmul.f32 %v5779, %v5801
      %v5817 = vmul.f32 %v5780, %v5801
      %v5818 = vmul.f32 %v5781, %v5801
      %v5819 = vmul.f32 %v5782, %v5801
      %v5820 = vmul.f32 %v5783, %v5801
      %v5821 = vmul.f32 %v5784, %v5801
      %v5822 = vmul.f32 %v5785, %v5801
      %v5823 = vmul.f32 %v5786, %v5801
      %v5824 = vmul.f32 %v5787, %v5801
      %v5825 = vmul.f32 %v5788, %v5801
      %v5826 = vmul.f32 %v5789, %v5801
      %v5827 = vmul.f32 %v5790, %v5801
      %v5828 = vmul.f32 %v5791, %v5801
      %v5829 = vmul.f32 %v5792, %v5801
      %v5830 = vmul.f32 %v5793, %v5801
      %v5831 = vmul.f32 %v5794, %v5801
      %v5832 = vmul.f32 %v5795, %v5801
      %v5833 = vmul.f32 %v5796, %v5801
      %v5834 = vsel %vm1014, %v5802, 0.0
      %5835 = vadd.xlane.f32.xlu0 %v5834
      %v5836 = vpop.xlane.xlu0 %5835
      %v5837 = vsel %vm1014, %v5803, 0.0
      %5838 = vadd.xlane.f32.xlu0 %v5837
      %v5839 = vpop.xlane.xlu0 %5838
      %v5840 = vsel %vm1014, %v5804, 0.0
      %5841 = vadd.xlane.f32.xlu0 %v5840
      %v5842 = vpop.xlane.xlu0 %5841
      %v5843 = vsel %vm1014, %v5805, 0.0
      %5844 = vadd.xlane.f32.xlu0 %v5843
      %v5845 = vpop.xlane.xlu0 %5844
      %v5846 = vsel %vm1014, %v5806, 0.0
      %5847 = vadd.xlane.f32.xlu0 %v5846
      %v5848 = vpop.xlane.xlu0 %5847
      %v5849 = vsel %vm1014, %v5807, 0.0
      %5850 = vadd.xlane.f32.xlu0 %v5849
      %v5851 = vpop.xlane.xlu0 %5850
      %v5852 = vsel %vm1014, %v5808, 0.0
      %5853 = vadd.xlane.f32.xlu0 %v5852
      %v5854 = vpop.xlane.xlu0 %5853
      %v5855 = vsel %vm1014, %v5809, 0.0
      %5856 = vadd.xlane.f32.xlu0 %v5855
      %v5857 = vpop.xlane.xlu0 %5856
      %v5858 = vsel %vm1014, %v5810, 0.0
      %5859 = vadd.xlane.f32.xlu0 %v5858
      %v5860 = vpop.xlane.xlu0 %5859
      %v5861 = vsel %vm1014, %v5811, 0.0
      %5862 = vadd.xlane.f32.xlu0 %v5861
      %v5863 = vpop.xlane.xlu0 %5862
      %v5864 = vsel %vm1014, %v5812, 0.0
      %5865 = vadd.xlane.f32.xlu0 %v5864
      %v5866 = vpop.xlane.xlu0 %5865
      %v5867 = vsel %vm1014, %v5813, 0.0
      %5868 = vadd.xlane.f32.xlu0 %v5867
      %v5869 = vpop.xlane.xlu0 %5868
      %v5870 = vsel %vm1014, %v5814, 0.0
      %5871 = vadd.xlane.f32.xlu0 %v5870
      %v5872 = vpop.xlane.xlu0 %5871
      %v5873 = vsel %vm1014, %v5815, 0.0
      %5874 = vadd.xlane.f32.xlu0 %v5873
      %v5875 = vpop.xlane.xlu0 %5874
      %v5876 = vsel %vm1014, %v5816, 0.0
      %5877 = vadd.xlane.f32.xlu0 %v5876
      %v5878 = vpop.xlane.xlu0 %5877
      %v5879 = vsel %vm1014, %v5817, 0.0
      %5880 = vadd.xlane.f32.xlu0 %v5879
      %v5881 = vpop.xlane.xlu0 %5880
      %v5882 = vsel %vm1014, %v5818, 0.0
      %5883 = vadd.xlane.f32.xlu0 %v5882
      %v5884 = vpop.xlane.xlu0 %5883
      %v5885 = vsel %vm1014, %v5819, 0.0
      %5886 = vadd.xlane.f32.xlu0 %v5885
      %v5887 = vpop.xlane.xlu0 %5886
      %v5888 = vsel %vm1014, %v5820, 0.0
      %5889 = vadd.xlane.f32.xlu0 %v5888
      %v5890 = vpop.xlane.xlu0 %5889
      %v5891 = vsel %vm1014, %v5821, 0.0
      %5892 = vadd.xlane.f32.xlu0 %v5891
      %v5893 = vpop.xlane.xlu0 %5892
      %v5894 = vsel %vm1014, %v5822, 0.0
      %5895 = vadd.xlane.f32.xlu0 %v5894
      %v5896 = vpop.xlane.xlu0 %5895
      %v5897 = vsel %vm1014, %v5823, 0.0
      %5898 = vadd.xlane.f32.xlu0 %v5897
      %v5899 = vpop.xlane.xlu0 %5898
      %v5900 = vsel %vm1014, %v5824, 0.0
      %5901 = vadd.xlane.f32.xlu0 %v5900
      %v5902 = vpop.xlane.xlu0 %5901
      %v5903 = vsel %vm1014, %v5825, 0.0
      %5904 = vadd.xlane.f32.xlu0 %v5903
      %v5905 = vpop.xlane.xlu0 %5904
      %v5906 = vsel %vm1014, %v5826, 0.0
      %5907 = vadd.xlane.f32.xlu0 %v5906
      %v5908 = vpop.xlane.xlu0 %5907
      %v5909 = vsel %vm1014, %v5827, 0.0
      %5910 = vadd.xlane.f32.xlu0 %v5909
      %v5911 = vpop.xlane.xlu0 %5910
      %v5912 = vsel %vm1014, %v5828, 0.0
      %5913 = vadd.xlane.f32.xlu0 %v5912
      %v5914 = vpop.xlane.xlu0 %5913
      %v5915 = vsel %vm1014, %v5829, 0.0
      %5916 = vadd.xlane.f32.xlu0 %v5915
      %v5917 = vpop.xlane.xlu0 %5916
      %v5918 = vsel %vm1014, %v5830, 0.0
      %5919 = vadd.xlane.f32.xlu0 %v5918
      %v5920 = vpop.xlane.xlu0 %5919
      %v5921 = vsel %vm1014, %v5831, 0.0
      %5922 = vadd.xlane.f32.xlu0 %v5921
      %v5923 = vpop.xlane.xlu0 %5922
      %v5924 = vsel %vm1014, %v5832, 0.0
      %5925 = vadd.xlane.f32.xlu0 %v5924
      %v5926 = vpop.xlane.xlu0 %5925
      %v5927 = vsel %vm1014, %v5833, 0.0
      %5928 = vadd.xlane.f32.xlu0 %v5927
      %v5929 = vpop.xlane.xlu0 %5928
      %v5930 = vadd.f32 %v5733, %v5836
      %v5931 = vadd.f32 %v5734, %v5839
      %v5932 = vadd.f32 %v5735, %v5842
      %v5933 = vadd.f32 %v5736, %v5845
      %v5934 = vadd.f32 %v5737, %v5848
      %v5935 = vadd.f32 %v5738, %v5851
      %v5936 = vadd.f32 %v5739, %v5854
      %v5937 = vadd.f32 %v5740, %v5857
      %v5938 = vadd.f32 %v5741, %v5860
      %v5939 = vadd.f32 %v5742, %v5863
      %v5940 = vadd.f32 %v5743, %v5866
      %v5941 = vadd.f32 %v5744, %v5869
      %v5942 = vadd.f32 %v5745, %v5872
      %v5943 = vadd.f32 %v5746, %v5875
      %v5944 = vadd.f32 %v5747, %v5878
      %v5945 = vadd.f32 %v5748, %v5881
      %v5946 = vadd.f32 %v5749, %v5884
      %v5947 = vadd.f32 %v5750, %v5887
      %v5948 = vadd.f32 %v5751, %v5890
      %v5949 = vadd.f32 %v5752, %v5893
      %v5950 = vadd.f32 %v5753, %v5896
      %v5951 = vadd.f32 %v5754, %v5899
      %v5952 = vadd.f32 %v5755, %v5902
      %v5953 = vadd.f32 %v5756, %v5905
      %v5954 = vadd.f32 %v5757, %v5908
      %v5955 = vadd.f32 %v5758, %v5911
      %v5956 = vadd.f32 %v5759, %v5914
      %v5957 = vadd.f32 %v5760, %v5917
      %v5958 = vadd.f32 %v5761, %v5920
      %v5959 = vadd.f32 %v5762, %v5923
      %v5960 = vadd.f32 %v5763, %v5926
      %v5961 = vadd.f32 %v5764, %v5929
      %v5962 = vld [vmem:[%s1013 + $0x4] sm:$0xff]
      %v5963 = vld [vmem:[%s1013 + $0xc] sm:$0xff]
      %v5964 = vld [vmem:[%s1013 + $0x1c] sm:$0xff]
      %v5965 = vld [vmem:[%s1013 + $0x24] sm:$0xff]
      %v5966 = vld [vmem:[%s1013 + $0x34] sm:$0xff]
      %v5967 = vld [vmem:[%s1013 + $0x3c] sm:$0xff]
      %v5968 = vld [vmem:[%s1013 + $0x4c] sm:$0xff]
      %v5969 = vld [vmem:[%s1013 + $0x54] sm:$0xff]
      %v5970 = vld [vmem:[%s1013 + $0x64] sm:$0xff]
      %v5971 = vld [vmem:[%s1013 + $0x6c] sm:$0xff]
      %v5972 = vld [vmem:[%s1013 + $0x7c] sm:$0xff]
      %v5973 = vld [vmem:[%s1013 + $0x84] sm:$0xff]
      %v5974 = vld [vmem:[%s1013 + $0x94] sm:$0xff]
      %v5975 = vld [vmem:[%s1013 + $0x9c] sm:$0xff]
      %v5976 = vld [vmem:[%s1013 + $0xac] sm:$0xff]
      %v5977 = vld [vmem:[%s1013 + $0xb4] sm:$0xff]
      %v5978 = vld [vmem:[%s1013 + $0xc4] sm:$0xff]
      %v5979 = vld [vmem:[%s1013 + $0xcc] sm:$0xff]
      %v5980 = vld [vmem:[%s1013 + $0xdc] sm:$0xff]
      %v5981 = vld [vmem:[%s1013 + $0xe4] sm:$0xff]
      %v5982 = vld [vmem:[%s1013 + $0xf4] sm:$0xff]
      %v5983 = vld [vmem:[%s1013 + $0xfc] sm:$0xff]
      %v5984 = vld [vmem:[%s1013 + $0x10c] sm:$0xff]
      %v5985 = vld [vmem:[%s1013 + $0x114] sm:$0xff]
      %v5986 = vld [vmem:[%s1013 + $0x124] sm:$0xff]
      %v5987 = vld [vmem:[%s1013 + $0x12c] sm:$0xff]
      %v5988 = vld [vmem:[%s1013 + $0x13c] sm:$0xff]
      %v5989 = vld [vmem:[%s1013 + $0x144] sm:$0xff]
      %v5990 = vld [vmem:[%s1013 + $0x154] sm:$0xff]
      %v5991 = vld [vmem:[%s1013 + $0x15c] sm:$0xff]
      %v5992 = vld [vmem:[%s1013 + $0x16c] sm:$0xff]
      %v5993 = vld [vmem:[%s1013 + $0x174] sm:$0xff]
      %v5994 = vld [vmem:[%s5205 + $0x4] sm:$0x1]
      %v5995 = vlaneseq
      %v5996 = vshrl.u32 %v5995, 7
      %v5997 = vsub.s32 0, %v5996
      %v5998 = vrot.slane %v5994, %v5997
      %v5999 = vmul.f32 %v5962, %v5998
      %v6000 = vmul.f32 %v5963, %v5998
      %v6001 = vmul.f32 %v5964, %v5998
      %v6002 = vmul.f32 %v5965, %v5998
      %v6003 = vmul.f32 %v5966, %v5998
      %v6004 = vmul.f32 %v5967, %v5998
      %v6005 = vmul.f32 %v5968, %v5998
      %v6006 = vmul.f32 %v5969, %v5998
      %v6007 = vmul.f32 %v5970, %v5998
      %v6008 = vmul.f32 %v5971, %v5998
      %v6009 = vmul.f32 %v5972, %v5998
      %v6010 = vmul.f32 %v5973, %v5998
      %v6011 = vmul.f32 %v5974, %v5998
      %v6012 = vmul.f32 %v5975, %v5998
      %v6013 = vmul.f32 %v5976, %v5998
      %v6014 = vmul.f32 %v5977, %v5998
      %v6015 = vmul.f32 %v5978, %v5998
      %v6016 = vmul.f32 %v5979, %v5998
      %v6017 = vmul.f32 %v5980, %v5998
      %v6018 = vmul.f32 %v5981, %v5998
      %v6019 = vmul.f32 %v5982, %v5998
      %v6020 = vmul.f32 %v5983, %v5998
      %v6021 = vmul.f32 %v5984, %v5998
      %v6022 = vmul.f32 %v5985, %v5998
      %v6023 = vmul.f32 %v5986, %v5998
      %v6024 = vmul.f32 %v5987, %v5998
      %v6025 = vmul.f32 %v5988, %v5998
      %v6026 = vmul.f32 %v5989, %v5998
      %v6027 = vmul.f32 %v5990, %v5998
      %v6028 = vmul.f32 %v5991, %v5998
      %v6029 = vmul.f32 %v5992, %v5998
      %v6030 = vmul.f32 %v5993, %v5998
      %v6031 = vsel %vm1014, %v5999, 0.0
      %6032 = vadd.xlane.f32.xlu0 %v6031
      %v6033 = vpop.xlane.xlu0 %6032
      %v6034 = vsel %vm1014, %v6000, 0.0
      %6035 = vadd.xlane.f32.xlu0 %v6034
      %v6036 = vpop.xlane.xlu0 %6035
      %v6037 = vsel %vm1014, %v6001, 0.0
      %6038 = vadd.xlane.f32.xlu0 %v6037
      %v6039 = vpop.xlane.xlu0 %6038
      %v6040 = vsel %vm1014, %v6002, 0.0
      %6041 = vadd.xlane.f32.xlu0 %v6040
      %v6042 = vpop.xlane.xlu0 %6041
      %v6043 = vsel %vm1014, %v6003, 0.0
      %6044 = vadd.xlane.f32.xlu0 %v6043
      %v6045 = vpop.xlane.xlu0 %6044
      %v6046 = vsel %vm1014, %v6004, 0.0
      %6047 = vadd.xlane.f32.xlu0 %v6046
      %v6048 = vpop.xlane.xlu0 %6047
      %v6049 = vsel %vm1014, %v6005, 0.0
      %6050 = vadd.xlane.f32.xlu0 %v6049
      %v6051 = vpop.xlane.xlu0 %6050
      %v6052 = vsel %vm1014, %v6006, 0.0
      %6053 = vadd.xlane.f32.xlu0 %v6052
      %v6054 = vpop.xlane.xlu0 %6053
      %v6055 = vsel %vm1014, %v6007, 0.0
      %6056 = vadd.xlane.f32.xlu0 %v6055
      %v6057 = vpop.xlane.xlu0 %6056
      %v6058 = vsel %vm1014, %v6008, 0.0
      %6059 = vadd.xlane.f32.xlu0 %v6058
      %v6060 = vpop.xlane.xlu0 %6059
      %v6061 = vsel %vm1014, %v6009, 0.0
      %6062 = vadd.xlane.f32.xlu0 %v6061
      %v6063 = vpop.xlane.xlu0 %6062
      %v6064 = vsel %vm1014, %v6010, 0.0
      %6065 = vadd.xlane.f32.xlu0 %v6064
      %v6066 = vpop.xlane.xlu0 %6065
      %v6067 = vsel %vm1014, %v6011, 0.0
      %6068 = vadd.xlane.f32.xlu0 %v6067
      %v6069 = vpop.xlane.xlu0 %6068
      %v6070 = vsel %vm1014, %v6012, 0.0
      %6071 = vadd.xlane.f32.xlu0 %v6070
      %v6072 = vpop.xlane.xlu0 %6071
      %v6073 = vsel %vm1014, %v6013, 0.0
      %6074 = vadd.xlane.f32.xlu0 %v6073
      %v6075 = vpop.xlane.xlu0 %6074
      %v6076 = vsel %vm1014, %v6014, 0.0
      %6077 = vadd.xlane.f32.xlu0 %v6076
      %v6078 = vpop.xlane.xlu0 %6077
      %v6079 = vsel %vm1014, %v6015, 0.0
      %6080 = vadd.xlane.f32.xlu0 %v6079
      %v6081 = vpop.xlane.xlu0 %6080
      %v6082 = vsel %vm1014, %v6016, 0.0
      %6083 = vadd.xlane.f32.xlu0 %v6082
      %v6084 = vpop.xlane.xlu0 %6083
      %v6085 = vsel %vm1014, %v6017, 0.0
      %6086 = vadd.xlane.f32.xlu0 %v6085
      %v6087 = vpop.xlane.xlu0 %6086
      %v6088 = vsel %vm1014, %v6018, 0.0
      %6089 = vadd.xlane.f32.xlu0 %v6088
      %v6090 = vpop.xlane.xlu0 %6089
      %v6091 = vsel %vm1014, %v6019, 0.0
      %6092 = vadd.xlane.f32.xlu0 %v6091
      %v6093 = vpop.xlane.xlu0 %6092
      %v6094 = vsel %vm1014, %v6020, 0.0
      %6095 = vadd.xlane.f32.xlu0 %v6094
      %v6096 = vpop.xlane.xlu0 %6095
      %v6097 = vsel %vm1014, %v6021, 0.0
      %6098 = vadd.xlane.f32.xlu0 %v6097
      %v6099 = vpop.xlane.xlu0 %6098
      %v6100 = vsel %vm1014, %v6022, 0.0
      %6101 = vadd.xlane.f32.xlu0 %v6100
      %v6102 = vpop.xlane.xlu0 %6101
      %v6103 = vsel %vm1014, %v6023, 0.0
      %6104 = vadd.xlane.f32.xlu0 %v6103
      %v6105 = vpop.xlane.xlu0 %6104
      %v6106 = vsel %vm1014, %v6024, 0.0
      %6107 = vadd.xlane.f32.xlu0 %v6106
      %v6108 = vpop.xlane.xlu0 %6107
      %v6109 = vsel %vm1014, %v6025, 0.0
      %6110 = vadd.xlane.f32.xlu0 %v6109
      %v6111 = vpop.xlane.xlu0 %6110
      %v6112 = vsel %vm1014, %v6026, 0.0
      %6113 = vadd.xlane.f32.xlu0 %v6112
      %v6114 = vpop.xlane.xlu0 %6113
      %v6115 = vsel %vm1014, %v6027, 0.0
      %6116 = vadd.xlane.f32.xlu0 %v6115
      %v6117 = vpop.xlane.xlu0 %6116
      %v6118 = vsel %vm1014, %v6028, 0.0
      %6119 = vadd.xlane.f32.xlu0 %v6118
      %v6120 = vpop.xlane.xlu0 %6119
      %v6121 = vsel %vm1014, %v6029, 0.0
      %6122 = vadd.xlane.f32.xlu0 %v6121
      %v6123 = vpop.xlane.xlu0 %6122
      %v6124 = vsel %vm1014, %v6030, 0.0
      %6125 = vadd.xlane.f32.xlu0 %v6124
      %v6126 = vpop.xlane.xlu0 %6125
      %v6127 = vadd.f32 %v5930, %v6033
      %v6128 = vadd.f32 %v5931, %v6036
      %v6129 = vadd.f32 %v5932, %v6039
      %v6130 = vadd.f32 %v5933, %v6042
      %v6131 = vadd.f32 %v5934, %v6045
      %v6132 = vadd.f32 %v5935, %v6048
      %v6133 = vadd.f32 %v5936, %v6051
      %v6134 = vadd.f32 %v5937, %v6054
      %v6135 = vadd.f32 %v5938, %v6057
      %v6136 = vadd.f32 %v5939, %v6060
      %v6137 = vadd.f32 %v5940, %v6063
      %v6138 = vadd.f32 %v5941, %v6066
      %v6139 = vadd.f32 %v5942, %v6069
      %v6140 = vadd.f32 %v5943, %v6072
      %v6141 = vadd.f32 %v5944, %v6075
      %v6142 = vadd.f32 %v5945, %v6078
      %v6143 = vadd.f32 %v5946, %v6081
      %v6144 = vadd.f32 %v5947, %v6084
      %v6145 = vadd.f32 %v5948, %v6087
      %v6146 = vadd.f32 %v5949, %v6090
      %v6147 = vadd.f32 %v5950, %v6093
      %v6148 = vadd.f32 %v5951, %v6096
      %v6149 = vadd.f32 %v5952, %v6099
      %v6150 = vadd.f32 %v5953, %v6102
      %v6151 = vadd.f32 %v5954, %v6105
      %v6152 = vadd.f32 %v5955, %v6108
      %v6153 = vadd.f32 %v5956, %v6111
      %v6154 = vadd.f32 %v5957, %v6114
      %v6155 = vadd.f32 %v5958, %v6117
      %v6156 = vadd.f32 %v5959, %v6120
      %v6157 = vadd.f32 %v5960, %v6123
      %v6158 = vadd.f32 %v5961, %v6126
      %v6159 = vld [vmem:[#allocation3] sm:$0x1]
      %v6161 = vlaneseq
      %v6162 = vshrl.u32 %v6161, 7
      %v6163 = vsub.s32 0, %v6162
      %v6164 = vrot.slane %v6159, %v6163
      %6165 = vset.pattern.permute.xlu0 0
      %6166 = vperm.xlu0 %6165, %v6164
      %v6167 = vpop.permute.xlu0 %6166
      %v6169 = vadd.f32 %v6127, %v6167
      %v6170 = vadd.f32 %v6128, %v6167
      %v6171 = vadd.f32 %v6129, %v6167
      %v6172 = vadd.f32 %v6130, %v6167
      %v6173 = vadd.f32 %v6131, %v6167
      %v6174 = vadd.f32 %v6132, %v6167
      %v6175 = vadd.f32 %v6133, %v6167
      %v6176 = vadd.f32 %v6134, %v6167
      %v6177 = vadd.f32 %v6135, %v6167
      %v6178 = vadd.f32 %v6136, %v6167
      %v6179 = vadd.f32 %v6137, %v6167
      %v6180 = vadd.f32 %v6138, %v6167
      %v6181 = vadd.f32 %v6139, %v6167
      %v6182 = vadd.f32 %v6140, %v6167
      %v6183 = vadd.f32 %v6141, %v6167
      %v6184 = vadd.f32 %v6142, %v6167
      %v6185 = vadd.f32 %v6143, %v6167
      %v6186 = vadd.f32 %v6144, %v6167
      %v6187 = vadd.f32 %v6145, %v6167
      %v6188 = vadd.f32 %v6146, %v6167
      %v6189 = vadd.f32 %v6147, %v6167
      %v6190 = vadd.f32 %v6148, %v6167
      %v6191 = vadd.f32 %v6149, %v6167
      %v6192 = vadd.f32 %v6150, %v6167
      %v6193 = vadd.f32 %v6151, %v6167
      %v6194 = vadd.f32 %v6152, %v6167
      %v6195 = vadd.f32 %v6153, %v6167
      %v6196 = vadd.f32 %v6154, %v6167
      %v6197 = vadd.f32 %v6155, %v6167
      %v6198 = vadd.f32 %v6156, %v6167
      %v6199 = vadd.f32 %v6157, %v6167
      %v6200 = vadd.f32 %v6158, %v6167
      %v6233 = vlaneseq
      %v6234 = vand.u32 %v6233, 127
      %v6235 = vlaneseq
      %v6236 = vshrl.u32 %v6235, 7
      %v6237 = vsub.s32 %v6234, %v6236
      %v6238 = vrot.slane %v6169, %v6237
      %v6239 = vadd.s32 %v6234, 4294967288
      %v6240 = vlaneseq
      %v6241 = vshrl.u32 %v6240, 7
      %v6242 = vsub.s32 %v6239, %v6241
      %v6243 = vrot.slane %v6170, %v6242
      %vm6244 = vcmask 130112
      %v6245 = vsel %vm6244, %v6243, %v6238
      %v6246 = vlaneseq
      %v6247 = vshrl.u32 %v6246, 7
      %v6248 = vsub.s32 %v6234, %v6247
      %v6249 = vrot.slane %v6171, %v6248
      %v6250 = vlaneseq
      %v6251 = vshrl.u32 %v6250, 7
      %v6252 = vsub.s32 %v6239, %v6251
      %v6253 = vrot.slane %v6172, %v6252
      %v6254 = vsel %vm6244, %v6253, %v6249
      %v6255 = vlaneseq
      %v6256 = vshrl.u32 %v6255, 7
      %v6257 = vsub.s32 %v6234, %v6256
      %v6258 = vrot.slane %v6173, %v6257
      %v6259 = vlaneseq
      %v6260 = vshrl.u32 %v6259, 7
      %v6261 = vsub.s32 %v6239, %v6260
      %v6262 = vrot.slane %v6174, %v6261
      %v6263 = vsel %vm6244, %v6262, %v6258
      %v6264 = vlaneseq
      %v6265 = vshrl.u32 %v6264, 7
      %v6266 = vsub.s32 %v6234, %v6265
      %v6267 = vrot.slane %v6175, %v6266
      %v6268 = vlaneseq
      %v6269 = vshrl.u32 %v6268, 7
      %v6270 = vsub.s32 %v6239, %v6269
      %v6271 = vrot.slane %v6176, %v6270
      %v6272 = vsel %vm6244, %v6271, %v6267
      %v6273 = vlaneseq
      %v6274 = vshrl.u32 %v6273, 7
      %v6275 = vsub.s32 %v6234, %v6274
      %v6276 = vrot.slane %v6177, %v6275
      %v6277 = vlaneseq
      %v6278 = vshrl.u32 %v6277, 7
      %v6279 = vsub.s32 %v6239, %v6278
      %v6280 = vrot.slane %v6178, %v6279
      %v6281 = vsel %vm6244, %v6280, %v6276
      %v6282 = vlaneseq
      %v6283 = vshrl.u32 %v6282, 7
      %v6284 = vsub.s32 %v6234, %v6283
      %v6285 = vrot.slane %v6179, %v6284
      %v6286 = vlaneseq
      %v6287 = vshrl.u32 %v6286, 7
      %v6288 = vsub.s32 %v6239, %v6287
      %v6289 = vrot.slane %v6180, %v6288
      %v6290 = vsel %vm6244, %v6289, %v6285
      %v6291 = vlaneseq
      %v6292 = vshrl.u32 %v6291, 7
      %v6293 = vsub.s32 %v6234, %v6292
      %v6294 = vrot.slane %v6181, %v6293
      %v6295 = vlaneseq
      %v6296 = vshrl.u32 %v6295, 7
      %v6297 = vsub.s32 %v6239, %v6296
      %v6298 = vrot.slane %v6182, %v6297
      %v6299 = vsel %vm6244, %v6298, %v6294
      %v6300 = vlaneseq
      %v6301 = vshrl.u32 %v6300, 7
      %v6302 = vsub.s32 %v6234, %v6301
      %v6303 = vrot.slane %v6183, %v6302
      %v6304 = vlaneseq
      %v6305 = vshrl.u32 %v6304, 7
      %v6306 = vsub.s32 %v6239, %v6305
      %v6307 = vrot.slane %v6184, %v6306
      %v6308 = vsel %vm6244, %v6307, %v6303
      %v6309 = vlaneseq
      %v6310 = vshrl.u32 %v6309, 7
      %v6311 = vsub.s32 %v6234, %v6310
      %v6312 = vrot.slane %v6185, %v6311
      %v6313 = vlaneseq
      %v6314 = vshrl.u32 %v6313, 7
      %v6315 = vsub.s32 %v6239, %v6314
      %v6316 = vrot.slane %v6186, %v6315
      %v6317 = vsel %vm6244, %v6316, %v6312
      %v6318 = vlaneseq
      %v6319 = vshrl.u32 %v6318, 7
      %v6320 = vsub.s32 %v6234, %v6319
      %v6321 = vrot.slane %v6187, %v6320
      %v6322 = vlaneseq
      %v6323 = vshrl.u32 %v6322, 7
      %v6324 = vsub.s32 %v6239, %v6323
      %v6325 = vrot.slane %v6188, %v6324
      %v6326 = vsel %vm6244, %v6325, %v6321
      %v6327 = vlaneseq
      %v6328 = vshrl.u32 %v6327, 7
      %v6329 = vsub.s32 %v6234, %v6328
      %v6330 = vrot.slane %v6189, %v6329
      %v6331 = vlaneseq
      %v6332 = vshrl.u32 %v6331, 7
      %v6333 = vsub.s32 %v6239, %v6332
      %v6334 = vrot.slane %v6190, %v6333
      %v6335 = vsel %vm6244, %v6334, %v6330
      %v6336 = vlaneseq
      %v6337 = vshrl.u32 %v6336, 7
      %v6338 = vsub.s32 %v6234, %v6337
      %v6339 = vrot.slane %v6191, %v6338
      %v6340 = vlaneseq
      %v6341 = vshrl.u32 %v6340, 7
      %v6342 = vsub.s32 %v6239, %v6341
      %v6343 = vrot.slane %v6192, %v6342
      %v6344 = vsel %vm6244, %v6343, %v6339
      %v6345 = vlaneseq
      %v6346 = vshrl.u32 %v6345, 7
      %v6347 = vsub.s32 %v6234, %v6346
      %v6348 = vrot.slane %v6193, %v6347
      %v6349 = vlaneseq
      %v6350 = vshrl.u32 %v6349, 7
      %v6351 = vsub.s32 %v6239, %v6350
      %v6352 = vrot.slane %v6194, %v6351
      %v6353 = vsel %vm6244, %v6352, %v6348
      %v6354 = vlaneseq
      %v6355 = vshrl.u32 %v6354, 7
      %v6356 = vsub.s32 %v6234, %v6355
      %v6357 = vrot.slane %v6195, %v6356
      %v6358 = vlaneseq
      %v6359 = vshrl.u32 %v6358, 7
      %v6360 = vsub.s32 %v6239, %v6359
      %v6361 = vrot.slane %v6196, %v6360
      %v6362 = vsel %vm6244, %v6361, %v6357
      %v6363 = vlaneseq
      %v6364 = vshrl.u32 %v6363, 7
      %v6365 = vsub.s32 %v6234, %v6364
      %v6366 = vrot.slane %v6197, %v6365
      %v6367 = vlaneseq
      %v6368 = vshrl.u32 %v6367, 7
      %v6369 = vsub.s32 %v6239, %v6368
      %v6370 = vrot.slane %v6198, %v6369
      %v6371 = vsel %vm6244, %v6370, %v6366
      %v6372 = vlaneseq
      %v6373 = vshrl.u32 %v6372, 7
      %v6374 = vsub.s32 %v6234, %v6373
      %v6375 = vrot.slane %v6199, %v6374
      %v6376 = vlaneseq
      %v6377 = vshrl.u32 %v6376, 7
      %v6378 = vsub.s32 %v6239, %v6377
      %v6379 = vrot.slane %v6200, %v6378
      %v6380 = vsel %vm6244, %v6379, %v6375
      %vm6381 = vcmask 1041409
      %v6382 = vsel %vm6381, %v6254, %v6245
      %vm6383 = vcmask 1042434
      %v6384 = vsel %vm6383, %v6263, %v6382
      %vm6385 = vcmask 1043459
      %v6386 = vsel %vm6385, %v6272, %v6384
      %vm6387 = vcmask 1044484
      %v6388 = vsel %vm6387, %v6281, %v6386
      %vm6389 = vcmask 1045509
      %v6390 = vsel %vm6389, %v6290, %v6388
      %vm6391 = vcmask 1046534
      %v6392 = vsel %vm6391, %v6299, %v6390
      %vm6393 = vcmask 1047559
      %v6394 = vsel %vm6393, %v6308, %v6392
      %v6395 = vsel %vm6381, %v6326, %v6317
      %v6396 = vsel %vm6383, %v6335, %v6395
      %v6397 = vsel %vm6385, %v6344, %v6396
      %v6398 = vsel %vm6387, %v6353, %v6397
      %v6399 = vsel %vm6389, %v6362, %v6398
      %v6400 = vsel %vm6391, %v6371, %v6399
      %v6401 = vsel %vm6393, %v6380, %v6400
      %vm6404 = vcmask 130048
      %6405 = vst.msk [vmem:[%s280] sm:$0xff] %vm6404, %v6394
      %6406 = vst.msk [vmem:[%s280 + $0x8] sm:$0xff] %vm6404, %v6401
      %p6407 = scmp.lt.s32.totalorder %s20, 1
      %s6408 = scalar_select %p6407, %s20, 1
      %s6409 = smul.addr %s6408, 2
      %s6410 = smul.addr %s6409, 8
      %s6411 = scalar_lea.vmem %s7, %s6410
      // Predicated region
      $region49: #{srcnn_forward.2} parent=47 // pred_check
        %p6412 = pneg %p190
      $region50: #{srcnn_forward.2} parent=47 // pred_check_branch
        %6414 = sbr.rel (%p6412) target = $region52
      $region51: #{srcnn_forward.2} parent=47 // pred_region
        _
      $region52: #{srcnn_forward.2} parent=47 // pred_fallthru
        _
    $region48: #{srcnn_forward.2} parent=5 // pred_fallthru
      _
    %p6415 = scmp.le.s32.totalorder 2, %s15
    // Predicated region
    $region53: #{srcnn_forward.2} parent=5 // pred_check
      %p6416 = pneg %p6415
    $region54: #{srcnn_forward.2} parent=5 // pred_check_branch
      %6418 = sbr.rel (%p6416) target = $region56
    $region55: #{srcnn_forward.2} parent=5 // pred_region
      %s6419 = ssub.s32 %s15, 2
      // Predicated region
      $region57: #{srcnn_forward.2} parent=55 // pred_check
        %p6420 = pneg %p196
      $region58: #{srcnn_forward.2} parent=55 // pred_check_branch
        %6422 = sbr.rel (%p6420) target = $region60
      $region59: #{srcnn_forward.2} parent=55 // pred_region
        %p6423 = scmp.lt.s32.totalorder %s21, 1
        %s6424 = scalar_select %p6423, %s21, 1
        %s6425 = smul.addr %s6424, 2
        %s6426 = smul.addr %s6425, 8
        %s6427 = scalar_lea.vmem %s7, %s6426
      $region60: #{srcnn_forward.2} parent=55 // pred_fallthru
        _
    $region56: #{srcnn_forward.2} parent=5 // pred_fallthru
      _
  $region6: #{srcnn_forward.2} parent=0 // loop_footer
    %s19 = sadd.s32 1, %s15
  $region7: #{srcnn_forward.2} parent=0 // loop_footer_branch
    %14 = sbr.rel target = $region3
  $region8: #{srcnn_forward.2} parent=0 // loop_exit
    _

</llo_original>
